<compile_context>
chip_gen: v6e
topology: v6e:2x2x1
jax: 0.10.0
libtpu: 0.0.40
codegen_flags: <defaults>
</compile_context>

<pallas_src>
import math

import numpy as np
import jax
import jax.numpy as jnp
from jax.experimental import pallas as pl
from jax.experimental.pallas import tpu as pltpu

# ----------------------------- configuration --------------------------------
PATCH = 8            # patch size of the synthetic patch embed
EMBED_DIM = 32       # transformer width
MLP_DIM = 64         # MLP hidden width
PROJ_DIM = 16        # backbone output dim (video/text projection dim)
MAX_CLIP_LEN = 8     # "pretrained" temporal_embed length
CLIP_LEN = 4         # clip_length used by the backbone (<= MAX_CLIP_LEN)
VOCAB = 64           # synthetic tokenizer vocab
QKV_WIDTH = 128      # 3*EMBED_DIM = 96 real columns, zero-padded to 128 lanes
LN_EPS = 1e-5        # match torch.nn.LayerNorm default


# --------------------------- in-kernel math helpers ---------------------------
def _erf(x):
    # Abramowitz & Stegun 7.1.26 polynomial, |err| <= 1.5e-7 (exact-GELU path,
    # avoids relying on an erf lowering; only uses mul/add/exp/select/div).
    a1, a2, a3, a4, a5 = 0.254829592, -0.284496736, 1.421413741, -1.453152027, 1.061405429
    pc = 0.3275911
    sgn = jnp.where(x < 0.0, -1.0, 1.0)
    z = jnp.abs(x)
    t = 1.0 / (1.0 + pc * z)
    poly = ((((a5 * t + a4) * t + a3) * t + a2) * t + a1) * t
    return sgn * (1.0 - poly * jnp.exp(-z * z))


def _gelu_exact(x):
    return 0.5 * x * (1.0 + _erf(x * (1.0 / math.sqrt(2.0))))


def _layernorm(x, g, b):
    mu = jnp.mean(x, axis=-1, keepdims=True)
    xc = x - mu
    var = jnp.mean(xc * xc, axis=-1, keepdims=True)
    return xc * jax.lax.rsqrt(var + LN_EPS) * g + b


# ------------------------------- video kernel --------------------------------
def _make_video_kernel(S, L, nP, D):
    T = 1 + L * nP
    scale = 1.0 / math.sqrt(D)

    def kernel(px_ref, pw_ref, pb_ref, pt_ref, cls_ref, ln_ref,
               wqkv_ref, bqkv_ref, wo_ref, bo_ref,
               w1_ref, b1_ref, w2_ref, b2_ref,
               wp_ref, bp_ref,
               o_ref, tok_buf, seq_buf, out_buf):
        # --- patch-embed every padded frame of this batch element ONCE ---
        tok_buf[...] = (
            jnp.dot(px_ref[0], pw_ref[...], preferred_element_type=jnp.float32)
            + pb_ref[...]
        )

        # hoist resident parameters into vregs once (reused by all S clips)
        pt = pt_ref[...]                      # [L*nP, D] spatial+temporal embed
        g1, be1 = ln_ref[0:1, :], ln_ref[1:2, :]
        g2, be2 = ln_ref[2:3, :], ln_ref[3:4, :]
        gf, bef = ln_ref[4:5, :], ln_ref[5:6, :]
        wqkv, bqkv = wqkv_ref[...], bqkv_ref[...]
        wo, bo = wo_ref[...], bo_ref[...]
        w1, b1 = w1_ref[...], b1_ref[...]
        w2, b2 = w2_ref[...], b2_ref[...]
        wp, bp = wp_ref[...], bp_ref[...]

        # CLS token occupies row 0 of the sequence buffer for every clip
        seq_buf[0:1, :] = cls_ref[...]

        for s in range(S):                    # clips of this batch element (unrolled)
            # assemble [CLS ; tokens of padded frames s .. s+L-1 (+ pos/temporal)]
            seq_buf[1:, :] = tok_buf[s * nP: s * nP + L * nP, :] + pt
            x = seq_buf[...]                  # [T, D]

            # ---- attention (pre-LN), QKV packed into one lane-dense matmul ----
            h = _layernorm(x, g1, be1)
            qkv = jnp.dot(h, wqkv, preferred_element_type=jnp.float32) + bqkv   # [T, 128]
            q = qkv[:, 0:D]
            k = qkv[:, D:2 * D]
            v = qkv[:, 2 * D:3 * D]
            sm = jnp.dot(q, k.T, preferred_element_type=jnp.float32) * scale    # [T, T]
            sm = sm - jnp.max(sm, axis=-1, keepdims=True)
            p = jnp.exp(sm)
            p = p * pl.reciprocal(jnp.sum(p, axis=-1, keepdims=True), approx=True)
            a = jnp.dot(p, v, preferred_element_type=jnp.float32)               # [T, D]
            x = x + jnp.dot(a, wo, preferred_element_type=jnp.float32) + bo

            # ---- MLP (pre-LN), exact erf GELU ----
            h = _layernorm(x, g2, be2)
            h = jnp.dot(h, w1, preferred_element_type=jnp.float32) + b1
            h = _gelu_exact(h)
            h = jnp.dot(h, w2, preferred_element_type=jnp.float32) + b2
            x = x + h

            # ---- final LN, CLS token, video projection ----
            x = _layernorm(x, gf, bef)
            out_buf[s:s + 1, :] = (
                jnp.dot(x[0:1, :], wp, preferred_element_type=jnp.float32) + bp
            )

        o_ref[0] = out_buf[...]               # single [S, P] store per grid step

    return kernel


def _video_features(frame_sequence, p):
    """frame_sequence: [B, C, S, H, W] f32 -> [B, S, PROJ_DIM] f32."""
    B, C, S, H, W = frame_sequence.shape
    L, ps = CLIP_LEN, PATCH
    nh, nw = H // ps, W // ps
    nP = nh * nw
    D, P = EMBED_DIM, PROJ_DIM
    F_pad = S + L - 1
    T = 1 + L * nP
    Cpp = C * ps * ps

    # pad with L-1 copies of the first frame at the front (exact module semantics)
    first = frame_sequence[:, :, 0:1]
    padded = jnp.concatenate([jnp.repeat(first, L - 1, axis=2), frame_sequence], axis=2)

    # Patchify every padded frame ONCE (clips are overlapping windows of frames, so
    # the per-frame patch embedding is shared) -- no 4x-duplicated unfold tensor.
    # NCHW -> rows of [C*ps*ps], channel-major within each patch.
    x = padded.reshape(B, C, F_pad, nh, ps, nw, ps)
    x = jnp.transpose(x, (0, 2, 3, 5, 1, 4, 6))          # [B, F, nh, nw, C, ps, ps]
    px = x.reshape(B, F_pad * nP, Cpp)

    # combined spatial + temporal positional embedding, frame-major [L*nP, D]
    pt = (p["temporal_embed"][:, None, :] + p["pos_embed"][None, :, :]).reshape(L * nP, D)

    kernel = _make_video_kernel(S, L, nP, D)
    return pl.pallas_call(
        kernel,
        out_shape=jax.ShapeDtypeStruct((B, S, P), jnp.float32),
        grid=(B,),
        in_specs=[
            pl.BlockSpec((1, F_pad * nP, Cpp), lambda b: (b, 0, 0)),   # patchified pixels
            pl.BlockSpec((Cpp, D), lambda b: (0, 0)),                  # patch_w
            pl.BlockSpec((1, D), lambda b: (0, 0)),                    # patch_b
            pl.BlockSpec((L * nP, D), lambda b: (0, 0)),               # pos+temporal
            pl.BlockSpec((1, D), lambda b: (0, 0)),                    # cls token
            pl.BlockSpec((6, D), lambda b: (0, 0)),                    # packed LN params
            pl.BlockSpec((D, QKV_WIDTH), lambda b: (0, 0)),            # packed QKV weight
            pl.BlockSpec((1, QKV_WIDTH), lambda b: (0, 0)),            # packed QKV bias
            pl.BlockSpec((D, D), lambda b: (0, 0)),                    # wo
            pl.BlockSpec((1, D), lambda b: (0, 0)),                    # bo
            pl.BlockSpec((D, MLP_DIM), lambda b: (0, 0)),              # w1
            pl.BlockSpec((1, MLP_DIM), lambda b: (0, 0)),              # b1
            pl.BlockSpec((MLP_DIM, D), lambda b: (0, 0)),              # w2
            pl.BlockSpec((1, D), lambda b: (0, 0)),                    # b2
            pl.BlockSpec((D, P), lambda b: (0, 0)),                    # vproj_w
            pl.BlockSpec((1, P), lambda b: (0, 0)),                    # vproj_b
        ],
        out_specs=pl.BlockSpec((1, S, P), lambda b: (b, 0, 0)),
        scratch_shapes=[
            pltpu.VMEM((F_pad * nP, D), jnp.float32),   # per-frame tokens
            pltpu.VMEM((T, D), jnp.float32),            # [CLS | clip tokens] sequence
            pltpu.VMEM((S, P), jnp.float32),            # per-clip outputs
        ],
        compiler_params=pltpu.CompilerParams(
            dimension_semantics=("parallel",)),          # v7x: split clips across 2 TCs
    )(
        px, p["patch_w"], p["patch_b"], pt, p["cls_token"], p["ln_params"],
        p["qkv_w"], p["qkv_b"], p["wo"], p["bo"],
        p["w1"], p["b1"], p["w2"], p["b2"],
        p["vproj_w"], p["vproj_b"],
    )


# -------------------------------- text kernel --------------------------------
def _text_kernel(emb_ref, mask_ref, g_ref, b_ref, wp_ref, bp_ref, o_ref):
    emb = emb_ref[...]                              # [n, T, D]
    mask = mask_ref[...]                            # [n, T, 1]
    h = _layernorm(emb, g_ref[...], b_ref[...])
    num = jnp.sum(h * mask, axis=1)                 # [n, D]
    den = jnp.sum(mask, axis=1)                     # [n, 1]
    pooled = num * pl.reciprocal(den, approx=True)
    o_ref[...] = jnp.dot(pooled, wp_ref[...], preferred_element_type=jnp.float32) + bp_ref[...]


def _text_features(token_ids, token_mask, p):
    """token_ids: [n, T] int32, token_mask: [n, T] f32 -> [n, PROJ_DIM] f32."""
    n, T = token_ids.shape
    D, P = EMBED_DIM, PROJ_DIM
    # token-embedding gather + positional add kept as XLA glue (tiny).
    emb = p["tok_emb"][token_ids] + p["txt_pos"][:T][None]
    mask = token_mask[:, :, None]
    return pl.pallas_call(
        _text_kernel,
        out_shape=jax.ShapeDtypeStruct((n, P), jnp.float32),
        grid=(1,),
        in_specs=[
            pl.BlockSpec((n, T, D), lambda i: (0, 0, 0)),
            pl.BlockSpec((n, T, 1), lambda i: (0, 0, 0)),
            pl.BlockSpec((1, D), lambda i: (0, 0)),
            pl.BlockSpec((1, D), lambda i: (0, 0)),
            pl.BlockSpec((D, P), lambda i: (0, 0)),
            pl.BlockSpec((1, P), lambda i: (0, 0)),
        ],
        out_specs=pl.BlockSpec((n, P), lambda i: (0, 0)),
    )(emb, mask, p["tln_g"], p["tln_b"], p["tproj_w"], p["tproj_b"])


# ----------------------------- parameters ------------------------------------
def init_params(key, channels):
    D, P, Hm = EMBED_DIM, PROJ_DIM, MLP_DIM
    n_patches = (16 // PATCH) * (16 // PATCH)   # spatial grid is fixed at 16x16 here
    keys = jax.random.split(key, 16)
    rnd = lambda k, s: jax.random.normal(k, s, jnp.float32) * 0.02
    wq, wk, wv = rnd(keys[3], (D, D)), rnd(keys[4], (D, D)), rnd(keys[5], (D, D))
    ones, zeros = jnp.ones((D,), jnp.float32), jnp.zeros((D,), jnp.float32)
    p = {
        "patch_w": rnd(keys[0], (channels * PATCH * PATCH, D)),
        "patch_b": jnp.zeros((1, D), jnp.float32),
        "pos_embed": rnd(keys[1], (n_patches, D)),
        "cls_token": rnd(keys[2], (1, D)),
        # Q/K/V packed into one lane-dense [D, 128] weight (96 real cols, zero pad)
        "qkv_w": jnp.pad(jnp.concatenate([wq, wk, wv], axis=1),
                         ((0, 0), (0, QKV_WIDTH - 3 * D))),
        "qkv_b": jnp.zeros((1, QKV_WIDTH), jnp.float32),
        "wo": rnd(keys[6], (D, D)), "bo": jnp.zeros((1, D), jnp.float32),
        "w1": rnd(keys[7], (D, Hm)), "b1": jnp.zeros((1, Hm), jnp.float32),
        "w2": rnd(keys[8], (Hm, D)), "b2": jnp.zeros((1, D), jnp.float32),
        # ln1_g, ln1_b, ln2_g, ln2_b, lnf_g, lnf_b packed into one [6, D] array
        "ln_params": jnp.stack([ones, zeros, ones, zeros, ones, zeros], axis=0),
        "vproj_w": rnd(keys[9], (D, P)), "vproj_b": jnp.zeros((1, P), jnp.float32),
        # text side
        "tok_emb": rnd(keys[10], (VOCAB, D)),
        "txt_pos": rnd(keys[11], (512, D)),
        "tln_g": jnp.ones((1, D), jnp.float32), "tln_b": jnp.zeros((1, D), jnp.float32),
        "tproj_w": rnd(keys[12], (D, P)), "tproj_b": jnp.zeros((1, P), jnp.float32),
    }
    # "pretrained" temporal embed of length MAX_CLIP_LEN; keep last CLIP_LEN rows,
    # mirroring `temporal_embed = Parameter(temporal_embed[:, -clip_length:])`.
    temporal_full = rnd(keys[13], (MAX_CLIP_LEN, D))
    p["temporal_embed"] = temporal_full[-CLIP_LEN:]
    return p


# ----------------------------- tokenizer + forward ----------------------------
def simple_tokenize(texts):
    """Deterministic char-level tokenizer standing in for the HF tokenizer."""
    # TODO(synk): real EgoVLP uses a pretrained HuggingFace subword tokenizer.
    seqs = [[1] + [2 + (ord(c) % (VOCAB - 2)) for c in t] for t in texts]
    L = max(len(s) for s in seqs)
    ids = np.zeros((len(seqs), L), np.int32)
    msk = np.zeros((len(seqs), L), np.float32)
    for i, s in enumerate(seqs):
        ids[i, : len(s)] = s
        msk[i, : len(s)] = 1.0
    return jnp.asarray(ids), jnp.asarray(msk)


@jax.jit
def egovlp_forward(frame_sequence, token_ids, token_mask, params):
    """frame_sequence: [B, C, S, H, W] f32 -> ([B, S, PROJ_DIM], [n, PROJ_DIM])."""
    vid = _video_features(frame_sequence, params)       # one fused pallas_call
    txt = _text_features(token_ids, token_mask, params)  # one fused pallas_call
    return vid, txt


# ----------------------------------- main -------------------------------------
if __name__ == "__main__":
    key = jax.random.PRNGKey(0)
    k_x, k_p = jax.random.split(key)

    B, C, S, H, W = 2, 3, 5, 16, 16
    frame_sequence = jax.random.normal(k_x, (B, C, S, H, W), jnp.float32)
    texts = ["a person opens a door", "someone picks up a cup"]
    token_ids, token_mask = simple_tokenize(texts)

    params = init_params(k_p, C)

    vid_feats, text_feats = egovlp_forward(frame_sequence, token_ids, token_mask, params)
    jax.block_until_ready((vid_feats, text_feats))

    assert vid_feats.shape == (B, S, PROJ_DIM), vid_feats.shape
    assert text_feats.shape == (len(texts), PROJ_DIM), text_feats.shape
    assert vid_feats.dtype == jnp.float32 and text_feats.dtype == jnp.float32
    assert bool(jnp.all(jnp.isfinite(vid_feats))) and bool(jnp.all(jnp.isfinite(text_feats)))
    print("KERNEL_OK")
</pallas_src>

<mosaic_0001>
module attributes {stable_mosaic.version = 11 : i64} {
  func.func @kernel(%arg0: i32, %arg1: memref<1x32x192xf32, #tpu.memory_space<vmem>>, %arg2: memref<192x32xf32, #tpu.memory_space<vmem>>, %arg3: memref<1x32xf32, #tpu.memory_space<vmem>>, %arg4: memref<16x32xf32, #tpu.memory_space<vmem>>, %arg5: memref<1x32xf32, #tpu.memory_space<vmem>>, %arg6: memref<6x32xf32, #tpu.memory_space<vmem>>, %arg7: memref<32x128xf32, #tpu.memory_space<vmem>>, %arg8: memref<1x128xf32, #tpu.memory_space<vmem>>, %arg9: memref<32x32xf32, #tpu.memory_space<vmem>>, %arg10: memref<1x32xf32, #tpu.memory_space<vmem>>, %arg11: memref<32x64xf32, #tpu.memory_space<vmem>>, %arg12: memref<1x64xf32, #tpu.memory_space<vmem>>, %arg13: memref<64x32xf32, #tpu.memory_space<vmem>>, %arg14: memref<1x32xf32, #tpu.memory_space<vmem>>, %arg15: memref<32x16xf32, #tpu.memory_space<vmem>>, %arg16: memref<1x16xf32, #tpu.memory_space<vmem>>, %arg17: memref<1x5x16xf32, #tpu.memory_space<vmem>>, %arg18: memref<32x32xf32, #tpu.memory_space<vmem>>, %arg19: memref<17x32xf32, #tpu.memory_space<vmem>>, %arg20: memref<5x16xf32, #tpu.memory_space<vmem>>) attributes {dimension_semantics = [#tpu.dimension_semantics<parallel>], iteration_bounds = array<i64: 2>, scalar_prefetch = 0 : i64, scratch_operands = 3 : i64, tpu.core_type = #tpu.core_type<tc>, window_params = [{transform_indices = @transform_0, window_bounds = array<i64: 1, 32, 192>}, {pipeline_mode = #tpu.pipeline_mode<synchronous>, transform_indices = @transform_1, window_bounds = array<i64: 192, 32>}, {pipeline_mode = #tpu.pipeline_mode<synchronous>, transform_indices = @transform_2, window_bounds = array<i64: 1, 32>}, {pipeline_mode = #tpu.pipeline_mode<synchronous>, transform_indices = @transform_3, window_bounds = array<i64: 16, 32>}, {pipeline_mode = #tpu.pipeline_mode<synchronous>, transform_indices = @transform_4, window_bounds = array<i64: 1, 32>}, {pipeline_mode = #tpu.pipeline_mode<synchronous>, transform_indices = @transform_5, window_bounds = array<i64: 6, 32>}, {pipeline_mode = #tpu.pipeline_mode<synchronous>, transform_indices = @transform_6, window_bounds = array<i64: 32, 128>}, {pipeline_mode = #tpu.pipeline_mode<synchronous>, transform_indices = @transform_7, window_bounds = array<i64: 1, 128>}, {pipeline_mode = #tpu.pipeline_mode<synchronous>, transform_indices = @transform_8, window_bounds = array<i64: 32, 32>}, {pipeline_mode = #tpu.pipeline_mode<synchronous>, transform_indices = @transform_9, window_bounds = array<i64: 1, 32>}, {pipeline_mode = #tpu.pipeline_mode<synchronous>, transform_indices = @transform_10, window_bounds = array<i64: 32, 64>}, {pipeline_mode = #tpu.pipeline_mode<synchronous>, transform_indices = @transform_11, window_bounds = array<i64: 1, 64>}, {pipeline_mode = #tpu.pipeline_mode<synchronous>, transform_indices = @transform_12, window_bounds = array<i64: 64, 32>}, {pipeline_mode = #tpu.pipeline_mode<synchronous>, transform_indices = @transform_13, window_bounds = array<i64: 1, 32>}, {pipeline_mode = #tpu.pipeline_mode<synchronous>, transform_indices = @transform_14, window_bounds = array<i64: 32, 16>}, {pipeline_mode = #tpu.pipeline_mode<synchronous>, transform_indices = @transform_15, window_bounds = array<i64: 1, 16>}, {transform_indices = @transform_16, window_bounds = array<i64: 1, 5, 16>}]} {
    %c0 = arith.constant 0 : index
    %c0_0 = arith.constant 0 : index
    %c0_1 = arith.constant 0 : index
    %0 = vector.load %arg1[%c0, %c0_0, %c0_1] : memref<1x32x192xf32, #tpu.memory_space<vmem>>, vector<1x32x192xf32>
    %1 = vector.shape_cast %0 : vector<1x32x192xf32> to vector<32x192xf32>
    %c0_2 = arith.constant 0 : index
    %c0_3 = arith.constant 0 : index
    %2 = vector.load %arg2[%c0_2, %c0_3] : memref<192x32xf32, #tpu.memory_space<vmem>>, vector<192x32xf32>
    %cst = arith.constant dense<0.000000e+00> : vector<32x32xf32>
    %3 = tpu.matmul %1, %2, %cst {dimension_numbers = #tpu.dot_dimension_numbers<[1], [0], [0], [1], [0, 0, 1, 1], [], []>} : vector<32x192xf32>, vector<192x32xf32>, vector<32x32xf32> -> vector<32x32xf32>
    %c0_4 = arith.constant 0 : index
    %c0_5 = arith.constant 0 : index
    %4 = vector.load %arg3[%c0_4, %c0_5] : memref<1x32xf32, #tpu.memory_space<vmem>>, vector<1x32xf32>
    %5 = vector.broadcast %4 : vector<1x32xf32> to vector<32x32xf32>
    %6 = arith.addf %3, %5 : vector<32x32xf32>
    %c0_6 = arith.constant 0 : index
    %c0_7 = arith.constant 0 : index
    %7 = vector.load %arg18[%c0_6, %c0_7] : memref<32x32xf32, #tpu.memory_space<vmem>>, vector<32x32xf32>
    tpu.vector_store %arg18[%c0_6, %c0_7], %6 {strides = array<i32>} : memref<32x32xf32, #tpu.memory_space<vmem>>, vector<32x32xf32>,
    %c0_8 = arith.constant 0 : index
    %c0_9 = arith.constant 0 : index
    %8 = vector.load %arg4[%c0_8, %c0_9] : memref<16x32xf32, #tpu.memory_space<vmem>>, vector<16x32xf32>
    %c0_10 = arith.constant 0 : index
    %c0_11 = arith.constant 0 : index
    %9 = vector.load %arg6[%c0_10, %c0_11] : memref<6x32xf32, #tpu.memory_space<vmem>>, vector<1x32xf32>
    %c1 = arith.constant 1 : index
    %c0_12 = arith.constant 0 : index
    %10 = vector.load %arg6[%c1, %c0_12] : memref<6x32xf32, #tpu.memory_space<vmem>>, vector<1x32xf32>
    %c2 = arith.constant 2 : index
    %c0_13 = arith.constant 0 : index
    %11 = vector.load %arg6[%c2, %c0_13] : memref<6x32xf32, #tpu.memory_space<vmem>>, vector<1x32xf32>
    %c3 = arith.constant 3 : index
    %c0_14 = arith.constant 0 : index
    %12 = vector.load %arg6[%c3, %c0_14] : memref<6x32xf32, #tpu.memory_space<vmem>>, vector<1x32xf32>
    %c4 = arith.constant 4 : index
    %c0_15 = arith.constant 0 : index
    %13 = vector.load %arg6[%c4, %c0_15] : memref<6x32xf32, #tpu.memory_space<vmem>>, vector<1x32xf32>
    %c5 = arith.constant 5 : index
    %c0_16 = arith.constant 0 : index
    %14 = vector.load %arg6[%c5, %c0_16] : memref<6x32xf32, #tpu.memory_space<vmem>>, vector<1x32xf32>
    %c0_17 = arith.constant 0 : index
    %c0_18 = arith.constant 0 : index
    %15 = vector.load %arg7[%c0_17, %c0_18] : memref<32x128xf32, #tpu.memory_space<vmem>>, vector<32x128xf32>
    %c0_19 = arith.constant 0 : index
    %c0_20 = arith.constant 0 : index
    %16 = vector.load %arg8[%c0_19, %c0_20] : memref<1x128xf32, #tpu.memory_space<vmem>>, vector<1x128xf32>
    %c0_21 = arith.constant 0 : index
    %c0_22 = arith.constant 0 : index
    %17 = vector.load %arg9[%c0_21, %c0_22] : memref<32x32xf32, #tpu.memory_space<vmem>>, vector<32x32xf32>
    %c0_23 = arith.constant 0 : index
    %c0_24 = arith.constant 0 : index
    %18 = vector.load %arg10[%c0_23, %c0_24] : memref<1x32xf32, #tpu.memory_space<vmem>>, vector<1x32xf32>
    %c0_25 = arith.constant 0 : index
    %c0_26 = arith.constant 0 : index
    %19 = vector.load %arg11[%c0_25, %c0_26] : memref<32x64xf32, #tpu.memory_space<vmem>>, vector<32x64xf32>
    %c0_27 = arith.constant 0 : index
    %c0_28 = arith.constant 0 : index
    %20 = vector.load %arg12[%c0_27, %c0_28] : memref<1x64xf32, #tpu.memory_space<vmem>>, vector<1x64xf32>
    %c0_29 = arith.constant 0 : index
    %c0_30 = arith.constant 0 : index
    %21 = vector.load %arg13[%c0_29, %c0_30] : memref<64x32xf32, #tpu.memory_space<vmem>>, vector<64x32xf32>
    %c0_31 = arith.constant 0 : index
    %c0_32 = arith.constant 0 : index
    %22 = vector.load %arg14[%c0_31, %c0_32] : memref<1x32xf32, #tpu.memory_space<vmem>>, vector<1x32xf32>
    %c0_33 = arith.constant 0 : index
    %c0_34 = arith.constant 0 : index
    %23 = vector.load %arg15[%c0_33, %c0_34] : memref<32x16xf32, #tpu.memory_space<vmem>>, vector<32x16xf32>
    %c0_35 = arith.constant 0 : index
    %c0_36 = arith.constant 0 : index
    %24 = vector.load %arg16[%c0_35, %c0_36] : memref<1x16xf32, #tpu.memory_space<vmem>>, vector<1x16xf32>
    %c0_37 = arith.constant 0 : index
    %c0_38 = arith.constant 0 : index
    %25 = vector.load %arg5[%c0_37, %c0_38] : memref<1x32xf32, #tpu.memory_space<vmem>>, vector<1x32xf32>
    %c0_39 = arith.constant 0 : index
    %c0_40 = arith.constant 0 : index
    %26 = vector.load %arg19[%c0_39, %c0_40] : memref<17x32xf32, #tpu.memory_space<vmem>>, vector<1x32xf32>
    tpu.vector_store %arg19[%c0_39, %c0_40], %25 {strides = array<i32>} : memref<17x32xf32, #tpu.memory_space<vmem>>, vector<1x32xf32>,
    %c0_41 = arith.constant 0 : index
    %c0_42 = arith.constant 0 : index
    %27 = vector.load %arg18[%c0_41, %c0_42] : memref<32x32xf32, #tpu.memory_space<vmem>>, vector<16x32xf32>
    %28 = arith.addf %27, %8 : vector<16x32xf32>
    %c1_43 = arith.constant 1 : index
    %c0_44 = arith.constant 0 : index
    %29 = vector.load %arg19[%c1_43, %c0_44] : memref<17x32xf32, #tpu.memory_space<vmem>>, vector<16x32xf32>
    tpu.vector_store %arg19[%c1_43, %c0_44], %28 {strides = array<i32>} : memref<17x32xf32, #tpu.memory_space<vmem>>, vector<16x32xf32>,
    %c0_45 = arith.constant 0 : index
    %c0_46 = arith.constant 0 : index
    %30 = vector.load %arg19[%c0_45, %c0_46] : memref<17x32xf32, #tpu.memory_space<vmem>>, vector<17x32xf32>
    %cst_47 = arith.constant dense<0.000000e+00> : vector<17xf32>
    %31 = vector.multi_reduction <add>, %30, %cst_47 [1] : vector<17x32xf32> to vector<17xf32>
    %32 = vector.shape_cast %31 : vector<17xf32> to vector<17x1xf32>
    %cst_48 = arith.constant 3.200000e+01 : f32
    %33 = vector.broadcast %cst_48 : f32 to vector<17x1xf32>
    %34 = arith.divf %32, %33 : vector<17x1xf32>
    %35 = vector.broadcast %34 : vector<17x1xf32> to vector<17x32xf32>
    %36 = arith.subf %30, %35 : vector<17x32xf32>
    %37 = arith.mulf %36, %36 : vector<17x32xf32>
    %cst_49 = arith.constant dense<0.000000e+00> : vector<17xf32>
    %38 = vector.multi_reduction <add>, %37, %cst_49 [1] : vector<17x32xf32> to vector<17xf32>
    %39 = vector.shape_cast %38 : vector<17xf32> to vector<17x1xf32>
    %cst_50 = arith.constant 3.200000e+01 : f32
    %40 = vector.broadcast %cst_50 : f32 to vector<17x1xf32>
    %41 = arith.divf %39, %40 : vector<17x1xf32>
    %cst_51 = arith.constant 9.99999974E-6 : f32
    %42 = vector.broadcast %cst_51 : f32 to vector<17x1xf32>
    %43 = arith.addf %41, %42 : vector<17x1xf32>
    %44 = math.rsqrt %43 : vector<17x1xf32>
    %45 = vector.broadcast %44 : vector<17x1xf32> to vector<17x32xf32>
    %46 = arith.mulf %36, %45 : vector<17x32xf32>
    %47 = vector.broadcast %9 : vector<1x32xf32> to vector<17x32xf32>
    %48 = arith.mulf %46, %47 : vector<17x32xf32>
    %49 = vector.broadcast %10 : vector<1x32xf32> to vector<17x32xf32>
    %50 = arith.addf %48, %49 : vector<17x32xf32>
    %cst_52 = arith.constant dense<0.000000e+00> : vector<17x128xf32>
    %51 = tpu.matmul %50, %15, %cst_52 {dimension_numbers = #tpu.dot_dimension_numbers<[1], [0], [0], [1], [0, 0, 1, 1], [], []>} : vector<17x32xf32>, vector<32x128xf32>, vector<17x128xf32> -> vector<17x128xf32>
    %52 = vector.broadcast %16 : vector<1x128xf32> to vector<17x128xf32>
    %53 = arith.addf %51, %52 : vector<17x128xf32>
    %54 = vector.extract_strided_slice %53 {offsets = [0, 0], sizes = [17, 32], strides = [1, 1]} : vector<17x128xf32> to vector<17x32xf32>
    %55 = vector.extract_strided_slice %53 {offsets = [0, 32], sizes = [17, 32], strides = [1, 1]} : vector<17x128xf32> to vector<17x32xf32>
    %56 = vector.extract_strided_slice %53 {offsets = [0, 64], sizes = [17, 32], strides = [1, 1]} : vector<17x128xf32> to vector<17x32xf32>
    %57 = tpu.transpose %55, [1, 0] : vector<17x32xf32> -> vector<32x17xf32>
    %cst_53 = arith.constant dense<0.000000e+00> : vector<17x17xf32>
    %58 = tpu.matmul %54, %57, %cst_53 {dimension_numbers = #tpu.dot_dimension_numbers<[1], [0], [0], [1], [0, 0, 1, 1], [], []>} : vector<17x32xf32>, vector<32x17xf32>, vector<17x17xf32> -> vector<17x17xf32>
    %cst_54 = arith.constant 0.176776692 : f32
    %59 = vector.broadcast %cst_54 : f32 to vector<17x17xf32>
    %60 = arith.mulf %58, %59 : vector<17x17xf32>
    %cst_55 = arith.constant dense<0xFF800000> : vector<17xf32>
    %61 = vector.multi_reduction <maximumf>, %60, %cst_55 [1] : vector<17x17xf32> to vector<17xf32>
    %62 = vector.shape_cast %61 : vector<17xf32> to vector<17x1xf32>
    %63 = vector.broadcast %62 : vector<17x1xf32> to vector<17x17xf32>
    %64 = arith.subf %60, %63 : vector<17x17xf32>
    %65 = math.exp %64 : vector<17x17xf32>
    %cst_56 = arith.constant dense<0.000000e+00> : vector<17xf32>
    %66 = vector.multi_reduction <add>, %65, %cst_56 [1] : vector<17x17xf32> to vector<17xf32>
    %67 = vector.shape_cast %66 : vector<17xf32> to vector<17x1xf32>
    %68 = tpu.reciprocal %67 {approx = true} : vector<17x1xf32> -> vector<17x1xf32>
    %69 = vector.broadcast %68 : vector<17x1xf32> to vector<17x17xf32>
    %70 = arith.mulf %65, %69 : vector<17x17xf32>
    %cst_57 = arith.constant dense<0.000000e+00> : vector<17x32xf32>
    %71 = tpu.matmul %70, %56, %cst_57 {dimension_numbers = #tpu.dot_dimension_numbers<[1], [0], [0], [1], [0, 0, 1, 1], [], []>} : vector<17x17xf32>, vector<17x32xf32>, vector<17x32xf32> -> vector<17x32xf32>
    %cst_58 = arith.constant dense<0.000000e+00> : vector<17x32xf32>
    %72 = tpu.matmul %71, %17, %cst_58 {dimension_numbers = #tpu.dot_dimension_numbers<[1], [0], [0], [1], [0, 0, 1, 1], [], []>} : vector<17x32xf32>, vector<32x32xf32>, vector<17x32xf32> -> vector<17x32xf32>
    %73 = arith.addf %30, %72 : vector<17x32xf32>
    %74 = vector.broadcast %18 : vector<1x32xf32> to vector<17x32xf32>
    %75 = arith.addf %73, %74 : vector<17x32xf32>
    %cst_59 = arith.constant dense<0.000000e+00> : vector<17xf32>
    %76 = vector.multi_reduction <add>, %75, %cst_59 [1] : vector<17x32xf32> to vector<17xf32>
    %77 = vector.shape_cast %76 : vector<17xf32> to vector<17x1xf32>
    %cst_60 = arith.constant 3.200000e+01 : f32
    %78 = vector.broadcast %cst_60 : f32 to vector<17x1xf32>
    %79 = arith.divf %77, %78 : vector<17x1xf32>
    %80 = vector.broadcast %79 : vector<17x1xf32> to vector<17x32xf32>
    %81 = arith.subf %75, %80 : vector<17x32xf32>
    %82 = arith.mulf %81, %81 : vector<17x32xf32>
    %cst_61 = arith.constant dense<0.000000e+00> : vector<17xf32>
    %83 = vector.multi_reduction <add>, %82, %cst_61 [1] : vector<17x32xf32> to vector<17xf32>
    %84 = vector.shape_cast %83 : vector<17xf32> to vector<17x1xf32>
    %cst_62 = arith.constant 3.200000e+01 : f32
    %85 = vector.broadcast %cst_62 : f32 to vector<17x1xf32>
    %86 = arith.divf %84, %85 : vector<17x1xf32>
    %cst_63 = arith.constant 9.99999974E-6 : f32
    %87 = vector.broadcast %cst_63 : f32 to vector<17x1xf32>
    %88 = arith.addf %86, %87 : vector<17x1xf32>
    %89 = math.rsqrt %88 : vector<17x1xf32>
    %90 = vector.broadcast %89 : vector<17x1xf32> to vector<17x32xf32>
    %91 = arith.mulf %81, %90 : vector<17x32xf32>
    %92 = vector.broadcast %11 : vector<1x32xf32> to vector<17x32xf32>
    %93 = arith.mulf %91, %92 : vector<17x32xf32>
    %94 = vector.broadcast %12 : vector<1x32xf32> to vector<17x32xf32>
    %95 = arith.addf %93, %94 : vector<17x32xf32>
    %cst_64 = arith.constant dense<0.000000e+00> : vector<17x64xf32>
    %96 = tpu.matmul %95, %19, %cst_64 {dimension_numbers = #tpu.dot_dimension_numbers<[1], [0], [0], [1], [0, 0, 1, 1], [], []>} : vector<17x32xf32>, vector<32x64xf32>, vector<17x64xf32> -> vector<17x64xf32>
    %97 = vector.broadcast %20 : vector<1x64xf32> to vector<17x64xf32>
    %98 = arith.addf %96, %97 : vector<17x64xf32>
    %cst_65 = arith.constant 5.000000e-01 : f32
    %99 = vector.broadcast %cst_65 : f32 to vector<17x64xf32>
    %100 = arith.mulf %99, %98 : vector<17x64xf32>
    %cst_66 = arith.constant 0.707106769 : f32
    %101 = vector.broadcast %cst_66 : f32 to vector<17x64xf32>
    %102 = arith.mulf %98, %101 : vector<17x64xf32>
    %cst_67 = arith.constant 0.000000e+00 : f32
    %103 = vector.broadcast %cst_67 : f32 to vector<17x64xf32>
    %104 = arith.cmpf olt, %102, %103 : vector<17x64xf32>
    %cst_68 = arith.constant -1.000000e+00 : f32
    %cst_69 = arith.constant 1.000000e+00 : f32
    %105 = vector.broadcast %cst_68 : f32 to vector<17x64xf32>
    %106 = vector.broadcast %cst_69 : f32 to vector<17x64xf32>
    %107 = arith.select %104, %105, %106 : vector<17x64xi1>, vector<17x64xf32>
    %108 = math.absf %102 : vector<17x64xf32>
    %cst_70 = arith.constant 0.327591091 : f32
    %109 = vector.broadcast %cst_70 : f32 to vector<17x64xf32>
    %110 = arith.mulf %109, %108 : vector<17x64xf32>
    %cst_71 = arith.constant 1.000000e+00 : f32
    %111 = vector.broadcast %cst_71 : f32 to vector<17x64xf32>
    %112 = arith.addf %111, %110 : vector<17x64xf32>
    %cst_72 = arith.constant 1.000000e+00 : f32
    %113 = vector.broadcast %cst_72 : f32 to vector<17x64xf32>
    %114 = arith.divf %113, %112 : vector<17x64xf32>
    %cst_73 = arith.constant 1.06140542 : f32
    %115 = vector.broadcast %cst_73 : f32 to vector<17x64xf32>
    %116 = arith.mulf %115, %114 : vector<17x64xf32>
    %cst_74 = arith.constant -1.45315206 : f32
    %117 = vector.broadcast %cst_74 : f32 to vector<17x64xf32>
    %118 = arith.addf %116, %117 : vector<17x64xf32>
    %119 = arith.mulf %118, %114 : vector<17x64xf32>
    %cst_75 = arith.constant 1.42141378 : f32
    %120 = vector.broadcast %cst_75 : f32 to vector<17x64xf32>
    %121 = arith.addf %119, %120 : vector<17x64xf32>
    %122 = arith.mulf %121, %114 : vector<17x64xf32>
    %cst_76 = arith.constant -0.284496725 : f32
    %123 = vector.broadcast %cst_76 : f32 to vector<17x64xf32>
    %124 = arith.addf %122, %123 : vector<17x64xf32>
    %125 = arith.mulf %124, %114 : vector<17x64xf32>
    %cst_77 = arith.constant 0.254829586 : f32
    %126 = vector.broadcast %cst_77 : f32 to vector<17x64xf32>
    %127 = arith.addf %125, %126 : vector<17x64xf32>
    %128 = arith.mulf %127, %114 : vector<17x64xf32>
    %cst_78 = arith.constant 0.000000e+00 : f32
    %129 = vector.broadcast %cst_78 : f32 to vector<17x64xf32>
    %130 = arith.subf %129, %108 : vector<17x64xf32>
    %131 = arith.mulf %130, %108 : vector<17x64xf32>
    %132 = math.exp %131 : vector<17x64xf32>
    %133 = arith.mulf %128, %132 : vector<17x64xf32>
    %cst_79 = arith.constant 1.000000e+00 : f32
    %134 = vector.broadcast %cst_79 : f32 to vector<17x64xf32>
    %135 = arith.subf %134, %133 : vector<17x64xf32>
    %136 = arith.mulf %107, %135 : vector<17x64xf32>
    %cst_80 = arith.constant 1.000000e+00 : f32
    %137 = vector.broadcast %cst_80 : f32 to vector<17x64xf32>
    %138 = arith.addf %137, %136 : vector<17x64xf32>
    %139 = arith.mulf %100, %138 : vector<17x64xf32>
    %cst_81 = arith.constant dense<0.000000e+00> : vector<17x32xf32>
    %140 = tpu.matmul %139, %21, %cst_81 {dimension_numbers = #tpu.dot_dimension_numbers<[1], [0], [0], [1], [0, 0, 1, 1], [], []>} : vector<17x64xf32>, vector<64x32xf32>, vector<17x32xf32> -> vector<17x32xf32>
    %141 = vector.broadcast %22 : vector<1x32xf32> to vector<17x32xf32>
    %142 = arith.addf %140, %141 : vector<17x32xf32>
    %143 = arith.addf %75, %142 : vector<17x32xf32>
    %cst_82 = arith.constant dense<0.000000e+00> : vector<17xf32>
    %144 = vector.multi_reduction <add>, %143, %cst_82 [1] : vector<17x32xf32> to vector<17xf32>
    %145 = vector.shape_cast %144 : vector<17xf32> to vector<17x1xf32>
    %cst_83 = arith.constant 3.200000e+01 : f32
    %146 = vector.broadcast %cst_83 : f32 to vector<17x1xf32>
    %147 = arith.divf %145, %146 : vector<17x1xf32>
    %148 = vector.broadcast %147 : vector<17x1xf32> to vector<17x32xf32>
    %149 = arith.subf %143, %148 : vector<17x32xf32>
    %150 = arith.mulf %149, %149 : vector<17x32xf32>
    %cst_84 = arith.constant dense<0.000000e+00> : vector<17xf32>
    %151 = vector.multi_reduction <add>, %150, %cst_84 [1] : vector<17x32xf32> to vector<17xf32>
    %152 = vector.shape_cast %151 : vector<17xf32> to vector<17x1xf32>
    %cst_85 = arith.constant 3.200000e+01 : f32
    %153 = vector.broadcast %cst_85 : f32 to vector<17x1xf32>
    %154 = arith.divf %152, %153 : vector<17x1xf32>
    %cst_86 = arith.constant 9.99999974E-6 : f32
    %155 = vector.broadcast %cst_86 : f32 to vector<17x1xf32>
    %156 = arith.addf %154, %155 : vector<17x1xf32>
    %157 = math.rsqrt %156 : vector<17x1xf32>
    %158 = vector.broadcast %157 : vector<17x1xf32> to vector<17x32xf32>
    %159 = arith.mulf %149, %158 : vector<17x32xf32>
    %160 = vector.broadcast %13 : vector<1x32xf32> to vector<17x32xf32>
    %161 = arith.mulf %159, %160 : vector<17x32xf32>
    %162 = vector.broadcast %14 : vector<1x32xf32> to vector<17x32xf32>
    %163 = arith.addf %161, %162 : vector<17x32xf32>
    %164 = vector.extract_strided_slice %163 {offsets = [0, 0], sizes = [1, 32], strides = [1, 1]} : vector<17x32xf32> to vector<1x32xf32>
    %cst_87 = arith.constant dense<0.000000e+00> : vector<1x16xf32>
    %165 = tpu.matmul %164, %23, %cst_87 {dimension_numbers = #tpu.dot_dimension_numbers<[1], [0], [0], [1], [0, 0, 1, 1], [], []>} : vector<1x32xf32>, vector<32x16xf32>, vector<1x16xf32> -> vector<1x16xf32>
    %166 = arith.addf %165, %24 : vector<1x16xf32>
    %c0_88 = arith.constant 0 : index
    %c0_89 = arith.constant 0 : index
    %167 = vector.load %arg20[%c0_88, %c0_89] : memref<5x16xf32, #tpu.memory_space<vmem>>, vector<1x16xf32>
    tpu.vector_store %arg20[%c0_88, %c0_89], %166 {strides = array<i32>} : memref<5x16xf32, #tpu.memory_space<vmem>>, vector<1x16xf32>,
    %c4_90 = arith.constant 4 : index
    %c0_91 = arith.constant 0 : index
    %168 = vector.load %arg18[%c4_90, %c0_91] : memref<32x32xf32, #tpu.memory_space<vmem>>, vector<16x32xf32>
    %169 = arith.addf %168, %8 : vector<16x32xf32>
    %c1_92 = arith.constant 1 : index
    %c0_93 = arith.constant 0 : index
    %170 = vector.load %arg19[%c1_92, %c0_93] : memref<17x32xf32, #tpu.memory_space<vmem>>, vector<16x32xf32>
    tpu.vector_store %arg19[%c1_92, %c0_93], %169 {strides = array<i32>} : memref<17x32xf32, #tpu.memory_space<vmem>>, vector<16x32xf32>,
    %c0_94 = arith.constant 0 : index
    %c0_95 = arith.constant 0 : index
    %171 = vector.load %arg19[%c0_94, %c0_95] : memref<17x32xf32, #tpu.memory_space<vmem>>, vector<17x32xf32>
    %cst_96 = arith.constant dense<0.000000e+00> : vector<17xf32>
    %172 = vector.multi_reduction <add>, %171, %cst_96 [1] : vector<17x32xf32> to vector<17xf32>
    %173 = vector.shape_cast %172 : vector<17xf32> to vector<17x1xf32>
    %cst_97 = arith.constant 3.200000e+01 : f32
    %174 = vector.broadcast %cst_97 : f32 to vector<17x1xf32>
    %175 = arith.divf %173, %174 : vector<17x1xf32>
    %176 = vector.broadcast %175 : vector<17x1xf32> to vector<17x32xf32>
    %177 = arith.subf %171, %176 : vector<17x32xf32>
    %178 = arith.mulf %177, %177 : vector<17x32xf32>
    %cst_98 = arith.constant dense<0.000000e+00> : vector<17xf32>
    %179 = vector.multi_reduction <add>, %178, %cst_98 [1] : vector<17x32xf32> to vector<17xf32>
    %180 = vector.shape_cast %179 : vector<17xf32> to vector<17x1xf32>
    %cst_99 = arith.constant 3.200000e+01 : f32
    %181 = vector.broadcast %cst_99 : f32 to vector<17x1xf32>
    %182 = arith.divf %180, %181 : vector<17x1xf32>
    %cst_100 = arith.constant 9.99999974E-6 : f32
    %183 = vector.broadcast %cst_100 : f32 to vector<17x1xf32>
    %184 = arith.addf %182, %183 : vector<17x1xf32>
    %185 = math.rsqrt %184 : vector<17x1xf32>
    %186 = vector.broadcast %185 : vector<17x1xf32> to vector<17x32xf32>
    %187 = arith.mulf %177, %186 : vector<17x32xf32>
    %188 = vector.broadcast %9 : vector<1x32xf32> to vector<17x32xf32>
    %189 = arith.mulf %187, %188 : vector<17x32xf32>
    %190 = vector.broadcast %10 : vector<1x32xf32> to vector<17x32xf32>
    %191 = arith.addf %189, %190 : vector<17x32xf32>
    %cst_101 = arith.constant dense<0.000000e+00> : vector<17x128xf32>
    %192 = tpu.matmul %191, %15, %cst_101 {dimension_numbers = #tpu.dot_dimension_numbers<[1], [0], [0], [1], [0, 0, 1, 1], [], []>} : vector<17x32xf32>, vector<32x128xf32>, vector<17x128xf32> -> vector<17x128xf32>
    %193 = vector.broadcast %16 : vector<1x128xf32> to vector<17x128xf32>
    %194 = arith.addf %192, %193 : vector<17x128xf32>
    %195 = vector.extract_strided_slice %194 {offsets = [0, 0], sizes = [17, 32], strides = [1, 1]} : vector<17x128xf32> to vector<17x32xf32>
    %196 = vector.extract_strided_slice %194 {offsets = [0, 32], sizes = [17, 32], strides = [1, 1]} : vector<17x128xf32> to vector<17x32xf32>
    %197 = vector.extract_strided_slice %194 {offsets = [0, 64], sizes = [17, 32], strides = [1, 1]} : vector<17x128xf32> to vector<17x32xf32>
    %198 = tpu.transpose %196, [1, 0] : vector<17x32xf32> -> vector<32x17xf32>
    %cst_102 = arith.constant dense<0.000000e+00> : vector<17x17xf32>
    %199 = tpu.matmul %195, %198, %cst_102 {dimension_numbers = #tpu.dot_dimension_numbers<[1], [0], [0], [1], [0, 0, 1, 1], [], []>} : vector<17x32xf32>, vector<32x17xf32>, vector<17x17xf32> -> vector<17x17xf32>
    %cst_103 = arith.constant 0.176776692 : f32
    %200 = vector.broadcast %cst_103 : f32 to vector<17x17xf32>
    %201 = arith.mulf %199, %200 : vector<17x17xf32>
    %cst_104 = arith.constant dense<0xFF800000> : vector<17xf32>
    %202 = vector.multi_reduction <maximumf>, %201, %cst_104 [1] : vector<17x17xf32> to vector<17xf32>
    %203 = vector.shape_cast %202 : vector<17xf32> to vector<17x1xf32>
    %204 = vector.broadcast %203 : vector<17x1xf32> to vector<17x17xf32>
    %205 = arith.subf %201, %204 : vector<17x17xf32>
    %206 = math.exp %205 : vector<17x17xf32>
    %cst_105 = arith.constant dense<0.000000e+00> : vector<17xf32>
    %207 = vector.multi_reduction <add>, %206, %cst_105 [1] : vector<17x17xf32> to vector<17xf32>
    %208 = vector.shape_cast %207 : vector<17xf32> to vector<17x1xf32>
    %209 = tpu.reciprocal %208 {approx = true} : vector<17x1xf32> -> vector<17x1xf32>
    %210 = vector.broadcast %209 : vector<17x1xf32> to vector<17x17xf32>
    %211 = arith.mulf %206, %210 : vector<17x17xf32>
    %cst_106 = arith.constant dense<0.000000e+00> : vector<17x32xf32>
    %212 = tpu.matmul %211, %197, %cst_106 {dimension_numbers = #tpu.dot_dimension_numbers<[1], [0], [0], [1], [0, 0, 1, 1], [], []>} : vector<17x17xf32>, vector<17x32xf32>, vector<17x32xf32> -> vector<17x32xf32>
    %cst_107 = arith.constant dense<0.000000e+00> : vector<17x32xf32>
    %213 = tpu.matmul %212, %17, %cst_107 {dimension_numbers = #tpu.dot_dimension_numbers<[1], [0], [0], [1], [0, 0, 1, 1], [], []>} : vector<17x32xf32>, vector<32x32xf32>, vector<17x32xf32> -> vector<17x32xf32>
    %214 = arith.addf %171, %213 : vector<17x32xf32>
    %215 = vector.broadcast %18 : vector<1x32xf32> to vector<17x32xf32>
    %216 = arith.addf %214, %215 : vector<17x32xf32>
    %cst_108 = arith.constant dense<0.000000e+00> : vector<17xf32>
    %217 = vector.multi_reduction <add>, %216, %cst_108 [1] : vector<17x32xf32> to vector<17xf32>
    %218 = vector.shape_cast %217 : vector<17xf32> to vector<17x1xf32>
    %cst_109 = arith.constant 3.200000e+01 : f32
    %219 = vector.broadcast %cst_109 : f32 to vector<17x1xf32>
    %220 = arith.divf %218, %219 : vector<17x1xf32>
    %221 = vector.broadcast %220 : vector<17x1xf32> to vector<17x32xf32>
    %222 = arith.subf %216, %221 : vector<17x32xf32>
    %223 = arith.mulf %222, %222 : vector<17x32xf32>
    %cst_110 = arith.constant dense<0.000000e+00> : vector<17xf32>
    %224 = vector.multi_reduction <add>, %223, %cst_110 [1] : vector<17x32xf32> to vector<17xf32>
    %225 = vector.shape_cast %224 : vector<17xf32> to vector<17x1xf32>
    %cst_111 = arith.constant 3.200000e+01 : f32
    %226 = vector.broadcast %cst_111 : f32 to vector<17x1xf32>
    %227 = arith.divf %225, %226 : vector<17x1xf32>
    %cst_112 = arith.constant 9.99999974E-6 : f32
    %228 = vector.broadcast %cst_112 : f32 to vector<17x1xf32>
    %229 = arith.addf %227, %228 : vector<17x1xf32>
    %230 = math.rsqrt %229 : vector<17x1xf32>
    %231 = vector.broadcast %230 : vector<17x1xf32> to vector<17x32xf32>
    %232 = arith.mulf %222, %231 : vector<17x32xf32>
    %233 = vector.broadcast %11 : vector<1x32xf32> to vector<17x32xf32>
    %234 = arith.mulf %232, %233 : vector<17x32xf32>
    %235 = vector.broadcast %12 : vector<1x32xf32> to vector<17x32xf32>
    %236 = arith.addf %234, %235 : vector<17x32xf32>
    %cst_113 = arith.constant dense<0.000000e+00> : vector<17x64xf32>
    %237 = tpu.matmul %236, %19, %cst_113 {dimension_numbers = #tpu.dot_dimension_numbers<[1], [0], [0], [1], [0, 0, 1, 1], [], []>} : vector<17x32xf32>, vector<32x64xf32>, vector<17x64xf32> -> vector<17x64xf32>
    %238 = vector.broadcast %20 : vector<1x64xf32> to vector<17x64xf32>
    %239 = arith.addf %237, %238 : vector<17x64xf32>
    %cst_114 = arith.constant 5.000000e-01 : f32
    %240 = vector.broadcast %cst_114 : f32 to vector<17x64xf32>
    %241 = arith.mulf %240, %239 : vector<17x64xf32>
    %cst_115 = arith.constant 0.707106769 : f32
    %242 = vector.broadcast %cst_115 : f32 to vector<17x64xf32>
    %243 = arith.mulf %239, %242 : vector<17x64xf32>
    %cst_116 = arith.constant 0.000000e+00 : f32
    %244 = vector.broadcast %cst_116 : f32 to vector<17x64xf32>
    %245 = arith.cmpf olt, %243, %244 : vector<17x64xf32>
    %cst_117 = arith.constant -1.000000e+00 : f32
    %cst_118 = arith.constant 1.000000e+00 : f32
    %246 = vector.broadcast %cst_117 : f32 to vector<17x64xf32>
    %247 = vector.broadcast %cst_118 : f32 to vector<17x64xf32>
    %248 = arith.select %245, %246, %247 : vector<17x64xi1>, vector<17x64xf32>
    %249 = math.absf %243 : vector<17x64xf32>
    %cst_119 = arith.constant 0.327591091 : f32
    %250 = vector.broadcast %cst_119 : f32 to vector<17x64xf32>
    %251 = arith.mulf %250, %249 : vector<17x64xf32>
    %cst_120 = arith.constant 1.000000e+00 : f32
    %252 = vector.broadcast %cst_120 : f32 to vector<17x64xf32>
    %253 = arith.addf %252, %251 : vector<17x64xf32>
    %cst_121 = arith.constant 1.000000e+00 : f32
    %254 = vector.broadcast %cst_121 : f32 to vector<17x64xf32>
    %255 = arith.divf %254, %253 : vector<17x64xf32>
    %cst_122 = arith.constant 1.06140542 : f32
    %256 = vector.broadcast %cst_122 : f32 to vector<17x64xf32>
    %257 = arith.mulf %256, %255 : vector<17x64xf32>
    %cst_123 = arith.constant -1.45315206 : f32
    %258 = vector.broadcast %cst_123 : f32 to vector<17x64xf32>
    %259 = arith.addf %257, %258 : vector<17x64xf32>
    %260 = arith.mulf %259, %255 : vector<17x64xf32>
    %cst_124 = arith.constant 1.42141378 : f32
    %261 = vector.broadcast %cst_124 : f32 to vector<17x64xf32>
    %262 = arith.addf %260, %261 : vector<17x64xf32>
    %263 = arith.mulf %262, %255 : vector<17x64xf32>
    %cst_125 = arith.constant -0.284496725 : f32
    %264 = vector.broadcast %cst_125 : f32 to vector<17x64xf32>
    %265 = arith.addf %263, %264 : vector<17x64xf32>
    %266 = arith.mulf %265, %255 : vector<17x64xf32>
    %cst_126 = arith.constant 0.254829586 : f32
    %267 = vector.broadcast %cst_126 : f32 to vector<17x64xf32>
    %268 = arith.addf %266, %267 : vector<17x64xf32>
    %269 = arith.mulf %268, %255 : vector<17x64xf32>
    %cst_127 = arith.constant 0.000000e+00 : f32
    %270 = vector.broadcast %cst_127 : f32 to vector<17x64xf32>
    %271 = arith.subf %270, %249 : vector<17x64xf32>
    %272 = arith.mulf %271, %249 : vector<17x64xf32>
    %273 = math.exp %272 : vector<17x64xf32>
    %274 = arith.mulf %269, %273 : vector<17x64xf32>
    %cst_128 = arith.constant 1.000000e+00 : f32
    %275 = vector.broadcast %cst_128 : f32 to vector<17x64xf32>
    %276 = arith.subf %275, %274 : vector<17x64xf32>
    %277 = arith.mulf %248, %276 : vector<17x64xf32>
    %cst_129 = arith.constant 1.000000e+00 : f32
    %278 = vector.broadcast %cst_129 : f32 to vector<17x64xf32>
    %279 = arith.addf %278, %277 : vector<17x64xf32>
    %280 = arith.mulf %241, %279 : vector<17x64xf32>
    %cst_130 = arith.constant dense<0.000000e+00> : vector<17x32xf32>
    %281 = tpu.matmul %280, %21, %cst_130 {dimension_numbers = #tpu.dot_dimension_numbers<[1], [0], [0], [1], [0, 0, 1, 1], [], []>} : vector<17x64xf32>, vector<64x32xf32>, vector<17x32xf32> -> vector<17x32xf32>
    %282 = vector.broadcast %22 : vector<1x32xf32> to vector<17x32xf32>
    %283 = arith.addf %281, %282 : vector<17x32xf32>
    %284 = arith.addf %216, %283 : vector<17x32xf32>
    %cst_131 = arith.constant dense<0.000000e+00> : vector<17xf32>
    %285 = vector.multi_reduction <add>, %284, %cst_131 [1] : vector<17x32xf32> to vector<17xf32>
    %286 = vector.shape_cast %285 : vector<17xf32> to vector<17x1xf32>
    %cst_132 = arith.constant 3.200000e+01 : f32
    %287 = vector.broadcast %cst_132 : f32 to vector<17x1xf32>
    %288 = arith.divf %286, %287 : vector<17x1xf32>
    %289 = vector.broadcast %288 : vector<17x1xf32> to vector<17x32xf32>
    %290 = arith.subf %284, %289 : vector<17x32xf32>
    %291 = arith.mulf %290, %290 : vector<17x32xf32>
    %cst_133 = arith.constant dense<0.000000e+00> : vector<17xf32>
    %292 = vector.multi_reduction <add>, %291, %cst_133 [1] : vector<17x32xf32> to vector<17xf32>
    %293 = vector.shape_cast %292 : vector<17xf32> to vector<17x1xf32>
    %cst_134 = arith.constant 3.200000e+01 : f32
    %294 = vector.broadcast %cst_134 : f32 to vector<17x1xf32>
    %295 = arith.divf %293, %294 : vector<17x1xf32>
    %cst_135 = arith.constant 9.99999974E-6 : f32
    %296 = vector.broadcast %cst_135 : f32 to vector<17x1xf32>
    %297 = arith.addf %295, %296 : vector<17x1xf32>
    %298 = math.rsqrt %297 : vector<17x1xf32>
    %299 = vector.broadcast %298 : vector<17x1xf32> to vector<17x32xf32>
    %300 = arith.mulf %290, %299 : vector<17x32xf32>
    %301 = vector.broadcast %13 : vector<1x32xf32> to vector<17x32xf32>
    %302 = arith.mulf %300, %301 : vector<17x32xf32>
    %303 = vector.broadcast %14 : vector<1x32xf32> to vector<17x32xf32>
    %304 = arith.addf %302, %303 : vector<17x32xf32>
    %305 = vector.extract_strided_slice %304 {offsets = [0, 0], sizes = [1, 32], strides = [1, 1]} : vector<17x32xf32> to vector<1x32xf32>
    %cst_136 = arith.constant dense<0.000000e+00> : vector<1x16xf32>
    %306 = tpu.matmul %305, %23, %cst_136 {dimension_numbers = #tpu.dot_dimension_numbers<[1], [0], [0], [1], [0, 0, 1, 1], [], []>} : vector<1x32xf32>, vector<32x16xf32>, vector<1x16xf32> -> vector<1x16xf32>
    %307 = arith.addf %306, %24 : vector<1x16xf32>
    %c1_137 = arith.constant 1 : index
    %c0_138 = arith.constant 0 : index
    %308 = vector.load %arg20[%c1_137, %c0_138] : memref<5x16xf32, #tpu.memory_space<vmem>>, vector<1x16xf32>
    tpu.vector_store %arg20[%c1_137, %c0_138], %307 {strides = array<i32>} : memref<5x16xf32, #tpu.memory_space<vmem>>, vector<1x16xf32>,
    %c8 = arith.constant 8 : index
    %c0_139 = arith.constant 0 : index
    %309 = vector.load %arg18[%c8, %c0_139] : memref<32x32xf32, #tpu.memory_space<vmem>>, vector<16x32xf32>
    %310 = arith.addf %309, %8 : vector<16x32xf32>
    %c1_140 = arith.constant 1 : index
    %c0_141 = arith.constant 0 : index
    %311 = vector.load %arg19[%c1_140, %c0_141] : memref<17x32xf32, #tpu.memory_space<vmem>>, vector<16x32xf32>
    tpu.vector_store %arg19[%c1_140, %c0_141], %310 {strides = array<i32>} : memref<17x32xf32, #tpu.memory_space<vmem>>, vector<16x32xf32>,
    %c0_142 = arith.constant 0 : index
    %c0_143 = arith.constant 0 : index
    %312 = vector.load %arg19[%c0_142, %c0_143] : memref<17x32xf32, #tpu.memory_space<vmem>>, vector<17x32xf32>
    %cst_144 = arith.constant dense<0.000000e+00> : vector<17xf32>
    %313 = vector.multi_reduction <add>, %312, %cst_144 [1] : vector<17x32xf32> to vector<17xf32>
    %314 = vector.shape_cast %313 : vector<17xf32> to vector<17x1xf32>
    %cst_145 = arith.constant 3.200000e+01 : f32
    %315 = vector.broadcast %cst_145 : f32 to vector<17x1xf32>
    %316 = arith.divf %314, %315 : vector<17x1xf32>
    %317 = vector.broadcast %316 : vector<17x1xf32> to vector<17x32xf32>
    %318 = arith.subf %312, %317 : vector<17x32xf32>
    %319 = arith.mulf %318, %318 : vector<17x32xf32>
    %cst_146 = arith.constant dense<0.000000e+00> : vector<17xf32>
    %320 = vector.multi_reduction <add>, %319, %cst_146 [1] : vector<17x32xf32> to vector<17xf32>
    %321 = vector.shape_cast %320 : vector<17xf32> to vector<17x1xf32>
    %cst_147 = arith.constant 3.200000e+01 : f32
    %322 = vector.broadcast %cst_147 : f32 to vector<17x1xf32>
    %323 = arith.divf %321, %322 : vector<17x1xf32>
    %cst_148 = arith.constant 9.99999974E-6 : f32
    %324 = vector.broadcast %cst_148 : f32 to vector<17x1xf32>
    %325 = arith.addf %323, %324 : vector<17x1xf32>
    %326 = math.rsqrt %325 : vector<17x1xf32>
    %327 = vector.broadcast %326 : vector<17x1xf32> to vector<17x32xf32>
    %328 = arith.mulf %318, %327 : vector<17x32xf32>
    %329 = vector.broadcast %9 : vector<1x32xf32> to vector<17x32xf32>
    %330 = arith.mulf %328, %329 : vector<17x32xf32>
    %331 = vector.broadcast %10 : vector<1x32xf32> to vector<17x32xf32>
    %332 = arith.addf %330, %331 : vector<17x32xf32>
    %cst_149 = arith.constant dense<0.000000e+00> : vector<17x128xf32>
    %333 = tpu.matmul %332, %15, %cst_149 {dimension_numbers = #tpu.dot_dimension_numbers<[1], [0], [0], [1], [0, 0, 1, 1], [], []>} : vector<17x32xf32>, vector<32x128xf32>, vector<17x128xf32> -> vector<17x128xf32>
    %334 = vector.broadcast %16 : vector<1x128xf32> to vector<17x128xf32>
    %335 = arith.addf %333, %334 : vector<17x128xf32>
    %336 = vector.extract_strided_slice %335 {offsets = [0, 0], sizes = [17, 32], strides = [1, 1]} : vector<17x128xf32> to vector<17x32xf32>
    %337 = vector.extract_strided_slice %335 {offsets = [0, 32], sizes = [17, 32], strides = [1, 1]} : vector<17x128xf32> to vector<17x32xf32>
    %338 = vector.extract_strided_slice %335 {offsets = [0, 64], sizes = [17, 32], strides = [1, 1]} : vector<17x128xf32> to vector<17x32xf32>
    %339 = tpu.transpose %337, [1, 0] : vector<17x32xf32> -> vector<32x17xf32>
    %cst_150 = arith.constant dense<0.000000e+00> : vector<17x17xf32>
    %340 = tpu.matmul %336, %339, %cst_150 {dimension_numbers = #tpu.dot_dimension_numbers<[1], [0], [0], [1], [0, 0, 1, 1], [], []>} : vector<17x32xf32>, vector<32x17xf32>, vector<17x17xf32> -> vector<17x17xf32>
    %cst_151 = arith.constant 0.176776692 : f32
    %341 = vector.broadcast %cst_151 : f32 to vector<17x17xf32>
    %342 = arith.mulf %340, %341 : vector<17x17xf32>
    %cst_152 = arith.constant dense<0xFF800000> : vector<17xf32>
    %343 = vector.multi_reduction <maximumf>, %342, %cst_152 [1] : vector<17x17xf32> to vector<17xf32>
    %344 = vector.shape_cast %343 : vector<17xf32> to vector<17x1xf32>
    %345 = vector.broadcast %344 : vector<17x1xf32> to vector<17x17xf32>
    %346 = arith.subf %342, %345 : vector<17x17xf32>
    %347 = math.exp %346 : vector<17x17xf32>
    %cst_153 = arith.constant dense<0.000000e+00> : vector<17xf32>
    %348 = vector.multi_reduction <add>, %347, %cst_153 [1] : vector<17x17xf32> to vector<17xf32>
    %349 = vector.shape_cast %348 : vector<17xf32> to vector<17x1xf32>
    %350 = tpu.reciprocal %349 {approx = true} : vector<17x1xf32> -> vector<17x1xf32>
    %351 = vector.broadcast %350 : vector<17x1xf32> to vector<17x17xf32>
    %352 = arith.mulf %347, %351 : vector<17x17xf32>
    %cst_154 = arith.constant dense<0.000000e+00> : vector<17x32xf32>
    %353 = tpu.matmul %352, %338, %cst_154 {dimension_numbers = #tpu.dot_dimension_numbers<[1], [0], [0], [1], [0, 0, 1, 1], [], []>} : vector<17x17xf32>, vector<17x32xf32>, vector<17x32xf32> -> vector<17x32xf32>
    %cst_155 = arith.constant dense<0.000000e+00> : vector<17x32xf32>
    %354 = tpu.matmul %353, %17, %cst_155 {dimension_numbers = #tpu.dot_dimension_numbers<[1], [0], [0], [1], [0, 0, 1, 1], [], []>} : vector<17x32xf32>, vector<32x32xf32>, vector<17x32xf32> -> vector<17x32xf32>
    %355 = arith.addf %312, %354 : vector<17x32xf32>
    %356 = vector.broadcast %18 : vector<1x32xf32> to vector<17x32xf32>
    %357 = arith.addf %355, %356 : vector<17x32xf32>
    %cst_156 = arith.constant dense<0.000000e+00> : vector<17xf32>
    %358 = vector.multi_reduction <add>, %357, %cst_156 [1] : vector<17x32xf32> to vector<17xf32>
    %359 = vector.shape_cast %358 : vector<17xf32> to vector<17x1xf32>
    %cst_157 = arith.constant 3.200000e+01 : f32
    %360 = vector.broadcast %cst_157 : f32 to vector<17x1xf32>
    %361 = arith.divf %359, %360 : vector<17x1xf32>
    %362 = vector.broadcast %361 : vector<17x1xf32> to vector<17x32xf32>
    %363 = arith.subf %357, %362 : vector<17x32xf32>
    %364 = arith.mulf %363, %363 : vector<17x32xf32>
    %cst_158 = arith.constant dense<0.000000e+00> : vector<17xf32>
    %365 = vector.multi_reduction <add>, %364, %cst_158 [1] : vector<17x32xf32> to vector<17xf32>
    %366 = vector.shape_cast %365 : vector<17xf32> to vector<17x1xf32>
    %cst_159 = arith.constant 3.200000e+01 : f32
    %367 = vector.broadcast %cst_159 : f32 to vector<17x1xf32>
    %368 = arith.divf %366, %367 : vector<17x1xf32>
    %cst_160 = arith.constant 9.99999974E-6 : f32
    %369 = vector.broadcast %cst_160 : f32 to vector<17x1xf32>
    %370 = arith.addf %368, %369 : vector<17x1xf32>
    %371 = math.rsqrt %370 : vector<17x1xf32>
    %372 = vector.broadcast %371 : vector<17x1xf32> to vector<17x32xf32>
    %373 = arith.mulf %363, %372 : vector<17x32xf32>
    %374 = vector.broadcast %11 : vector<1x32xf32> to vector<17x32xf32>
    %375 = arith.mulf %373, %374 : vector<17x32xf32>
    %376 = vector.broadcast %12 : vector<1x32xf32> to vector<17x32xf32>
    %377 = arith.addf %375, %376 : vector<17x32xf32>
    %cst_161 = arith.constant dense<0.000000e+00> : vector<17x64xf32>
    %378 = tpu.matmul %377, %19, %cst_161 {dimension_numbers = #tpu.dot_dimension_numbers<[1], [0], [0], [1], [0, 0, 1, 1], [], []>} : vector<17x32xf32>, vector<32x64xf32>, vector<17x64xf32> -> vector<17x64xf32>
    %379 = vector.broadcast %20 : vector<1x64xf32> to vector<17x64xf32>
    %380 = arith.addf %378, %379 : vector<17x64xf32>
    %cst_162 = arith.constant 5.000000e-01 : f32
    %381 = vector.broadcast %cst_162 : f32 to vector<17x64xf32>
    %382 = arith.mulf %381, %380 : vector<17x64xf32>
    %cst_163 = arith.constant 0.707106769 : f32
    %383 = vector.broadcast %cst_163 : f32 to vector<17x64xf32>
    %384 = arith.mulf %380, %383 : vector<17x64xf32>
    %cst_164 = arith.constant 0.000000e+00 : f32
    %385 = vector.broadcast %cst_164 : f32 to vector<17x64xf32>
    %386 = arith.cmpf olt, %384, %385 : vector<17x64xf32>
    %cst_165 = arith.constant -1.000000e+00 : f32
    %cst_166 = arith.constant 1.000000e+00 : f32
    %387 = vector.broadcast %cst_165 : f32 to vector<17x64xf32>
    %388 = vector.broadcast %cst_166 : f32 to vector<17x64xf32>
    %389 = arith.select %386, %387, %388 : vector<17x64xi1>, vector<17x64xf32>
    %390 = math.absf %384 : vector<17x64xf32>
    %cst_167 = arith.constant 0.327591091 : f32
    %391 = vector.broadcast %cst_167 : f32 to vector<17x64xf32>
    %392 = arith.mulf %391, %390 : vector<17x64xf32>
    %cst_168 = arith.constant 1.000000e+00 : f32
    %393 = vector.broadcast %cst_168 : f32 to vector<17x64xf32>
    %394 = arith.addf %393, %392 : vector<17x64xf32>
    %cst_169 = arith.constant 1.000000e+00 : f32
    %395 = vector.broadcast %cst_169 : f32 to vector<17x64xf32>
    %396 = arith.divf %395, %394 : vector<17x64xf32>
    %cst_170 = arith.constant 1.06140542 : f32
    %397 = vector.broadcast %cst_170 : f32 to vector<17x64xf32>
    %398 = arith.mulf %397, %396 : vector<17x64xf32>
    %cst_171 = arith.constant -1.45315206 : f32
    %399 = vector.broadcast %cst_171 : f32 to vector<17x64xf32>
    %400 = arith.addf %398, %399 : vector<17x64xf32>
    %401 = arith.mulf %400, %396 : vector<17x64xf32>
    %cst_172 = arith.constant 1.42141378 : f32
    %402 = vector.broadcast %cst_172 : f32 to vector<17x64xf32>
    %403 = arith.addf %401, %402 : vector<17x64xf32>
    %404 = arith.mulf %403, %396 : vector<17x64xf32>
    %cst_173 = arith.constant -0.284496725 : f32
    %405 = vector.broadcast %cst_173 : f32 to vector<17x64xf32>
    %406 = arith.addf %404, %405 : vector<17x64xf32>
    %407 = arith.mulf %406, %396 : vector<17x64xf32>
    %cst_174 = arith.constant 0.254829586 : f32
    %408 = vector.broadcast %cst_174 : f32 to vector<17x64xf32>
    %409 = arith.addf %407, %408 : vector<17x64xf32>
    %410 = arith.mulf %409, %396 : vector<17x64xf32>
    %cst_175 = arith.constant 0.000000e+00 : f32
    %411 = vector.broadcast %cst_175 : f32 to vector<17x64xf32>
    %412 = arith.subf %411, %390 : vector<17x64xf32>
    %413 = arith.mulf %412, %390 : vector<17x64xf32>
    %414 = math.exp %413 : vector<17x64xf32>
    %415 = arith.mulf %410, %414 : vector<17x64xf32>
    %cst_176 = arith.constant 1.000000e+00 : f32
    %416 = vector.broadcast %cst_176 : f32 to vector<17x64xf32>
    %417 = arith.subf %416, %415 : vector<17x64xf32>
    %418 = arith.mulf %389, %417 : vector<17x64xf32>
    %cst_177 = arith.constant 1.000000e+00 : f32
    %419 = vector.broadcast %cst_177 : f32 to vector<17x64xf32>
    %420 = arith.addf %419, %418 : vector<17x64xf32>
    %421 = arith.mulf %382, %420 : vector<17x64xf32>
    %cst_178 = arith.constant dense<0.000000e+00> : vector<17x32xf32>
    %422 = tpu.matmul %421, %21, %cst_178 {dimension_numbers = #tpu.dot_dimension_numbers<[1], [0], [0], [1], [0, 0, 1, 1], [], []>} : vector<17x64xf32>, vector<64x32xf32>, vector<17x32xf32> -> vector<17x32xf32>
    %423 = vector.broadcast %22 : vector<1x32xf32> to vector<17x32xf32>
    %424 = arith.addf %422, %423 : vector<17x32xf32>
    %425 = arith.addf %357, %424 : vector<17x32xf32>
    %cst_179 = arith.constant dense<0.000000e+00> : vector<17xf32>
    %426 = vector.multi_reduction <add>, %425, %cst_179 [1] : vector<17x32xf32> to vector<17xf32>
    %427 = vector.shape_cast %426 : vector<17xf32> to vector<17x1xf32>
    %cst_180 = arith.constant 3.200000e+01 : f32
    %428 = vector.broadcast %cst_180 : f32 to vector<17x1xf32>
    %429 = arith.divf %427, %428 : vector<17x1xf32>
    %430 = vector.broadcast %429 : vector<17x1xf32> to vector<17x32xf32>
    %431 = arith.subf %425, %430 : vector<17x32xf32>
    %432 = arith.mulf %431, %431 : vector<17x32xf32>
    %cst_181 = arith.constant dense<0.000000e+00> : vector<17xf32>
    %433 = vector.multi_reduction <add>, %432, %cst_181 [1] : vector<17x32xf32> to vector<17xf32>
    %434 = vector.shape_cast %433 : vector<17xf32> to vector<17x1xf32>
    %cst_182 = arith.constant 3.200000e+01 : f32
    %435 = vector.broadcast %cst_182 : f32 to vector<17x1xf32>
    %436 = arith.divf %434, %435 : vector<17x1xf32>
    %cst_183 = arith.constant 9.99999974E-6 : f32
    %437 = vector.broadcast %cst_183 : f32 to vector<17x1xf32>
    %438 = arith.addf %436, %437 : vector<17x1xf32>
    %439 = math.rsqrt %438 : vector<17x1xf32>
    %440 = vector.broadcast %439 : vector<17x1xf32> to vector<17x32xf32>
    %441 = arith.mulf %431, %440 : vector<17x32xf32>
    %442 = vector.broadcast %13 : vector<1x32xf32> to vector<17x32xf32>
    %443 = arith.mulf %441, %442 : vector<17x32xf32>
    %444 = vector.broadcast %14 : vector<1x32xf32> to vector<17x32xf32>
    %445 = arith.addf %443, %444 : vector<17x32xf32>
    %446 = vector.extract_strided_slice %445 {offsets = [0, 0], sizes = [1, 32], strides = [1, 1]} : vector<17x32xf32> to vector<1x32xf32>
    %cst_184 = arith.constant dense<0.000000e+00> : vector<1x16xf32>
    %447 = tpu.matmul %446, %23, %cst_184 {dimension_numbers = #tpu.dot_dimension_numbers<[1], [0], [0], [1], [0, 0, 1, 1], [], []>} : vector<1x32xf32>, vector<32x16xf32>, vector<1x16xf32> -> vector<1x16xf32>
    %448 = arith.addf %447, %24 : vector<1x16xf32>
    %c2_185 = arith.constant 2 : index
    %c0_186 = arith.constant 0 : index
    %449 = vector.load %arg20[%c2_185, %c0_186] : memref<5x16xf32, #tpu.memory_space<vmem>>, vector<1x16xf32>
    tpu.vector_store %arg20[%c2_185, %c0_186], %448 {strides = array<i32>} : memref<5x16xf32, #tpu.memory_space<vmem>>, vector<1x16xf32>,
    %c12 = arith.constant 12 : index
    %c0_187 = arith.constant 0 : index
    %450 = vector.load %arg18[%c12, %c0_187] : memref<32x32xf32, #tpu.memory_space<vmem>>, vector<16x32xf32>
    %451 = arith.addf %450, %8 : vector<16x32xf32>
    %c1_188 = arith.constant 1 : index
    %c0_189 = arith.constant 0 : index
    %452 = vector.load %arg19[%c1_188, %c0_189] : memref<17x32xf32, #tpu.memory_space<vmem>>, vector<16x32xf32>
    tpu.vector_store %arg19[%c1_188, %c0_189], %451 {strides = array<i32>} : memref<17x32xf32, #tpu.memory_space<vmem>>, vector<16x32xf32>,
    %c0_190 = arith.constant 0 : index
    %c0_191 = arith.constant 0 : index
    %453 = vector.load %arg19[%c0_190, %c0_191] : memref<17x32xf32, #tpu.memory_space<vmem>>, vector<17x32xf32>
    %cst_192 = arith.constant dense<0.000000e+00> : vector<17xf32>
    %454 = vector.multi_reduction <add>, %453, %cst_192 [1] : vector<17x32xf32> to vector<17xf32>
    %455 = vector.shape_cast %454 : vector<17xf32> to vector<17x1xf32>
    %cst_193 = arith.constant 3.200000e+01 : f32
    %456 = vector.broadcast %cst_193 : f32 to vector<17x1xf32>
    %457 = arith.divf %455, %456 : vector<17x1xf32>
    %458 = vector.broadcast %457 : vector<17x1xf32> to vector<17x32xf32>
    %459 = arith.subf %453, %458 : vector<17x32xf32>
    %460 = arith.mulf %459, %459 : vector<17x32xf32>
    %cst_194 = arith.constant dense<0.000000e+00> : vector<17xf32>
    %461 = vector.multi_reduction <add>, %460, %cst_194 [1] : vector<17x32xf32> to vector<17xf32>
    %462 = vector.shape_cast %461 : vector<17xf32> to vector<17x1xf32>
    %cst_195 = arith.constant 3.200000e+01 : f32
    %463 = vector.broadcast %cst_195 : f32 to vector<17x1xf32>
    %464 = arith.divf %462, %463 : vector<17x1xf32>
    %cst_196 = arith.constant 9.99999974E-6 : f32
    %465 = vector.broadcast %cst_196 : f32 to vector<17x1xf32>
    %466 = arith.addf %464, %465 : vector<17x1xf32>
    %467 = math.rsqrt %466 : vector<17x1xf32>
    %468 = vector.broadcast %467 : vector<17x1xf32> to vector<17x32xf32>
    %469 = arith.mulf %459, %468 : vector<17x32xf32>
    %470 = vector.broadcast %9 : vector<1x32xf32> to vector<17x32xf32>
    %471 = arith.mulf %469, %470 : vector<17x32xf32>
    %472 = vector.broadcast %10 : vector<1x32xf32> to vector<17x32xf32>
    %473 = arith.addf %471, %472 : vector<17x32xf32>
    %cst_197 = arith.constant dense<0.000000e+00> : vector<17x128xf32>
    %474 = tpu.matmul %473, %15, %cst_197 {dimension_numbers = #tpu.dot_dimension_numbers<[1], [0], [0], [1], [0, 0, 1, 1], [], []>} : vector<17x32xf32>, vector<32x128xf32>, vector<17x128xf32> -> vector<17x128xf32>
    %475 = vector.broadcast %16 : vector<1x128xf32> to vector<17x128xf32>
    %476 = arith.addf %474, %475 : vector<17x128xf32>
    %477 = vector.extract_strided_slice %476 {offsets = [0, 0], sizes = [17, 32], strides = [1, 1]} : vector<17x128xf32> to vector<17x32xf32>
    %478 = vector.extract_strided_slice %476 {offsets = [0, 32], sizes = [17, 32], strides = [1, 1]} : vector<17x128xf32> to vector<17x32xf32>
    %479 = vector.extract_strided_slice %476 {offsets = [0, 64], sizes = [17, 32], strides = [1, 1]} : vector<17x128xf32> to vector<17x32xf32>
    %480 = tpu.transpose %478, [1, 0] : vector<17x32xf32> -> vector<32x17xf32>
    %cst_198 = arith.constant dense<0.000000e+00> : vector<17x17xf32>
    %481 = tpu.matmul %477, %480, %cst_198 {dimension_numbers = #tpu.dot_dimension_numbers<[1], [0], [0], [1], [0, 0, 1, 1], [], []>} : vector<17x32xf32>, vector<32x17xf32>, vector<17x17xf32> -> vector<17x17xf32>
    %cst_199 = arith.constant 0.176776692 : f32
    %482 = vector.broadcast %cst_199 : f32 to vector<17x17xf32>
    %483 = arith.mulf %481, %482 : vector<17x17xf32>
    %cst_200 = arith.constant dense<0xFF800000> : vector<17xf32>
    %484 = vector.multi_reduction <maximumf>, %483, %cst_200 [1] : vector<17x17xf32> to vector<17xf32>
    %485 = vector.shape_cast %484 : vector<17xf32> to vector<17x1xf32>
    %486 = vector.broadcast %485 : vector<17x1xf32> to vector<17x17xf32>
    %487 = arith.subf %483, %486 : vector<17x17xf32>
    %488 = math.exp %487 : vector<17x17xf32>
    %cst_201 = arith.constant dense<0.000000e+00> : vector<17xf32>
    %489 = vector.multi_reduction <add>, %488, %cst_201 [1] : vector<17x17xf32> to vector<17xf32>
    %490 = vector.shape_cast %489 : vector<17xf32> to vector<17x1xf32>
    %491 = tpu.reciprocal %490 {approx = true} : vector<17x1xf32> -> vector<17x1xf32>
    %492 = vector.broadcast %491 : vector<17x1xf32> to vector<17x17xf32>
    %493 = arith.mulf %488, %492 : vector<17x17xf32>
    %cst_202 = arith.constant dense<0.000000e+00> : vector<17x32xf32>
    %494 = tpu.matmul %493, %479, %cst_202 {dimension_numbers = #tpu.dot_dimension_numbers<[1], [0], [0], [1], [0, 0, 1, 1], [], []>} : vector<17x17xf32>, vector<17x32xf32>, vector<17x32xf32> -> vector<17x32xf32>
    %cst_203 = arith.constant dense<0.000000e+00> : vector<17x32xf32>
    %495 = tpu.matmul %494, %17, %cst_203 {dimension_numbers = #tpu.dot_dimension_numbers<[1], [0], [0], [1], [0, 0, 1, 1], [], []>} : vector<17x32xf32>, vector<32x32xf32>, vector<17x32xf32> -> vector<17x32xf32>
    %496 = arith.addf %453, %495 : vector<17x32xf32>
    %497 = vector.broadcast %18 : vector<1x32xf32> to vector<17x32xf32>
    %498 = arith.addf %496, %497 : vector<17x32xf32>
    %cst_204 = arith.constant dense<0.000000e+00> : vector<17xf32>
    %499 = vector.multi_reduction <add>, %498, %cst_204 [1] : vector<17x32xf32> to vector<17xf32>
    %500 = vector.shape_cast %499 : vector<17xf32> to vector<17x1xf32>
    %cst_205 = arith.constant 3.200000e+01 : f32
    %501 = vector.broadcast %cst_205 : f32 to vector<17x1xf32>
    %502 = arith.divf %500, %501 : vector<17x1xf32>
    %503 = vector.broadcast %502 : vector<17x1xf32> to vector<17x32xf32>
    %504 = arith.subf %498, %503 : vector<17x32xf32>
    %505 = arith.mulf %504, %504 : vector<17x32xf32>
    %cst_206 = arith.constant dense<0.000000e+00> : vector<17xf32>
    %506 = vector.multi_reduction <add>, %505, %cst_206 [1] : vector<17x32xf32> to vector<17xf32>
    %507 = vector.shape_cast %506 : vector<17xf32> to vector<17x1xf32>
    %cst_207 = arith.constant 3.200000e+01 : f32
    %508 = vector.broadcast %cst_207 : f32 to vector<17x1xf32>
    %509 = arith.divf %507, %508 : vector<17x1xf32>
    %cst_208 = arith.constant 9.99999974E-6 : f32
    %510 = vector.broadcast %cst_208 : f32 to vector<17x1xf32>
    %511 = arith.addf %509, %510 : vector<17x1xf32>
    %512 = math.rsqrt %511 : vector<17x1xf32>
    %513 = vector.broadcast %512 : vector<17x1xf32> to vector<17x32xf32>
    %514 = arith.mulf %504, %513 : vector<17x32xf32>
    %515 = vector.broadcast %11 : vector<1x32xf32> to vector<17x32xf32>
    %516 = arith.mulf %514, %515 : vector<17x32xf32>
    %517 = vector.broadcast %12 : vector<1x32xf32> to vector<17x32xf32>
    %518 = arith.addf %516, %517 : vector<17x32xf32>
    %cst_209 = arith.constant dense<0.000000e+00> : vector<17x64xf32>
    %519 = tpu.matmul %518, %19, %cst_209 {dimension_numbers = #tpu.dot_dimension_numbers<[1], [0], [0], [1], [0, 0, 1, 1], [], []>} : vector<17x32xf32>, vector<32x64xf32>, vector<17x64xf32> -> vector<17x64xf32>
    %520 = vector.broadcast %20 : vector<1x64xf32> to vector<17x64xf32>
    %521 = arith.addf %519, %520 : vector<17x64xf32>
    %cst_210 = arith.constant 5.000000e-01 : f32
    %522 = vector.broadcast %cst_210 : f32 to vector<17x64xf32>
    %523 = arith.mulf %522, %521 : vector<17x64xf32>
    %cst_211 = arith.constant 0.707106769 : f32
    %524 = vector.broadcast %cst_211 : f32 to vector<17x64xf32>
    %525 = arith.mulf %521, %524 : vector<17x64xf32>
    %cst_212 = arith.constant 0.000000e+00 : f32
    %526 = vector.broadcast %cst_212 : f32 to vector<17x64xf32>
    %527 = arith.cmpf olt, %525, %526 : vector<17x64xf32>
    %cst_213 = arith.constant -1.000000e+00 : f32
    %cst_214 = arith.constant 1.000000e+00 : f32
    %528 = vector.broadcast %cst_213 : f32 to vector<17x64xf32>
    %529 = vector.broadcast %cst_214 : f32 to vector<17x64xf32>
    %530 = arith.select %527, %528, %529 : vector<17x64xi1>, vector<17x64xf32>
    %531 = math.absf %525 : vector<17x64xf32>
    %cst_215 = arith.constant 0.327591091 : f32
    %532 = vector.broadcast %cst_215 : f32 to vector<17x64xf32>
    %533 = arith.mulf %532, %531 : vector<17x64xf32>
    %cst_216 = arith.constant 1.000000e+00 : f32
    %534 = vector.broadcast %cst_216 : f32 to vector<17x64xf32>
    %535 = arith.addf %534, %533 : vector<17x64xf32>
    %cst_217 = arith.constant 1.000000e+00 : f32
    %536 = vector.broadcast %cst_217 : f32 to vector<17x64xf32>
    %537 = arith.divf %536, %535 : vector<17x64xf32>
    %cst_218 = arith.constant 1.06140542 : f32
    %538 = vector.broadcast %cst_218 : f32 to vector<17x64xf32>
    %539 = arith.mulf %538, %537 : vector<17x64xf32>
    %cst_219 = arith.constant -1.45315206 : f32
    %540 = vector.broadcast %cst_219 : f32 to vector<17x64xf32>
    %541 = arith.addf %539, %540 : vector<17x64xf32>
    %542 = arith.mulf %541, %537 : vector<17x64xf32>
    %cst_220 = arith.constant 1.42141378 : f32
    %543 = vector.broadcast %cst_220 : f32 to vector<17x64xf32>
    %544 = arith.addf %542, %543 : vector<17x64xf32>
    %545 = arith.mulf %544, %537 : vector<17x64xf32>
    %cst_221 = arith.constant -0.284496725 : f32
    %546 = vector.broadcast %cst_221 : f32 to vector<17x64xf32>
    %547 = arith.addf %545, %546 : vector<17x64xf32>
    %548 = arith.mulf %547, %537 : vector<17x64xf32>
    %cst_222 = arith.constant 0.254829586 : f32
    %549 = vector.broadcast %cst_222 : f32 to vector<17x64xf32>
    %550 = arith.addf %548, %549 : vector<17x64xf32>
    %551 = arith.mulf %550, %537 : vector<17x64xf32>
    %cst_223 = arith.constant 0.000000e+00 : f32
    %552 = vector.broadcast %cst_223 : f32 to vector<17x64xf32>
    %553 = arith.subf %552, %531 : vector<17x64xf32>
    %554 = arith.mulf %553, %531 : vector<17x64xf32>
    %555 = math.exp %554 : vector<17x64xf32>
    %556 = arith.mulf %551, %555 : vector<17x64xf32>
    %cst_224 = arith.constant 1.000000e+00 : f32
    %557 = vector.broadcast %cst_224 : f32 to vector<17x64xf32>
    %558 = arith.subf %557, %556 : vector<17x64xf32>
    %559 = arith.mulf %530, %558 : vector<17x64xf32>
    %cst_225 = arith.constant 1.000000e+00 : f32
    %560 = vector.broadcast %cst_225 : f32 to vector<17x64xf32>
    %561 = arith.addf %560, %559 : vector<17x64xf32>
    %562 = arith.mulf %523, %561 : vector<17x64xf32>
    %cst_226 = arith.constant dense<0.000000e+00> : vector<17x32xf32>
    %563 = tpu.matmul %562, %21, %cst_226 {dimension_numbers = #tpu.dot_dimension_numbers<[1], [0], [0], [1], [0, 0, 1, 1], [], []>} : vector<17x64xf32>, vector<64x32xf32>, vector<17x32xf32> -> vector<17x32xf32>
    %564 = vector.broadcast %22 : vector<1x32xf32> to vector<17x32xf32>
    %565 = arith.addf %563, %564 : vector<17x32xf32>
    %566 = arith.addf %498, %565 : vector<17x32xf32>
    %cst_227 = arith.constant dense<0.000000e+00> : vector<17xf32>
    %567 = vector.multi_reduction <add>, %566, %cst_227 [1] : vector<17x32xf32> to vector<17xf32>
    %568 = vector.shape_cast %567 : vector<17xf32> to vector<17x1xf32>
    %cst_228 = arith.constant 3.200000e+01 : f32
    %569 = vector.broadcast %cst_228 : f32 to vector<17x1xf32>
    %570 = arith.divf %568, %569 : vector<17x1xf32>
    %571 = vector.broadcast %570 : vector<17x1xf32> to vector<17x32xf32>
    %572 = arith.subf %566, %571 : vector<17x32xf32>
    %573 = arith.mulf %572, %572 : vector<17x32xf32>
    %cst_229 = arith.constant dense<0.000000e+00> : vector<17xf32>
    %574 = vector.multi_reduction <add>, %573, %cst_229 [1] : vector<17x32xf32> to vector<17xf32>
    %575 = vector.shape_cast %574 : vector<17xf32> to vector<17x1xf32>
    %cst_230 = arith.constant 3.200000e+01 : f32
    %576 = vector.broadcast %cst_230 : f32 to vector<17x1xf32>
    %577 = arith.divf %575, %576 : vector<17x1xf32>
    %cst_231 = arith.constant 9.99999974E-6 : f32
    %578 = vector.broadcast %cst_231 : f32 to vector<17x1xf32>
    %579 = arith.addf %577, %578 : vector<17x1xf32>
    %580 = math.rsqrt %579 : vector<17x1xf32>
    %581 = vector.broadcast %580 : vector<17x1xf32> to vector<17x32xf32>
    %582 = arith.mulf %572, %581 : vector<17x32xf32>
    %583 = vector.broadcast %13 : vector<1x32xf32> to vector<17x32xf32>
    %584 = arith.mulf %582, %583 : vector<17x32xf32>
    %585 = vector.broadcast %14 : vector<1x32xf32> to vector<17x32xf32>
    %586 = arith.addf %584, %585 : vector<17x32xf32>
    %587 = vector.extract_strided_slice %586 {offsets = [0, 0], sizes = [1, 32], strides = [1, 1]} : vector<17x32xf32> to vector<1x32xf32>
    %cst_232 = arith.constant dense<0.000000e+00> : vector<1x16xf32>
    %588 = tpu.matmul %587, %23, %cst_232 {dimension_numbers = #tpu.dot_dimension_numbers<[1], [0], [0], [1], [0, 0, 1, 1], [], []>} : vector<1x32xf32>, vector<32x16xf32>, vector<1x16xf32> -> vector<1x16xf32>
    %589 = arith.addf %588, %24 : vector<1x16xf32>
    %c3_233 = arith.constant 3 : index
    %c0_234 = arith.constant 0 : index
    %590 = vector.load %arg20[%c3_233, %c0_234] : memref<5x16xf32, #tpu.memory_space<vmem>>, vector<1x16xf32>
    tpu.vector_store %arg20[%c3_233, %c0_234], %589 {strides = array<i32>} : memref<5x16xf32, #tpu.memory_space<vmem>>, vector<1x16xf32>,
    %c16 = arith.constant 16 : index
    %c0_235 = arith.constant 0 : index
    %591 = vector.load %arg18[%c16, %c0_235] : memref<32x32xf32, #tpu.memory_space<vmem>>, vector<16x32xf32>
    %592 = arith.addf %591, %8 : vector<16x32xf32>
    %c1_236 = arith.constant 1 : index
    %c0_237 = arith.constant 0 : index
    %593 = vector.load %arg19[%c1_236, %c0_237] : memref<17x32xf32, #tpu.memory_space<vmem>>, vector<16x32xf32>
    tpu.vector_store %arg19[%c1_236, %c0_237], %592 {strides = array<i32>} : memref<17x32xf32, #tpu.memory_space<vmem>>, vector<16x32xf32>,
    %c0_238 = arith.constant 0 : index
    %c0_239 = arith.constant 0 : index
    %594 = vector.load %arg19[%c0_238, %c0_239] : memref<17x32xf32, #tpu.memory_space<vmem>>, vector<17x32xf32>
    %cst_240 = arith.constant dense<0.000000e+00> : vector<17xf32>
    %595 = vector.multi_reduction <add>, %594, %cst_240 [1] : vector<17x32xf32> to vector<17xf32>
    %596 = vector.shape_cast %595 : vector<17xf32> to vector<17x1xf32>
    %cst_241 = arith.constant 3.200000e+01 : f32
    %597 = vector.broadcast %cst_241 : f32 to vector<17x1xf32>
    %598 = arith.divf %596, %597 : vector<17x1xf32>
    %599 = vector.broadcast %598 : vector<17x1xf32> to vector<17x32xf32>
    %600 = arith.subf %594, %599 : vector<17x32xf32>
    %601 = arith.mulf %600, %600 : vector<17x32xf32>
    %cst_242 = arith.constant dense<0.000000e+00> : vector<17xf32>
    %602 = vector.multi_reduction <add>, %601, %cst_242 [1] : vector<17x32xf32> to vector<17xf32>
    %603 = vector.shape_cast %602 : vector<17xf32> to vector<17x1xf32>
    %cst_243 = arith.constant 3.200000e+01 : f32
    %604 = vector.broadcast %cst_243 : f32 to vector<17x1xf32>
    %605 = arith.divf %603, %604 : vector<17x1xf32>
    %cst_244 = arith.constant 9.99999974E-6 : f32
    %606 = vector.broadcast %cst_244 : f32 to vector<17x1xf32>
    %607 = arith.addf %605, %606 : vector<17x1xf32>
    %608 = math.rsqrt %607 : vector<17x1xf32>
    %609 = vector.broadcast %608 : vector<17x1xf32> to vector<17x32xf32>
    %610 = arith.mulf %600, %609 : vector<17x32xf32>
    %611 = vector.broadcast %9 : vector<1x32xf32> to vector<17x32xf32>
    %612 = arith.mulf %610, %611 : vector<17x32xf32>
    %613 = vector.broadcast %10 : vector<1x32xf32> to vector<17x32xf32>
    %614 = arith.addf %612, %613 : vector<17x32xf32>
    %cst_245 = arith.constant dense<0.000000e+00> : vector<17x128xf32>
    %615 = tpu.matmul %614, %15, %cst_245 {dimension_numbers = #tpu.dot_dimension_numbers<[1], [0], [0], [1], [0, 0, 1, 1], [], []>} : vector<17x32xf32>, vector<32x128xf32>, vector<17x128xf32> -> vector<17x128xf32>
    %616 = vector.broadcast %16 : vector<1x128xf32> to vector<17x128xf32>
    %617 = arith.addf %615, %616 : vector<17x128xf32>
    %618 = vector.extract_strided_slice %617 {offsets = [0, 0], sizes = [17, 32], strides = [1, 1]} : vector<17x128xf32> to vector<17x32xf32>
    %619 = vector.extract_strided_slice %617 {offsets = [0, 32], sizes = [17, 32], strides = [1, 1]} : vector<17x128xf32> to vector<17x32xf32>
    %620 = vector.extract_strided_slice %617 {offsets = [0, 64], sizes = [17, 32], strides = [1, 1]} : vector<17x128xf32> to vector<17x32xf32>
    %621 = tpu.transpose %619, [1, 0] : vector<17x32xf32> -> vector<32x17xf32>
    %cst_246 = arith.constant dense<0.000000e+00> : vector<17x17xf32>
    %622 = tpu.matmul %618, %621, %cst_246 {dimension_numbers = #tpu.dot_dimension_numbers<[1], [0], [0], [1], [0, 0, 1, 1], [], []>} : vector<17x32xf32>, vector<32x17xf32>, vector<17x17xf32> -> vector<17x17xf32>
    %cst_247 = arith.constant 0.176776692 : f32
    %623 = vector.broadcast %cst_247 : f32 to vector<17x17xf32>
    %624 = arith.mulf %622, %623 : vector<17x17xf32>
    %cst_248 = arith.constant dense<0xFF800000> : vector<17xf32>
    %625 = vector.multi_reduction <maximumf>, %624, %cst_248 [1] : vector<17x17xf32> to vector<17xf32>
    %626 = vector.shape_cast %625 : vector<17xf32> to vector<17x1xf32>
    %627 = vector.broadcast %626 : vector<17x1xf32> to vector<17x17xf32>
    %628 = arith.subf %624, %627 : vector<17x17xf32>
    %629 = math.exp %628 : vector<17x17xf32>
    %cst_249 = arith.constant dense<0.000000e+00> : vector<17xf32>
    %630 = vector.multi_reduction <add>, %629, %cst_249 [1] : vector<17x17xf32> to vector<17xf32>
    %631 = vector.shape_cast %630 : vector<17xf32> to vector<17x1xf32>
    %632 = tpu.reciprocal %631 {approx = true} : vector<17x1xf32> -> vector<17x1xf32>
    %633 = vector.broadcast %632 : vector<17x1xf32> to vector<17x17xf32>
    %634 = arith.mulf %629, %633 : vector<17x17xf32>
    %cst_250 = arith.constant dense<0.000000e+00> : vector<17x32xf32>
    %635 = tpu.matmul %634, %620, %cst_250 {dimension_numbers = #tpu.dot_dimension_numbers<[1], [0], [0], [1], [0, 0, 1, 1], [], []>} : vector<17x17xf32>, vector<17x32xf32>, vector<17x32xf32> -> vector<17x32xf32>
    %cst_251 = arith.constant dense<0.000000e+00> : vector<17x32xf32>
    %636 = tpu.matmul %635, %17, %cst_251 {dimension_numbers = #tpu.dot_dimension_numbers<[1], [0], [0], [1], [0, 0, 1, 1], [], []>} : vector<17x32xf32>, vector<32x32xf32>, vector<17x32xf32> -> vector<17x32xf32>
    %637 = arith.addf %594, %636 : vector<17x32xf32>
    %638 = vector.broadcast %18 : vector<1x32xf32> to vector<17x32xf32>
    %639 = arith.addf %637, %638 : vector<17x32xf32>
    %cst_252 = arith.constant dense<0.000000e+00> : vector<17xf32>
    %640 = vector.multi_reduction <add>, %639, %cst_252 [1] : vector<17x32xf32> to vector<17xf32>
    %641 = vector.shape_cast %640 : vector<17xf32> to vector<17x1xf32>
    %cst_253 = arith.constant 3.200000e+01 : f32
    %642 = vector.broadcast %cst_253 : f32 to vector<17x1xf32>
    %643 = arith.divf %641, %642 : vector<17x1xf32>
    %644 = vector.broadcast %643 : vector<17x1xf32> to vector<17x32xf32>
    %645 = arith.subf %639, %644 : vector<17x32xf32>
    %646 = arith.mulf %645, %645 : vector<17x32xf32>
    %cst_254 = arith.constant dense<0.000000e+00> : vector<17xf32>
    %647 = vector.multi_reduction <add>, %646, %cst_254 [1] : vector<17x32xf32> to vector<17xf32>
    %648 = vector.shape_cast %647 : vector<17xf32> to vector<17x1xf32>
    %cst_255 = arith.constant 3.200000e+01 : f32
    %649 = vector.broadcast %cst_255 : f32 to vector<17x1xf32>
    %650 = arith.divf %648, %649 : vector<17x1xf32>
    %cst_256 = arith.constant 9.99999974E-6 : f32
    %651 = vector.broadcast %cst_256 : f32 to vector<17x1xf32>
    %652 = arith.addf %650, %651 : vector<17x1xf32>
    %653 = math.rsqrt %652 : vector<17x1xf32>
    %654 = vector.broadcast %653 : vector<17x1xf32> to vector<17x32xf32>
    %655 = arith.mulf %645, %654 : vector<17x32xf32>
    %656 = vector.broadcast %11 : vector<1x32xf32> to vector<17x32xf32>
    %657 = arith.mulf %655, %656 : vector<17x32xf32>
    %658 = vector.broadcast %12 : vector<1x32xf32> to vector<17x32xf32>
    %659 = arith.addf %657, %658 : vector<17x32xf32>
    %cst_257 = arith.constant dense<0.000000e+00> : vector<17x64xf32>
    %660 = tpu.matmul %659, %19, %cst_257 {dimension_numbers = #tpu.dot_dimension_numbers<[1], [0], [0], [1], [0, 0, 1, 1], [], []>} : vector<17x32xf32>, vector<32x64xf32>, vector<17x64xf32> -> vector<17x64xf32>
    %661 = vector.broadcast %20 : vector<1x64xf32> to vector<17x64xf32>
    %662 = arith.addf %660, %661 : vector<17x64xf32>
    %cst_258 = arith.constant 5.000000e-01 : f32
    %663 = vector.broadcast %cst_258 : f32 to vector<17x64xf32>
    %664 = arith.mulf %663, %662 : vector<17x64xf32>
    %cst_259 = arith.constant 0.707106769 : f32
    %665 = vector.broadcast %cst_259 : f32 to vector<17x64xf32>
    %666 = arith.mulf %662, %665 : vector<17x64xf32>
    %cst_260 = arith.constant 0.000000e+00 : f32
    %667 = vector.broadcast %cst_260 : f32 to vector<17x64xf32>
    %668 = arith.cmpf olt, %666, %667 : vector<17x64xf32>
    %cst_261 = arith.constant -1.000000e+00 : f32
    %cst_262 = arith.constant 1.000000e+00 : f32
    %669 = vector.broadcast %cst_261 : f32 to vector<17x64xf32>
    %670 = vector.broadcast %cst_262 : f32 to vector<17x64xf32>
    %671 = arith.select %668, %669, %670 : vector<17x64xi1>, vector<17x64xf32>
    %672 = math.absf %666 : vector<17x64xf32>
    %cst_263 = arith.constant 0.327591091 : f32
    %673 = vector.broadcast %cst_263 : f32 to vector<17x64xf32>
    %674 = arith.mulf %673, %672 : vector<17x64xf32>
    %cst_264 = arith.constant 1.000000e+00 : f32
    %675 = vector.broadcast %cst_264 : f32 to vector<17x64xf32>
    %676 = arith.addf %675, %674 : vector<17x64xf32>
    %cst_265 = arith.constant 1.000000e+00 : f32
    %677 = vector.broadcast %cst_265 : f32 to vector<17x64xf32>
    %678 = arith.divf %677, %676 : vector<17x64xf32>
    %cst_266 = arith.constant 1.06140542 : f32
    %679 = vector.broadcast %cst_266 : f32 to vector<17x64xf32>
    %680 = arith.mulf %679, %678 : vector<17x64xf32>
    %cst_267 = arith.constant -1.45315206 : f32
    %681 = vector.broadcast %cst_267 : f32 to vector<17x64xf32>
    %682 = arith.addf %680, %681 : vector<17x64xf32>
    %683 = arith.mulf %682, %678 : vector<17x64xf32>
    %cst_268 = arith.constant 1.42141378 : f32
    %684 = vector.broadcast %cst_268 : f32 to vector<17x64xf32>
    %685 = arith.addf %683, %684 : vector<17x64xf32>
    %686 = arith.mulf %685, %678 : vector<17x64xf32>
    %cst_269 = arith.constant -0.284496725 : f32
    %687 = vector.broadcast %cst_269 : f32 to vector<17x64xf32>
    %688 = arith.addf %686, %687 : vector<17x64xf32>
    %689 = arith.mulf %688, %678 : vector<17x64xf32>
    %cst_270 = arith.constant 0.254829586 : f32
    %690 = vector.broadcast %cst_270 : f32 to vector<17x64xf32>
    %691 = arith.addf %689, %690 : vector<17x64xf32>
    %692 = arith.mulf %691, %678 : vector<17x64xf32>
    %cst_271 = arith.constant 0.000000e+00 : f32
    %693 = vector.broadcast %cst_271 : f32 to vector<17x64xf32>
    %694 = arith.subf %693, %672 : vector<17x64xf32>
    %695 = arith.mulf %694, %672 : vector<17x64xf32>
    %696 = math.exp %695 : vector<17x64xf32>
    %697 = arith.mulf %692, %696 : vector<17x64xf32>
    %cst_272 = arith.constant 1.000000e+00 : f32
    %698 = vector.broadcast %cst_272 : f32 to vector<17x64xf32>
    %699 = arith.subf %698, %697 : vector<17x64xf32>
    %700 = arith.mulf %671, %699 : vector<17x64xf32>
    %cst_273 = arith.constant 1.000000e+00 : f32
    %701 = vector.broadcast %cst_273 : f32 to vector<17x64xf32>
    %702 = arith.addf %701, %700 : vector<17x64xf32>
    %703 = arith.mulf %664, %702 : vector<17x64xf32>
    %cst_274 = arith.constant dense<0.000000e+00> : vector<17x32xf32>
    %704 = tpu.matmul %703, %21, %cst_274 {dimension_numbers = #tpu.dot_dimension_numbers<[1], [0], [0], [1], [0, 0, 1, 1], [], []>} : vector<17x64xf32>, vector<64x32xf32>, vector<17x32xf32> -> vector<17x32xf32>
    %705 = vector.broadcast %22 : vector<1x32xf32> to vector<17x32xf32>
    %706 = arith.addf %704, %705 : vector<17x32xf32>
    %707 = arith.addf %639, %706 : vector<17x32xf32>
    %cst_275 = arith.constant dense<0.000000e+00> : vector<17xf32>
    %708 = vector.multi_reduction <add>, %707, %cst_275 [1] : vector<17x32xf32> to vector<17xf32>
    %709 = vector.shape_cast %708 : vector<17xf32> to vector<17x1xf32>
    %cst_276 = arith.constant 3.200000e+01 : f32
    %710 = vector.broadcast %cst_276 : f32 to vector<17x1xf32>
    %711 = arith.divf %709, %710 : vector<17x1xf32>
    %712 = vector.broadcast %711 : vector<17x1xf32> to vector<17x32xf32>
    %713 = arith.subf %707, %712 : vector<17x32xf32>
    %714 = arith.mulf %713, %713 : vector<17x32xf32>
    %cst_277 = arith.constant dense<0.000000e+00> : vector<17xf32>
    %715 = vector.multi_reduction <add>, %714, %cst_277 [1] : vector<17x32xf32> to vector<17xf32>
    %716 = vector.shape_cast %715 : vector<17xf32> to vector<17x1xf32>
    %cst_278 = arith.constant 3.200000e+01 : f32
    %717 = vector.broadcast %cst_278 : f32 to vector<17x1xf32>
    %718 = arith.divf %716, %717 : vector<17x1xf32>
    %cst_279 = arith.constant 9.99999974E-6 : f32
    %719 = vector.broadcast %cst_279 : f32 to vector<17x1xf32>
    %720 = arith.addf %718, %719 : vector<17x1xf32>
    %721 = math.rsqrt %720 : vector<17x1xf32>
    %722 = vector.broadcast %721 : vector<17x1xf32> to vector<17x32xf32>
    %723 = arith.mulf %713, %722 : vector<17x32xf32>
    %724 = vector.broadcast %13 : vector<1x32xf32> to vector<17x32xf32>
    %725 = arith.mulf %723, %724 : vector<17x32xf32>
    %726 = vector.broadcast %14 : vector<1x32xf32> to vector<17x32xf32>
    %727 = arith.addf %725, %726 : vector<17x32xf32>
    %728 = vector.extract_strided_slice %727 {offsets = [0, 0], sizes = [1, 32], strides = [1, 1]} : vector<17x32xf32> to vector<1x32xf32>
    %cst_280 = arith.constant dense<0.000000e+00> : vector<1x16xf32>
    %729 = tpu.matmul %728, %23, %cst_280 {dimension_numbers = #tpu.dot_dimension_numbers<[1], [0], [0], [1], [0, 0, 1, 1], [], []>} : vector<1x32xf32>, vector<32x16xf32>, vector<1x16xf32> -> vector<1x16xf32>
    %730 = arith.addf %729, %24 : vector<1x16xf32>
    %c4_281 = arith.constant 4 : index
    %c0_282 = arith.constant 0 : index
    %731 = vector.load %arg20[%c4_281, %c0_282] : memref<5x16xf32, #tpu.memory_space<vmem>>, vector<1x16xf32>
    tpu.vector_store %arg20[%c4_281, %c0_282], %730 {strides = array<i32>} : memref<5x16xf32, #tpu.memory_space<vmem>>, vector<1x16xf32>,
    %c0_283 = arith.constant 0 : index
    %c0_284 = arith.constant 0 : index
    %732 = vector.load %arg20[%c0_283, %c0_284] : memref<5x16xf32, #tpu.memory_space<vmem>>, vector<5x16xf32>
    %c0_285 = arith.constant 0 : index
    %c0_286 = arith.constant 0 : index
    %c0_287 = arith.constant 0 : index
    %733 = vector.load %arg17[%c0_285, %c0_286, %c0_287] : memref<1x5x16xf32, #tpu.memory_space<vmem>>, vector<1x5x16xf32>
    %734 = vector.shape_cast %733 : vector<1x5x16xf32> to vector<5x16xf32>
    %735 = vector.shape_cast %732 : vector<5x16xf32> to vector<1x5x16xf32>
    tpu.vector_store %arg17[%c0_285, %c0_286, %c0_287], %735 {strides = array<i32>} : memref<1x5x16xf32, #tpu.memory_space<vmem>>, vector<1x5x16xf32>,
    return
  }
  func.func @transform_0(%arg0: i32) -> (i32, i32, i32) {
    %c0_i32 = arith.constant 0 : i32
    %c0_i32_0 = arith.constant 0 : i32
    %c0_i32_1 = arith.constant 0 : i32
    return %arg0, %c0_i32, %c0_i32_0 : i32, i32, i32
  }
  func.func @transform_1(%arg0: i32) -> (i32, i32) {
    %c0_i32 = arith.constant 0 : i32
    %c0_i32_0 = arith.constant 0 : i32
    %c0_i32_1 = arith.constant 0 : i32
    return %c0_i32, %c0_i32_0 : i32, i32
  }
  func.func @transform_2(%arg0: i32) -> (i32, i32) {
    %c0_i32 = arith.constant 0 : i32
    %c0_i32_0 = arith.constant 0 : i32
    %c0_i32_1 = arith.constant 0 : i32
    return %c0_i32, %c0_i32_0 : i32, i32
  }
  func.func @transform_3(%arg0: i32) -> (i32, i32) {
    %c0_i32 = arith.constant 0 : i32
    %c0_i32_0 = arith.constant 0 : i32
    %c0_i32_1 = arith.constant 0 : i32
    return %c0_i32, %c0_i32_0 : i32, i32
  }
  func.func @transform_4(%arg0: i32) -> (i32, i32) {
    %c0_i32 = arith.constant 0 : i32
    %c0_i32_0 = arith.constant 0 : i32
    %c0_i32_1 = arith.constant 0 : i32
    return %c0_i32, %c0_i32_0 : i32, i32
  }
  func.func @transform_5(%arg0: i32) -> (i32, i32) {
    %c0_i32 = arith.constant 0 : i32
    %c0_i32_0 = arith.constant 0 : i32
    %c0_i32_1 = arith.constant 0 : i32
    return %c0_i32, %c0_i32_0 : i32, i32
  }
  func.func @transform_6(%arg0: i32) -> (i32, i32) {
    %c0_i32 = arith.constant 0 : i32
    %c0_i32_0 = arith.constant 0 : i32
    %c0_i32_1 = arith.constant 0 : i32
    return %c0_i32, %c0_i32_0 : i32, i32
  }
  func.func @transform_7(%arg0: i32) -> (i32, i32) {
    %c0_i32 = arith.constant 0 : i32
    %c0_i32_0 = arith.constant 0 : i32
    %c0_i32_1 = arith.constant 0 : i32
    return %c0_i32, %c0_i32_0 : i32, i32
  }
  func.func @transform_8(%arg0: i32) -> (i32, i32) {
    %c0_i32 = arith.constant 0 : i32
    %c0_i32_0 = arith.constant 0 : i32
    %c0_i32_1 = arith.constant 0 : i32
    return %c0_i32, %c0_i32_0 : i32, i32
  }
  func.func @transform_9(%arg0: i32) -> (i32, i32) {
    %c0_i32 = arith.constant 0 : i32
    %c0_i32_0 = arith.constant 0 : i32
    %c0_i32_1 = arith.constant 0 : i32
    return %c0_i32, %c0_i32_0 : i32, i32
  }
  func.func @transform_10(%arg0: i32) -> (i32, i32) {
    %c0_i32 = arith.constant 0 : i32
    %c0_i32_0 = arith.constant 0 : i32
    %c0_i32_1 = arith.constant 0 : i32
    return %c0_i32, %c0_i32_0 : i32, i32
  }
  func.func @transform_11(%arg0: i32) -> (i32, i32) {
    %c0_i32 = arith.constant 0 : i32
    %c0_i32_0 = arith.constant 0 : i32
    %c0_i32_1 = arith.constant 0 : i32
    return %c0_i32, %c0_i32_0 : i32, i32
  }
  func.func @transform_12(%arg0: i32) -> (i32, i32) {
    %c0_i32 = arith.constant 0 : i32
    %c0_i32_0 = arith.constant 0 : i32
    %c0_i32_1 = arith.constant 0 : i32
    return %c0_i32, %c0_i32_0 : i32, i32
  }
  func.func @transform_13(%arg0: i32) -> (i32, i32) {
    %c0_i32 = arith.constant 0 : i32
    %c0_i32_0 = arith.constant 0 : i32
    %c0_i32_1 = arith.constant 0 : i32
    return %c0_i32, %c0_i32_0 : i32, i32
  }
  func.func @transform_14(%arg0: i32) -> (i32, i32) {
    %c0_i32 = arith.constant 0 : i32
    %c0_i32_0 = arith.constant 0 : i32
    %c0_i32_1 = arith.constant 0 : i32
    return %c0_i32, %c0_i32_0 : i32, i32
  }
  func.func @transform_15(%arg0: i32) -> (i32, i32) {
    %c0_i32 = arith.constant 0 : i32
    %c0_i32_0 = arith.constant 0 : i32
    %c0_i32_1 = arith.constant 0 : i32
    return %c0_i32, %c0_i32_0 : i32, i32
  }
  func.func @transform_16(%arg0: i32) -> (i32, i32, i32) {
    %c0_i32 = arith.constant 0 : i32
    %c0_i32_0 = arith.constant 0 : i32
    %c0_i32_1 = arith.constant 0 : i32
    return %arg0, %c0_i32, %c0_i32_0 : i32, i32, i32
  }
}

module attributes {stable_mosaic.version = 11 : i64} {
  func.func @_text_kernel(%arg0: i32, %arg1: memref<2x23x32xf32, #tpu.memory_space<vmem>>, %arg2: memref<2x23x1xf32, #tpu.memory_space<vmem>>, %arg3: memref<1x32xf32, #tpu.memory_space<vmem>>, %arg4: memref<1x32xf32, #tpu.memory_space<vmem>>, %arg5: memref<32x16xf32, #tpu.memory_space<vmem>>, %arg6: memref<1x16xf32, #tpu.memory_space<vmem>>, %arg7: memref<2x16xf32, #tpu.memory_space<vmem>>) attributes {dimension_semantics = [#tpu.dimension_semantics<arbitrary>], iteration_bounds = array<i64: 1>, scalar_prefetch = 0 : i64, scratch_operands = 0 : i64, tpu.core_type = #tpu.core_type<tc>, window_params = [{pipeline_mode = #tpu.pipeline_mode<synchronous>, transform_indices = @transform_0, window_bounds = array<i64: 2, 23, 32>}, {pipeline_mode = #tpu.pipeline_mode<synchronous>, transform_indices = @transform_1, window_bounds = array<i64: 2, 23, 1>}, {pipeline_mode = #tpu.pipeline_mode<synchronous>, transform_indices = @transform_2, window_bounds = array<i64: 1, 32>}, {pipeline_mode = #tpu.pipeline_mode<synchronous>, transform_indices = @transform_3, window_bounds = array<i64: 1, 32>}, {pipeline_mode = #tpu.pipeline_mode<synchronous>, transform_indices = @transform_4, window_bounds = array<i64: 32, 16>}, {pipeline_mode = #tpu.pipeline_mode<synchronous>, transform_indices = @transform_5, window_bounds = array<i64: 1, 16>}, {pipeline_mode = #tpu.pipeline_mode<synchronous>, transform_indices = @transform_6, window_bounds = array<i64: 2, 16>}]} {
    %c0 = arith.constant 0 : index
    %c0_0 = arith.constant 0 : index
    %c0_1 = arith.constant 0 : index
    %0 = vector.load %arg1[%c0, %c0_0, %c0_1] : memref<2x23x32xf32, #tpu.memory_space<vmem>>, vector<2x23x32xf32>
    %c0_2 = arith.constant 0 : index
    %c0_3 = arith.constant 0 : index
    %c0_4 = arith.constant 0 : index
    %1 = vector.load %arg2[%c0_2, %c0_3, %c0_4] : memref<2x23x1xf32, #tpu.memory_space<vmem>>, vector<2x23x1xf32>
    %c0_5 = arith.constant 0 : index
    %c0_6 = arith.constant 0 : index
    %2 = vector.load %arg3[%c0_5, %c0_6] : memref<1x32xf32, #tpu.memory_space<vmem>>, vector<1x32xf32>
    %c0_7 = arith.constant 0 : index
    %c0_8 = arith.constant 0 : index
    %3 = vector.load %arg4[%c0_7, %c0_8] : memref<1x32xf32, #tpu.memory_space<vmem>>, vector<1x32xf32>
    %cst = arith.constant dense<0.000000e+00> : vector<2x23xf32>
    %4 = vector.multi_reduction <add>, %0, %cst [2] : vector<2x23x32xf32> to vector<2x23xf32>
    %5 = vector.shape_cast %4 : vector<2x23xf32> to vector<2x23x1xf32>
    %cst_9 = arith.constant 3.200000e+01 : f32
    %6 = vector.broadcast %cst_9 : f32 to vector<2x23x1xf32>
    %7 = arith.divf %5, %6 : vector<2x23x1xf32>
    %8 = vector.broadcast %7 : vector<2x23x1xf32> to vector<2x23x32xf32>
    %9 = arith.subf %0, %8 : vector<2x23x32xf32>
    %10 = arith.mulf %9, %9 : vector<2x23x32xf32>
    %cst_10 = arith.constant dense<0.000000e+00> : vector<2x23xf32>
    %11 = vector.multi_reduction <add>, %10, %cst_10 [2] : vector<2x23x32xf32> to vector<2x23xf32>
    %12 = vector.shape_cast %11 : vector<2x23xf32> to vector<2x23x1xf32>
    %cst_11 = arith.constant 3.200000e+01 : f32
    %13 = vector.broadcast %cst_11 : f32 to vector<2x23x1xf32>
    %14 = arith.divf %12, %13 : vector<2x23x1xf32>
    %cst_12 = arith.constant 9.99999974E-6 : f32
    %15 = vector.broadcast %cst_12 : f32 to vector<2x23x1xf32>
    %16 = arith.addf %14, %15 : vector<2x23x1xf32>
    %17 = math.rsqrt %16 : vector<2x23x1xf32>
    %18 = vector.broadcast %17 : vector<2x23x1xf32> to vector<2x23x32xf32>
    %19 = arith.mulf %9, %18 : vector<2x23x32xf32>
    %20 = vector.shape_cast %2 : vector<1x32xf32> to vector<1x1x32xf32>
    %21 = vector.broadcast %20 : vector<1x1x32xf32> to vector<2x23x32xf32>
    %22 = arith.mulf %19, %21 : vector<2x23x32xf32>
    %23 = vector.shape_cast %3 : vector<1x32xf32> to vector<1x1x32xf32>
    %24 = vector.broadcast %23 : vector<1x1x32xf32> to vector<2x23x32xf32>
    %25 = arith.addf %22, %24 : vector<2x23x32xf32>
    %26 = vector.broadcast %1 : vector<2x23x1xf32> to vector<2x23x32xf32>
    %27 = arith.mulf %25, %26 : vector<2x23x32xf32>
    %cst_13 = arith.constant dense<0.000000e+00> : vector<2x32xf32>
    %28 = vector.multi_reduction <add>, %27, %cst_13 [1] : vector<2x23x32xf32> to vector<2x32xf32>
    %cst_14 = arith.constant dense<0.000000e+00> : vector<2x1xf32>
    %29 = vector.multi_reduction <add>, %1, %cst_14 [1] : vector<2x23x1xf32> to vector<2x1xf32>
    %30 = tpu.reciprocal %29 {approx = true} : vector<2x1xf32> -> vector<2x1xf32>
    %31 = vector.broadcast %30 : vector<2x1xf32> to vector<2x32xf32>
    %32 = arith.mulf %28, %31 : vector<2x32xf32>
    %c0_15 = arith.constant 0 : index
    %c0_16 = arith.constant 0 : index
    %33 = vector.load %arg5[%c0_15, %c0_16] : memref<32x16xf32, #tpu.memory_space<vmem>>, vector<32x16xf32>
    %cst_17 = arith.constant dense<0.000000e+00> : vector<2x16xf32>
    %34 = tpu.matmul %32, %33, %cst_17 {dimension_numbers = #tpu.dot_dimension_numbers<[1], [0], [0], [1], [0, 0, 1, 1], [], []>} : vector<2x32xf32>, vector<32x16xf32>, vector<2x16xf32> -> vector<2x16xf32>
    %c0_18 = arith.constant 0 : index
    %c0_19 = arith.constant 0 : index
    %35 = vector.load %arg6[%c0_18, %c0_19] : memref<1x16xf32, #tpu.memory_space<vmem>>, vector<1x16xf32>
    %36 = vector.broadcast %35 : vector<1x16xf32> to vector<2x16xf32>
    %37 = arith.addf %34, %36 : vector<2x16xf32>
    %c0_20 = arith.constant 0 : index
    %c0_21 = arith.constant 0 : index
    %38 = vector.load %arg7[%c0_20, %c0_21] : memref<2x16xf32, #tpu.memory_space<vmem>>, vector<2x16xf32>
    tpu.vector_store %arg7[%c0_20, %c0_21], %37 {strides = array<i32>} : memref<2x16xf32, #tpu.memory_space<vmem>>, vector<2x16xf32>,
    return
  }
  func.func @transform_0(%arg0: i32) -> (i32, i32, i32) {
    %c0_i32 = arith.constant 0 : i32
    %c0_i32_0 = arith.constant 0 : i32
    %c0_i32_1 = arith.constant 0 : i32
    %c0_i32_2 = arith.constant 0 : i32
    return %c0_i32, %c0_i32_0, %c0_i32_1 : i32, i32, i32
  }
  func.func @transform_1(%arg0: i32) -> (i32, i32, i32) {
    %c0_i32 = arith.constant 0 : i32
    %c0_i32_0 = arith.constant 0 : i32
    %c0_i32_1 = arith.constant 0 : i32
    %c0_i32_2 = arith.constant 0 : i32
    return %c0_i32, %c0_i32_0, %c0_i32_1 : i32, i32, i32
  }
  func.func @transform_2(%arg0: i32) -> (i32, i32) {
    %c0_i32 = arith.constant 0 : i32
    %c0_i32_0 = arith.constant 0 : i32
    %c0_i32_1 = arith.constant 0 : i32
    return %c0_i32, %c0_i32_0 : i32, i32
  }
  func.func @transform_3(%arg0: i32) -> (i32, i32) {
    %c0_i32 = arith.constant 0 : i32
    %c0_i32_0 = arith.constant 0 : i32
    %c0_i32_1 = arith.constant 0 : i32
    return %c0_i32, %c0_i32_0 : i32, i32
  }
  func.func @transform_4(%arg0: i32) -> (i32, i32) {
    %c0_i32 = arith.constant 0 : i32
    %c0_i32_0 = arith.constant 0 : i32
    %c0_i32_1 = arith.constant 0 : i32
    return %c0_i32, %c0_i32_0 : i32, i32
  }
  func.func @transform_5(%arg0: i32) -> (i32, i32) {
    %c0_i32 = arith.constant 0 : i32
    %c0_i32_0 = arith.constant 0 : i32
    %c0_i32_1 = arith.constant 0 : i32
    return %c0_i32, %c0_i32_0 : i32, i32
  }
  func.func @transform_6(%arg0: i32) -> (i32, i32) {
    %c0_i32 = arith.constant 0 : i32
    %c0_i32_0 = arith.constant 0 : i32
    %c0_i32_1 = arith.constant 0 : i32
    return %c0_i32, %c0_i32_0 : i32, i32
  }
}

</mosaic_0001>

<llo_original>
// kernel: egovlp_forward.3
$region0: #{egovlp_forward.3}
  #allocation0 [shape = 'u32[]', space=smem, size = 0x4, offset = 0x4, fixed_abs, tag = 'smem constant byte address 0x4 - core index']
  #allocation1 [shape = 'u32[144,128]{1,0:T(1,128)}', space=vmem, size = 0x12000, scoped, tag = 'internal scratch']
  %s0 = inlined_call_operand.vmem [shape: f32[2,23,32], index: 0, kind: input, shape index: {}]
  %s1 = inlined_call_operand.vmem [shape: f32[2,23,1], index: 1, kind: input, shape index: {}]
  %s2 = inlined_call_operand.vmem [shape: f32[1,32], index: 2, kind: input, shape index: {}]
  %s3 = inlined_call_operand.vmem [shape: f32[1,32], index: 3, kind: input, shape index: {}]
  %s4 = inlined_call_operand.vmem [shape: f32[32,16], index: 4, kind: input, shape index: {}]
  %s5 = inlined_call_operand.vmem [shape: f32[1,16], index: 5, kind: input, shape index: {}]
  %s6 = inlined_call_operand.hbm [shape: f32[2,16], index: 6, kind: output, shape index: {}]
  %s7 = sld [smem:[#allocation0]]
  $region34: #{egovlp_forward.3} parent=0
    _
  %s9 = ssub.s32 1, %s7
  %s10 = scalar_select 0, %s9, %s7
  $region1: #{egovlp_forward.3} parent=0
    #allocation2 [shape = 'u8[1024]{0}', space=vmem, size = 0x400, scoped, tag = 'output window, operand 0, single buffered']
    #allocation3 [shape = 's32[1]{0}', space=sflag, size = 0x4, scoped, tag = 'scoped memory for egovlp_forward.3']
    %11 = vsyncpa [#allocation3], 0
    // Predicated region
    $region2: #{egovlp_forward.3} parent=1 // pred_check
      _
    $region3: #{egovlp_forward.3} parent=1 // pred_check_branch
      %13 = sbr.rel (0) target = $region5
    $region4: #{egovlp_forward.3} parent=1 // pred_region
      _
    $region5: #{egovlp_forward.3} parent=1 // pred_fallthru
      _
    // Predicated region
    $region6: #{egovlp_forward.3} parent=1 // pred_check
      _
    $region7: #{egovlp_forward.3} parent=1 // pred_check_branch
      %15 = sbr.rel (0) target = $region9
    $region8: #{egovlp_forward.3} parent=1 // pred_region
      _
    $region9: #{egovlp_forward.3} parent=1 // pred_fallthru
      _
    // Predicated region
    $region10: #{egovlp_forward.3} parent=1 // pred_check
      _
    $region11: #{egovlp_forward.3} parent=1 // pred_check_branch
      %17 = sbr.rel (0) target = $region13
    $region12: #{egovlp_forward.3} parent=1 // pred_region
      _
    $region13: #{egovlp_forward.3} parent=1 // pred_fallthru
      _
    // Predicated region
    $region14: #{egovlp_forward.3} parent=1 // pred_check
      _
    $region15: #{egovlp_forward.3} parent=1 // pred_check_branch
      %19 = sbr.rel (0) target = $region17
    $region16: #{egovlp_forward.3} parent=1 // pred_region
      _
    $region17: #{egovlp_forward.3} parent=1 // pred_fallthru
      _
    // Predicated region
    $region18: #{egovlp_forward.3} parent=1 // pred_check
      _
    $region19: #{egovlp_forward.3} parent=1 // pred_check_branch
      %21 = sbr.rel (0) target = $region21
    $region20: #{egovlp_forward.3} parent=1 // pred_region
      _
    $region21: #{egovlp_forward.3} parent=1 // pred_fallthru
      _
    // Predicated region
    $region22: #{egovlp_forward.3} parent=1 // pred_check
      _
    $region23: #{egovlp_forward.3} parent=1 // pred_check_branch
      %23 = sbr.rel (0) target = $region25
    $region24: #{egovlp_forward.3} parent=1 // pred_region
      _
    $region25: #{egovlp_forward.3} parent=1 // pred_fallthru
      _
    %v24 = vld [vmem:[%s0] sm:$0xff]
    %v25 = vld [vmem:[%s0 + $0x8] sm:$0xff]
    %v26 = vld [vmem:[%s0 + $0x10] sm:$0x7f]
    %v27 = vld [vmem:[%s0 + $0x18] sm:$0xff]
    %v28 = vld [vmem:[%s0 + $0x20] sm:$0xff]
    %v29 = vld [vmem:[%s0 + $0x28] sm:$0x7f]
    %v30 = vld [vmem:[%s1] sm:$0xff]
    %v31 = vld [vmem:[%s1 + $0x8] sm:$0xff]
    %v32 = vld [vmem:[%s1 + $0x10] sm:$0x7f]
    %v33 = vld [vmem:[%s1 + $0x18] sm:$0xff]
    %v34 = vld [vmem:[%s1 + $0x20] sm:$0xff]
    %v35 = vld [vmem:[%s1 + $0x28] sm:$0x7f]
    %v36 = vld [vmem:[%s2] sm:$0x1]
    %v37 = vld [vmem:[%s3] sm:$0x1]
    %vm38 = vcmask 261120
    %v39 = vsel %vm38, %v24, 0.0
    %40 = vadd.xlane.f32.xlu0 %v39
    %v41 = vpop.xlane.xlu0 %40
    %v42 = vsel %vm38, %v25, 0.0
    %43 = vadd.xlane.f32.xlu0 %v42
    %v44 = vpop.xlane.xlu0 %43
    %vm45 = vcmask 260096
    %v46 = vsel %vm45, %v26, 0.0
    %47 = vadd.xlane.f32.xlu0 %v46
    %v48 = vpop.xlane.xlu0 %47
    %v49 = vsel %vm38, %v27, 0.0
    %50 = vadd.xlane.f32.xlu0 %v49
    %v51 = vpop.xlane.xlu0 %50
    %v52 = vsel %vm38, %v28, 0.0
    %53 = vadd.xlane.f32.xlu0 %v52
    %v54 = vpop.xlane.xlu0 %53
    %v55 = vsel %vm45, %v29, 0.0
    %56 = vadd.xlane.f32.xlu0 %v55
    %v57 = vpop.xlane.xlu0 %56
    %v58 = vrcp.pop 32.0
    %v59 = vmul.f32 %v41, %v58
    %v60 = vmul.f32 %v44, %v58
    %v61 = vmul.f32 %v48, %v58
    %v62 = vmul.f32 %v51, %v58
    %v63 = vmul.f32 %v54, %v58
    %v64 = vmul.f32 %v57, %v58
    %v65 = vsub.f32 %v24, %v59
    %v66 = vsub.f32 %v25, %v60
    %v67 = vsub.f32 %v26, %v61
    %v68 = vsub.f32 %v27, %v62
    %v69 = vsub.f32 %v28, %v63
    %v70 = vsub.f32 %v29, %v64
    %v71 = vmul.f32 %v65, %v65
    %v72 = vmul.f32 %v66, %v66
    %v73 = vmul.f32 %v67, %v67
    %v74 = vmul.f32 %v68, %v68
    %v75 = vmul.f32 %v69, %v69
    %v76 = vmul.f32 %v70, %v70
    %v77 = vsel %vm38, %v71, 0.0
    %78 = vadd.xlane.f32.xlu0 %v77
    %v79 = vpop.xlane.xlu0 %78
    %v80 = vsel %vm38, %v72, 0.0
    %81 = vadd.xlane.f32.xlu0 %v80
    %v82 = vpop.xlane.xlu0 %81
    %v83 = vsel %vm45, %v73, 0.0
    %84 = vadd.xlane.f32.xlu0 %v83
    %v85 = vpop.xlane.xlu0 %84
    %v86 = vsel %vm38, %v74, 0.0
    %87 = vadd.xlane.f32.xlu0 %v86
    %v88 = vpop.xlane.xlu0 %87
    %v89 = vsel %vm38, %v75, 0.0
    %90 = vadd.xlane.f32.xlu0 %v89
    %v91 = vpop.xlane.xlu0 %90
    %v92 = vsel %vm45, %v76, 0.0
    %93 = vadd.xlane.f32.xlu0 %v92
    %v94 = vpop.xlane.xlu0 %93
    %v95 = vmul.f32 %v79, %v58
    %v96 = vmul.f32 %v82, %v58
    %v97 = vmul.f32 %v85, %v58
    %v98 = vmul.f32 %v88, %v58
    %v99 = vmul.f32 %v91, %v58
    %v100 = vmul.f32 %v94, %v58
    %v101 = vadd.f32 %v95, 1e-05
    %v102 = vadd.f32 %v96, 1e-05
    %v103 = vadd.f32 %v97, 1e-05
    %v104 = vadd.f32 %v98, 1e-05
    %v105 = vadd.f32 %v99, 1e-05
    %v106 = vadd.f32 %v100, 1e-05
    %v107 = vrsqrt.pop %v101
    %v108 = vrsqrt.pop %v102
    %v109 = vrsqrt.pop %v103
    %v110 = vrsqrt.pop %v104
    %v111 = vrsqrt.pop %v105
    %v112 = vrsqrt.pop %v106
    %v113 = vmul.f32 %v65, %v107
    %v114 = vmul.f32 %v66, %v108
    %v115 = vmul.f32 %v67, %v109
    %v116 = vmul.f32 %v68, %v110
    %v117 = vmul.f32 %v69, %v111
    %v118 = vmul.f32 %v70, %v112
    %v120 = vlaneseq
    %v121 = vshrl.u32 %v120, 7
    %v122 = vsub.s32 0, %v121
    %v123 = vrot.slane %v36, %v122
    %v125 = vmul.f32 %v113, %v123
    %v126 = vmul.f32 %v114, %v123
    %v127 = vmul.f32 %v115, %v123
    %v128 = vmul.f32 %v116, %v123
    %v129 = vmul.f32 %v117, %v123
    %v130 = vmul.f32 %v118, %v123
    %v132 = vlaneseq
    %v133 = vshrl.u32 %v132, 7
    %v134 = vsub.s32 0, %v133
    %v135 = vrot.slane %v37, %v134
    %v137 = vadd.f32 %v125, %v135
    %v138 = vadd.f32 %v126, %v135
    %v139 = vadd.f32 %v127, %v135
    %v140 = vadd.f32 %v128, %v135
    %v141 = vadd.f32 %v129, %v135
    %v142 = vadd.f32 %v130, %v135
    %144 = vset.pattern.permute.xlu0 0
    %145 = vperm.xlu0 %144, %v30
    %v146 = vpop.permute.xlu0 %145
    %149 = vset.pattern.permute.xlu0 0
    %150 = vperm.xlu0 %149, %v31
    %v151 = vpop.permute.xlu0 %150
    %154 = vset.pattern.permute.xlu0 0
    %155 = vperm.xlu0 %154, %v32
    %v156 = vpop.permute.xlu0 %155
    %159 = vset.pattern.permute.xlu0 0
    %160 = vperm.xlu0 %159, %v33
    %v161 = vpop.permute.xlu0 %160
    %164 = vset.pattern.permute.xlu0 0
    %165 = vperm.xlu0 %164, %v34
    %v166 = vpop.permute.xlu0 %165
    %169 = vset.pattern.permute.xlu0 0
    %170 = vperm.xlu0 %169, %v35
    %v171 = vpop.permute.xlu0 %170
    %v173 = vmul.f32 %v137, %v146
    %v174 = vmul.f32 %v138, %v151
    %v175 = vmul.f32 %v139, %v156
    %v176 = vmul.f32 %v140, %v161
    %v177 = vmul.f32 %v141, %v166
    %v178 = vmul.f32 %v142, %v171
    %v179 = vsel %vm38, %v173, 0.0
    %v180 = vsel %vm38, %v174, 0.0
    %v181 = vadd.f32 %v179, %v180
    %v182 = vsel %vm45, %v175, 0.0
    %v183 = vadd.f32 %v181, %v182
    %v184 = vrot.slane %v183, 4
    %v185 = vadd.f32 %v183, %v184
    %v186 = vrot.slane %v185, 2
    %v187 = vadd.f32 %v185, %v186
    %v188 = vrot.slane %v187, 1
    %v189 = vadd.f32 %v187, %v188
    %v190 = vsel %vm38, %v176, 0.0
    %v191 = vsel %vm38, %v177, 0.0
    %v192 = vadd.f32 %v190, %v191
    %v193 = vsel %vm45, %v178, 0.0
    %v194 = vadd.f32 %v192, %v193
    %v195 = vrot.slane %v194, 4
    %v196 = vadd.f32 %v194, %v195
    %v197 = vrot.slane %v196, 2
    %v198 = vadd.f32 %v196, %v197
    %v199 = vrot.slane %v198, 1
    %v200 = vadd.f32 %v198, %v199
    %vm201 = vcmask 7168
    %v202 = vsel %vm201, %v30, 0.0
    %v203 = vsel %vm201, %v31, 0.0
    %v204 = vadd.f32 %v202, %v203
    %vm205 = vcmask 6144
    %v206 = vsel %vm205, %v32, 0.0
    %v207 = vadd.f32 %v204, %v206
    %v208 = vrot.slane %v207, 4
    %v209 = vadd.f32 %v207, %v208
    %v210 = vrot.slane %v209, 2
    %v211 = vadd.f32 %v209, %v210
    %v212 = vrot.slane %v211, 1
    %v213 = vadd.f32 %v211, %v212
    %v214 = vsel %vm201, %v33, 0.0
    %v215 = vsel %vm201, %v34, 0.0
    %v216 = vadd.f32 %v214, %v215
    %v217 = vsel %vm205, %v35, 0.0
    %v218 = vadd.f32 %v216, %v217
    %v219 = vrot.slane %v218, 4
    %v220 = vadd.f32 %v218, %v219
    %v221 = vrot.slane %v220, 2
    %v222 = vadd.f32 %v220, %v221
    %v223 = vrot.slane %v222, 1
    %v224 = vadd.f32 %v222, %v223
    %v225 = vrcp.pop %v213
    %v226 = vrcp.pop %v224
    %228 = vset.pattern.permute.xlu0 0
    %229 = vperm.xlu0 %228, %v225
    %v230 = vpop.permute.xlu0 %229
    %233 = vset.pattern.permute.xlu0 0
    %234 = vperm.xlu0 %233, %v226
    %v235 = vpop.permute.xlu0 %234
    %v237 = vmul.f32 %v189, %v230
    %v238 = vmul.f32 %v200, %v235
    %v239 = vld [vmem:[%s4] sm:$0xff]
    %v240 = vld [vmem:[%s4 + $0x8] sm:$0xff]
    %v241 = vld [vmem:[%s4 + $0x10] sm:$0xff]
    %v242 = vld [vmem:[%s4 + $0x18] sm:$0xff]
    %v243 = vld [vmem:[%s5] sm:$0x1]
    %v245 = vlaneseq
    %v246 = vshrl.u32 %v245, 7
    %v247 = vsub.s32 0, %v246
    %v248 = vrot.slane %v243, %v247
    %vm252 = vcmask 1041409
    %v253 = vsel %vm252, %v238, %v237
    %v254 = vsel %vm38, %v253, 0
    %256 = vmatprep.subr.mxu0 0.0
    %257 = vmatpush1.msra.mxu0 0.0
    %258 = vmatprep.subr.mxu0 0.0
    %259 = vmatpush1.msra.mxu0 0.0
    %260 = vmatprep.subr.mxu0 0.0
    %261 = vmatpush1.msra.mxu0 0.0
    %262 = vmatprep.subr.mxu0 0.0
    %263 = vmatpush1.msra.mxu0 0.0
    %264 = vmatprep.subr.mxu0 0.0
    %265 = vmatpush1.msra.mxu0 0.0
    %266 = vmatprep.subr.mxu0 0.0
    %267 = vmatpush1.msra.mxu0 0.0
    %268 = vmatprep.subr.mxu0 0.0
    %269 = vmatpush1.msra.mxu0 0.0
    %270 = vmatprep.subr.mxu0 0.0
    %271 = vmatpush1.msra.mxu0 0.0
    %272 = vmatprep.subr.mxu0 0.0
    %273 = vmatpush1.msra.mxu0 0.0
    %274 = vmatprep.subr.mxu0 0.0
    %275 = vmatpush1.msra.mxu0 0.0
    %276 = vmatprep.subr.mxu0 0.0
    %277 = vmatpush1.msra.mxu0 0.0
    %278 = vmatprep.subr.mxu0 0.0
    %279 = vmatpush1.msra.mxu0 0.0
    %280 = vmatprep.subr.mxu0 0.0
    %281 = vmatpush1.msra.mxu0 %v242
    %282 = vmatprep.subr.mxu0 0.0
    %283 = vmatpush1.msra.mxu0 %v241
    %284 = vmatprep.subr.mxu0 0.0
    %285 = vmatpush1.msra.mxu0 %v240
    %286 = vmatprep.subr.mxu0 0.0
    %287 = vmatpush1.msra.mxu0 %v239
    %288 = vmatprep.subr.mxu0 0.0
    %289 = vmatpush2.msra.mxu0 0.0
    %290 = vmatprep.subr.mxu0 0.0
    %291 = vmatpush2.msra.mxu0 0.0
    %292 = vmatprep.subr.mxu0 0.0
    %293 = vmatpush2.msra.mxu0 0.0
    %294 = vmatprep.subr.mxu0 0.0
    %295 = vmatpush2.msra.mxu0 0.0
    %296 = vmatprep.subr.mxu0 0.0
    %297 = vmatpush2.msra.mxu0 0.0
    %298 = vmatprep.subr.mxu0 0.0
    %299 = vmatpush2.msra.mxu0 0.0
    %300 = vmatprep.subr.mxu0 0.0
    %301 = vmatpush2.msra.mxu0 0.0
    %302 = vmatprep.subr.mxu0 0.0
    %303 = vmatpush2.msra.mxu0 0.0
    %304 = vmatprep.subr.mxu0 0.0
    %305 = vmatpush2.msra.mxu0 0.0
    %306 = vmatprep.subr.mxu0 0.0
    %307 = vmatpush2.msra.mxu0 0.0
    %308 = vmatprep.subr.mxu0 0.0
    %309 = vmatpush2.msra.mxu0 0.0
    %310 = vmatprep.subr.mxu0 0.0
    %311 = vmatpush2.msra.mxu0 0.0
    %312 = vmatprep.subr.mxu0 0.0
    %313 = vmatpush2.msra.mxu0 0.0
    %314 = vmatprep.subr.mxu0 0.0
    %315 = vmatpush2.msra.mxu0 0.0
    %316 = vmatprep.subr.mxu0 0.0
    %317 = vmatpush2.msra.mxu0 0.0
    %318 = vmatprep.subr.mxu0 0.0
    %319 = vmatpush2.msra.mxu0 0.0
    %320 = vmatprep.mubr.f32.mxu0 0.0
    %321 = vmatmul.mubr.f32.gmra.mxu0 %v254
    %v322 = vpop.f32.mrf.mxu0
    %v323 = vadd.f32 %v248, %v322
    %v324 = vpop.f32.mrf.mxu0
    %325 = vdwg.mxu0
    %vm326 = vcmask 123904
    %327 = vst.msk [vmem:[#allocation2] sm:$0x3] %vm326, %v323
    // Predicated region
    $region26: #{egovlp_forward.3} parent=1 // pred_check
      _
    $region27: #{egovlp_forward.3} parent=1 // pred_check_branch
      %329 = sbr.rel (0) target = $region29
    $region28: #{egovlp_forward.3} parent=1 // pred_region
      %s331 = ssub.s32 32, 32
      %332 = vsyncadd [#allocation3], %s331
      %s334 = sshll.u32 [#allocation2], 4
      %s335 = int_to_ptr.vmem [resolvable:$true] %s334
      %337 = dma.vmem_to_hbm [thread:$0]  %s335, 32, %s6, [#allocation3]
    $region29: #{egovlp_forward.3} parent=1 // pred_fallthru
      _
    // Predicated region
    $region30: #{egovlp_forward.3} parent=1 // pred_check
      _
    $region31: #{egovlp_forward.3} parent=1 // pred_check_branch
      %339 = sbr.rel (0) target = $region33
    $region32: #{egovlp_forward.3} parent=1 // pred_region
      %340 = dma.done [#allocation3], 32
    $region33: #{egovlp_forward.3} parent=1 // pred_fallthru
      _
    %341 = vsyncpa [#allocation3], 1

// kernel: egovlp_forward.2
$region0: #{egovlp_forward.2}
  #allocation0 [shape = 'u32[]', space=smem, size = 0x4, offset = 0x4, fixed_abs, tag = 'smem constant byte address 0x4 - core index']
  #allocation1 [shape = 'u32[144,128]{1,0:T(1,128)}', space=vmem, size = 0x12000, scoped, tag = 'internal scratch']
  #allocation2 [shape = 'f32[32,32]{1,0:T(8,128)}', space=vmem, size = 0x4000, scoped, tag = 'scratch operand']
  #allocation3 [shape = 'f32[17,32]{1,0:T(8,128)}', space=vmem, size = 0x3000, scoped, tag = 'scratch operand']
  #allocation4 [shape = 'f32[5,16]{1,0:T(8,128)}', space=vmem, size = 0x1000, scoped, tag = 'scratch operand']
  %s0 = inlined_call_operand.vmem [shape: f32[2,32,192], index: 0, kind: input, shape index: {}]
  %s1 = inlined_call_operand.vmem [shape: f32[192,32], index: 1, kind: input, shape index: {}]
  %s2 = inlined_call_operand.vmem [shape: f32[1,32], index: 2, kind: input, shape index: {}]
  %s3 = inlined_call_operand.vmem [shape: f32[16,32], index: 3, kind: input, shape index: {}]
  %s4 = inlined_call_operand.vmem [shape: f32[1,32], index: 4, kind: input, shape index: {}]
  %s5 = inlined_call_operand.vmem [shape: f32[6,32], index: 5, kind: input, shape index: {}]
  %s6 = inlined_call_operand.vmem [shape: f32[32,128], index: 6, kind: input, shape index: {}]
  %s7 = inlined_call_operand.vmem [shape: f32[1,128], index: 7, kind: input, shape index: {}]
  %s8 = inlined_call_operand.vmem [shape: f32[32,32], index: 8, kind: input, shape index: {}]
  %s9 = inlined_call_operand.vmem [shape: f32[1,32], index: 9, kind: input, shape index: {}]
  %s10 = inlined_call_operand.vmem [shape: f32[32,64], index: 10, kind: input, shape index: {}]
  %s11 = inlined_call_operand.vmem [shape: f32[1,64], index: 11, kind: input, shape index: {}]
  %s12 = inlined_call_operand.vmem [shape: f32[64,32], index: 12, kind: input, shape index: {}]
  %s13 = inlined_call_operand.vmem [shape: f32[1,32], index: 13, kind: input, shape index: {}]
  %s14 = inlined_call_operand.vmem [shape: f32[32,16], index: 14, kind: input, shape index: {}]
  %s15 = inlined_call_operand.vmem [shape: f32[1,16], index: 15, kind: input, shape index: {}]
  %s16 = inlined_call_operand.vmem [shape: f32[2,5,16], index: 16, kind: output, shape index: {}]
  %s17 = sld [smem:[#allocation0]]
  $region97: #{egovlp_forward.2} parent=0
    _
  %s19 = ssub.s32 1, %s17
  %s20 = scalar_select 0, %s19, %s17
  loop: start=0, step=1, limit=4
  $region2: #{egovlp_forward.2} parent=0 // loop_pre_header
    _
  $region3: #{egovlp_forward.2} parent=0 // loop_header
    %s22 = sphi 0, %s26
    %p23 = scmp.ge.s32.totalorder %s22, 4
    %s32 = sphi 0, %s34
    %s35 = sphi 0, %s32
    %s36 = sphi 0, %s35
    %s52 = sphi 0, %s36
    %s56 = sphi 0, %s56
    %s58 = sphi 0, %s56
    %s59 = sphi 0, %s58
    %s73 = sphi 0, %s59
    %s77 = sphi 0, %s77
    %s79 = sphi 0, %s77
    %s80 = sphi 0, %s79
    %s94 = sphi 0, %s80
    %s98 = sphi 0, %s98
    %s100 = sphi 0, %s98
    %s101 = sphi 0, %s100
    %s115 = sphi 0, %s101
    %s119 = sphi 0, %s119
    %s121 = sphi 0, %s119
    %s122 = sphi 0, %s121
    %s136 = sphi 0, %s122
    %s140 = sphi 0, %s140
    %s142 = sphi 0, %s140
    %s143 = sphi 0, %s142
    %s157 = sphi 0, %s143
    %s161 = sphi 0, %s161
    %s163 = sphi 0, %s161
    %s164 = sphi 0, %s163
    %s178 = sphi 0, %s164
    %s182 = sphi 0, %s182
    %s184 = sphi 0, %s182
    %s185 = sphi 0, %s184
    %s199 = sphi 0, %s185
    %s203 = sphi 0, %s203
    %s205 = sphi 0, %s203
    %s206 = sphi 0, %s205
    %s220 = sphi 0, %s206
    %s224 = sphi 0, %s224
    %s226 = sphi 0, %s224
    %s227 = sphi 0, %s226
    %s241 = sphi 0, %s227
    %s245 = sphi 0, %s245
    %s247 = sphi 0, %s245
    %s248 = sphi 0, %s247
    %s262 = sphi 0, %s248
    %s266 = sphi 0, %s266
    %s268 = sphi 0, %s266
    %s269 = sphi 0, %s268
    %s283 = sphi 0, %s269
    %s287 = sphi 0, %s287
    %s289 = sphi 0, %s287
    %s290 = sphi 0, %s289
    %s304 = sphi 0, %s290
    %s308 = sphi 0, %s308
    %s310 = sphi 0, %s308
    %s311 = sphi 0, %s310
    %s325 = sphi 0, %s311
    %s329 = sphi 0, %s329
    %s331 = sphi 0, %s329
    %s332 = sphi 0, %s331
    %s346 = sphi 0, %s332
    %s350 = sphi 0, %s350
    %s352 = sphi 0, %s350
    %s353 = sphi 0, %s352
    %s367 = sphi 0, %s353
    %s373 = sphi 0, %s375
    %s376 = sphi 0, %s373
    %s377 = sphi 0, %s376
    %s393 = sphi 0, %s377
  $region4: #{egovlp_forward.2} parent=0 // loop_header_branch
    %25 = sbr.rel (%p23) target = $region8
  $region5: #{egovlp_forward.2} parent=0 // loop_body
    %s27 = ssub.s32 %s22, 1
    %s28 = ssub.s32 %s22, 2
    %s29 = sadd.s32 %s22, 1
    %s30 = ssub.s32 %s22, %s29
    %p31 = scmp.eq.s32.totalorder %s30, 0
    %s33 = sadd.s32 %s32, 1
    %s34 = scalar_select %p31, %s32, %s33
    %p37 = pneg %p31
    %p38 = scmp.eq.s32.totalorder %s22, 1
    %p39 = por %p37, %p38
    %p40 = scmp.ne.s32.totalorder %s32, %s35
    %p41 = scmp.eq.s32.totalorder %s22, 0
    %p42 = por %p40, %p41
    %p43 = scmp.ne.s32.totalorder %s32, %s35
    %p44 = scmp.eq.s32.totalorder %s27, 1
    %p45 = por %p43, %p44
    %p46 = scmp.ne.s32.totalorder %s35, %s36
    %p47 = scmp.eq.s32.totalorder %s27, 0
    %p48 = por %p46, %p47
    %p49 = scmp.ne.s32.totalorder %s35, %s36
    %p50 = scmp.eq.s32.totalorder %s28, 1
    %p51 = por %p49, %p50
    %p53 = scmp.ne.s32.totalorder %s36, %s52
    %p54 = scmp.eq.s32.totalorder %s28, 0
    %p55 = por %p53, %p54
    %s57 = sadd.s32 %s56, 1
    %p60 = scmp.eq.s32.totalorder %s22, 1
    %p61 = scmp.ne.s32.totalorder %s56, %s58
    %p62 = scmp.eq.s32.totalorder %s22, 0
    %p63 = por %p61, %p62
    %p64 = scmp.ne.s32.totalorder %s56, %s58
    %p65 = scmp.eq.s32.totalorder %s27, 1
    %p66 = por %p64, %p65
    %p67 = scmp.ne.s32.totalorder %s58, %s59
    %p68 = scmp.eq.s32.totalorder %s27, 0
    %p69 = por %p67, %p68
    %p70 = scmp.ne.s32.totalorder %s58, %s59
    %p71 = scmp.eq.s32.totalorder %s28, 1
    %p72 = por %p70, %p71
    %p74 = scmp.ne.s32.totalorder %s59, %s73
    %p75 = scmp.eq.s32.totalorder %s28, 0
    %p76 = por %p74, %p75
    %s78 = sadd.s32 %s77, 1
    %p81 = scmp.eq.s32.totalorder %s22, 1
    %p82 = scmp.ne.s32.totalorder %s77, %s79
    %p83 = scmp.eq.s32.totalorder %s22, 0
    %p84 = por %p82, %p83
    %p85 = scmp.ne.s32.totalorder %s77, %s79
    %p86 = scmp.eq.s32.totalorder %s27, 1
    %p87 = por %p85, %p86
    %p88 = scmp.ne.s32.totalorder %s79, %s80
    %p89 = scmp.eq.s32.totalorder %s27, 0
    %p90 = por %p88, %p89
    %p91 = scmp.ne.s32.totalorder %s79, %s80
    %p92 = scmp.eq.s32.totalorder %s28, 1
    %p93 = por %p91, %p92
    %p95 = scmp.ne.s32.totalorder %s80, %s94
    %p96 = scmp.eq.s32.totalorder %s28, 0
    %p97 = por %p95, %p96
    %s99 = sadd.s32 %s98, 1
    %p102 = scmp.eq.s32.totalorder %s22, 1
    %p103 = scmp.ne.s32.totalorder %s98, %s100
    %p104 = scmp.eq.s32.totalorder %s22, 0
    %p105 = por %p103, %p104
    %p106 = scmp.ne.s32.totalorder %s98, %s100
    %p107 = scmp.eq.s32.totalorder %s27, 1
    %p108 = por %p106, %p107
    %p109 = scmp.ne.s32.totalorder %s100, %s101
    %p110 = scmp.eq.s32.totalorder %s27, 0
    %p111 = por %p109, %p110
    %p112 = scmp.ne.s32.totalorder %s100, %s101
    %p113 = scmp.eq.s32.totalorder %s28, 1
    %p114 = por %p112, %p113
    %p116 = scmp.ne.s32.totalorder %s101, %s115
    %p117 = scmp.eq.s32.totalorder %s28, 0
    %p118 = por %p116, %p117
    %s120 = sadd.s32 %s119, 1
    %p123 = scmp.eq.s32.totalorder %s22, 1
    %p124 = scmp.ne.s32.totalorder %s119, %s121
    %p125 = scmp.eq.s32.totalorder %s22, 0
    %p126 = por %p124, %p125
    %p127 = scmp.ne.s32.totalorder %s119, %s121
    %p128 = scmp.eq.s32.totalorder %s27, 1
    %p129 = por %p127, %p128
    %p130 = scmp.ne.s32.totalorder %s121, %s122
    %p131 = scmp.eq.s32.totalorder %s27, 0
    %p132 = por %p130, %p131
    %p133 = scmp.ne.s32.totalorder %s121, %s122
    %p134 = scmp.eq.s32.totalorder %s28, 1
    %p135 = por %p133, %p134
    %p137 = scmp.ne.s32.totalorder %s122, %s136
    %p138 = scmp.eq.s32.totalorder %s28, 0
    %p139 = por %p137, %p138
    %s141 = sadd.s32 %s140, 1
    %p144 = scmp.eq.s32.totalorder %s22, 1
    %p145 = scmp.ne.s32.totalorder %s140, %s142
    %p146 = scmp.eq.s32.totalorder %s22, 0
    %p147 = por %p145, %p146
    %p148 = scmp.ne.s32.totalorder %s140, %s142
    %p149 = scmp.eq.s32.totalorder %s27, 1
    %p150 = por %p148, %p149
    %p151 = scmp.ne.s32.totalorder %s142, %s143
    %p152 = scmp.eq.s32.totalorder %s27, 0
    %p153 = por %p151, %p152
    %p154 = scmp.ne.s32.totalorder %s142, %s143
    %p155 = scmp.eq.s32.totalorder %s28, 1
    %p156 = por %p154, %p155
    %p158 = scmp.ne.s32.totalorder %s143, %s157
    %p159 = scmp.eq.s32.totalorder %s28, 0
    %p160 = por %p158, %p159
    %s162 = sadd.s32 %s161, 1
    %p165 = scmp.eq.s32.totalorder %s22, 1
    %p166 = scmp.ne.s32.totalorder %s161, %s163
    %p167 = scmp.eq.s32.totalorder %s22, 0
    %p168 = por %p166, %p167
    %p169 = scmp.ne.s32.totalorder %s161, %s163
    %p170 = scmp.eq.s32.totalorder %s27, 1
    %p171 = por %p169, %p170
    %p172 = scmp.ne.s32.totalorder %s163, %s164
    %p173 = scmp.eq.s32.totalorder %s27, 0
    %p174 = por %p172, %p173
    %p175 = scmp.ne.s32.totalorder %s163, %s164
    %p176 = scmp.eq.s32.totalorder %s28, 1
    %p177 = por %p175, %p176
    %p179 = scmp.ne.s32.totalorder %s164, %s178
    %p180 = scmp.eq.s32.totalorder %s28, 0
    %p181 = por %p179, %p180
    %s183 = sadd.s32 %s182, 1
    %p186 = scmp.eq.s32.totalorder %s22, 1
    %p187 = scmp.ne.s32.totalorder %s182, %s184
    %p188 = scmp.eq.s32.totalorder %s22, 0
    %p189 = por %p187, %p188
    %p190 = scmp.ne.s32.totalorder %s182, %s184
    %p191 = scmp.eq.s32.totalorder %s27, 1
    %p192 = por %p190, %p191
    %p193 = scmp.ne.s32.totalorder %s184, %s185
    %p194 = scmp.eq.s32.totalorder %s27, 0
    %p195 = por %p193, %p194
    %p196 = scmp.ne.s32.totalorder %s184, %s185
    %p197 = scmp.eq.s32.totalorder %s28, 1
    %p198 = por %p196, %p197
    %p200 = scmp.ne.s32.totalorder %s185, %s199
    %p201 = scmp.eq.s32.totalorder %s28, 0
    %p202 = por %p200, %p201
    %s204 = sadd.s32 %s203, 1
    %p207 = scmp.eq.s32.totalorder %s22, 1
    %p208 = scmp.ne.s32.totalorder %s203, %s205
    %p209 = scmp.eq.s32.totalorder %s22, 0
    %p210 = por %p208, %p209
    %p211 = scmp.ne.s32.totalorder %s203, %s205
    %p212 = scmp.eq.s32.totalorder %s27, 1
    %p213 = por %p211, %p212
    %p214 = scmp.ne.s32.totalorder %s205, %s206
    %p215 = scmp.eq.s32.totalorder %s27, 0
    %p216 = por %p214, %p215
    %p217 = scmp.ne.s32.totalorder %s205, %s206
    %p218 = scmp.eq.s32.totalorder %s28, 1
    %p219 = por %p217, %p218
    %p221 = scmp.ne.s32.totalorder %s206, %s220
    %p222 = scmp.eq.s32.totalorder %s28, 0
    %p223 = por %p221, %p222
    %s225 = sadd.s32 %s224, 1
    %p228 = scmp.eq.s32.totalorder %s22, 1
    %p229 = scmp.ne.s32.totalorder %s224, %s226
    %p230 = scmp.eq.s32.totalorder %s22, 0
    %p231 = por %p229, %p230
    %p232 = scmp.ne.s32.totalorder %s224, %s226
    %p233 = scmp.eq.s32.totalorder %s27, 1
    %p234 = por %p232, %p233
    %p235 = scmp.ne.s32.totalorder %s226, %s227
    %p236 = scmp.eq.s32.totalorder %s27, 0
    %p237 = por %p235, %p236
    %p238 = scmp.ne.s32.totalorder %s226, %s227
    %p239 = scmp.eq.s32.totalorder %s28, 1
    %p240 = por %p238, %p239
    %p242 = scmp.ne.s32.totalorder %s227, %s241
    %p243 = scmp.eq.s32.totalorder %s28, 0
    %p244 = por %p242, %p243
    %s246 = sadd.s32 %s245, 1
    %p249 = scmp.eq.s32.totalorder %s22, 1
    %p250 = scmp.ne.s32.totalorder %s245, %s247
    %p251 = scmp.eq.s32.totalorder %s22, 0
    %p252 = por %p250, %p251
    %p253 = scmp.ne.s32.totalorder %s245, %s247
    %p254 = scmp.eq.s32.totalorder %s27, 1
    %p255 = por %p253, %p254
    %p256 = scmp.ne.s32.totalorder %s247, %s248
    %p257 = scmp.eq.s32.totalorder %s27, 0
    %p258 = por %p256, %p257
    %p259 = scmp.ne.s32.totalorder %s247, %s248
    %p260 = scmp.eq.s32.totalorder %s28, 1
    %p261 = por %p259, %p260
    %p263 = scmp.ne.s32.totalorder %s248, %s262
    %p264 = scmp.eq.s32.totalorder %s28, 0
    %p265 = por %p263, %p264
    %s267 = sadd.s32 %s266, 1
    %p270 = scmp.eq.s32.totalorder %s22, 1
    %p271 = scmp.ne.s32.totalorder %s266, %s268
    %p272 = scmp.eq.s32.totalorder %s22, 0
    %p273 = por %p271, %p272
    %p274 = scmp.ne.s32.totalorder %s266, %s268
    %p275 = scmp.eq.s32.totalorder %s27, 1
    %p276 = por %p274, %p275
    %p277 = scmp.ne.s32.totalorder %s268, %s269
    %p278 = scmp.eq.s32.totalorder %s27, 0
    %p279 = por %p277, %p278
    %p280 = scmp.ne.s32.totalorder %s268, %s269
    %p281 = scmp.eq.s32.totalorder %s28, 1
    %p282 = por %p280, %p281
    %p284 = scmp.ne.s32.totalorder %s269, %s283
    %p285 = scmp.eq.s32.totalorder %s28, 0
    %p286 = por %p284, %p285
    %s288 = sadd.s32 %s287, 1
    %p291 = scmp.eq.s32.totalorder %s22, 1
    %p292 = scmp.ne.s32.totalorder %s287, %s289
    %p293 = scmp.eq.s32.totalorder %s22, 0
    %p294 = por %p292, %p293
    %p295 = scmp.ne.s32.totalorder %s287, %s289
    %p296 = scmp.eq.s32.totalorder %s27, 1
    %p297 = por %p295, %p296
    %p298 = scmp.ne.s32.totalorder %s289, %s290
    %p299 = scmp.eq.s32.totalorder %s27, 0
    %p300 = por %p298, %p299
    %p301 = scmp.ne.s32.totalorder %s289, %s290
    %p302 = scmp.eq.s32.totalorder %s28, 1
    %p303 = por %p301, %p302
    %p305 = scmp.ne.s32.totalorder %s290, %s304
    %p306 = scmp.eq.s32.totalorder %s28, 0
    %p307 = por %p305, %p306
    %s309 = sadd.s32 %s308, 1
    %p312 = scmp.eq.s32.totalorder %s22, 1
    %p313 = scmp.ne.s32.totalorder %s308, %s310
    %p314 = scmp.eq.s32.totalorder %s22, 0
    %p315 = por %p313, %p314
    %p316 = scmp.ne.s32.totalorder %s308, %s310
    %p317 = scmp.eq.s32.totalorder %s27, 1
    %p318 = por %p316, %p317
    %p319 = scmp.ne.s32.totalorder %s310, %s311
    %p320 = scmp.eq.s32.totalorder %s27, 0
    %p321 = por %p319, %p320
    %p322 = scmp.ne.s32.totalorder %s310, %s311
    %p323 = scmp.eq.s32.totalorder %s28, 1
    %p324 = por %p322, %p323
    %p326 = scmp.ne.s32.totalorder %s311, %s325
    %p327 = scmp.eq.s32.totalorder %s28, 0
    %p328 = por %p326, %p327
    %s330 = sadd.s32 %s329, 1
    %p333 = scmp.eq.s32.totalorder %s22, 1
    %p334 = scmp.ne.s32.totalorder %s329, %s331
    %p335 = scmp.eq.s32.totalorder %s22, 0
    %p336 = por %p334, %p335
    %p337 = scmp.ne.s32.totalorder %s329, %s331
    %p338 = scmp.eq.s32.totalorder %s27, 1
    %p339 = por %p337, %p338
    %p340 = scmp.ne.s32.totalorder %s331, %s332
    %p341 = scmp.eq.s32.totalorder %s27, 0
    %p342 = por %p340, %p341
    %p343 = scmp.ne.s32.totalorder %s331, %s332
    %p344 = scmp.eq.s32.totalorder %s28, 1
    %p345 = por %p343, %p344
    %p347 = scmp.ne.s32.totalorder %s332, %s346
    %p348 = scmp.eq.s32.totalorder %s28, 0
    %p349 = por %p347, %p348
    %s351 = sadd.s32 %s350, 1
    %p354 = scmp.eq.s32.totalorder %s22, 1
    %p355 = scmp.ne.s32.totalorder %s350, %s352
    %p356 = scmp.eq.s32.totalorder %s22, 0
    %p357 = por %p355, %p356
    %p358 = scmp.ne.s32.totalorder %s350, %s352
    %p359 = scmp.eq.s32.totalorder %s27, 1
    %p360 = por %p358, %p359
    %p361 = scmp.ne.s32.totalorder %s352, %s353
    %p362 = scmp.eq.s32.totalorder %s27, 0
    %p363 = por %p361, %p362
    %p364 = scmp.ne.s32.totalorder %s352, %s353
    %p365 = scmp.eq.s32.totalorder %s28, 1
    %p366 = por %p364, %p365
    %p368 = scmp.ne.s32.totalorder %s353, %s367
    %p369 = scmp.eq.s32.totalorder %s28, 0
    %p370 = por %p368, %p369
    %s371 = ssub.s32 %s22, %s29
    %p372 = scmp.eq.s32.totalorder %s371, 0
    %s374 = sadd.s32 %s373, 1
    %s375 = scalar_select %p372, %s373, %s374
    %p378 = pneg %p372
    %p379 = scmp.eq.s32.totalorder %s22, 1
    %p380 = por %p378, %p379
    %p381 = scmp.ne.s32.totalorder %s373, %s376
    %p382 = scmp.eq.s32.totalorder %s22, 0
    %p383 = por %p381, %p382
    %p384 = scmp.ne.s32.totalorder %s373, %s376
    %p385 = scmp.eq.s32.totalorder %s27, 1
    %p386 = por %p384, %p385
    %p387 = scmp.ne.s32.totalorder %s376, %s377
    %p388 = scmp.eq.s32.totalorder %s27, 0
    %p389 = por %p387, %p388
    %p390 = scmp.ne.s32.totalorder %s376, %s377
    %p391 = scmp.eq.s32.totalorder %s28, 1
    %p392 = por %p390, %p391
    %p394 = scmp.ne.s32.totalorder %s377, %s393
    %p395 = scmp.eq.s32.totalorder %s28, 0
    %p396 = por %p394, %p395
    %p397 = scmp.le.s32.totalorder 1, %s22
    %p398 = scmp.lt.s32.totalorder %s22, 3
    %p399 = pnand %p397, %p398
    %p400 = pneg %p399
    // Predicated region
    $region9: #{egovlp_forward.2} parent=5 // pred_check
      _
    $region10: #{egovlp_forward.2} parent=5 // pred_check_branch
      %402 = sbr.rel (%p399) target = $region12
    $region11: #{egovlp_forward.2} parent=5 // pred_region
      %s403 = ssub.s32 %s22, 1
      // Predicated region
      $region13: #{egovlp_forward.2} parent=11 // pred_check
        %p404 = pneg %p69
      $region14: #{egovlp_forward.2} parent=11 // pred_check_branch
        %406 = sbr.rel (%p404) target = $region16
      $region15: #{egovlp_forward.2} parent=11 // pred_region
        _
      $region16: #{egovlp_forward.2} parent=11 // pred_fallthru
        _
      // Predicated region
      $region17: #{egovlp_forward.2} parent=11 // pred_check
        %p407 = pneg %p90
      $region18: #{egovlp_forward.2} parent=11 // pred_check_branch
        %409 = sbr.rel (%p407) target = $region20
      $region19: #{egovlp_forward.2} parent=11 // pred_region
        _
      $region20: #{egovlp_forward.2} parent=11 // pred_fallthru
        _
      // Predicated region
      $region21: #{egovlp_forward.2} parent=11 // pred_check
        %p410 = pneg %p111
      $region22: #{egovlp_forward.2} parent=11 // pred_check_branch
        %412 = sbr.rel (%p410) target = $region24
      $region23: #{egovlp_forward.2} parent=11 // pred_region
        _
      $region24: #{egovlp_forward.2} parent=11 // pred_fallthru
        _
      // Predicated region
      $region25: #{egovlp_forward.2} parent=11 // pred_check
        %p413 = pneg %p132
      $region26: #{egovlp_forward.2} parent=11 // pred_check_branch
        %415 = sbr.rel (%p413) target = $region28
      $region27: #{egovlp_forward.2} parent=11 // pred_region
        _
      $region28: #{egovlp_forward.2} parent=11 // pred_fallthru
        _
      // Predicated region
      $region29: #{egovlp_forward.2} parent=11 // pred_check
        %p416 = pneg %p153
      $region30: #{egovlp_forward.2} parent=11 // pred_check_branch
        %418 = sbr.rel (%p416) target = $region32
      $region31: #{egovlp_forward.2} parent=11 // pred_region
        _
      $region32: #{egovlp_forward.2} parent=11 // pred_fallthru
        _
      // Predicated region
      $region33: #{egovlp_forward.2} parent=11 // pred_check
        %p419 = pneg %p174
      $region34: #{egovlp_forward.2} parent=11 // pred_check_branch
        %421 = sbr.rel (%p419) target = $region36
      $region35: #{egovlp_forward.2} parent=11 // pred_region
        _
      $region36: #{egovlp_forward.2} parent=11 // pred_fallthru
        _
      // Predicated region
      $region37: #{egovlp_forward.2} parent=11 // pred_check
        %p422 = pneg %p195
      $region38: #{egovlp_forward.2} parent=11 // pred_check_branch
        %424 = sbr.rel (%p422) target = $region40
      $region39: #{egovlp_forward.2} parent=11 // pred_region
        _
      $region40: #{egovlp_forward.2} parent=11 // pred_fallthru
        _
      // Predicated region
      $region41: #{egovlp_forward.2} parent=11 // pred_check
        %p425 = pneg %p216
      $region42: #{egovlp_forward.2} parent=11 // pred_check_branch
        %427 = sbr.rel (%p425) target = $region44
      $region43: #{egovlp_forward.2} parent=11 // pred_region
        _
      $region44: #{egovlp_forward.2} parent=11 // pred_fallthru
        _
      // Predicated region
      $region45: #{egovlp_forward.2} parent=11 // pred_check
        %p428 = pneg %p237
      $region46: #{egovlp_forward.2} parent=11 // pred_check_branch
        %430 = sbr.rel (%p428) target = $region48
      $region47: #{egovlp_forward.2} parent=11 // pred_region
        _
      $region48: #{egovlp_forward.2} parent=11 // pred_fallthru
        _
      // Predicated region
      $region49: #{egovlp_forward.2} parent=11 // pred_check
        %p431 = pneg %p258
      $region50: #{egovlp_forward.2} parent=11 // pred_check_branch
        %433 = sbr.rel (%p431) target = $region52
      $region51: #{egovlp_forward.2} parent=11 // pred_region
        _
      $region52: #{egovlp_forward.2} parent=11 // pred_fallthru
        _
      // Predicated region
      $region53: #{egovlp_forward.2} parent=11 // pred_check
        %p434 = pneg %p279
      $region54: #{egovlp_forward.2} parent=11 // pred_check_branch
        %436 = sbr.rel (%p434) target = $region56
      $region55: #{egovlp_forward.2} parent=11 // pred_region
        _
      $region56: #{egovlp_forward.2} parent=11 // pred_fallthru
        _
      // Predicated region
      $region57: #{egovlp_forward.2} parent=11 // pred_check
        %p437 = pneg %p300
      $region58: #{egovlp_forward.2} parent=11 // pred_check_branch
        %439 = sbr.rel (%p437) target = $region60
      $region59: #{egovlp_forward.2} parent=11 // pred_region
        _
      $region60: #{egovlp_forward.2} parent=11 // pred_fallthru
        _
      // Predicated region
      $region61: #{egovlp_forward.2} parent=11 // pred_check
        %p440 = pneg %p321
      $region62: #{egovlp_forward.2} parent=11 // pred_check_branch
        %442 = sbr.rel (%p440) target = $region64
      $region63: #{egovlp_forward.2} parent=11 // pred_region
        _
      $region64: #{egovlp_forward.2} parent=11 // pred_fallthru
        _
      // Predicated region
      $region65: #{egovlp_forward.2} parent=11 // pred_check
        %p443 = pneg %p342
      $region66: #{egovlp_forward.2} parent=11 // pred_check_branch
        %445 = sbr.rel (%p443) target = $region68
      $region67: #{egovlp_forward.2} parent=11 // pred_region
        _
      $region68: #{egovlp_forward.2} parent=11 // pred_fallthru
        _
      // Predicated region
      $region69: #{egovlp_forward.2} parent=11 // pred_check
        %p446 = pneg %p363
      $region70: #{egovlp_forward.2} parent=11 // pred_check_branch
        %448 = sbr.rel (%p446) target = $region72
      $region71: #{egovlp_forward.2} parent=11 // pred_region
        _
      $region72: #{egovlp_forward.2} parent=11 // pred_fallthru
        _
    $region12: #{egovlp_forward.2} parent=5 // pred_fallthru
      _
    %p449 = scmp.lt.s32.totalorder %s22, 2
    // Predicated region
    $region73: #{egovlp_forward.2} parent=5 // pred_check
      %p450 = pneg %p449
    $region74: #{egovlp_forward.2} parent=5 // pred_check_branch
      %452 = sbr.rel (%p450) target = $region76
    $region75: #{egovlp_forward.2} parent=5 // pred_region
      // Predicated region
      $region77: #{egovlp_forward.2} parent=75 // pred_check
        %p453 = pneg %p42
      $region78: #{egovlp_forward.2} parent=75 // pred_check_branch
        %455 = sbr.rel (%p453) target = $region80
      $region79: #{egovlp_forward.2} parent=75 // pred_region
        %p456 = scmp.lt.s32.totalorder %s22, 1
        %s457 = scalar_select %p456, %s22, 1
        %s458 = smul.addr %s457, 8
        %s459 = smul.addr %s458, 8
        %s460 = scalar_lea.vmem %s0, %s459
      $region80: #{egovlp_forward.2} parent=75 // pred_fallthru
        _
    $region76: #{egovlp_forward.2} parent=5 // pred_fallthru
      _
    %p461 = scmp.le.s32.totalorder 1, %s22
    %p462 = scmp.lt.s32.totalorder %s22, 3
    %p463 = pnand %p461, %p462
    %p464 = pneg %p463
    // Predicated region
    $region81: #{egovlp_forward.2} parent=5 // pred_check
      _
    $region82: #{egovlp_forward.2} parent=5 // pred_check_branch
      %466 = sbr.rel (%p463) target = $region84
    $region83: #{egovlp_forward.2} parent=5 // pred_region
      %s467 = ssub.s32 %s22, 1
      %p468 = scmp.lt.s32.totalorder %s27, 1
      %s469 = scalar_select %p468, %s27, 1
      %s470 = smul.addr %s469, 8
      %s471 = smul.addr %s470, 8
      %s472 = scalar_lea.vmem %s0, %s471
      %p473 = pneg %p48
      %p474 = pneg %p45
      %p475 = pneg %p69
      %p476 = pneg %p66
      %p477 = pneg %p90
      %p478 = pneg %p87
      %p479 = pneg %p111
      %p480 = pneg %p108
      %p481 = pneg %p132
      %p482 = pneg %p129
      %p483 = pneg %p153
      %p484 = pneg %p150
      %p485 = pneg %p174
      %p486 = pneg %p171
      %p487 = pneg %p195
      %p488 = pneg %p192
      %p489 = pneg %p216
      %p490 = pneg %p213
      %p491 = pneg %p237
      %p492 = pneg %p234
      %p493 = pneg %p258
      %p494 = pneg %p255
      %p495 = pneg %p279
      %p496 = pneg %p276
      %p497 = pneg %p300
      %p498 = pneg %p297
      %p499 = pneg %p321
      %p500 = pneg %p318
      %p501 = pneg %p342
      %p502 = pneg %p339
      %p503 = pneg %p363
      %p504 = pneg %p360
      %p505 = pneg %p389
      %p506 = pneg %p386
      %p507 = scmp.lt.s32.totalorder %s27, 1
      %s508 = scalar_select %p507, %s27, 1
      %s509 = smul.addr %s508, 8
      %s510 = scalar_lea.vmem %s16, %s509
      %p511 = scmp.lt.s32.totalorder %s27, 1
      %s512 = scalar_select %p511, %s27, 1
      %s513 = smul.addr %s512, 8
      %s514 = smul.addr %s513, 8
      %s515 = scalar_lea.vmem %s0, %s514
      %p516 = scmp.lt.s32.totalorder %s27, 1
      %s517 = scalar_select %p516, %s27, 1
      %s518 = smul.addr %s517, 8
      %s519 = scalar_lea.vmem %s16, %s518
      %v520 = vld [vmem:[%s515] sm:$0xff]
      %v521 = vld [vmem:[%s515 + $0x8] sm:$0xff]
      %v522 = vld [vmem:[%s515 + $0x10] sm:$0xff]
      %v523 = vld [vmem:[%s515 + $0x18] sm:$0xff]
      %v524 = vld [vmem:[%s515 + $0x20] sm:$0xff]
      %v525 = vld [vmem:[%s515 + $0x28] sm:$0xff]
      %v526 = vld [vmem:[%s515 + $0x30] sm:$0xff]
      %v527 = vld [vmem:[%s515 + $0x38] sm:$0xff]
      %v528 = vld [vmem:[%s1] sm:$0xff]
      %v529 = vld [vmem:[%s1 + $0x8] sm:$0xff]
      %v530 = vld [vmem:[%s1 + $0x10] sm:$0xff]
      %v531 = vld [vmem:[%s1 + $0x18] sm:$0xff]
      %v532 = vld [vmem:[%s1 + $0x20] sm:$0xff]
      %v533 = vld [vmem:[%s1 + $0x28] sm:$0xff]
      %v534 = vld [vmem:[%s1 + $0x30] sm:$0xff]
      %v535 = vld [vmem:[%s1 + $0x38] sm:$0xff]
      %v536 = vld [vmem:[%s1 + $0x40] sm:$0xff]
      %v537 = vld [vmem:[%s1 + $0x48] sm:$0xff]
      %v538 = vld [vmem:[%s1 + $0x50] sm:$0xff]
      %v539 = vld [vmem:[%s1 + $0x58] sm:$0xff]
      %v540 = vld [vmem:[%s1 + $0x60] sm:$0xff]
      %v541 = vld [vmem:[%s1 + $0x68] sm:$0xff]
      %v542 = vld [vmem:[%s1 + $0x70] sm:$0xff]
      %v543 = vld [vmem:[%s1 + $0x78] sm:$0xff]
      %v544 = vld [vmem:[%s1 + $0x80] sm:$0xff]
      %v545 = vld [vmem:[%s1 + $0x88] sm:$0xff]
      %v546 = vld [vmem:[%s1 + $0x90] sm:$0xff]
      %v547 = vld [vmem:[%s1 + $0x98] sm:$0xff]
      %v548 = vld [vmem:[%s1 + $0xa0] sm:$0xff]
      %v549 = vld [vmem:[%s1 + $0xa8] sm:$0xff]
      %v550 = vld [vmem:[%s1 + $0xb0] sm:$0xff]
      %v551 = vld [vmem:[%s1 + $0xb8] sm:$0xff]
      %v552 = vld [vmem:[%s2] sm:$0x1]
      %v554 = vlaneseq
      %v555 = vshrl.u32 %v554, 7
      %v556 = vsub.s32 0, %v555
      %v557 = vrot.slane %v552, %v556
      %vm559 = vcmask 523264
      %v561 = vsel %vm559, %v521, 0
      %v564 = vsel %vm559, %v523, 0
      %v567 = vsel %vm559, %v525, 0
      %v570 = vsel %vm559, %v527, 0
      %572 = vmatprep.subr.mxu0 0.0
      %573 = vmatpush1.msra.mxu0 %v543
      %574 = vmatprep.subr.mxu0 0.0
      %575 = vmatpush1.msra.mxu0 %v542
      %576 = vmatprep.subr.mxu0 0.0
      %577 = vmatpush1.msra.mxu0 %v541
      %578 = vmatprep.subr.mxu0 0.0
      %579 = vmatpush1.msra.mxu0 %v540
      %580 = vmatprep.subr.mxu0 0.0
      %581 = vmatpush1.msra.mxu0 %v539
      %582 = vmatprep.subr.mxu0 0.0
      %583 = vmatpush1.msra.mxu0 %v538
      %584 = vmatprep.subr.mxu0 0.0
      %585 = vmatpush1.msra.mxu0 %v537
      %586 = vmatprep.subr.mxu0 0.0
      %587 = vmatpush1.msra.mxu0 %v536
      %588 = vmatprep.subr.mxu0 0.0
      %589 = vmatpush1.msra.mxu0 %v535
      %590 = vmatprep.subr.mxu0 0.0
      %591 = vmatpush1.msra.mxu0 %v534
      %592 = vmatprep.subr.mxu0 0.0
      %593 = vmatpush1.msra.mxu0 %v533
      %594 = vmatprep.subr.mxu0 0.0
      %595 = vmatpush1.msra.mxu0 %v532
      %596 = vmatprep.subr.mxu0 0.0
      %597 = vmatpush1.msra.mxu0 %v531
      %598 = vmatprep.subr.mxu0 0.0
      %599 = vmatpush1.msra.mxu0 %v530
      %600 = vmatprep.subr.mxu0 0.0
      %601 = vmatpush1.msra.mxu0 %v529
      %602 = vmatprep.subr.mxu0 0.0
      %603 = vmatpush1.msra.mxu0 %v528
      %604 = vmatprep.subr.mxu0 0.0
      %605 = vmatpush2.msra.mxu0 0.0
      %606 = vmatprep.subr.mxu0 0.0
      %607 = vmatpush2.msra.mxu0 0.0
      %608 = vmatprep.subr.mxu0 0.0
      %609 = vmatpush2.msra.mxu0 0.0
      %610 = vmatprep.subr.mxu0 0.0
      %611 = vmatpush2.msra.mxu0 0.0
      %612 = vmatprep.subr.mxu0 0.0
      %613 = vmatpush2.msra.mxu0 0.0
      %614 = vmatprep.subr.mxu0 0.0
      %615 = vmatpush2.msra.mxu0 0.0
      %616 = vmatprep.subr.mxu0 0.0
      %617 = vmatpush2.msra.mxu0 0.0
      %618 = vmatprep.subr.mxu0 0.0
      %619 = vmatpush2.msra.mxu0 0.0
      %620 = vmatprep.subr.mxu0 0.0
      %621 = vmatpush2.msra.mxu0 %v551
      %622 = vmatprep.subr.mxu0 0.0
      %623 = vmatpush2.msra.mxu0 %v550
      %624 = vmatprep.subr.mxu0 0.0
      %625 = vmatpush2.msra.mxu0 %v549
      %626 = vmatprep.subr.mxu0 0.0
      %627 = vmatpush2.msra.mxu0 %v548
      %628 = vmatprep.subr.mxu0 0.0
      %629 = vmatpush2.msra.mxu0 %v547
      %630 = vmatprep.subr.mxu0 0.0
      %631 = vmatpush2.msra.mxu0 %v546
      %632 = vmatprep.subr.mxu0 0.0
      %633 = vmatpush2.msra.mxu0 %v545
      %634 = vmatprep.subr.mxu0 0.0
      %635 = vmatpush2.msra.mxu0 %v544
      %636 = vmatprep.mubr.f32.mxu0 %v561
      %637 = vmatmul.mubr.f32.gmra.mxu0 %v520
      %v638 = vpop.f32.mrf.mxu0
      %v639 = vadd.f32 %v557, %v638
      %v640 = vpop.f32.mrf.mxu0
      %641 = vmatprep.mubr.f32.mxu0 %v564
      %642 = vmatmul.mubr.f32.gmra.mxu0 %v522
      %v643 = vpop.f32.mrf.mxu0
      %v644 = vadd.f32 %v557, %v643
      %v645 = vpop.f32.mrf.mxu0
      %646 = vmatprep.mubr.f32.mxu0 %v567
      %647 = vmatmul.mubr.f32.gmra.mxu0 %v524
      %v648 = vpop.f32.mrf.mxu0
      %v649 = vadd.f32 %v557, %v648
      %v650 = vpop.f32.mrf.mxu0
      %651 = vmatprep.mubr.f32.mxu0 %v570
      %652 = vmatmul.mubr.f32.gmra.mxu0 %v526
      %v653 = vpop.f32.mrf.mxu0
      %v654 = vadd.f32 %v557, %v653
      %v655 = vpop.f32.mrf.mxu0
      %656 = vdwg.mxu0
      %vm657 = vcmask 261120
      %658 = vst.msk [vmem:[#allocation2] sm:$0xff] %vm657, %v639
      %659 = vst.msk [vmem:[#allocation2 + $0x8] sm:$0xff] %vm657, %v644
      %660 = vst.msk [vmem:[#allocation2 + $0x10] sm:$0xff] %vm657, %v649
      %661 = vst.msk [vmem:[#allocation2 + $0x18] sm:$0xff] %vm657, %v654
      %v662 = vld [vmem:[%s3] sm:$0xff]
      %v663 = vld [vmem:[%s3 + $0x8] sm:$0xff]
      %v664 = vld [vmem:[%s5] sm:$0x1]
      %v665 = vld [vmem:[%s5 + $0x1] sm:$0x1]
      %v666 = vld [vmem:[%s5 + $0x2] sm:$0x1]
      %v667 = vld [vmem:[%s5 + $0x3] sm:$0x1]
      %v668 = vld [vmem:[%s5 + $0x4] sm:$0x1]
      %v669 = vld [vmem:[%s5 + $0x5] sm:$0x1]
      %v670 = vld [vmem:[%s6] sm:$0xff]
      %v671 = vld [vmem:[%s6 + $0x8] sm:$0xff]
      %v672 = vld [vmem:[%s6 + $0x10] sm:$0xff]
      %v673 = vld [vmem:[%s6 + $0x18] sm:$0xff]
      %v674 = vld [vmem:[%s7] sm:$0x1]
      %v675 = vld [vmem:[%s8] sm:$0xff]
      %v676 = vld [vmem:[%s8 + $0x8] sm:$0xff]
      %v677 = vld [vmem:[%s8 + $0x10] sm:$0xff]
      %v678 = vld [vmem:[%s8 + $0x18] sm:$0xff]
      %v679 = vld [vmem:[%s9] sm:$0x1]
      %v680 = vld [vmem:[%s10] sm:$0xff]
      %v681 = vld [vmem:[%s10 + $0x8] sm:$0xff]
      %v682 = vld [vmem:[%s10 + $0x10] sm:$0xff]
      %v683 = vld [vmem:[%s10 + $0x18] sm:$0xff]
      %v684 = vld [vmem:[%s11] sm:$0x1]
      %v685 = vld [vmem:[%s12] sm:$0xff]
      %v686 = vld [vmem:[%s12 + $0x8] sm:$0xff]
      %v687 = vld [vmem:[%s12 + $0x10] sm:$0xff]
      %v688 = vld [vmem:[%s12 + $0x18] sm:$0xff]
      %v689 = vld [vmem:[%s12 + $0x20] sm:$0xff]
      %v690 = vld [vmem:[%s12 + $0x28] sm:$0xff]
      %v691 = vld [vmem:[%s12 + $0x30] sm:$0xff]
      %v692 = vld [vmem:[%s12 + $0x38] sm:$0xff]
      %v693 = vld [vmem:[%s13] sm:$0x1]
      %v694 = vld [vmem:[%s14] sm:$0xff]
      %v695 = vld [vmem:[%s14 + $0x8] sm:$0xff]
      %v696 = vld [vmem:[%s14 + $0x10] sm:$0xff]
      %v697 = vld [vmem:[%s14 + $0x18] sm:$0xff]
      %v698 = vld [vmem:[%s15] sm:$0x1]
      %v699 = vld [vmem:[%s4] sm:$0x1]
      %vm700 = vcmask 253952
      %701 = vst.msk [vmem:[#allocation3] sm:$0x1] %vm700, %v699
      %v702 = vld [vmem:[#allocation2] sm:$0xff]
      %v703 = vld [vmem:[#allocation2 + $0x8] sm:$0xff]
      %v704 = vadd.f32 %v702, %v662
      %v705 = vadd.f32 %v703, %v663
      %706 = vst.msk [vmem:[#allocation3 + $0x1] sm:$0xff] %vm657, %v704
      %707 = vst.msk [vmem:[#allocation3 + $0x9] sm:$0xff] %vm657, %v705
      %v708 = vld [vmem:[#allocation3] sm:$0xff]
      %v709 = vld [vmem:[#allocation3 + $0x8] sm:$0xff]
      %v710 = vld [vmem:[#allocation3 + $0x10] sm:$0x1]
      %v711 = vsel %vm657, %v708, 0.0
      %712 = vadd.xlane.f32.xlu0 %v711
      %v713 = vpop.xlane.xlu0 %712
      %v714 = vsel %vm657, %v709, 0.0
      %715 = vadd.xlane.f32.xlu0 %v714
      %v716 = vpop.xlane.xlu0 %715
      %v717 = vsel %vm700, %v710, 0.0
      %718 = vadd.xlane.f32.xlu0 %v717
      %v719 = vpop.xlane.xlu0 %718
      %v720 = vrcp.pop 32.0
      %v721 = vmul.f32 %v713, %v720
      %v722 = vmul.f32 %v716, %v720
      %v723 = vmul.f32 %v719, %v720
      %v724 = vsub.f32 %v708, %v721
      %v725 = vsub.f32 %v709, %v722
      %v726 = vsub.f32 %v710, %v723
      %v727 = vmul.f32 %v724, %v724
      %v728 = vmul.f32 %v725, %v725
      %v729 = vmul.f32 %v726, %v726
      %v730 = vsel %vm657, %v727, 0.0
      %731 = vadd.xlane.f32.xlu0 %v730
      %v732 = vpop.xlane.xlu0 %731
      %v733 = vsel %vm657, %v728, 0.0
      %734 = vadd.xlane.f32.xlu0 %v733
      %v735 = vpop.xlane.xlu0 %734
      %v736 = vsel %vm700, %v729, 0.0
      %737 = vadd.xlane.f32.xlu0 %v736
      %v738 = vpop.xlane.xlu0 %737
      %v739 = vmul.f32 %v732, %v720
      %v740 = vmul.f32 %v735, %v720
      %v741 = vmul.f32 %v738, %v720
      %v742 = vadd.f32 %v739, 1e-05
      %v743 = vadd.f32 %v740, 1e-05
      %v744 = vadd.f32 %v741, 1e-05
      %v745 = vrsqrt.pop %v742
      %v746 = vrsqrt.pop %v743
      %v747 = vrsqrt.pop %v744
      %v748 = vmul.f32 %v724, %v745
      %v749 = vmul.f32 %v725, %v746
      %v750 = vmul.f32 %v726, %v747
      %v751 = vlaneseq
      %v752 = vshrl.u32 %v751, 7
      %v753 = vsub.s32 0, %v752
      %v754 = vrot.slane %v664, %v753
      %v755 = vmul.f32 %v748, %v754
      %v756 = vmul.f32 %v749, %v754
      %v757 = vmul.f32 %v750, %v754
      %v758 = vlaneseq
      %v759 = vshrl.u32 %v758, 7
      %v760 = vsub.s32 0, %v759
      %v761 = vrot.slane %v665, %v760
      %v762 = vadd.f32 %v755, %v761
      %v763 = vadd.f32 %v756, %v761
      %v764 = vadd.f32 %v757, %v761
      %v766 = vlaneseq
      %v767 = vshrl.u32 %v766, 7
      %v768 = vsub.s32 0, %v767
      %v769 = vrot.slane %v674, %v768
      %v772 = vsel %vm657, %v762, 0
      %v775 = vsel %vm657, %v763, 0
      %v778 = vsel %vm657, %v764, 0
      %780 = vmatprep.subr.mxu0 0.0
      %781 = vmatpush1.msra.mxu0 0.0
      %782 = vmatprep.subr.mxu0 0.0
      %783 = vmatpush1.msra.mxu0 0.0
      %784 = vmatprep.subr.mxu0 0.0
      %785 = vmatpush1.msra.mxu0 0.0
      %786 = vmatprep.subr.mxu0 0.0
      %787 = vmatpush1.msra.mxu0 0.0
      %788 = vmatprep.subr.mxu0 0.0
      %789 = vmatpush1.msra.mxu0 0.0
      %790 = vmatprep.subr.mxu0 0.0
      %791 = vmatpush1.msra.mxu0 0.0
      %792 = vmatprep.subr.mxu0 0.0
      %793 = vmatpush1.msra.mxu0 0.0
      %794 = vmatprep.subr.mxu0 0.0
      %795 = vmatpush1.msra.mxu0 0.0
      %796 = vmatprep.subr.mxu0 0.0
      %797 = vmatpush1.msra.mxu0 0.0
      %798 = vmatprep.subr.mxu0 0.0
      %799 = vmatpush1.msra.mxu0 0.0
      %800 = vmatprep.subr.mxu0 0.0
      %801 = vmatpush1.msra.mxu0 0.0
      %802 = vmatprep.subr.mxu0 0.0
      %803 = vmatpush1.msra.mxu0 0.0
      %804 = vmatprep.subr.mxu0 0.0
      %805 = vmatpush1.msra.mxu0 %v673
      %806 = vmatprep.subr.mxu0 0.0
      %807 = vmatpush1.msra.mxu0 %v672
      %808 = vmatprep.subr.mxu0 0.0
      %809 = vmatpush1.msra.mxu0 %v671
      %810 = vmatprep.subr.mxu0 0.0
      %811 = vmatpush1.msra.mxu0 %v670
      %812 = vmatprep.subr.mxu0 0.0
      %813 = vmatpush2.msra.mxu0 0.0
      %814 = vmatprep.subr.mxu0 0.0
      %815 = vmatpush2.msra.mxu0 0.0
      %816 = vmatprep.subr.mxu0 0.0
      %817 = vmatpush2.msra.mxu0 0.0
      %818 = vmatprep.subr.mxu0 0.0
      %819 = vmatpush2.msra.mxu0 0.0
      %820 = vmatprep.subr.mxu0 0.0
      %821 = vmatpush2.msra.mxu0 0.0
      %822 = vmatprep.subr.mxu0 0.0
      %823 = vmatpush2.msra.mxu0 0.0
      %824 = vmatprep.subr.mxu0 0.0
      %825 = vmatpush2.msra.mxu0 0.0
      %826 = vmatprep.subr.mxu0 0.0
      %827 = vmatpush2.msra.mxu0 0.0
      %828 = vmatprep.subr.mxu0 0.0
      %829 = vmatpush2.msra.mxu0 0.0
      %830 = vmatprep.subr.mxu0 0.0
      %831 = vmatpush2.msra.mxu0 0.0
      %832 = vmatprep.subr.mxu0 0.0
      %833 = vmatpush2.msra.mxu0 0.0
      %834 = vmatprep.subr.mxu0 0.0
      %835 = vmatpush2.msra.mxu0 0.0
      %836 = vmatprep.subr.mxu0 0.0
      %837 = vmatpush2.msra.mxu0 0.0
      %838 = vmatprep.subr.mxu0 0.0
      %839 = vmatpush2.msra.mxu0 0.0
      %840 = vmatprep.subr.mxu0 0.0
      %841 = vmatpush2.msra.mxu0 0.0
      %842 = vmatprep.subr.mxu0 0.0
      %843 = vmatpush2.msra.mxu0 0.0
      %844 = vmatprep.mubr.f32.mxu0 0.0
      %845 = vmatmul.mubr.f32.gmra.mxu0 %v772
      %v846 = vpop.f32.mrf.mxu0
      %v847 = vadd.f32 %v769, %v846
      %v848 = vpop.f32.mrf.mxu0
      %849 = vmatprep.mubr.f32.mxu0 0.0
      %850 = vmatmul.mubr.f32.gmra.mxu0 %v775
      %v851 = vpop.f32.mrf.mxu0
      %v852 = vadd.f32 %v769, %v851
      %v853 = vpop.f32.mrf.mxu0
      %854 = vmatprep.mubr.f32.mxu0 0.0
      %855 = vmatmul.mubr.f32.gmra.mxu0 %v778
      %v856 = vpop.f32.mrf.mxu0
      %v857 = vadd.f32 %v769, %v856
      %v858 = vpop.f32.mrf.mxu0
      %859 = vdwg.mxu0
      %863 = vrot.lane.b32.xlu0 %v847, 96
      %v864 = vpop.permute.xlu0 %863
      %865 = vrot.lane.b32.xlu0 %v852, 96
      %v866 = vpop.permute.xlu0 %865
      %867 = vrot.lane.b32.xlu0 %v857, 96
      %v868 = vpop.permute.xlu0 %867
      %v869 = vsel %vm657, %v847, 0
      %v871 = vsel %vm657, %v852, 0
      %v873 = vsel %vm657, %v857, 0
      %v875 = vsel %vm657, %v864, 0
      %v877 = vsel %vm657, %v866, 0
      %v879 = vsel %vm657, %v868, 0
      %881 = vmatprep.subr.mxu0 0.0
      %882 = vmatpush1.xpose.msra.mxu0 0.0
      %883 = vmatprep.subr.mxu0 0.0
      %884 = vmatpush1.xpose.msra.mxu0 0.0
      %885 = vmatprep.subr.mxu0 0.0
      %886 = vmatpush1.xpose.msra.mxu0 0.0
      %887 = vmatprep.subr.mxu0 0.0
      %888 = vmatpush1.xpose.msra.mxu0 0.0
      %889 = vmatprep.subr.mxu0 0.0
      %890 = vmatpush1.xpose.msra.mxu0 0.0
      %891 = vmatprep.subr.mxu0 0.0
      %892 = vmatpush1.xpose.msra.mxu0 0.0
      %893 = vmatprep.subr.mxu0 0.0
      %894 = vmatpush1.xpose.msra.mxu0 0.0
      %895 = vmatprep.subr.mxu0 0.0
      %896 = vmatpush1.xpose.msra.mxu0 0.0
      %897 = vmatprep.subr.mxu0 0.0
      %898 = vmatpush1.xpose.msra.mxu0 0.0
      %899 = vmatprep.subr.mxu0 0.0
      %900 = vmatpush1.xpose.msra.mxu0 0.0
      %901 = vmatprep.subr.mxu0 0.0
      %902 = vmatpush1.xpose.msra.mxu0 0.0
      %903 = vmatprep.subr.mxu0 0.0
      %904 = vmatpush1.xpose.msra.mxu0 0.0
      %905 = vmatprep.subr.mxu0 0.0
      %906 = vmatpush1.xpose.msra.mxu0 0.0
      %907 = vmatprep.subr.mxu0 0.0
      %908 = vmatpush1.xpose.msra.mxu0 %v879
      %909 = vmatprep.subr.mxu0 0.0
      %910 = vmatpush1.xpose.msra.mxu0 %v877
      %911 = vmatprep.subr.mxu0 0.0
      %912 = vmatpush1.xpose.msra.mxu0 %v875
      %913 = vmatprep.subr.mxu0 0.0
      %914 = vmatpush2.xpose.msra.mxu0 0.0
      %915 = vmatprep.subr.mxu0 0.0
      %916 = vmatpush2.xpose.msra.mxu0 0.0
      %917 = vmatprep.subr.mxu0 0.0
      %918 = vmatpush2.xpose.msra.mxu0 0.0
      %919 = vmatprep.subr.mxu0 0.0
      %920 = vmatpush2.xpose.msra.mxu0 0.0
      %921 = vmatprep.subr.mxu0 0.0
      %922 = vmatpush2.xpose.msra.mxu0 0.0
      %923 = vmatprep.subr.mxu0 0.0
      %924 = vmatpush2.xpose.msra.mxu0 0.0
      %925 = vmatprep.subr.mxu0 0.0
      %926 = vmatpush2.xpose.msra.mxu0 0.0
      %927 = vmatprep.subr.mxu0 0.0
      %928 = vmatpush2.xpose.msra.mxu0 0.0
      %929 = vmatprep.subr.mxu0 0.0
      %930 = vmatpush2.xpose.msra.mxu0 0.0
      %931 = vmatprep.subr.mxu0 0.0
      %932 = vmatpush2.xpose.msra.mxu0 0.0
      %933 = vmatprep.subr.mxu0 0.0
      %934 = vmatpush2.xpose.msra.mxu0 0.0
      %935 = vmatprep.subr.mxu0 0.0
      %936 = vmatpush2.xpose.msra.mxu0 0.0
      %937 = vmatprep.subr.mxu0 0.0
      %938 = vmatpush2.xpose.msra.mxu0 0.0
      %939 = vmatprep.subr.mxu0 0.0
      %940 = vmatpush2.xpose.msra.mxu0 0.0
      %941 = vmatprep.subr.mxu0 0.0
      %942 = vmatpush2.xpose.msra.mxu0 0.0
      %943 = vmatprep.subr.mxu0 0.0
      %944 = vmatpush2.xpose.msra.mxu0 0.0
      %945 = vmatprep.mubr.f32.mxu0 0.0
      %946 = vmatmul.mubr.f32.gmra.mxu0 %v869
      %v947 = vpop.f32.mrf.mxu0
      %v948 = vadd.f32 0.0, %v947
      %v949 = vpop.f32.mrf.mxu0
      %950 = vmatprep.mubr.f32.mxu0 0.0
      %951 = vmatmul.mubr.f32.gmra.mxu0 %v871
      %v952 = vpop.f32.mrf.mxu0
      %v953 = vadd.f32 0.0, %v952
      %v954 = vpop.f32.mrf.mxu0
      %955 = vmatprep.mubr.f32.mxu0 0.0
      %956 = vmatmul.mubr.f32.gmra.mxu0 %v873
      %v957 = vpop.f32.mrf.mxu0
      %v958 = vadd.f32 0.0, %v957
      %v959 = vpop.f32.mrf.mxu0
      %960 = vdwg.mxu0
      %v961 = vmul.f32 %v948, 0.17677669
      %v962 = vmul.f32 %v953, 0.17677669
      %v963 = vmul.f32 %v958, 0.17677669
      %vm964 = vcmask 138240
      %v965 = vsel %vm964, %v961, -inf
      %966 = vmax.xlane.f32.xlu0 %v965
      %v967 = vpop.xlane.xlu0 %966
      %v968 = vsel %vm964, %v962, -inf
      %969 = vmax.xlane.f32.xlu0 %v968
      %v970 = vpop.xlane.xlu0 %969
      %vm971 = vcmask 131072
      %v972 = vsel %vm971, %v963, -inf
      %973 = vmax.xlane.f32.xlu0 %v972
      %v974 = vpop.xlane.xlu0 %973
      %v975 = vsub.f32 %v961, %v967
      %v976 = vsub.f32 %v962, %v970
      %v977 = vsub.f32 %v963, %v974
      %v978 = vmul.f32 %v975, 1.442695
      %v979 = vpow.pop %v978
      %v980 = vmul.f32 %v976, 1.442695
      %v981 = vpow.pop %v980
      %v982 = vmul.f32 %v977, 1.442695
      %v983 = vpow.pop %v982
      %v984 = vsel %vm964, %v979, 0.0
      %985 = vadd.xlane.f32.xlu0 %v984
      %v986 = vpop.xlane.xlu0 %985
      %v987 = vsel %vm964, %v981, 0.0
      %988 = vadd.xlane.f32.xlu0 %v987
      %v989 = vpop.xlane.xlu0 %988
      %v990 = vsel %vm971, %v983, 0.0
      %991 = vadd.xlane.f32.xlu0 %v990
      %v992 = vpop.xlane.xlu0 %991
      %v993 = vrcp.pop %v986
      %v994 = vrcp.pop %v989
      %v995 = vrcp.pop %v992
      %v996 = vmul.f32 %v979, %v993
      %v997 = vmul.f32 %v981, %v994
      %v998 = vmul.f32 %v983, %v995
      %999 = vrot.lane.b32.xlu0 %v847, 64
      %v1000 = vpop.permute.xlu0 %999
      %1001 = vrot.lane.b32.xlu0 %v852, 64
      %v1002 = vpop.permute.xlu0 %1001
      %1003 = vrot.lane.b32.xlu0 %v857, 64
      %v1004 = vpop.permute.xlu0 %1003
      %v1008 = vsel %vm964, %v996, 0
      %v1011 = vsel %vm964, %v997, 0
      %v1014 = vsel %vm964, %v998, 0
      %vm1016 = vcmask 1040384
      %v1017 = vsel %vm1016, %v1004, 0
      %1019 = vmatprep.subr.mxu0 0.0
      %1020 = vmatpush1.msra.mxu0 0.0
      %1021 = vmatprep.subr.mxu0 0.0
      %1022 = vmatpush1.msra.mxu0 0.0
      %1023 = vmatprep.subr.mxu0 0.0
      %1024 = vmatpush1.msra.mxu0 0.0
      %1025 = vmatprep.subr.mxu0 0.0
      %1026 = vmatpush1.msra.mxu0 0.0
      %1027 = vmatprep.subr.mxu0 0.0
      %1028 = vmatpush1.msra.mxu0 0.0
      %1029 = vmatprep.subr.mxu0 0.0
      %1030 = vmatpush1.msra.mxu0 0.0
      %1031 = vmatprep.subr.mxu0 0.0
      %1032 = vmatpush1.msra.mxu0 0.0
      %1033 = vmatprep.subr.mxu0 0.0
      %1034 = vmatpush1.msra.mxu0 0.0
      %1035 = vmatprep.subr.mxu0 0.0
      %1036 = vmatpush1.msra.mxu0 0.0
      %1037 = vmatprep.subr.mxu0 0.0
      %1038 = vmatpush1.msra.mxu0 0.0
      %1039 = vmatprep.subr.mxu0 0.0
      %1040 = vmatpush1.msra.mxu0 0.0
      %1041 = vmatprep.subr.mxu0 0.0
      %1042 = vmatpush1.msra.mxu0 0.0
      %1043 = vmatprep.subr.mxu0 0.0
      %1044 = vmatpush1.msra.mxu0 0.0
      %1045 = vmatprep.subr.mxu0 0.0
      %1046 = vmatpush1.msra.mxu0 %v1017
      %1047 = vmatprep.subr.mxu0 0.0
      %1048 = vmatpush1.msra.mxu0 %v1002
      %1049 = vmatprep.subr.mxu0 0.0
      %1050 = vmatpush1.msra.mxu0 %v1000
      %1051 = vmatprep.subr.mxu0 0.0
      %1052 = vmatpush2.msra.mxu0 0.0
      %1053 = vmatprep.subr.mxu0 0.0
      %1054 = vmatpush2.msra.mxu0 0.0
      %1055 = vmatprep.subr.mxu0 0.0
      %1056 = vmatpush2.msra.mxu0 0.0
      %1057 = vmatprep.subr.mxu0 0.0
      %1058 = vmatpush2.msra.mxu0 0.0
      %1059 = vmatprep.subr.mxu0 0.0
      %1060 = vmatpush2.msra.mxu0 0.0
      %1061 = vmatprep.subr.mxu0 0.0
      %1062 = vmatpush2.msra.mxu0 0.0
      %1063 = vmatprep.subr.mxu0 0.0
      %1064 = vmatpush2.msra.mxu0 0.0
      %1065 = vmatprep.subr.mxu0 0.0
      %1066 = vmatpush2.msra.mxu0 0.0
      %1067 = vmatprep.subr.mxu0 0.0
      %1068 = vmatpush2.msra.mxu0 0.0
      %1069 = vmatprep.subr.mxu0 0.0
      %1070 = vmatpush2.msra.mxu0 0.0
      %1071 = vmatprep.subr.mxu0 0.0
      %1072 = vmatpush2.msra.mxu0 0.0
      %1073 = vmatprep.subr.mxu0 0.0
      %1074 = vmatpush2.msra.mxu0 0.0
      %1075 = vmatprep.subr.mxu0 0.0
      %1076 = vmatpush2.msra.mxu0 0.0
      %1077 = vmatprep.subr.mxu0 0.0
      %1078 = vmatpush2.msra.mxu0 0.0
      %1079 = vmatprep.subr.mxu0 0.0
      %1080 = vmatpush2.msra.mxu0 0.0
      %1081 = vmatprep.subr.mxu0 0.0
      %1082 = vmatpush2.msra.mxu0 0.0
      %1083 = vmatprep.mubr.f32.mxu0 0.0
      %1084 = vmatmul.mubr.f32.gmra.mxu0 %v1008
      %v1085 = vpop.f32.mrf.mxu0
      %v1086 = vadd.f32 0.0, %v1085
      %v1087 = vpop.f32.mrf.mxu0
      %1088 = vmatprep.mubr.f32.mxu0 0.0
      %1089 = vmatmul.mubr.f32.gmra.mxu0 %v1011
      %v1090 = vpop.f32.mrf.mxu0
      %v1091 = vadd.f32 0.0, %v1090
      %v1092 = vpop.f32.mrf.mxu0
      %1093 = vmatprep.mubr.f32.mxu0 0.0
      %1094 = vmatmul.mubr.f32.gmra.mxu0 %v1014
      %v1095 = vpop.f32.mrf.mxu0
      %v1096 = vadd.f32 0.0, %v1095
      %v1097 = vpop.f32.mrf.mxu0
      %1098 = vdwg.mxu0
      %v1100 = vsel %vm657, %v1086, 0
      %v1103 = vsel %vm657, %v1091, 0
      %v1106 = vsel %vm657, %v1096, 0
      %1108 = vmatprep.subr.mxu0 0.0
      %1109 = vmatpush1.msra.mxu0 0.0
      %1110 = vmatprep.subr.mxu0 0.0
      %1111 = vmatpush1.msra.mxu0 0.0
      %1112 = vmatprep.subr.mxu0 0.0
      %1113 = vmatpush1.msra.mxu0 0.0
      %1114 = vmatprep.subr.mxu0 0.0
      %1115 = vmatpush1.msra.mxu0 0.0
      %1116 = vmatprep.subr.mxu0 0.0
      %1117 = vmatpush1.msra.mxu0 0.0
      %1118 = vmatprep.subr.mxu0 0.0
      %1119 = vmatpush1.msra.mxu0 0.0
      %1120 = vmatprep.subr.mxu0 0.0
      %1121 = vmatpush1.msra.mxu0 0.0
      %1122 = vmatprep.subr.mxu0 0.0
      %1123 = vmatpush1.msra.mxu0 0.0
      %1124 = vmatprep.subr.mxu0 0.0
      %1125 = vmatpush1.msra.mxu0 0.0
      %1126 = vmatprep.subr.mxu0 0.0
      %1127 = vmatpush1.msra.mxu0 0.0
      %1128 = vmatprep.subr.mxu0 0.0
      %1129 = vmatpush1.msra.mxu0 0.0
      %1130 = vmatprep.subr.mxu0 0.0
      %1131 = vmatpush1.msra.mxu0 0.0
      %1132 = vmatprep.subr.mxu0 0.0
      %1133 = vmatpush1.msra.mxu0 %v678
      %1134 = vmatprep.subr.mxu0 0.0
      %1135 = vmatpush1.msra.mxu0 %v677
      %1136 = vmatprep.subr.mxu0 0.0
      %1137 = vmatpush1.msra.mxu0 %v676
      %1138 = vmatprep.subr.mxu0 0.0
      %1139 = vmatpush1.msra.mxu0 %v675
      %1140 = vmatprep.subr.mxu0 0.0
      %1141 = vmatpush2.msra.mxu0 0.0
      %1142 = vmatprep.subr.mxu0 0.0
      %1143 = vmatpush2.msra.mxu0 0.0
      %1144 = vmatprep.subr.mxu0 0.0
      %1145 = vmatpush2.msra.mxu0 0.0
      %1146 = vmatprep.subr.mxu0 0.0
      %1147 = vmatpush2.msra.mxu0 0.0
      %1148 = vmatprep.subr.mxu0 0.0
      %1149 = vmatpush2.msra.mxu0 0.0
      %1150 = vmatprep.subr.mxu0 0.0
      %1151 = vmatpush2.msra.mxu0 0.0
      %1152 = vmatprep.subr.mxu0 0.0
      %1153 = vmatpush2.msra.mxu0 0.0
      %1154 = vmatprep.subr.mxu0 0.0
      %1155 = vmatpush2.msra.mxu0 0.0
      %1156 = vmatprep.subr.mxu0 0.0
      %1157 = vmatpush2.msra.mxu0 0.0
      %1158 = vmatprep.subr.mxu0 0.0
      %1159 = vmatpush2.msra.mxu0 0.0
      %1160 = vmatprep.subr.mxu0 0.0
      %1161 = vmatpush2.msra.mxu0 0.0
      %1162 = vmatprep.subr.mxu0 0.0
      %1163 = vmatpush2.msra.mxu0 0.0
      %1164 = vmatprep.subr.mxu0 0.0
      %1165 = vmatpush2.msra.mxu0 0.0
      %1166 = vmatprep.subr.mxu0 0.0
      %1167 = vmatpush2.msra.mxu0 0.0
      %1168 = vmatprep.subr.mxu0 0.0
      %1169 = vmatpush2.msra.mxu0 0.0
      %1170 = vmatprep.subr.mxu0 0.0
      %1171 = vmatpush2.msra.mxu0 0.0
      %1172 = vmatprep.mubr.f32.mxu0 0.0
      %1173 = vmatmul.mubr.f32.gmra.mxu0 %v1100
      %v1174 = vpop.f32.mrf.mxu0
      %v1175 = vadd.f32 0.0, %v1174
      %v1176 = vpop.f32.mrf.mxu0
      %1177 = vmatprep.mubr.f32.mxu0 0.0
      %1178 = vmatmul.mubr.f32.gmra.mxu0 %v1103
      %v1179 = vpop.f32.mrf.mxu0
      %v1180 = vadd.f32 0.0, %v1179
      %v1181 = vpop.f32.mrf.mxu0
      %1182 = vmatprep.mubr.f32.mxu0 0.0
      %1183 = vmatmul.mubr.f32.gmra.mxu0 %v1106
      %v1184 = vpop.f32.mrf.mxu0
      %v1185 = vadd.f32 0.0, %v1184
      %v1186 = vpop.f32.mrf.mxu0
      %1187 = vdwg.mxu0
      %v1188 = vadd.f32 %v708, %v1175
      %v1189 = vadd.f32 %v709, %v1180
      %v1190 = vadd.f32 %v710, %v1185
      %v1192 = vlaneseq
      %v1193 = vshrl.u32 %v1192, 7
      %v1194 = vsub.s32 0, %v1193
      %v1195 = vrot.slane %v679, %v1194
      %v1197 = vadd.f32 %v1188, %v1195
      %v1198 = vadd.f32 %v1189, %v1195
      %v1199 = vadd.f32 %v1190, %v1195
      %v1200 = vsel %vm657, %v1197, 0.0
      %1201 = vadd.xlane.f32.xlu0 %v1200
      %v1202 = vpop.xlane.xlu0 %1201
      %v1203 = vsel %vm657, %v1198, 0.0
      %1204 = vadd.xlane.f32.xlu0 %v1203
      %v1205 = vpop.xlane.xlu0 %1204
      %v1206 = vsel %vm700, %v1199, 0.0
      %1207 = vadd.xlane.f32.xlu0 %v1206
      %v1208 = vpop.xlane.xlu0 %1207
      %v1209 = vmul.f32 %v1202, %v720
      %v1210 = vmul.f32 %v1205, %v720
      %v1211 = vmul.f32 %v1208, %v720
      %v1212 = vsub.f32 %v1197, %v1209
      %v1213 = vsub.f32 %v1198, %v1210
      %v1214 = vsub.f32 %v1199, %v1211
      %v1215 = vmul.f32 %v1212, %v1212
      %v1216 = vmul.f32 %v1213, %v1213
      %v1217 = vmul.f32 %v1214, %v1214
      %v1218 = vsel %vm657, %v1215, 0.0
      %1219 = vadd.xlane.f32.xlu0 %v1218
      %v1220 = vpop.xlane.xlu0 %1219
      %v1221 = vsel %vm657, %v1216, 0.0
      %1222 = vadd.xlane.f32.xlu0 %v1221
      %v1223 = vpop.xlane.xlu0 %1222
      %v1224 = vsel %vm700, %v1217, 0.0
      %1225 = vadd.xlane.f32.xlu0 %v1224
      %v1226 = vpop.xlane.xlu0 %1225
      %v1227 = vmul.f32 %v1220, %v720
      %v1228 = vmul.f32 %v1223, %v720
      %v1229 = vmul.f32 %v1226, %v720
      %v1230 = vadd.f32 %v1227, 1e-05
      %v1231 = vadd.f32 %v1228, 1e-05
      %v1232 = vadd.f32 %v1229, 1e-05
      %v1233 = vrsqrt.pop %v1230
      %v1234 = vrsqrt.pop %v1231
      %v1235 = vrsqrt.pop %v1232
      %v1236 = vmul.f32 %v1212, %v1233
      %v1237 = vmul.f32 %v1213, %v1234
      %v1238 = vmul.f32 %v1214, %v1235
      %v1239 = vlaneseq
      %v1240 = vshrl.u32 %v1239, 7
      %v1241 = vsub.s32 0, %v1240
      %v1242 = vrot.slane %v666, %v1241
      %v1243 = vmul.f32 %v1236, %v1242
      %v1244 = vmul.f32 %v1237, %v1242
      %v1245 = vmul.f32 %v1238, %v1242
      %v1246 = vlaneseq
      %v1247 = vshrl.u32 %v1246, 7
      %v1248 = vsub.s32 0, %v1247
      %v1249 = vrot.slane %v667, %v1248
      %v1250 = vadd.f32 %v1243, %v1249
      %v1251 = vadd.f32 %v1244, %v1249
      %v1252 = vadd.f32 %v1245, %v1249
      %v1254 = vlaneseq
      %v1255 = vshrl.u32 %v1254, 7
      %v1256 = vsub.s32 0, %v1255
      %v1257 = vrot.slane %v684, %v1256
      %v1260 = vsel %vm657, %v1250, 0
      %v1263 = vsel %vm657, %v1251, 0
      %v1266 = vsel %vm657, %v1252, 0
      %1268 = vmatprep.subr.mxu0 0.0
      %1269 = vmatpush1.msra.mxu0 0.0
      %1270 = vmatprep.subr.mxu0 0.0
      %1271 = vmatpush1.msra.mxu0 0.0
      %1272 = vmatprep.subr.mxu0 0.0
      %1273 = vmatpush1.msra.mxu0 0.0
      %1274 = vmatprep.subr.mxu0 0.0
      %1275 = vmatpush1.msra.mxu0 0.0
      %1276 = vmatprep.subr.mxu0 0.0
      %1277 = vmatpush1.msra.mxu0 0.0
      %1278 = vmatprep.subr.mxu0 0.0
      %1279 = vmatpush1.msra.mxu0 0.0
      %1280 = vmatprep.subr.mxu0 0.0
      %1281 = vmatpush1.msra.mxu0 0.0
      %1282 = vmatprep.subr.mxu0 0.0
      %1283 = vmatpush1.msra.mxu0 0.0
      %1284 = vmatprep.subr.mxu0 0.0
      %1285 = vmatpush1.msra.mxu0 0.0
      %1286 = vmatprep.subr.mxu0 0.0
      %1287 = vmatpush1.msra.mxu0 0.0
      %1288 = vmatprep.subr.mxu0 0.0
      %1289 = vmatpush1.msra.mxu0 0.0
      %1290 = vmatprep.subr.mxu0 0.0
      %1291 = vmatpush1.msra.mxu0 0.0
      %1292 = vmatprep.subr.mxu0 0.0
      %1293 = vmatpush1.msra.mxu0 %v683
      %1294 = vmatprep.subr.mxu0 0.0
      %1295 = vmatpush1.msra.mxu0 %v682
      %1296 = vmatprep.subr.mxu0 0.0
      %1297 = vmatpush1.msra.mxu0 %v681
      %1298 = vmatprep.subr.mxu0 0.0
      %1299 = vmatpush1.msra.mxu0 %v680
      %1300 = vmatprep.subr.mxu0 0.0
      %1301 = vmatpush2.msra.mxu0 0.0
      %1302 = vmatprep.subr.mxu0 0.0
      %1303 = vmatpush2.msra.mxu0 0.0
      %1304 = vmatprep.subr.mxu0 0.0
      %1305 = vmatpush2.msra.mxu0 0.0
      %1306 = vmatprep.subr.mxu0 0.0
      %1307 = vmatpush2.msra.mxu0 0.0
      %1308 = vmatprep.subr.mxu0 0.0
      %1309 = vmatpush2.msra.mxu0 0.0
      %1310 = vmatprep.subr.mxu0 0.0
      %1311 = vmatpush2.msra.mxu0 0.0
      %1312 = vmatprep.subr.mxu0 0.0
      %1313 = vmatpush2.msra.mxu0 0.0
      %1314 = vmatprep.subr.mxu0 0.0
      %1315 = vmatpush2.msra.mxu0 0.0
      %1316 = vmatprep.subr.mxu0 0.0
      %1317 = vmatpush2.msra.mxu0 0.0
      %1318 = vmatprep.subr.mxu0 0.0
      %1319 = vmatpush2.msra.mxu0 0.0
      %1320 = vmatprep.subr.mxu0 0.0
      %1321 = vmatpush2.msra.mxu0 0.0
      %1322 = vmatprep.subr.mxu0 0.0
      %1323 = vmatpush2.msra.mxu0 0.0
      %1324 = vmatprep.subr.mxu0 0.0
      %1325 = vmatpush2.msra.mxu0 0.0
      %1326 = vmatprep.subr.mxu0 0.0
      %1327 = vmatpush2.msra.mxu0 0.0
      %1328 = vmatprep.subr.mxu0 0.0
      %1329 = vmatpush2.msra.mxu0 0.0
      %1330 = vmatprep.subr.mxu0 0.0
      %1331 = vmatpush2.msra.mxu0 0.0
      %1332 = vmatprep.mubr.f32.mxu0 0.0
      %1333 = vmatmul.mubr.f32.gmra.mxu0 %v1260
      %v1334 = vpop.f32.mrf.mxu0
      %v1335 = vadd.f32 %v1257, %v1334
      %v1336 = vpop.f32.mrf.mxu0
      %1337 = vmatprep.mubr.f32.mxu0 0.0
      %1338 = vmatmul.mubr.f32.gmra.mxu0 %v1263
      %v1339 = vpop.f32.mrf.mxu0
      %v1340 = vadd.f32 %v1257, %v1339
      %v1341 = vpop.f32.mrf.mxu0
      %1342 = vmatprep.mubr.f32.mxu0 0.0
      %1343 = vmatmul.mubr.f32.gmra.mxu0 %v1266
      %v1344 = vpop.f32.mrf.mxu0
      %v1345 = vadd.f32 %v1257, %v1344
      %v1346 = vpop.f32.mrf.mxu0
      %1347 = vdwg.mxu0
      %v1348 = vmul.f32 %v1335, 0.5
      %v1349 = vmul.f32 %v1340, 0.5
      %v1350 = vmul.f32 %v1345, 0.5
      %v1351 = vmul.f32 %v1335, 0.70710677
      %v1352 = vmul.f32 %v1340, 0.70710677
      %v1353 = vmul.f32 %v1345, 0.70710677
      %vm1354 = vcmp.lt.f32.partialorder %v1351, 0.0
      %vm1355 = vcmp.lt.f32.partialorder %v1352, 0.0
      %vm1356 = vcmp.lt.f32.partialorder %v1353, 0.0
      %v1357 = vsel %vm1354, -1.0, 1.0
      %v1358 = vsel %vm1355, -1.0, 1.0
      %v1359 = vsel %vm1356, -1.0, 1.0
      %v1360 = vand.u32 2147483647, %v1351
      %v1361 = vand.u32 2147483647, %v1352
      %v1362 = vand.u32 2147483647, %v1353
      %v1363 = vmul.f32 %v1360, 0.3275911
      %v1364 = vmul.f32 %v1361, 0.3275911
      %v1365 = vmul.f32 %v1362, 0.3275911
      %v1366 = vadd.f32 %v1363, 1.0
      %v1367 = vadd.f32 %v1364, 1.0
      %v1368 = vadd.f32 %v1365, 1.0
      %v1369 = vrcp.pop %v1366
      %v1370 = vmul.f32 1.0, %v1369
      %v1371 = vrcp.pop %v1367
      %v1372 = vmul.f32 1.0, %v1371
      %v1373 = vrcp.pop %v1368
      %v1374 = vmul.f32 1.0, %v1373
      %v1375 = vmul.f32 %v1370, 1.0614054
      %v1376 = vmul.f32 %v1372, 1.0614054
      %v1377 = vmul.f32 %v1374, 1.0614054
      %v1378 = vadd.f32 %v1375, -1.4531521
      %v1379 = vadd.f32 %v1376, -1.4531521
      %v1380 = vadd.f32 %v1377, -1.4531521
      %v1381 = vmul.f32 %v1378, %v1370
      %v1382 = vmul.f32 %v1379, %v1372
      %v1383 = vmul.f32 %v1380, %v1374
      %v1384 = vadd.f32 %v1381, 1.4214138
      %v1385 = vadd.f32 %v1382, 1.4214138
      %v1386 = vadd.f32 %v1383, 1.4214138
      %v1387 = vmul.f32 %v1384, %v1370
      %v1388 = vmul.f32 %v1385, %v1372
      %v1389 = vmul.f32 %v1386, %v1374
      %v1390 = vadd.f32 %v1387, -0.28449672
      %v1391 = vadd.f32 %v1388, -0.28449672
      %v1392 = vadd.f32 %v1389, -0.28449672
      %v1393 = vmul.f32 %v1390, %v1370
      %v1394 = vmul.f32 %v1391, %v1372
      %v1395 = vmul.f32 %v1392, %v1374
      %v1396 = vadd.f32 %v1393, 0.2548296
      %v1397 = vadd.f32 %v1394, 0.2548296
      %v1398 = vadd.f32 %v1395, 0.2548296
      %v1399 = vmul.f32 %v1396, %v1370
      %v1400 = vmul.f32 %v1397, %v1372
      %v1401 = vmul.f32 %v1398, %v1374
      %v1402 = vsub.f32 0.0, %v1360
      %v1403 = vsub.f32 0.0, %v1361
      %v1404 = vsub.f32 0.0, %v1362
      %v1405 = vmul.f32 %v1402, %v1360
      %v1406 = vmul.f32 %v1403, %v1361
      %v1407 = vmul.f32 %v1404, %v1362
      %v1408 = vmul.f32 %v1405, 1.442695
      %v1409 = vpow.pop %v1408
      %v1410 = vmul.f32 %v1406, 1.442695
      %v1411 = vpow.pop %v1410
      %v1412 = vmul.f32 %v1407, 1.442695
      %v1413 = vpow.pop %v1412
      %v1414 = vmul.f32 %v1399, %v1409
      %v1415 = vmul.f32 %v1400, %v1411
      %v1416 = vmul.f32 %v1401, %v1413
      %v1417 = vsub.f32 1.0, %v1414
      %v1418 = vsub.f32 1.0, %v1415
      %v1419 = vsub.f32 1.0, %v1416
      %v1420 = vmul.f32 %v1357, %v1417
      %v1421 = vmul.f32 %v1358, %v1418
      %v1422 = vmul.f32 %v1359, %v1419
      %v1423 = vadd.f32 %v1420, 1.0
      %v1424 = vadd.f32 %v1421, 1.0
      %v1425 = vadd.f32 %v1422, 1.0
      %v1426 = vmul.f32 %v1348, %v1423
      %v1427 = vmul.f32 %v1349, %v1424
      %v1428 = vmul.f32 %v1350, %v1425
      %v1430 = vlaneseq
      %v1431 = vshrl.u32 %v1430, 7
      %v1432 = vsub.s32 0, %v1431
      %v1433 = vrot.slane %v693, %v1432
      %v1436 = vsel %vm559, %v1426, 0
      %v1439 = vsel %vm559, %v1427, 0
      %v1442 = vsel %vm559, %v1428, 0
      %1444 = vmatprep.subr.mxu0 0.0
      %1445 = vmatpush1.msra.mxu0 0.0
      %1446 = vmatprep.subr.mxu0 0.0
      %1447 = vmatpush1.msra.mxu0 0.0
      %1448 = vmatprep.subr.mxu0 0.0
      %1449 = vmatpush1.msra.mxu0 0.0
      %1450 = vmatprep.subr.mxu0 0.0
      %1451 = vmatpush1.msra.mxu0 0.0
      %1452 = vmatprep.subr.mxu0 0.0
      %1453 = vmatpush1.msra.mxu0 0.0
      %1454 = vmatprep.subr.mxu0 0.0
      %1455 = vmatpush1.msra.mxu0 0.0
      %1456 = vmatprep.subr.mxu0 0.0
      %1457 = vmatpush1.msra.mxu0 0.0
      %1458 = vmatprep.subr.mxu0 0.0
      %1459 = vmatpush1.msra.mxu0 0.0
      %1460 = vmatprep.subr.mxu0 0.0
      %1461 = vmatpush1.msra.mxu0 %v692
      %1462 = vmatprep.subr.mxu0 0.0
      %1463 = vmatpush1.msra.mxu0 %v691
      %1464 = vmatprep.subr.mxu0 0.0
      %1465 = vmatpush1.msra.mxu0 %v690
      %1466 = vmatprep.subr.mxu0 0.0
      %1467 = vmatpush1.msra.mxu0 %v689
      %1468 = vmatprep.subr.mxu0 0.0
      %1469 = vmatpush1.msra.mxu0 %v688
      %1470 = vmatprep.subr.mxu0 0.0
      %1471 = vmatpush1.msra.mxu0 %v687
      %1472 = vmatprep.subr.mxu0 0.0
      %1473 = vmatpush1.msra.mxu0 %v686
      %1474 = vmatprep.subr.mxu0 0.0
      %1475 = vmatpush1.msra.mxu0 %v685
      %1476 = vmatprep.subr.mxu0 0.0
      %1477 = vmatpush2.msra.mxu0 0.0
      %1478 = vmatprep.subr.mxu0 0.0
      %1479 = vmatpush2.msra.mxu0 0.0
      %1480 = vmatprep.subr.mxu0 0.0
      %1481 = vmatpush2.msra.mxu0 0.0
      %1482 = vmatprep.subr.mxu0 0.0
      %1483 = vmatpush2.msra.mxu0 0.0
      %1484 = vmatprep.subr.mxu0 0.0
      %1485 = vmatpush2.msra.mxu0 0.0
      %1486 = vmatprep.subr.mxu0 0.0
      %1487 = vmatpush2.msra.mxu0 0.0
      %1488 = vmatprep.subr.mxu0 0.0
      %1489 = vmatpush2.msra.mxu0 0.0
      %1490 = vmatprep.subr.mxu0 0.0
      %1491 = vmatpush2.msra.mxu0 0.0
      %1492 = vmatprep.subr.mxu0 0.0
      %1493 = vmatpush2.msra.mxu0 0.0
      %1494 = vmatprep.subr.mxu0 0.0
      %1495 = vmatpush2.msra.mxu0 0.0
      %1496 = vmatprep.subr.mxu0 0.0
      %1497 = vmatpush2.msra.mxu0 0.0
      %1498 = vmatprep.subr.mxu0 0.0
      %1499 = vmatpush2.msra.mxu0 0.0
      %1500 = vmatprep.subr.mxu0 0.0
      %1501 = vmatpush2.msra.mxu0 0.0
      %1502 = vmatprep.subr.mxu0 0.0
      %1503 = vmatpush2.msra.mxu0 0.0
      %1504 = vmatprep.subr.mxu0 0.0
      %1505 = vmatpush2.msra.mxu0 0.0
      %1506 = vmatprep.subr.mxu0 0.0
      %1507 = vmatpush2.msra.mxu0 0.0
      %1508 = vmatprep.mubr.f32.mxu0 0.0
      %1509 = vmatmul.mubr.f32.gmra.mxu0 %v1436
      %v1510 = vpop.f32.mrf.mxu0
      %v1511 = vadd.f32 %v1433, %v1510
      %v1512 = vpop.f32.mrf.mxu0
      %1513 = vmatprep.mubr.f32.mxu0 0.0
      %1514 = vmatmul.mubr.f32.gmra.mxu0 %v1439
      %v1515 = vpop.f32.mrf.mxu0
      %v1516 = vpop.f32.mrf.mxu0
      %1517 = vmatprep.mubr.f32.mxu0 0.0
      %1518 = vmatmul.mubr.f32.gmra.mxu0 %v1442
      %v1519 = vpop.f32.mrf.mxu0
      %v1520 = vpop.f32.mrf.mxu0
      %1521 = vdwg.mxu0
      %v1522 = vadd.f32 %v1197, %v1511
      %v1523 = vsel %vm657, %v1522, 0.0
      %1524 = vadd.xlane.f32.xlu0 %v1523
      %v1525 = vpop.xlane.xlu0 %1524
      %v1526 = vmul.f32 %v1525, %v720
      %v1527 = vsub.f32 %v1522, %v1526
      %v1528 = vmul.f32 %v1527, %v1527
      %v1529 = vsel %vm657, %v1528, 0.0
      %1530 = vadd.xlane.f32.xlu0 %v1529
      %v1531 = vpop.xlane.xlu0 %1530
      %v1532 = vmul.f32 %v1531, %v720
      %v1533 = vadd.f32 %v1532, 1e-05
      %v1534 = vrsqrt.pop %v1533
      %v1535 = vmul.f32 %v1527, %v1534
      %v1536 = vlaneseq
      %v1537 = vshrl.u32 %v1536, 7
      %v1538 = vsub.s32 0, %v1537
      %v1539 = vrot.slane %v668, %v1538
      %v1540 = vmul.f32 %v1535, %v1539
      %v1541 = vlaneseq
      %v1542 = vshrl.u32 %v1541, 7
      %v1543 = vsub.s32 0, %v1542
      %v1544 = vrot.slane %v669, %v1543
      %v1545 = vadd.f32 %v1540, %v1544
      %v1547 = vsel %vm657, %v1545, 0
      %1549 = vmatprep.subr.mxu0 0.0
      %1550 = vmatpush1.msra.mxu0 0.0
      %1551 = vmatprep.subr.mxu0 0.0
      %1552 = vmatpush1.msra.mxu0 0.0
      %1553 = vmatprep.subr.mxu0 0.0
      %1554 = vmatpush1.msra.mxu0 0.0
      %1555 = vmatprep.subr.mxu0 0.0
      %1556 = vmatpush1.msra.mxu0 0.0
      %1557 = vmatprep.subr.mxu0 0.0
      %1558 = vmatpush1.msra.mxu0 0.0
      %1559 = vmatprep.subr.mxu0 0.0
      %1560 = vmatpush1.msra.mxu0 0.0
      %1561 = vmatprep.subr.mxu0 0.0
      %1562 = vmatpush1.msra.mxu0 0.0
      %1563 = vmatprep.subr.mxu0 0.0
      %1564 = vmatpush1.msra.mxu0 0.0
      %1565 = vmatprep.subr.mxu0 0.0
      %1566 = vmatpush1.msra.mxu0 0.0
      %1567 = vmatprep.subr.mxu0 0.0
      %1568 = vmatpush1.msra.mxu0 0.0
      %1569 = vmatprep.subr.mxu0 0.0
      %1570 = vmatpush1.msra.mxu0 0.0
      %1571 = vmatprep.subr.mxu0 0.0
      %1572 = vmatpush1.msra.mxu0 0.0
      %1573 = vmatprep.subr.mxu0 0.0
      %1574 = vmatpush1.msra.mxu0 %v697
      %1575 = vmatprep.subr.mxu0 0.0
      %1576 = vmatpush1.msra.mxu0 %v696
      %1577 = vmatprep.subr.mxu0 0.0
      %1578 = vmatpush1.msra.mxu0 %v695
      %1579 = vmatprep.subr.mxu0 0.0
      %1580 = vmatpush1.msra.mxu0 %v694
      %1581 = vmatprep.subr.mxu0 0.0
      %1582 = vmatpush2.msra.mxu0 0.0
      %1583 = vmatprep.subr.mxu0 0.0
      %1584 = vmatpush2.msra.mxu0 0.0
      %1585 = vmatprep.subr.mxu0 0.0
      %1586 = vmatpush2.msra.mxu0 0.0
      %1587 = vmatprep.subr.mxu0 0.0
      %1588 = vmatpush2.msra.mxu0 0.0
      %1589 = vmatprep.subr.mxu0 0.0
      %1590 = vmatpush2.msra.mxu0 0.0
      %1591 = vmatprep.subr.mxu0 0.0
      %1592 = vmatpush2.msra.mxu0 0.0
      %1593 = vmatprep.subr.mxu0 0.0
      %1594 = vmatpush2.msra.mxu0 0.0
      %1595 = vmatprep.subr.mxu0 0.0
      %1596 = vmatpush2.msra.mxu0 0.0
      %1597 = vmatprep.subr.mxu0 0.0
      %1598 = vmatpush2.msra.mxu0 0.0
      %1599 = vmatprep.subr.mxu0 0.0
      %1600 = vmatpush2.msra.mxu0 0.0
      %1601 = vmatprep.subr.mxu0 0.0
      %1602 = vmatpush2.msra.mxu0 0.0
      %1603 = vmatprep.subr.mxu0 0.0
      %1604 = vmatpush2.msra.mxu0 0.0
      %1605 = vmatprep.subr.mxu0 0.0
      %1606 = vmatpush2.msra.mxu0 0.0
      %1607 = vmatprep.subr.mxu0 0.0
      %1608 = vmatpush2.msra.mxu0 0.0
      %1609 = vmatprep.subr.mxu0 0.0
      %1610 = vmatpush2.msra.mxu0 0.0
      %1611 = vmatprep.subr.mxu0 0.0
      %1612 = vmatpush2.msra.mxu0 0.0
      %1613 = vmatprep.mubr.f32.mxu0 0.0
      %1614 = vmatmul.mubr.f32.gmra.mxu0 %v1547
      %v1615 = vpop.f32.mrf.mxu0
      %v1616 = vadd.f32 %v698, %v1615
      %v1617 = vpop.f32.mrf.mxu0
      %1618 = vdwg.mxu0
      %vm1619 = vcmask 122880
      %1620 = vst.msk [vmem:[#allocation4] sm:$0x1] %vm1619, %v1616
      %v1621 = vld [vmem:[#allocation2 + $0x4] sm:$0xff]
      %v1622 = vld [vmem:[#allocation2 + $0xc] sm:$0xff]
      %v1623 = vadd.f32 %v1621, %v662
      %v1624 = vadd.f32 %v1622, %v663
      %1625 = vst.msk [vmem:[#allocation3 + $0x1] sm:$0xff] %vm657, %v1623
      %1626 = vst.msk [vmem:[#allocation3 + $0x9] sm:$0xff] %vm657, %v1624
      %v1627 = vld [vmem:[#allocation3] sm:$0xff]
      %v1628 = vld [vmem:[#allocation3 + $0x8] sm:$0xff]
      %v1629 = vld [vmem:[#allocation3 + $0x10] sm:$0x1]
      %v1630 = vsel %vm657, %v1627, 0.0
      %1631 = vadd.xlane.f32.xlu0 %v1630
      %v1632 = vpop.xlane.xlu0 %1631
      %v1633 = vsel %vm657, %v1628, 0.0
      %1634 = vadd.xlane.f32.xlu0 %v1633
      %v1635 = vpop.xlane.xlu0 %1634
      %v1636 = vsel %vm700, %v1629, 0.0
      %1637 = vadd.xlane.f32.xlu0 %v1636
      %v1638 = vpop.xlane.xlu0 %1637
      %v1639 = vmul.f32 %v1632, %v720
      %v1640 = vmul.f32 %v1635, %v720
      %v1641 = vmul.f32 %v1638, %v720
      %v1642 = vsub.f32 %v1627, %v1639
      %v1643 = vsub.f32 %v1628, %v1640
      %v1644 = vsub.f32 %v1629, %v1641
      %v1645 = vmul.f32 %v1642, %v1642
      %v1646 = vmul.f32 %v1643, %v1643
      %v1647 = vmul.f32 %v1644, %v1644
      %v1648 = vsel %vm657, %v1645, 0.0
      %1649 = vadd.xlane.f32.xlu0 %v1648
      %v1650 = vpop.xlane.xlu0 %1649
      %v1651 = vsel %vm657, %v1646, 0.0
      %1652 = vadd.xlane.f32.xlu0 %v1651
      %v1653 = vpop.xlane.xlu0 %1652
      %v1654 = vsel %vm700, %v1647, 0.0
      %1655 = vadd.xlane.f32.xlu0 %v1654
      %v1656 = vpop.xlane.xlu0 %1655
      %v1657 = vmul.f32 %v1650, %v720
      %v1658 = vmul.f32 %v1653, %v720
      %v1659 = vmul.f32 %v1656, %v720
      %v1660 = vadd.f32 %v1657, 1e-05
      %v1661 = vadd.f32 %v1658, 1e-05
      %v1662 = vadd.f32 %v1659, 1e-05
      %v1663 = vrsqrt.pop %v1660
      %v1664 = vrsqrt.pop %v1661
      %v1665 = vrsqrt.pop %v1662
      %v1666 = vmul.f32 %v1642, %v1663
      %v1667 = vmul.f32 %v1643, %v1664
      %v1668 = vmul.f32 %v1644, %v1665
      %v1669 = vmul.f32 %v1666, %v754
      %v1670 = vmul.f32 %v1667, %v754
      %v1671 = vmul.f32 %v1668, %v754
      %v1672 = vadd.f32 %v1669, %v761
      %v1673 = vadd.f32 %v1670, %v761
      %v1674 = vadd.f32 %v1671, %v761
      %v1676 = vsel %vm657, %v1672, 0
      %v1679 = vsel %vm657, %v1673, 0
      %v1682 = vsel %vm657, %v1674, 0
      %1684 = vmatprep.subr.mxu0 0.0
      %1685 = vmatpush1.msra.mxu0 0.0
      %1686 = vmatprep.subr.mxu0 0.0
      %1687 = vmatpush1.msra.mxu0 0.0
      %1688 = vmatprep.subr.mxu0 0.0
      %1689 = vmatpush1.msra.mxu0 0.0
      %1690 = vmatprep.subr.mxu0 0.0
      %1691 = vmatpush1.msra.mxu0 0.0
      %1692 = vmatprep.subr.mxu0 0.0
      %1693 = vmatpush1.msra.mxu0 0.0
      %1694 = vmatprep.subr.mxu0 0.0
      %1695 = vmatpush1.msra.mxu0 0.0
      %1696 = vmatprep.subr.mxu0 0.0
      %1697 = vmatpush1.msra.mxu0 0.0
      %1698 = vmatprep.subr.mxu0 0.0
      %1699 = vmatpush1.msra.mxu0 0.0
      %1700 = vmatprep.subr.mxu0 0.0
      %1701 = vmatpush1.msra.mxu0 0.0
      %1702 = vmatprep.subr.mxu0 0.0
      %1703 = vmatpush1.msra.mxu0 0.0
      %1704 = vmatprep.subr.mxu0 0.0
      %1705 = vmatpush1.msra.mxu0 0.0
      %1706 = vmatprep.subr.mxu0 0.0
      %1707 = vmatpush1.msra.mxu0 0.0
      %1708 = vmatprep.subr.mxu0 0.0
      %1709 = vmatpush1.msra.mxu0 %v673
      %1710 = vmatprep.subr.mxu0 0.0
      %1711 = vmatpush1.msra.mxu0 %v672
      %1712 = vmatprep.subr.mxu0 0.0
      %1713 = vmatpush1.msra.mxu0 %v671
      %1714 = vmatprep.subr.mxu0 0.0
      %1715 = vmatpush1.msra.mxu0 %v670
      %1716 = vmatprep.subr.mxu0 0.0
      %1717 = vmatpush2.msra.mxu0 0.0
      %1718 = vmatprep.subr.mxu0 0.0
      %1719 = vmatpush2.msra.mxu0 0.0
      %1720 = vmatprep.subr.mxu0 0.0
      %1721 = vmatpush2.msra.mxu0 0.0
      %1722 = vmatprep.subr.mxu0 0.0
      %1723 = vmatpush2.msra.mxu0 0.0
      %1724 = vmatprep.subr.mxu0 0.0
      %1725 = vmatpush2.msra.mxu0 0.0
      %1726 = vmatprep.subr.mxu0 0.0
      %1727 = vmatpush2.msra.mxu0 0.0
      %1728 = vmatprep.subr.mxu0 0.0
      %1729 = vmatpush2.msra.mxu0 0.0
      %1730 = vmatprep.subr.mxu0 0.0
      %1731 = vmatpush2.msra.mxu0 0.0
      %1732 = vmatprep.subr.mxu0 0.0
      %1733 = vmatpush2.msra.mxu0 0.0
      %1734 = vmatprep.subr.mxu0 0.0
      %1735 = vmatpush2.msra.mxu0 0.0
      %1736 = vmatprep.subr.mxu0 0.0
      %1737 = vmatpush2.msra.mxu0 0.0
      %1738 = vmatprep.subr.mxu0 0.0
      %1739 = vmatpush2.msra.mxu0 0.0
      %1740 = vmatprep.subr.mxu0 0.0
      %1741 = vmatpush2.msra.mxu0 0.0
      %1742 = vmatprep.subr.mxu0 0.0
      %1743 = vmatpush2.msra.mxu0 0.0
      %1744 = vmatprep.subr.mxu0 0.0
      %1745 = vmatpush2.msra.mxu0 0.0
      %1746 = vmatprep.subr.mxu0 0.0
      %1747 = vmatpush2.msra.mxu0 0.0
      %1748 = vmatprep.mubr.f32.mxu0 0.0
      %1749 = vmatmul.mubr.f32.gmra.mxu0 %v1676
      %v1750 = vpop.f32.mrf.mxu0
      %v1751 = vadd.f32 %v769, %v1750
      %v1752 = vpop.f32.mrf.mxu0
      %1753 = vmatprep.mubr.f32.mxu0 0.0
      %1754 = vmatmul.mubr.f32.gmra.mxu0 %v1679
      %v1755 = vpop.f32.mrf.mxu0
      %v1756 = vadd.f32 %v769, %v1755
      %v1757 = vpop.f32.mrf.mxu0
      %1758 = vmatprep.mubr.f32.mxu0 0.0
      %1759 = vmatmul.mubr.f32.gmra.mxu0 %v1682
      %v1760 = vpop.f32.mrf.mxu0
      %v1761 = vadd.f32 %v769, %v1760
      %v1762 = vpop.f32.mrf.mxu0
      %1763 = vdwg.mxu0
      %1767 = vrot.lane.b32.xlu0 %v1751, 96
      %v1768 = vpop.permute.xlu0 %1767
      %1769 = vrot.lane.b32.xlu0 %v1756, 96
      %v1770 = vpop.permute.xlu0 %1769
      %1771 = vrot.lane.b32.xlu0 %v1761, 96
      %v1772 = vpop.permute.xlu0 %1771
      %v1773 = vsel %vm657, %v1751, 0
      %v1775 = vsel %vm657, %v1756, 0
      %v1777 = vsel %vm657, %v1761, 0
      %v1779 = vsel %vm657, %v1768, 0
      %v1781 = vsel %vm657, %v1770, 0
      %v1783 = vsel %vm657, %v1772, 0
      %1785 = vmatprep.subr.mxu0 0.0
      %1786 = vmatpush1.xpose.msra.mxu0 0.0
      %1787 = vmatprep.subr.mxu0 0.0
      %1788 = vmatpush1.xpose.msra.mxu0 0.0
      %1789 = vmatprep.subr.mxu0 0.0
      %1790 = vmatpush1.xpose.msra.mxu0 0.0
      %1791 = vmatprep.subr.mxu0 0.0
      %1792 = vmatpush1.xpose.msra.mxu0 0.0
      %1793 = vmatprep.subr.mxu0 0.0
      %1794 = vmatpush1.xpose.msra.mxu0 0.0
      %1795 = vmatprep.subr.mxu0 0.0
      %1796 = vmatpush1.xpose.msra.mxu0 0.0
      %1797 = vmatprep.subr.mxu0 0.0
      %1798 = vmatpush1.xpose.msra.mxu0 0.0
      %1799 = vmatprep.subr.mxu0 0.0
      %1800 = vmatpush1.xpose.msra.mxu0 0.0
      %1801 = vmatprep.subr.mxu0 0.0
      %1802 = vmatpush1.xpose.msra.mxu0 0.0
      %1803 = vmatprep.subr.mxu0 0.0
      %1804 = vmatpush1.xpose.msra.mxu0 0.0
      %1805 = vmatprep.subr.mxu0 0.0
      %1806 = vmatpush1.xpose.msra.mxu0 0.0
      %1807 = vmatprep.subr.mxu0 0.0
      %1808 = vmatpush1.xpose.msra.mxu0 0.0
      %1809 = vmatprep.subr.mxu0 0.0
      %1810 = vmatpush1.xpose.msra.mxu0 0.0
      %1811 = vmatprep.subr.mxu0 0.0
      %1812 = vmatpush1.xpose.msra.mxu0 %v1783
      %1813 = vmatprep.subr.mxu0 0.0
      %1814 = vmatpush1.xpose.msra.mxu0 %v1781
      %1815 = vmatprep.subr.mxu0 0.0
      %1816 = vmatpush1.xpose.msra.mxu0 %v1779
      %1817 = vmatprep.subr.mxu0 0.0
      %1818 = vmatpush2.xpose.msra.mxu0 0.0
      %1819 = vmatprep.subr.mxu0 0.0
      %1820 = vmatpush2.xpose.msra.mxu0 0.0
      %1821 = vmatprep.subr.mxu0 0.0
      %1822 = vmatpush2.xpose.msra.mxu0 0.0
      %1823 = vmatprep.subr.mxu0 0.0
      %1824 = vmatpush2.xpose.msra.mxu0 0.0
      %1825 = vmatprep.subr.mxu0 0.0
      %1826 = vmatpush2.xpose.msra.mxu0 0.0
      %1827 = vmatprep.subr.mxu0 0.0
      %1828 = vmatpush2.xpose.msra.mxu0 0.0
      %1829 = vmatprep.subr.mxu0 0.0
      %1830 = vmatpush2.xpose.msra.mxu0 0.0
      %1831 = vmatprep.subr.mxu0 0.0
      %1832 = vmatpush2.xpose.msra.mxu0 0.0
      %1833 = vmatprep.subr.mxu0 0.0
      %1834 = vmatpush2.xpose.msra.mxu0 0.0
      %1835 = vmatprep.subr.mxu0 0.0
      %1836 = vmatpush2.xpose.msra.mxu0 0.0
      %1837 = vmatprep.subr.mxu0 0.0
      %1838 = vmatpush2.xpose.msra.mxu0 0.0
      %1839 = vmatprep.subr.mxu0 0.0
      %1840 = vmatpush2.xpose.msra.mxu0 0.0
      %1841 = vmatprep.subr.mxu0 0.0
      %1842 = vmatpush2.xpose.msra.mxu0 0.0
      %1843 = vmatprep.subr.mxu0 0.0
      %1844 = vmatpush2.xpose.msra.mxu0 0.0
      %1845 = vmatprep.subr.mxu0 0.0
      %1846 = vmatpush2.xpose.msra.mxu0 0.0
      %1847 = vmatprep.subr.mxu0 0.0
      %1848 = vmatpush2.xpose.msra.mxu0 0.0
      %1849 = vmatprep.mubr.f32.mxu0 0.0
      %1850 = vmatmul.mubr.f32.gmra.mxu0 %v1773
      %v1851 = vpop.f32.mrf.mxu0
      %v1852 = vadd.f32 0.0, %v1851
      %v1853 = vpop.f32.mrf.mxu0
      %1854 = vmatprep.mubr.f32.mxu0 0.0
      %1855 = vmatmul.mubr.f32.gmra.mxu0 %v1775
      %v1856 = vpop.f32.mrf.mxu0
      %v1857 = vadd.f32 0.0, %v1856
      %v1858 = vpop.f32.mrf.mxu0
      %1859 = vmatprep.mubr.f32.mxu0 0.0
      %1860 = vmatmul.mubr.f32.gmra.mxu0 %v1777
      %v1861 = vpop.f32.mrf.mxu0
      %v1862 = vadd.f32 0.0, %v1861
      %v1863 = vpop.f32.mrf.mxu0
      %1864 = vdwg.mxu0
      %v1865 = vmul.f32 %v1852, 0.17677669
      %v1866 = vmul.f32 %v1857, 0.17677669
      %v1867 = vmul.f32 %v1862, 0.17677669
      %v1868 = vsel %vm964, %v1865, -inf
      %1869 = vmax.xlane.f32.xlu0 %v1868
      %v1870 = vpop.xlane.xlu0 %1869
      %v1871 = vsel %vm964, %v1866, -inf
      %1872 = vmax.xlane.f32.xlu0 %v1871
      %v1873 = vpop.xlane.xlu0 %1872
      %v1874 = vsel %vm971, %v1867, -inf
      %1875 = vmax.xlane.f32.xlu0 %v1874
      %v1876 = vpop.xlane.xlu0 %1875
      %v1877 = vsub.f32 %v1865, %v1870
      %v1878 = vsub.f32 %v1866, %v1873
      %v1879 = vsub.f32 %v1867, %v1876
      %v1880 = vmul.f32 %v1877, 1.442695
      %v1881 = vpow.pop %v1880
      %v1882 = vmul.f32 %v1878, 1.442695
      %v1883 = vpow.pop %v1882
      %v1884 = vmul.f32 %v1879, 1.442695
      %v1885 = vpow.pop %v1884
      %v1886 = vsel %vm964, %v1881, 0.0
      %1887 = vadd.xlane.f32.xlu0 %v1886
      %v1888 = vpop.xlane.xlu0 %1887
      %v1889 = vsel %vm964, %v1883, 0.0
      %1890 = vadd.xlane.f32.xlu0 %v1889
      %v1891 = vpop.xlane.xlu0 %1890
      %v1892 = vsel %vm971, %v1885, 0.0
      %1893 = vadd.xlane.f32.xlu0 %v1892
      %v1894 = vpop.xlane.xlu0 %1893
      %v1895 = vrcp.pop %v1888
      %v1896 = vrcp.pop %v1891
      %v1897 = vrcp.pop %v1894
      %v1898 = vmul.f32 %v1881, %v1895
      %v1899 = vmul.f32 %v1883, %v1896
      %v1900 = vmul.f32 %v1885, %v1897
      %1901 = vrot.lane.b32.xlu0 %v1751, 64
      %v1902 = vpop.permute.xlu0 %1901
      %1903 = vrot.lane.b32.xlu0 %v1756, 64
      %v1904 = vpop.permute.xlu0 %1903
      %1905 = vrot.lane.b32.xlu0 %v1761, 64
      %v1906 = vpop.permute.xlu0 %1905
      %v1910 = vsel %vm964, %v1898, 0
      %v1913 = vsel %vm964, %v1899, 0
      %v1916 = vsel %vm964, %v1900, 0
      %v1918 = vsel %vm1016, %v1906, 0
      %1920 = vmatprep.subr.mxu0 0.0
      %1921 = vmatpush1.msra.mxu0 0.0
      %1922 = vmatprep.subr.mxu0 0.0
      %1923 = vmatpush1.msra.mxu0 0.0
      %1924 = vmatprep.subr.mxu0 0.0
      %1925 = vmatpush1.msra.mxu0 0.0
      %1926 = vmatprep.subr.mxu0 0.0
      %1927 = vmatpush1.msra.mxu0 0.0
      %1928 = vmatprep.subr.mxu0 0.0
      %1929 = vmatpush1.msra.mxu0 0.0
      %1930 = vmatprep.subr.mxu0 0.0
      %1931 = vmatpush1.msra.mxu0 0.0
      %1932 = vmatprep.subr.mxu0 0.0
      %1933 = vmatpush1.msra.mxu0 0.0
      %1934 = vmatprep.subr.mxu0 0.0
      %1935 = vmatpush1.msra.mxu0 0.0
      %1936 = vmatprep.subr.mxu0 0.0
      %1937 = vmatpush1.msra.mxu0 0.0
      %1938 = vmatprep.subr.mxu0 0.0
      %1939 = vmatpush1.msra.mxu0 0.0
      %1940 = vmatprep.subr.mxu0 0.0
      %1941 = vmatpush1.msra.mxu0 0.0
      %1942 = vmatprep.subr.mxu0 0.0
      %1943 = vmatpush1.msra.mxu0 0.0
      %1944 = vmatprep.subr.mxu0 0.0
      %1945 = vmatpush1.msra.mxu0 0.0
      %1946 = vmatprep.subr.mxu0 0.0
      %1947 = vmatpush1.msra.mxu0 %v1918
      %1948 = vmatprep.subr.mxu0 0.0
      %1949 = vmatpush1.msra.mxu0 %v1904
      %1950 = vmatprep.subr.mxu0 0.0
      %1951 = vmatpush1.msra.mxu0 %v1902
      %1952 = vmatprep.subr.mxu0 0.0
      %1953 = vmatpush2.msra.mxu0 0.0
      %1954 = vmatprep.subr.mxu0 0.0
      %1955 = vmatpush2.msra.mxu0 0.0
      %1956 = vmatprep.subr.mxu0 0.0
      %1957 = vmatpush2.msra.mxu0 0.0
      %1958 = vmatprep.subr.mxu0 0.0
      %1959 = vmatpush2.msra.mxu0 0.0
      %1960 = vmatprep.subr.mxu0 0.0
      %1961 = vmatpush2.msra.mxu0 0.0
      %1962 = vmatprep.subr.mxu0 0.0
      %1963 = vmatpush2.msra.mxu0 0.0
      %1964 = vmatprep.subr.mxu0 0.0
      %1965 = vmatpush2.msra.mxu0 0.0
      %1966 = vmatprep.subr.mxu0 0.0
      %1967 = vmatpush2.msra.mxu0 0.0
      %1968 = vmatprep.subr.mxu0 0.0
      %1969 = vmatpush2.msra.mxu0 0.0
      %1970 = vmatprep.subr.mxu0 0.0
      %1971 = vmatpush2.msra.mxu0 0.0
      %1972 = vmatprep.subr.mxu0 0.0
      %1973 = vmatpush2.msra.mxu0 0.0
      %1974 = vmatprep.subr.mxu0 0.0
      %1975 = vmatpush2.msra.mxu0 0.0
      %1976 = vmatprep.subr.mxu0 0.0
      %1977 = vmatpush2.msra.mxu0 0.0
      %1978 = vmatprep.subr.mxu0 0.0
      %1979 = vmatpush2.msra.mxu0 0.0
      %1980 = vmatprep.subr.mxu0 0.0
      %1981 = vmatpush2.msra.mxu0 0.0
      %1982 = vmatprep.subr.mxu0 0.0
      %1983 = vmatpush2.msra.mxu0 0.0
      %1984 = vmatprep.mubr.f32.mxu0 0.0
      %1985 = vmatmul.mubr.f32.gmra.mxu0 %v1910
      %v1986 = vpop.f32.mrf.mxu0
      %v1987 = vadd.f32 0.0, %v1986
      %v1988 = vpop.f32.mrf.mxu0
      %1989 = vmatprep.mubr.f32.mxu0 0.0
      %1990 = vmatmul.mubr.f32.gmra.mxu0 %v1913
      %v1991 = vpop.f32.mrf.mxu0
      %v1992 = vadd.f32 0.0, %v1991
      %v1993 = vpop.f32.mrf.mxu0
      %1994 = vmatprep.mubr.f32.mxu0 0.0
      %1995 = vmatmul.mubr.f32.gmra.mxu0 %v1916
      %v1996 = vpop.f32.mrf.mxu0
      %v1997 = vadd.f32 0.0, %v1996
      %v1998 = vpop.f32.mrf.mxu0
      %1999 = vdwg.mxu0
      %v2001 = vsel %vm657, %v1987, 0
      %v2004 = vsel %vm657, %v1992, 0
      %v2007 = vsel %vm657, %v1997, 0
      %2009 = vmatprep.subr.mxu0 0.0
      %2010 = vmatpush1.msra.mxu0 0.0
      %2011 = vmatprep.subr.mxu0 0.0
      %2012 = vmatpush1.msra.mxu0 0.0
      %2013 = vmatprep.subr.mxu0 0.0
      %2014 = vmatpush1.msra.mxu0 0.0
      %2015 = vmatprep.subr.mxu0 0.0
      %2016 = vmatpush1.msra.mxu0 0.0
      %2017 = vmatprep.subr.mxu0 0.0
      %2018 = vmatpush1.msra.mxu0 0.0
      %2019 = vmatprep.subr.mxu0 0.0
      %2020 = vmatpush1.msra.mxu0 0.0
      %2021 = vmatprep.subr.mxu0 0.0
      %2022 = vmatpush1.msra.mxu0 0.0
      %2023 = vmatprep.subr.mxu0 0.0
      %2024 = vmatpush1.msra.mxu0 0.0
      %2025 = vmatprep.subr.mxu0 0.0
      %2026 = vmatpush1.msra.mxu0 0.0
      %2027 = vmatprep.subr.mxu0 0.0
      %2028 = vmatpush1.msra.mxu0 0.0
      %2029 = vmatprep.subr.mxu0 0.0
      %2030 = vmatpush1.msra.mxu0 0.0
      %2031 = vmatprep.subr.mxu0 0.0
      %2032 = vmatpush1.msra.mxu0 0.0
      %2033 = vmatprep.subr.mxu0 0.0
      %2034 = vmatpush1.msra.mxu0 %v678
      %2035 = vmatprep.subr.mxu0 0.0
      %2036 = vmatpush1.msra.mxu0 %v677
      %2037 = vmatprep.subr.mxu0 0.0
      %2038 = vmatpush1.msra.mxu0 %v676
      %2039 = vmatprep.subr.mxu0 0.0
      %2040 = vmatpush1.msra.mxu0 %v675
      %2041 = vmatprep.subr.mxu0 0.0
      %2042 = vmatpush2.msra.mxu0 0.0
      %2043 = vmatprep.subr.mxu0 0.0
      %2044 = vmatpush2.msra.mxu0 0.0
      %2045 = vmatprep.subr.mxu0 0.0
      %2046 = vmatpush2.msra.mxu0 0.0
      %2047 = vmatprep.subr.mxu0 0.0
      %2048 = vmatpush2.msra.mxu0 0.0
      %2049 = vmatprep.subr.mxu0 0.0
      %2050 = vmatpush2.msra.mxu0 0.0
      %2051 = vmatprep.subr.mxu0 0.0
      %2052 = vmatpush2.msra.mxu0 0.0
      %2053 = vmatprep.subr.mxu0 0.0
      %2054 = vmatpush2.msra.mxu0 0.0
      %2055 = vmatprep.subr.mxu0 0.0
      %2056 = vmatpush2.msra.mxu0 0.0
      %2057 = vmatprep.subr.mxu0 0.0
      %2058 = vmatpush2.msra.mxu0 0.0
      %2059 = vmatprep.subr.mxu0 0.0
      %2060 = vmatpush2.msra.mxu0 0.0
      %2061 = vmatprep.subr.mxu0 0.0
      %2062 = vmatpush2.msra.mxu0 0.0
      %2063 = vmatprep.subr.mxu0 0.0
      %2064 = vmatpush2.msra.mxu0 0.0
      %2065 = vmatprep.subr.mxu0 0.0
      %2066 = vmatpush2.msra.mxu0 0.0
      %2067 = vmatprep.subr.mxu0 0.0
      %2068 = vmatpush2.msra.mxu0 0.0
      %2069 = vmatprep.subr.mxu0 0.0
      %2070 = vmatpush2.msra.mxu0 0.0
      %2071 = vmatprep.subr.mxu0 0.0
      %2072 = vmatpush2.msra.mxu0 0.0
      %2073 = vmatprep.mubr.f32.mxu0 0.0
      %2074 = vmatmul.mubr.f32.gmra.mxu0 %v2001
      %v2075 = vpop.f32.mrf.mxu0
      %v2076 = vadd.f32 0.0, %v2075
      %v2077 = vpop.f32.mrf.mxu0
      %2078 = vmatprep.mubr.f32.mxu0 0.0
      %2079 = vmatmul.mubr.f32.gmra.mxu0 %v2004
      %v2080 = vpop.f32.mrf.mxu0
      %v2081 = vadd.f32 0.0, %v2080
      %v2082 = vpop.f32.mrf.mxu0
      %2083 = vmatprep.mubr.f32.mxu0 0.0
      %2084 = vmatmul.mubr.f32.gmra.mxu0 %v2007
      %v2085 = vpop.f32.mrf.mxu0
      %v2086 = vadd.f32 0.0, %v2085
      %v2087 = vpop.f32.mrf.mxu0
      %2088 = vdwg.mxu0
      %v2089 = vadd.f32 %v1627, %v2076
      %v2090 = vadd.f32 %v1628, %v2081
      %v2091 = vadd.f32 %v1629, %v2086
      %v2092 = vadd.f32 %v2089, %v1195
      %v2093 = vadd.f32 %v2090, %v1195
      %v2094 = vadd.f32 %v2091, %v1195
      %v2095 = vsel %vm657, %v2092, 0.0
      %2096 = vadd.xlane.f32.xlu0 %v2095
      %v2097 = vpop.xlane.xlu0 %2096
      %v2098 = vsel %vm657, %v2093, 0.0
      %2099 = vadd.xlane.f32.xlu0 %v2098
      %v2100 = vpop.xlane.xlu0 %2099
      %v2101 = vsel %vm700, %v2094, 0.0
      %2102 = vadd.xlane.f32.xlu0 %v2101
      %v2103 = vpop.xlane.xlu0 %2102
      %v2104 = vmul.f32 %v2097, %v720
      %v2105 = vmul.f32 %v2100, %v720
      %v2106 = vmul.f32 %v2103, %v720
      %v2107 = vsub.f32 %v2092, %v2104
      %v2108 = vsub.f32 %v2093, %v2105
      %v2109 = vsub.f32 %v2094, %v2106
      %v2110 = vmul.f32 %v2107, %v2107
      %v2111 = vmul.f32 %v2108, %v2108
      %v2112 = vmul.f32 %v2109, %v2109
      %v2113 = vsel %vm657, %v2110, 0.0
      %2114 = vadd.xlane.f32.xlu0 %v2113
      %v2115 = vpop.xlane.xlu0 %2114
      %v2116 = vsel %vm657, %v2111, 0.0
      %2117 = vadd.xlane.f32.xlu0 %v2116
      %v2118 = vpop.xlane.xlu0 %2117
      %v2119 = vsel %vm700, %v2112, 0.0
      %2120 = vadd.xlane.f32.xlu0 %v2119
      %v2121 = vpop.xlane.xlu0 %2120
      %v2122 = vmul.f32 %v2115, %v720
      %v2123 = vmul.f32 %v2118, %v720
      %v2124 = vmul.f32 %v2121, %v720
      %v2125 = vadd.f32 %v2122, 1e-05
      %v2126 = vadd.f32 %v2123, 1e-05
      %v2127 = vadd.f32 %v2124, 1e-05
      %v2128 = vrsqrt.pop %v2125
      %v2129 = vrsqrt.pop %v2126
      %v2130 = vrsqrt.pop %v2127
      %v2131 = vmul.f32 %v2107, %v2128
      %v2132 = vmul.f32 %v2108, %v2129
      %v2133 = vmul.f32 %v2109, %v2130
      %v2134 = vmul.f32 %v2131, %v1242
      %v2135 = vmul.f32 %v2132, %v1242
      %v2136 = vmul.f32 %v2133, %v1242
      %v2137 = vadd.f32 %v2134, %v1249
      %v2138 = vadd.f32 %v2135, %v1249
      %v2139 = vadd.f32 %v2136, %v1249
      %v2141 = vsel %vm657, %v2137, 0
      %v2144 = vsel %vm657, %v2138, 0
      %v2147 = vsel %vm657, %v2139, 0
      %2149 = vmatprep.subr.mxu0 0.0
      %2150 = vmatpush1.msra.mxu0 0.0
      %2151 = vmatprep.subr.mxu0 0.0
      %2152 = vmatpush1.msra.mxu0 0.0
      %2153 = vmatprep.subr.mxu0 0.0
      %2154 = vmatpush1.msra.mxu0 0.0
      %2155 = vmatprep.subr.mxu0 0.0
      %2156 = vmatpush1.msra.mxu0 0.0
      %2157 = vmatprep.subr.mxu0 0.0
      %2158 = vmatpush1.msra.mxu0 0.0
      %2159 = vmatprep.subr.mxu0 0.0
      %2160 = vmatpush1.msra.mxu0 0.0
      %2161 = vmatprep.subr.mxu0 0.0
      %2162 = vmatpush1.msra.mxu0 0.0
      %2163 = vmatprep.subr.mxu0 0.0
      %2164 = vmatpush1.msra.mxu0 0.0
      %2165 = vmatprep.subr.mxu0 0.0
      %2166 = vmatpush1.msra.mxu0 0.0
      %2167 = vmatprep.subr.mxu0 0.0
      %2168 = vmatpush1.msra.mxu0 0.0
      %2169 = vmatprep.subr.mxu0 0.0
      %2170 = vmatpush1.msra.mxu0 0.0
      %2171 = vmatprep.subr.mxu0 0.0
      %2172 = vmatpush1.msra.mxu0 0.0
      %2173 = vmatprep.subr.mxu0 0.0
      %2174 = vmatpush1.msra.mxu0 %v683
      %2175 = vmatprep.subr.mxu0 0.0
      %2176 = vmatpush1.msra.mxu0 %v682
      %2177 = vmatprep.subr.mxu0 0.0
      %2178 = vmatpush1.msra.mxu0 %v681
      %2179 = vmatprep.subr.mxu0 0.0
      %2180 = vmatpush1.msra.mxu0 %v680
      %2181 = vmatprep.subr.mxu0 0.0
      %2182 = vmatpush2.msra.mxu0 0.0
      %2183 = vmatprep.subr.mxu0 0.0
      %2184 = vmatpush2.msra.mxu0 0.0
      %2185 = vmatprep.subr.mxu0 0.0
      %2186 = vmatpush2.msra.mxu0 0.0
      %2187 = vmatprep.subr.mxu0 0.0
      %2188 = vmatpush2.msra.mxu0 0.0
      %2189 = vmatprep.subr.mxu0 0.0
      %2190 = vmatpush2.msra.mxu0 0.0
      %2191 = vmatprep.subr.mxu0 0.0
      %2192 = vmatpush2.msra.mxu0 0.0
      %2193 = vmatprep.subr.mxu0 0.0
      %2194 = vmatpush2.msra.mxu0 0.0
      %2195 = vmatprep.subr.mxu0 0.0
      %2196 = vmatpush2.msra.mxu0 0.0
      %2197 = vmatprep.subr.mxu0 0.0
      %2198 = vmatpush2.msra.mxu0 0.0
      %2199 = vmatprep.subr.mxu0 0.0
      %2200 = vmatpush2.msra.mxu0 0.0
      %2201 = vmatprep.subr.mxu0 0.0
      %2202 = vmatpush2.msra.mxu0 0.0
      %2203 = vmatprep.subr.mxu0 0.0
      %2204 = vmatpush2.msra.mxu0 0.0
      %2205 = vmatprep.subr.mxu0 0.0
      %2206 = vmatpush2.msra.mxu0 0.0
      %2207 = vmatprep.subr.mxu0 0.0
      %2208 = vmatpush2.msra.mxu0 0.0
      %2209 = vmatprep.subr.mxu0 0.0
      %2210 = vmatpush2.msra.mxu0 0.0
      %2211 = vmatprep.subr.mxu0 0.0
      %2212 = vmatpush2.msra.mxu0 0.0
      %2213 = vmatprep.mubr.f32.mxu0 0.0
      %2214 = vmatmul.mubr.f32.gmra.mxu0 %v2141
      %v2215 = vpop.f32.mrf.mxu0
      %v2216 = vadd.f32 %v1257, %v2215
      %v2217 = vpop.f32.mrf.mxu0
      %2218 = vmatprep.mubr.f32.mxu0 0.0
      %2219 = vmatmul.mubr.f32.gmra.mxu0 %v2144
      %v2220 = vpop.f32.mrf.mxu0
      %v2221 = vadd.f32 %v1257, %v2220
      %v2222 = vpop.f32.mrf.mxu0
      %2223 = vmatprep.mubr.f32.mxu0 0.0
      %2224 = vmatmul.mubr.f32.gmra.mxu0 %v2147
      %v2225 = vpop.f32.mrf.mxu0
      %v2226 = vadd.f32 %v1257, %v2225
      %v2227 = vpop.f32.mrf.mxu0
      %2228 = vdwg.mxu0
      %v2229 = vmul.f32 %v2216, 0.5
      %v2230 = vmul.f32 %v2221, 0.5
      %v2231 = vmul.f32 %v2226, 0.5
      %v2232 = vmul.f32 %v2216, 0.70710677
      %v2233 = vmul.f32 %v2221, 0.70710677
      %v2234 = vmul.f32 %v2226, 0.70710677
      %vm2235 = vcmp.lt.f32.partialorder %v2232, 0.0
      %vm2236 = vcmp.lt.f32.partialorder %v2233, 0.0
      %vm2237 = vcmp.lt.f32.partialorder %v2234, 0.0
      %v2238 = vsel %vm2235, -1.0, 1.0
      %v2239 = vsel %vm2236, -1.0, 1.0
      %v2240 = vsel %vm2237, -1.0, 1.0
      %v2241 = vand.u32 2147483647, %v2232
      %v2242 = vand.u32 2147483647, %v2233
      %v2243 = vand.u32 2147483647, %v2234
      %v2244 = vmul.f32 %v2241, 0.3275911
      %v2245 = vmul.f32 %v2242, 0.3275911
      %v2246 = vmul.f32 %v2243, 0.3275911
      %v2247 = vadd.f32 %v2244, 1.0
      %v2248 = vadd.f32 %v2245, 1.0
      %v2249 = vadd.f32 %v2246, 1.0
      %v2250 = vrcp.pop %v2247
      %v2251 = vmul.f32 1.0, %v2250
      %v2252 = vrcp.pop %v2248
      %v2253 = vmul.f32 1.0, %v2252
      %v2254 = vrcp.pop %v2249
      %v2255 = vmul.f32 1.0, %v2254
      %v2256 = vmul.f32 %v2251, 1.0614054
      %v2257 = vmul.f32 %v2253, 1.0614054
      %v2258 = vmul.f32 %v2255, 1.0614054
      %v2259 = vadd.f32 %v2256, -1.4531521
      %v2260 = vadd.f32 %v2257, -1.4531521
      %v2261 = vadd.f32 %v2258, -1.4531521
      %v2262 = vmul.f32 %v2259, %v2251
      %v2263 = vmul.f32 %v2260, %v2253
      %v2264 = vmul.f32 %v2261, %v2255
      %v2265 = vadd.f32 %v2262, 1.4214138
      %v2266 = vadd.f32 %v2263, 1.4214138
      %v2267 = vadd.f32 %v2264, 1.4214138
      %v2268 = vmul.f32 %v2265, %v2251
      %v2269 = vmul.f32 %v2266, %v2253
      %v2270 = vmul.f32 %v2267, %v2255
      %v2271 = vadd.f32 %v2268, -0.28449672
      %v2272 = vadd.f32 %v2269, -0.28449672
      %v2273 = vadd.f32 %v2270, -0.28449672
      %v2274 = vmul.f32 %v2271, %v2251
      %v2275 = vmul.f32 %v2272, %v2253
      %v2276 = vmul.f32 %v2273, %v2255
      %v2277 = vadd.f32 %v2274, 0.2548296
      %v2278 = vadd.f32 %v2275, 0.2548296
      %v2279 = vadd.f32 %v2276, 0.2548296
      %v2280 = vmul.f32 %v2277, %v2251
      %v2281 = vmul.f32 %v2278, %v2253
      %v2282 = vmul.f32 %v2279, %v2255
      %v2283 = vsub.f32 0.0, %v2241
      %v2284 = vsub.f32 0.0, %v2242
      %v2285 = vsub.f32 0.0, %v2243
      %v2286 = vmul.f32 %v2283, %v2241
      %v2287 = vmul.f32 %v2284, %v2242
      %v2288 = vmul.f32 %v2285, %v2243
      %v2289 = vmul.f32 %v2286, 1.442695
      %v2290 = vpow.pop %v2289
      %v2291 = vmul.f32 %v2287, 1.442695
      %v2292 = vpow.pop %v2291
      %v2293 = vmul.f32 %v2288, 1.442695
      %v2294 = vpow.pop %v2293
      %v2295 = vmul.f32 %v2280, %v2290
      %v2296 = vmul.f32 %v2281, %v2292
      %v2297 = vmul.f32 %v2282, %v2294
      %v2298 = vsub.f32 1.0, %v2295
      %v2299 = vsub.f32 1.0, %v2296
      %v2300 = vsub.f32 1.0, %v2297
      %v2301 = vmul.f32 %v2238, %v2298
      %v2302 = vmul.f32 %v2239, %v2299
      %v2303 = vmul.f32 %v2240, %v2300
      %v2304 = vadd.f32 %v2301, 1.0
      %v2305 = vadd.f32 %v2302, 1.0
      %v2306 = vadd.f32 %v2303, 1.0
      %v2307 = vmul.f32 %v2229, %v2304
      %v2308 = vmul.f32 %v2230, %v2305
      %v2309 = vmul.f32 %v2231, %v2306
      %v2311 = vsel %vm559, %v2307, 0
      %v2314 = vsel %vm559, %v2308, 0
      %v2317 = vsel %vm559, %v2309, 0
      %2319 = vmatprep.subr.mxu0 0.0
      %2320 = vmatpush1.msra.mxu0 0.0
      %2321 = vmatprep.subr.mxu0 0.0
      %2322 = vmatpush1.msra.mxu0 0.0
      %2323 = vmatprep.subr.mxu0 0.0
      %2324 = vmatpush1.msra.mxu0 0.0
      %2325 = vmatprep.subr.mxu0 0.0
      %2326 = vmatpush1.msra.mxu0 0.0
      %2327 = vmatprep.subr.mxu0 0.0
      %2328 = vmatpush1.msra.mxu0 0.0
      %2329 = vmatprep.subr.mxu0 0.0
      %2330 = vmatpush1.msra.mxu0 0.0
      %2331 = vmatprep.subr.mxu0 0.0
      %2332 = vmatpush1.msra.mxu0 0.0
      %2333 = vmatprep.subr.mxu0 0.0
      %2334 = vmatpush1.msra.mxu0 0.0
      %2335 = vmatprep.subr.mxu0 0.0
      %2336 = vmatpush1.msra.mxu0 %v692
      %2337 = vmatprep.subr.mxu0 0.0
      %2338 = vmatpush1.msra.mxu0 %v691
      %2339 = vmatprep.subr.mxu0 0.0
      %2340 = vmatpush1.msra.mxu0 %v690
      %2341 = vmatprep.subr.mxu0 0.0
      %2342 = vmatpush1.msra.mxu0 %v689
      %2343 = vmatprep.subr.mxu0 0.0
      %2344 = vmatpush1.msra.mxu0 %v688
      %2345 = vmatprep.subr.mxu0 0.0
      %2346 = vmatpush1.msra.mxu0 %v687
      %2347 = vmatprep.subr.mxu0 0.0
      %2348 = vmatpush1.msra.mxu0 %v686
      %2349 = vmatprep.subr.mxu0 0.0
      %2350 = vmatpush1.msra.mxu0 %v685
      %2351 = vmatprep.subr.mxu0 0.0
      %2352 = vmatpush2.msra.mxu0 0.0
      %2353 = vmatprep.subr.mxu0 0.0
      %2354 = vmatpush2.msra.mxu0 0.0
      %2355 = vmatprep.subr.mxu0 0.0
      %2356 = vmatpush2.msra.mxu0 0.0
      %2357 = vmatprep.subr.mxu0 0.0
      %2358 = vmatpush2.msra.mxu0 0.0
      %2359 = vmatprep.subr.mxu0 0.0
      %2360 = vmatpush2.msra.mxu0 0.0
      %2361 = vmatprep.subr.mxu0 0.0
      %2362 = vmatpush2.msra.mxu0 0.0
      %2363 = vmatprep.subr.mxu0 0.0
      %2364 = vmatpush2.msra.mxu0 0.0
      %2365 = vmatprep.subr.mxu0 0.0
      %2366 = vmatpush2.msra.mxu0 0.0
      %2367 = vmatprep.subr.mxu0 0.0
      %2368 = vmatpush2.msra.mxu0 0.0
      %2369 = vmatprep.subr.mxu0 0.0
      %2370 = vmatpush2.msra.mxu0 0.0
      %2371 = vmatprep.subr.mxu0 0.0
      %2372 = vmatpush2.msra.mxu0 0.0
      %2373 = vmatprep.subr.mxu0 0.0
      %2374 = vmatpush2.msra.mxu0 0.0
      %2375 = vmatprep.subr.mxu0 0.0
      %2376 = vmatpush2.msra.mxu0 0.0
      %2377 = vmatprep.subr.mxu0 0.0
      %2378 = vmatpush2.msra.mxu0 0.0
      %2379 = vmatprep.subr.mxu0 0.0
      %2380 = vmatpush2.msra.mxu0 0.0
      %2381 = vmatprep.subr.mxu0 0.0
      %2382 = vmatpush2.msra.mxu0 0.0
      %2383 = vmatprep.mubr.f32.mxu0 0.0
      %2384 = vmatmul.mubr.f32.gmra.mxu0 %v2311
      %v2385 = vpop.f32.mrf.mxu0
      %v2386 = vadd.f32 %v1433, %v2385
      %v2387 = vpop.f32.mrf.mxu0
      %2388 = vmatprep.mubr.f32.mxu0 0.0
      %2389 = vmatmul.mubr.f32.gmra.mxu0 %v2314
      %v2390 = vpop.f32.mrf.mxu0
      %v2391 = vpop.f32.mrf.mxu0
      %2392 = vmatprep.mubr.f32.mxu0 0.0
      %2393 = vmatmul.mubr.f32.gmra.mxu0 %v2317
      %v2394 = vpop.f32.mrf.mxu0
      %v2395 = vpop.f32.mrf.mxu0
      %2396 = vdwg.mxu0
      %v2397 = vadd.f32 %v2092, %v2386
      %v2398 = vsel %vm657, %v2397, 0.0
      %2399 = vadd.xlane.f32.xlu0 %v2398
      %v2400 = vpop.xlane.xlu0 %2399
      %v2401 = vmul.f32 %v2400, %v720
      %v2402 = vsub.f32 %v2397, %v2401
      %v2403 = vmul.f32 %v2402, %v2402
      %v2404 = vsel %vm657, %v2403, 0.0
      %2405 = vadd.xlane.f32.xlu0 %v2404
      %v2406 = vpop.xlane.xlu0 %2405
      %v2407 = vmul.f32 %v2406, %v720
      %v2408 = vadd.f32 %v2407, 1e-05
      %v2409 = vrsqrt.pop %v2408
      %v2410 = vmul.f32 %v2402, %v2409
      %v2411 = vmul.f32 %v2410, %v1539
      %v2412 = vadd.f32 %v2411, %v1544
      %v2414 = vsel %vm657, %v2412, 0
      %2416 = vmatprep.subr.mxu0 0.0
      %2417 = vmatpush1.msra.mxu0 0.0
      %2418 = vmatprep.subr.mxu0 0.0
      %2419 = vmatpush1.msra.mxu0 0.0
      %2420 = vmatprep.subr.mxu0 0.0
      %2421 = vmatpush1.msra.mxu0 0.0
      %2422 = vmatprep.subr.mxu0 0.0
      %2423 = vmatpush1.msra.mxu0 0.0
      %2424 = vmatprep.subr.mxu0 0.0
      %2425 = vmatpush1.msra.mxu0 0.0
      %2426 = vmatprep.subr.mxu0 0.0
      %2427 = vmatpush1.msra.mxu0 0.0
      %2428 = vmatprep.subr.mxu0 0.0
      %2429 = vmatpush1.msra.mxu0 0.0
      %2430 = vmatprep.subr.mxu0 0.0
      %2431 = vmatpush1.msra.mxu0 0.0
      %2432 = vmatprep.subr.mxu0 0.0
      %2433 = vmatpush1.msra.mxu0 0.0
      %2434 = vmatprep.subr.mxu0 0.0
      %2435 = vmatpush1.msra.mxu0 0.0
      %2436 = vmatprep.subr.mxu0 0.0
      %2437 = vmatpush1.msra.mxu0 0.0
      %2438 = vmatprep.subr.mxu0 0.0
      %2439 = vmatpush1.msra.mxu0 0.0
      %2440 = vmatprep.subr.mxu0 0.0
      %2441 = vmatpush1.msra.mxu0 %v697
      %2442 = vmatprep.subr.mxu0 0.0
      %2443 = vmatpush1.msra.mxu0 %v696
      %2444 = vmatprep.subr.mxu0 0.0
      %2445 = vmatpush1.msra.mxu0 %v695
      %2446 = vmatprep.subr.mxu0 0.0
      %2447 = vmatpush1.msra.mxu0 %v694
      %2448 = vmatprep.subr.mxu0 0.0
      %2449 = vmatpush2.msra.mxu0 0.0
      %2450 = vmatprep.subr.mxu0 0.0
      %2451 = vmatpush2.msra.mxu0 0.0
      %2452 = vmatprep.subr.mxu0 0.0
      %2453 = vmatpush2.msra.mxu0 0.0
      %2454 = vmatprep.subr.mxu0 0.0
      %2455 = vmatpush2.msra.mxu0 0.0
      %2456 = vmatprep.subr.mxu0 0.0
      %2457 = vmatpush2.msra.mxu0 0.0
      %2458 = vmatprep.subr.mxu0 0.0
      %2459 = vmatpush2.msra.mxu0 0.0
      %2460 = vmatprep.subr.mxu0 0.0
      %2461 = vmatpush2.msra.mxu0 0.0
      %2462 = vmatprep.subr.mxu0 0.0
      %2463 = vmatpush2.msra.mxu0 0.0
      %2464 = vmatprep.subr.mxu0 0.0
      %2465 = vmatpush2.msra.mxu0 0.0
      %2466 = vmatprep.subr.mxu0 0.0
      %2467 = vmatpush2.msra.mxu0 0.0
      %2468 = vmatprep.subr.mxu0 0.0
      %2469 = vmatpush2.msra.mxu0 0.0
      %2470 = vmatprep.subr.mxu0 0.0
      %2471 = vmatpush2.msra.mxu0 0.0
      %2472 = vmatprep.subr.mxu0 0.0
      %2473 = vmatpush2.msra.mxu0 0.0
      %2474 = vmatprep.subr.mxu0 0.0
      %2475 = vmatpush2.msra.mxu0 0.0
      %2476 = vmatprep.subr.mxu0 0.0
      %2477 = vmatpush2.msra.mxu0 0.0
      %2478 = vmatprep.subr.mxu0 0.0
      %2479 = vmatpush2.msra.mxu0 0.0
      %2480 = vmatprep.mubr.f32.mxu0 0.0
      %2481 = vmatmul.mubr.f32.gmra.mxu0 %v2414
      %v2482 = vpop.f32.mrf.mxu0
      %v2483 = vadd.f32 %v698, %v2482
      %v2484 = vpop.f32.mrf.mxu0
      %2485 = vdwg.mxu0
      %2486 = vst.msk [vmem:[#allocation4 + $0x1] sm:$0x1] %vm1619, %v2483
      %v2487 = vld [vmem:[#allocation2 + $0x8] sm:$0xff]
      %v2488 = vld [vmem:[#allocation2 + $0x10] sm:$0xff]
      %v2489 = vadd.f32 %v2487, %v662
      %v2490 = vadd.f32 %v2488, %v663
      %2491 = vst.msk [vmem:[#allocation3 + $0x1] sm:$0xff] %vm657, %v2489
      %2492 = vst.msk [vmem:[#allocation3 + $0x9] sm:$0xff] %vm657, %v2490
      %v2493 = vld [vmem:[#allocation3] sm:$0xff]
      %v2494 = vld [vmem:[#allocation3 + $0x8] sm:$0xff]
      %v2495 = vld [vmem:[#allocation3 + $0x10] sm:$0x1]
      %v2496 = vsel %vm657, %v2493, 0.0
      %2497 = vadd.xlane.f32.xlu0 %v2496
      %v2498 = vpop.xlane.xlu0 %2497
      %v2499 = vsel %vm657, %v2494, 0.0
      %2500 = vadd.xlane.f32.xlu0 %v2499
      %v2501 = vpop.xlane.xlu0 %2500
      %v2502 = vsel %vm700, %v2495, 0.0
      %2503 = vadd.xlane.f32.xlu0 %v2502
      %v2504 = vpop.xlane.xlu0 %2503
      %v2505 = vmul.f32 %v2498, %v720
      %v2506 = vmul.f32 %v2501, %v720
      %v2507 = vmul.f32 %v2504, %v720
      %v2508 = vsub.f32 %v2493, %v2505
      %v2509 = vsub.f32 %v2494, %v2506
      %v2510 = vsub.f32 %v2495, %v2507
      %v2511 = vmul.f32 %v2508, %v2508
      %v2512 = vmul.f32 %v2509, %v2509
      %v2513 = vmul.f32 %v2510, %v2510
      %v2514 = vsel %vm657, %v2511, 0.0
      %2515 = vadd.xlane.f32.xlu0 %v2514
      %v2516 = vpop.xlane.xlu0 %2515
      %v2517 = vsel %vm657, %v2512, 0.0
      %2518 = vadd.xlane.f32.xlu0 %v2517
      %v2519 = vpop.xlane.xlu0 %2518
      %v2520 = vsel %vm700, %v2513, 0.0
      %2521 = vadd.xlane.f32.xlu0 %v2520
      %v2522 = vpop.xlane.xlu0 %2521
      %v2523 = vmul.f32 %v2516, %v720
      %v2524 = vmul.f32 %v2519, %v720
      %v2525 = vmul.f32 %v2522, %v720
      %v2526 = vadd.f32 %v2523, 1e-05
      %v2527 = vadd.f32 %v2524, 1e-05
      %v2528 = vadd.f32 %v2525, 1e-05
      %v2529 = vrsqrt.pop %v2526
      %v2530 = vrsqrt.pop %v2527
      %v2531 = vrsqrt.pop %v2528
      %v2532 = vmul.f32 %v2508, %v2529
      %v2533 = vmul.f32 %v2509, %v2530
      %v2534 = vmul.f32 %v2510, %v2531
      %v2535 = vmul.f32 %v2532, %v754
      %v2536 = vmul.f32 %v2533, %v754
      %v2537 = vmul.f32 %v2534, %v754
      %v2538 = vadd.f32 %v2535, %v761
      %v2539 = vadd.f32 %v2536, %v761
      %v2540 = vadd.f32 %v2537, %v761
      %v2542 = vsel %vm657, %v2538, 0
      %v2545 = vsel %vm657, %v2539, 0
      %v2548 = vsel %vm657, %v2540, 0
      %2550 = vmatprep.subr.mxu0 0.0
      %2551 = vmatpush1.msra.mxu0 0.0
      %2552 = vmatprep.subr.mxu0 0.0
      %2553 = vmatpush1.msra.mxu0 0.0
      %2554 = vmatprep.subr.mxu0 0.0
      %2555 = vmatpush1.msra.mxu0 0.0
      %2556 = vmatprep.subr.mxu0 0.0
      %2557 = vmatpush1.msra.mxu0 0.0
      %2558 = vmatprep.subr.mxu0 0.0
      %2559 = vmatpush1.msra.mxu0 0.0
      %2560 = vmatprep.subr.mxu0 0.0
      %2561 = vmatpush1.msra.mxu0 0.0
      %2562 = vmatprep.subr.mxu0 0.0
      %2563 = vmatpush1.msra.mxu0 0.0
      %2564 = vmatprep.subr.mxu0 0.0
      %2565 = vmatpush1.msra.mxu0 0.0
      %2566 = vmatprep.subr.mxu0 0.0
      %2567 = vmatpush1.msra.mxu0 0.0
      %2568 = vmatprep.subr.mxu0 0.0
      %2569 = vmatpush1.msra.mxu0 0.0
      %2570 = vmatprep.subr.mxu0 0.0
      %2571 = vmatpush1.msra.mxu0 0.0
      %2572 = vmatprep.subr.mxu0 0.0
      %2573 = vmatpush1.msra.mxu0 0.0
      %2574 = vmatprep.subr.mxu0 0.0
      %2575 = vmatpush1.msra.mxu0 %v673
      %2576 = vmatprep.subr.mxu0 0.0
      %2577 = vmatpush1.msra.mxu0 %v672
      %2578 = vmatprep.subr.mxu0 0.0
      %2579 = vmatpush1.msra.mxu0 %v671
      %2580 = vmatprep.subr.mxu0 0.0
      %2581 = vmatpush1.msra.mxu0 %v670
      %2582 = vmatprep.subr.mxu0 0.0
      %2583 = vmatpush2.msra.mxu0 0.0
      %2584 = vmatprep.subr.mxu0 0.0
      %2585 = vmatpush2.msra.mxu0 0.0
      %2586 = vmatprep.subr.mxu0 0.0
      %2587 = vmatpush2.msra.mxu0 0.0
      %2588 = vmatprep.subr.mxu0 0.0
      %2589 = vmatpush2.msra.mxu0 0.0
      %2590 = vmatprep.subr.mxu0 0.0
      %2591 = vmatpush2.msra.mxu0 0.0
      %2592 = vmatprep.subr.mxu0 0.0
      %2593 = vmatpush2.msra.mxu0 0.0
      %2594 = vmatprep.subr.mxu0 0.0
      %2595 = vmatpush2.msra.mxu0 0.0
      %2596 = vmatprep.subr.mxu0 0.0
      %2597 = vmatpush2.msra.mxu0 0.0
      %2598 = vmatprep.subr.mxu0 0.0
      %2599 = vmatpush2.msra.mxu0 0.0
      %2600 = vmatprep.subr.mxu0 0.0
      %2601 = vmatpush2.msra.mxu0 0.0
      %2602 = vmatprep.subr.mxu0 0.0
      %2603 = vmatpush2.msra.mxu0 0.0
      %2604 = vmatprep.subr.mxu0 0.0
      %2605 = vmatpush2.msra.mxu0 0.0
      %2606 = vmatprep.subr.mxu0 0.0
      %2607 = vmatpush2.msra.mxu0 0.0
      %2608 = vmatprep.subr.mxu0 0.0
      %2609 = vmatpush2.msra.mxu0 0.0
      %2610 = vmatprep.subr.mxu0 0.0
      %2611 = vmatpush2.msra.mxu0 0.0
      %2612 = vmatprep.subr.mxu0 0.0
      %2613 = vmatpush2.msra.mxu0 0.0
      %2614 = vmatprep.mubr.f32.mxu0 0.0
      %2615 = vmatmul.mubr.f32.gmra.mxu0 %v2542
      %v2616 = vpop.f32.mrf.mxu0
      %v2617 = vadd.f32 %v769, %v2616
      %v2618 = vpop.f32.mrf.mxu0
      %2619 = vmatprep.mubr.f32.mxu0 0.0
      %2620 = vmatmul.mubr.f32.gmra.mxu0 %v2545
      %v2621 = vpop.f32.mrf.mxu0
      %v2622 = vadd.f32 %v769, %v2621
      %v2623 = vpop.f32.mrf.mxu0
      %2624 = vmatprep.mubr.f32.mxu0 0.0
      %2625 = vmatmul.mubr.f32.gmra.mxu0 %v2548
      %v2626 = vpop.f32.mrf.mxu0
      %v2627 = vadd.f32 %v769, %v2626
      %v2628 = vpop.f32.mrf.mxu0
      %2629 = vdwg.mxu0
      %2633 = vrot.lane.b32.xlu0 %v2617, 96
      %v2634 = vpop.permute.xlu0 %2633
      %2635 = vrot.lane.b32.xlu0 %v2622, 96
      %v2636 = vpop.permute.xlu0 %2635
      %2637 = vrot.lane.b32.xlu0 %v2627, 96
      %v2638 = vpop.permute.xlu0 %2637
      %v2639 = vsel %vm657, %v2617, 0
      %v2641 = vsel %vm657, %v2622, 0
      %v2643 = vsel %vm657, %v2627, 0
      %v2645 = vsel %vm657, %v2634, 0
      %v2647 = vsel %vm657, %v2636, 0
      %v2649 = vsel %vm657, %v2638, 0
      %2651 = vmatprep.subr.mxu0 0.0
      %2652 = vmatpush1.xpose.msra.mxu0 0.0
      %2653 = vmatprep.subr.mxu0 0.0
      %2654 = vmatpush1.xpose.msra.mxu0 0.0
      %2655 = vmatprep.subr.mxu0 0.0
      %2656 = vmatpush1.xpose.msra.mxu0 0.0
      %2657 = vmatprep.subr.mxu0 0.0
      %2658 = vmatpush1.xpose.msra.mxu0 0.0
      %2659 = vmatprep.subr.mxu0 0.0
      %2660 = vmatpush1.xpose.msra.mxu0 0.0
      %2661 = vmatprep.subr.mxu0 0.0
      %2662 = vmatpush1.xpose.msra.mxu0 0.0
      %2663 = vmatprep.subr.mxu0 0.0
      %2664 = vmatpush1.xpose.msra.mxu0 0.0
      %2665 = vmatprep.subr.mxu0 0.0
      %2666 = vmatpush1.xpose.msra.mxu0 0.0
      %2667 = vmatprep.subr.mxu0 0.0
      %2668 = vmatpush1.xpose.msra.mxu0 0.0
      %2669 = vmatprep.subr.mxu0 0.0
      %2670 = vmatpush1.xpose.msra.mxu0 0.0
      %2671 = vmatprep.subr.mxu0 0.0
      %2672 = vmatpush1.xpose.msra.mxu0 0.0
      %2673 = vmatprep.subr.mxu0 0.0
      %2674 = vmatpush1.xpose.msra.mxu0 0.0
      %2675 = vmatprep.subr.mxu0 0.0
      %2676 = vmatpush1.xpose.msra.mxu0 0.0
      %2677 = vmatprep.subr.mxu0 0.0
      %2678 = vmatpush1.xpose.msra.mxu0 %v2649
      %2679 = vmatprep.subr.mxu0 0.0
      %2680 = vmatpush1.xpose.msra.mxu0 %v2647
      %2681 = vmatprep.subr.mxu0 0.0
      %2682 = vmatpush1.xpose.msra.mxu0 %v2645
      %2683 = vmatprep.subr.mxu0 0.0
      %2684 = vmatpush2.xpose.msra.mxu0 0.0
      %2685 = vmatprep.subr.mxu0 0.0
      %2686 = vmatpush2.xpose.msra.mxu0 0.0
      %2687 = vmatprep.subr.mxu0 0.0
      %2688 = vmatpush2.xpose.msra.mxu0 0.0
      %2689 = vmatprep.subr.mxu0 0.0
      %2690 = vmatpush2.xpose.msra.mxu0 0.0
      %2691 = vmatprep.subr.mxu0 0.0
      %2692 = vmatpush2.xpose.msra.mxu0 0.0
      %2693 = vmatprep.subr.mxu0 0.0
      %2694 = vmatpush2.xpose.msra.mxu0 0.0
      %2695 = vmatprep.subr.mxu0 0.0
      %2696 = vmatpush2.xpose.msra.mxu0 0.0
      %2697 = vmatprep.subr.mxu0 0.0
      %2698 = vmatpush2.xpose.msra.mxu0 0.0
      %2699 = vmatprep.subr.mxu0 0.0
      %2700 = vmatpush2.xpose.msra.mxu0 0.0
      %2701 = vmatprep.subr.mxu0 0.0
      %2702 = vmatpush2.xpose.msra.mxu0 0.0
      %2703 = vmatprep.subr.mxu0 0.0
      %2704 = vmatpush2.xpose.msra.mxu0 0.0
      %2705 = vmatprep.subr.mxu0 0.0
      %2706 = vmatpush2.xpose.msra.mxu0 0.0
      %2707 = vmatprep.subr.mxu0 0.0
      %2708 = vmatpush2.xpose.msra.mxu0 0.0
      %2709 = vmatprep.subr.mxu0 0.0
      %2710 = vmatpush2.xpose.msra.mxu0 0.0
      %2711 = vmatprep.subr.mxu0 0.0
      %2712 = vmatpush2.xpose.msra.mxu0 0.0
      %2713 = vmatprep.subr.mxu0 0.0
      %2714 = vmatpush2.xpose.msra.mxu0 0.0
      %2715 = vmatprep.mubr.f32.mxu0 0.0
      %2716 = vmatmul.mubr.f32.gmra.mxu0 %v2639
      %v2717 = vpop.f32.mrf.mxu0
      %v2718 = vadd.f32 0.0, %v2717
      %v2719 = vpop.f32.mrf.mxu0
      %2720 = vmatprep.mubr.f32.mxu0 0.0
      %2721 = vmatmul.mubr.f32.gmra.mxu0 %v2641
      %v2722 = vpop.f32.mrf.mxu0
      %v2723 = vadd.f32 0.0, %v2722
      %v2724 = vpop.f32.mrf.mxu0
      %2725 = vmatprep.mubr.f32.mxu0 0.0
      %2726 = vmatmul.mubr.f32.gmra.mxu0 %v2643
      %v2727 = vpop.f32.mrf.mxu0
      %v2728 = vadd.f32 0.0, %v2727
      %v2729 = vpop.f32.mrf.mxu0
      %2730 = vdwg.mxu0
      %v2731 = vmul.f32 %v2718, 0.17677669
      %v2732 = vmul.f32 %v2723, 0.17677669
      %v2733 = vmul.f32 %v2728, 0.17677669
      %v2734 = vsel %vm964, %v2731, -inf
      %2735 = vmax.xlane.f32.xlu0 %v2734
      %v2736 = vpop.xlane.xlu0 %2735
      %v2737 = vsel %vm964, %v2732, -inf
      %2738 = vmax.xlane.f32.xlu0 %v2737
      %v2739 = vpop.xlane.xlu0 %2738
      %v2740 = vsel %vm971, %v2733, -inf
      %2741 = vmax.xlane.f32.xlu0 %v2740
      %v2742 = vpop.xlane.xlu0 %2741
      %v2743 = vsub.f32 %v2731, %v2736
      %v2744 = vsub.f32 %v2732, %v2739
      %v2745 = vsub.f32 %v2733, %v2742
      %v2746 = vmul.f32 %v2743, 1.442695
      %v2747 = vpow.pop %v2746
      %v2748 = vmul.f32 %v2744, 1.442695
      %v2749 = vpow.pop %v2748
      %v2750 = vmul.f32 %v2745, 1.442695
      %v2751 = vpow.pop %v2750
      %v2752 = vsel %vm964, %v2747, 0.0
      %2753 = vadd.xlane.f32.xlu0 %v2752
      %v2754 = vpop.xlane.xlu0 %2753
      %v2755 = vsel %vm964, %v2749, 0.0
      %2756 = vadd.xlane.f32.xlu0 %v2755
      %v2757 = vpop.xlane.xlu0 %2756
      %v2758 = vsel %vm971, %v2751, 0.0
      %2759 = vadd.xlane.f32.xlu0 %v2758
      %v2760 = vpop.xlane.xlu0 %2759
      %v2761 = vrcp.pop %v2754
      %v2762 = vrcp.pop %v2757
      %v2763 = vrcp.pop %v2760
      %v2764 = vmul.f32 %v2747, %v2761
      %v2765 = vmul.f32 %v2749, %v2762
      %v2766 = vmul.f32 %v2751, %v2763
      %2767 = vrot.lane.b32.xlu0 %v2617, 64
      %v2768 = vpop.permute.xlu0 %2767
      %2769 = vrot.lane.b32.xlu0 %v2622, 64
      %v2770 = vpop.permute.xlu0 %2769
      %2771 = vrot.lane.b32.xlu0 %v2627, 64
      %v2772 = vpop.permute.xlu0 %2771
      %v2776 = vsel %vm964, %v2764, 0
      %v2779 = vsel %vm964, %v2765, 0
      %v2782 = vsel %vm964, %v2766, 0
      %v2784 = vsel %vm1016, %v2772, 0
      %2786 = vmatprep.subr.mxu0 0.0
      %2787 = vmatpush1.msra.mxu0 0.0
      %2788 = vmatprep.subr.mxu0 0.0
      %2789 = vmatpush1.msra.mxu0 0.0
      %2790 = vmatprep.subr.mxu0 0.0
      %2791 = vmatpush1.msra.mxu0 0.0
      %2792 = vmatprep.subr.mxu0 0.0
      %2793 = vmatpush1.msra.mxu0 0.0
      %2794 = vmatprep.subr.mxu0 0.0
      %2795 = vmatpush1.msra.mxu0 0.0
      %2796 = vmatprep.subr.mxu0 0.0
      %2797 = vmatpush1.msra.mxu0 0.0
      %2798 = vmatprep.subr.mxu0 0.0
      %2799 = vmatpush1.msra.mxu0 0.0
      %2800 = vmatprep.subr.mxu0 0.0
      %2801 = vmatpush1.msra.mxu0 0.0
      %2802 = vmatprep.subr.mxu0 0.0
      %2803 = vmatpush1.msra.mxu0 0.0
      %2804 = vmatprep.subr.mxu0 0.0
      %2805 = vmatpush1.msra.mxu0 0.0
      %2806 = vmatprep.subr.mxu0 0.0
      %2807 = vmatpush1.msra.mxu0 0.0
      %2808 = vmatprep.subr.mxu0 0.0
      %2809 = vmatpush1.msra.mxu0 0.0
      %2810 = vmatprep.subr.mxu0 0.0
      %2811 = vmatpush1.msra.mxu0 0.0
      %2812 = vmatprep.subr.mxu0 0.0
      %2813 = vmatpush1.msra.mxu0 %v2784
      %2814 = vmatprep.subr.mxu0 0.0
      %2815 = vmatpush1.msra.mxu0 %v2770
      %2816 = vmatprep.subr.mxu0 0.0
      %2817 = vmatpush1.msra.mxu0 %v2768
      %2818 = vmatprep.subr.mxu0 0.0
      %2819 = vmatpush2.msra.mxu0 0.0
      %2820 = vmatprep.subr.mxu0 0.0
      %2821 = vmatpush2.msra.mxu0 0.0
      %2822 = vmatprep.subr.mxu0 0.0
      %2823 = vmatpush2.msra.mxu0 0.0
      %2824 = vmatprep.subr.mxu0 0.0
      %2825 = vmatpush2.msra.mxu0 0.0
      %2826 = vmatprep.subr.mxu0 0.0
      %2827 = vmatpush2.msra.mxu0 0.0
      %2828 = vmatprep.subr.mxu0 0.0
      %2829 = vmatpush2.msra.mxu0 0.0
      %2830 = vmatprep.subr.mxu0 0.0
      %2831 = vmatpush2.msra.mxu0 0.0
      %2832 = vmatprep.subr.mxu0 0.0
      %2833 = vmatpush2.msra.mxu0 0.0
      %2834 = vmatprep.subr.mxu0 0.0
      %2835 = vmatpush2.msra.mxu0 0.0
      %2836 = vmatprep.subr.mxu0 0.0
      %2837 = vmatpush2.msra.mxu0 0.0
      %2838 = vmatprep.subr.mxu0 0.0
      %2839 = vmatpush2.msra.mxu0 0.0
      %2840 = vmatprep.subr.mxu0 0.0
      %2841 = vmatpush2.msra.mxu0 0.0
      %2842 = vmatprep.subr.mxu0 0.0
      %2843 = vmatpush2.msra.mxu0 0.0
      %2844 = vmatprep.subr.mxu0 0.0
      %2845 = vmatpush2.msra.mxu0 0.0
      %2846 = vmatprep.subr.mxu0 0.0
      %2847 = vmatpush2.msra.mxu0 0.0
      %2848 = vmatprep.subr.mxu0 0.0
      %2849 = vmatpush2.msra.mxu0 0.0
      %2850 = vmatprep.mubr.f32.mxu0 0.0
      %2851 = vmatmul.mubr.f32.gmra.mxu0 %v2776
      %v2852 = vpop.f32.mrf.mxu0
      %v2853 = vadd.f32 0.0, %v2852
      %v2854 = vpop.f32.mrf.mxu0
      %2855 = vmatprep.mubr.f32.mxu0 0.0
      %2856 = vmatmul.mubr.f32.gmra.mxu0 %v2779
      %v2857 = vpop.f32.mrf.mxu0
      %v2858 = vadd.f32 0.0, %v2857
      %v2859 = vpop.f32.mrf.mxu0
      %2860 = vmatprep.mubr.f32.mxu0 0.0
      %2861 = vmatmul.mubr.f32.gmra.mxu0 %v2782
      %v2862 = vpop.f32.mrf.mxu0
      %v2863 = vadd.f32 0.0, %v2862
      %v2864 = vpop.f32.mrf.mxu0
      %2865 = vdwg.mxu0
      %v2867 = vsel %vm657, %v2853, 0
      %v2870 = vsel %vm657, %v2858, 0
      %v2873 = vsel %vm657, %v2863, 0
      %2875 = vmatprep.subr.mxu0 0.0
      %2876 = vmatpush1.msra.mxu0 0.0
      %2877 = vmatprep.subr.mxu0 0.0
      %2878 = vmatpush1.msra.mxu0 0.0
      %2879 = vmatprep.subr.mxu0 0.0
      %2880 = vmatpush1.msra.mxu0 0.0
      %2881 = vmatprep.subr.mxu0 0.0
      %2882 = vmatpush1.msra.mxu0 0.0
      %2883 = vmatprep.subr.mxu0 0.0
      %2884 = vmatpush1.msra.mxu0 0.0
      %2885 = vmatprep.subr.mxu0 0.0
      %2886 = vmatpush1.msra.mxu0 0.0
      %2887 = vmatprep.subr.mxu0 0.0
      %2888 = vmatpush1.msra.mxu0 0.0
      %2889 = vmatprep.subr.mxu0 0.0
      %2890 = vmatpush1.msra.mxu0 0.0
      %2891 = vmatprep.subr.mxu0 0.0
      %2892 = vmatpush1.msra.mxu0 0.0
      %2893 = vmatprep.subr.mxu0 0.0
      %2894 = vmatpush1.msra.mxu0 0.0
      %2895 = vmatprep.subr.mxu0 0.0
      %2896 = vmatpush1.msra.mxu0 0.0
      %2897 = vmatprep.subr.mxu0 0.0
      %2898 = vmatpush1.msra.mxu0 0.0
      %2899 = vmatprep.subr.mxu0 0.0
      %2900 = vmatpush1.msra.mxu0 %v678
      %2901 = vmatprep.subr.mxu0 0.0
      %2902 = vmatpush1.msra.mxu0 %v677
      %2903 = vmatprep.subr.mxu0 0.0
      %2904 = vmatpush1.msra.mxu0 %v676
      %2905 = vmatprep.subr.mxu0 0.0
      %2906 = vmatpush1.msra.mxu0 %v675
      %2907 = vmatprep.subr.mxu0 0.0
      %2908 = vmatpush2.msra.mxu0 0.0
      %2909 = vmatprep.subr.mxu0 0.0
      %2910 = vmatpush2.msra.mxu0 0.0
      %2911 = vmatprep.subr.mxu0 0.0
      %2912 = vmatpush2.msra.mxu0 0.0
      %2913 = vmatprep.subr.mxu0 0.0
      %2914 = vmatpush2.msra.mxu0 0.0
      %2915 = vmatprep.subr.mxu0 0.0
      %2916 = vmatpush2.msra.mxu0 0.0
      %2917 = vmatprep.subr.mxu0 0.0
      %2918 = vmatpush2.msra.mxu0 0.0
      %2919 = vmatprep.subr.mxu0 0.0
      %2920 = vmatpush2.msra.mxu0 0.0
      %2921 = vmatprep.subr.mxu0 0.0
      %2922 = vmatpush2.msra.mxu0 0.0
      %2923 = vmatprep.subr.mxu0 0.0
      %2924 = vmatpush2.msra.mxu0 0.0
      %2925 = vmatprep.subr.mxu0 0.0
      %2926 = vmatpush2.msra.mxu0 0.0
      %2927 = vmatprep.subr.mxu0 0.0
      %2928 = vmatpush2.msra.mxu0 0.0
      %2929 = vmatprep.subr.mxu0 0.0
      %2930 = vmatpush2.msra.mxu0 0.0
      %2931 = vmatprep.subr.mxu0 0.0
      %2932 = vmatpush2.msra.mxu0 0.0
      %2933 = vmatprep.subr.mxu0 0.0
      %2934 = vmatpush2.msra.mxu0 0.0
      %2935 = vmatprep.subr.mxu0 0.0
      %2936 = vmatpush2.msra.mxu0 0.0
      %2937 = vmatprep.subr.mxu0 0.0
      %2938 = vmatpush2.msra.mxu0 0.0
      %2939 = vmatprep.mubr.f32.mxu0 0.0
      %2940 = vmatmul.mubr.f32.gmra.mxu0 %v2867
      %v2941 = vpop.f32.mrf.mxu0
      %v2942 = vadd.f32 0.0, %v2941
      %v2943 = vpop.f32.mrf.mxu0
      %2944 = vmatprep.mubr.f32.mxu0 0.0
      %2945 = vmatmul.mubr.f32.gmra.mxu0 %v2870
      %v2946 = vpop.f32.mrf.mxu0
      %v2947 = vadd.f32 0.0, %v2946
      %v2948 = vpop.f32.mrf.mxu0
      %2949 = vmatprep.mubr.f32.mxu0 0.0
      %2950 = vmatmul.mubr.f32.gmra.mxu0 %v2873
      %v2951 = vpop.f32.mrf.mxu0
      %v2952 = vadd.f32 0.0, %v2951
      %v2953 = vpop.f32.mrf.mxu0
      %2954 = vdwg.mxu0
      %v2955 = vadd.f32 %v2493, %v2942
      %v2956 = vadd.f32 %v2494, %v2947
      %v2957 = vadd.f32 %v2495, %v2952
      %v2958 = vadd.f32 %v2955, %v1195
      %v2959 = vadd.f32 %v2956, %v1195
      %v2960 = vadd.f32 %v2957, %v1195
      %v2961 = vsel %vm657, %v2958, 0.0
      %2962 = vadd.xlane.f32.xlu0 %v2961
      %v2963 = vpop.xlane.xlu0 %2962
      %v2964 = vsel %vm657, %v2959, 0.0
      %2965 = vadd.xlane.f32.xlu0 %v2964
      %v2966 = vpop.xlane.xlu0 %2965
      %v2967 = vsel %vm700, %v2960, 0.0
      %2968 = vadd.xlane.f32.xlu0 %v2967
      %v2969 = vpop.xlane.xlu0 %2968
      %v2970 = vmul.f32 %v2963, %v720
      %v2971 = vmul.f32 %v2966, %v720
      %v2972 = vmul.f32 %v2969, %v720
      %v2973 = vsub.f32 %v2958, %v2970
      %v2974 = vsub.f32 %v2959, %v2971
      %v2975 = vsub.f32 %v2960, %v2972
      %v2976 = vmul.f32 %v2973, %v2973
      %v2977 = vmul.f32 %v2974, %v2974
      %v2978 = vmul.f32 %v2975, %v2975
      %v2979 = vsel %vm657, %v2976, 0.0
      %2980 = vadd.xlane.f32.xlu0 %v2979
      %v2981 = vpop.xlane.xlu0 %2980
      %v2982 = vsel %vm657, %v2977, 0.0
      %2983 = vadd.xlane.f32.xlu0 %v2982
      %v2984 = vpop.xlane.xlu0 %2983
      %v2985 = vsel %vm700, %v2978, 0.0
      %2986 = vadd.xlane.f32.xlu0 %v2985
      %v2987 = vpop.xlane.xlu0 %2986
      %v2988 = vmul.f32 %v2981, %v720
      %v2989 = vmul.f32 %v2984, %v720
      %v2990 = vmul.f32 %v2987, %v720
      %v2991 = vadd.f32 %v2988, 1e-05
      %v2992 = vadd.f32 %v2989, 1e-05
      %v2993 = vadd.f32 %v2990, 1e-05
      %v2994 = vrsqrt.pop %v2991
      %v2995 = vrsqrt.pop %v2992
      %v2996 = vrsqrt.pop %v2993
      %v2997 = vmul.f32 %v2973, %v2994
      %v2998 = vmul.f32 %v2974, %v2995
      %v2999 = vmul.f32 %v2975, %v2996
      %v3000 = vmul.f32 %v2997, %v1242
      %v3001 = vmul.f32 %v2998, %v1242
      %v3002 = vmul.f32 %v2999, %v1242
      %v3003 = vadd.f32 %v3000, %v1249
      %v3004 = vadd.f32 %v3001, %v1249
      %v3005 = vadd.f32 %v3002, %v1249
      %v3007 = vsel %vm657, %v3003, 0
      %v3010 = vsel %vm657, %v3004, 0
      %v3013 = vsel %vm657, %v3005, 0
      %3015 = vmatprep.subr.mxu0 0.0
      %3016 = vmatpush1.msra.mxu0 0.0
      %3017 = vmatprep.subr.mxu0 0.0
      %3018 = vmatpush1.msra.mxu0 0.0
      %3019 = vmatprep.subr.mxu0 0.0
      %3020 = vmatpush1.msra.mxu0 0.0
      %3021 = vmatprep.subr.mxu0 0.0
      %3022 = vmatpush1.msra.mxu0 0.0
      %3023 = vmatprep.subr.mxu0 0.0
      %3024 = vmatpush1.msra.mxu0 0.0
      %3025 = vmatprep.subr.mxu0 0.0
      %3026 = vmatpush1.msra.mxu0 0.0
      %3027 = vmatprep.subr.mxu0 0.0
      %3028 = vmatpush1.msra.mxu0 0.0
      %3029 = vmatprep.subr.mxu0 0.0
      %3030 = vmatpush1.msra.mxu0 0.0
      %3031 = vmatprep.subr.mxu0 0.0
      %3032 = vmatpush1.msra.mxu0 0.0
      %3033 = vmatprep.subr.mxu0 0.0
      %3034 = vmatpush1.msra.mxu0 0.0
      %3035 = vmatprep.subr.mxu0 0.0
      %3036 = vmatpush1.msra.mxu0 0.0
      %3037 = vmatprep.subr.mxu0 0.0
      %3038 = vmatpush1.msra.mxu0 0.0
      %3039 = vmatprep.subr.mxu0 0.0
      %3040 = vmatpush1.msra.mxu0 %v683
      %3041 = vmatprep.subr.mxu0 0.0
      %3042 = vmatpush1.msra.mxu0 %v682
      %3043 = vmatprep.subr.mxu0 0.0
      %3044 = vmatpush1.msra.mxu0 %v681
      %3045 = vmatprep.subr.mxu0 0.0
      %3046 = vmatpush1.msra.mxu0 %v680
      %3047 = vmatprep.subr.mxu0 0.0
      %3048 = vmatpush2.msra.mxu0 0.0
      %3049 = vmatprep.subr.mxu0 0.0
      %3050 = vmatpush2.msra.mxu0 0.0
      %3051 = vmatprep.subr.mxu0 0.0
      %3052 = vmatpush2.msra.mxu0 0.0
      %3053 = vmatprep.subr.mxu0 0.0
      %3054 = vmatpush2.msra.mxu0 0.0
      %3055 = vmatprep.subr.mxu0 0.0
      %3056 = vmatpush2.msra.mxu0 0.0
      %3057 = vmatprep.subr.mxu0 0.0
      %3058 = vmatpush2.msra.mxu0 0.0
      %3059 = vmatprep.subr.mxu0 0.0
      %3060 = vmatpush2.msra.mxu0 0.0
      %3061 = vmatprep.subr.mxu0 0.0
      %3062 = vmatpush2.msra.mxu0 0.0
      %3063 = vmatprep.subr.mxu0 0.0
      %3064 = vmatpush2.msra.mxu0 0.0
      %3065 = vmatprep.subr.mxu0 0.0
      %3066 = vmatpush2.msra.mxu0 0.0
      %3067 = vmatprep.subr.mxu0 0.0
      %3068 = vmatpush2.msra.mxu0 0.0
      %3069 = vmatprep.subr.mxu0 0.0
      %3070 = vmatpush2.msra.mxu0 0.0
      %3071 = vmatprep.subr.mxu0 0.0
      %3072 = vmatpush2.msra.mxu0 0.0
      %3073 = vmatprep.subr.mxu0 0.0
      %3074 = vmatpush2.msra.mxu0 0.0
      %3075 = vmatprep.subr.mxu0 0.0
      %3076 = vmatpush2.msra.mxu0 0.0
      %3077 = vmatprep.subr.mxu0 0.0
      %3078 = vmatpush2.msra.mxu0 0.0
      %3079 = vmatprep.mubr.f32.mxu0 0.0
      %3080 = vmatmul.mubr.f32.gmra.mxu0 %v3007
      %v3081 = vpop.f32.mrf.mxu0
      %v3082 = vadd.f32 %v1257, %v3081
      %v3083 = vpop.f32.mrf.mxu0
      %3084 = vmatprep.mubr.f32.mxu0 0.0
      %3085 = vmatmul.mubr.f32.gmra.mxu0 %v3010
      %v3086 = vpop.f32.mrf.mxu0
      %v3087 = vadd.f32 %v1257, %v3086
      %v3088 = vpop.f32.mrf.mxu0
      %3089 = vmatprep.mubr.f32.mxu0 0.0
      %3090 = vmatmul.mubr.f32.gmra.mxu0 %v3013
      %v3091 = vpop.f32.mrf.mxu0
      %v3092 = vadd.f32 %v1257, %v3091
      %v3093 = vpop.f32.mrf.mxu0
      %3094 = vdwg.mxu0
      %v3095 = vmul.f32 %v3082, 0.5
      %v3096 = vmul.f32 %v3087, 0.5
      %v3097 = vmul.f32 %v3092, 0.5
      %v3098 = vmul.f32 %v3082, 0.70710677
      %v3099 = vmul.f32 %v3087, 0.70710677
      %v3100 = vmul.f32 %v3092, 0.70710677
      %vm3101 = vcmp.lt.f32.partialorder %v3098, 0.0
      %vm3102 = vcmp.lt.f32.partialorder %v3099, 0.0
      %vm3103 = vcmp.lt.f32.partialorder %v3100, 0.0
      %v3104 = vsel %vm3101, -1.0, 1.0
      %v3105 = vsel %vm3102, -1.0, 1.0
      %v3106 = vsel %vm3103, -1.0, 1.0
      %v3107 = vand.u32 2147483647, %v3098
      %v3108 = vand.u32 2147483647, %v3099
      %v3109 = vand.u32 2147483647, %v3100
      %v3110 = vmul.f32 %v3107, 0.3275911
      %v3111 = vmul.f32 %v3108, 0.3275911
      %v3112 = vmul.f32 %v3109, 0.3275911
      %v3113 = vadd.f32 %v3110, 1.0
      %v3114 = vadd.f32 %v3111, 1.0
      %v3115 = vadd.f32 %v3112, 1.0
      %v3116 = vrcp.pop %v3113
      %v3117 = vmul.f32 1.0, %v3116
      %v3118 = vrcp.pop %v3114
      %v3119 = vmul.f32 1.0, %v3118
      %v3120 = vrcp.pop %v3115
      %v3121 = vmul.f32 1.0, %v3120
      %v3122 = vmul.f32 %v3117, 1.0614054
      %v3123 = vmul.f32 %v3119, 1.0614054
      %v3124 = vmul.f32 %v3121, 1.0614054
      %v3125 = vadd.f32 %v3122, -1.4531521
      %v3126 = vadd.f32 %v3123, -1.4531521
      %v3127 = vadd.f32 %v3124, -1.4531521
      %v3128 = vmul.f32 %v3125, %v3117
      %v3129 = vmul.f32 %v3126, %v3119
      %v3130 = vmul.f32 %v3127, %v3121
      %v3131 = vadd.f32 %v3128, 1.4214138
      %v3132 = vadd.f32 %v3129, 1.4214138
      %v3133 = vadd.f32 %v3130, 1.4214138
      %v3134 = vmul.f32 %v3131, %v3117
      %v3135 = vmul.f32 %v3132, %v3119
      %v3136 = vmul.f32 %v3133, %v3121
      %v3137 = vadd.f32 %v3134, -0.28449672
      %v3138 = vadd.f32 %v3135, -0.28449672
      %v3139 = vadd.f32 %v3136, -0.28449672
      %v3140 = vmul.f32 %v3137, %v3117
      %v3141 = vmul.f32 %v3138, %v3119
      %v3142 = vmul.f32 %v3139, %v3121
      %v3143 = vadd.f32 %v3140, 0.2548296
      %v3144 = vadd.f32 %v3141, 0.2548296
      %v3145 = vadd.f32 %v3142, 0.2548296
      %v3146 = vmul.f32 %v3143, %v3117
      %v3147 = vmul.f32 %v3144, %v3119
      %v3148 = vmul.f32 %v3145, %v3121
      %v3149 = vsub.f32 0.0, %v3107
      %v3150 = vsub.f32 0.0, %v3108
      %v3151 = vsub.f32 0.0, %v3109
      %v3152 = vmul.f32 %v3149, %v3107
      %v3153 = vmul.f32 %v3150, %v3108
      %v3154 = vmul.f32 %v3151, %v3109
      %v3155 = vmul.f32 %v3152, 1.442695
      %v3156 = vpow.pop %v3155
      %v3157 = vmul.f32 %v3153, 1.442695
      %v3158 = vpow.pop %v3157
      %v3159 = vmul.f32 %v3154, 1.442695
      %v3160 = vpow.pop %v3159
      %v3161 = vmul.f32 %v3146, %v3156
      %v3162 = vmul.f32 %v3147, %v3158
      %v3163 = vmul.f32 %v3148, %v3160
      %v3164 = vsub.f32 1.0, %v3161
      %v3165 = vsub.f32 1.0, %v3162
      %v3166 = vsub.f32 1.0, %v3163
      %v3167 = vmul.f32 %v3104, %v3164
      %v3168 = vmul.f32 %v3105, %v3165
      %v3169 = vmul.f32 %v3106, %v3166
      %v3170 = vadd.f32 %v3167, 1.0
      %v3171 = vadd.f32 %v3168, 1.0
      %v3172 = vadd.f32 %v3169, 1.0
      %v3173 = vmul.f32 %v3095, %v3170
      %v3174 = vmul.f32 %v3096, %v3171
      %v3175 = vmul.f32 %v3097, %v3172
      %v3177 = vsel %vm559, %v3173, 0
      %v3180 = vsel %vm559, %v3174, 0
      %v3183 = vsel %vm559, %v3175, 0
      %3185 = vmatprep.subr.mxu0 0.0
      %3186 = vmatpush1.msra.mxu0 0.0
      %3187 = vmatprep.subr.mxu0 0.0
      %3188 = vmatpush1.msra.mxu0 0.0
      %3189 = vmatprep.subr.mxu0 0.0
      %3190 = vmatpush1.msra.mxu0 0.0
      %3191 = vmatprep.subr.mxu0 0.0
      %3192 = vmatpush1.msra.mxu0 0.0
      %3193 = vmatprep.subr.mxu0 0.0
      %3194 = vmatpush1.msra.mxu0 0.0
      %3195 = vmatprep.subr.mxu0 0.0
      %3196 = vmatpush1.msra.mxu0 0.0
      %3197 = vmatprep.subr.mxu0 0.0
      %3198 = vmatpush1.msra.mxu0 0.0
      %3199 = vmatprep.subr.mxu0 0.0
      %3200 = vmatpush1.msra.mxu0 0.0
      %3201 = vmatprep.subr.mxu0 0.0
      %3202 = vmatpush1.msra.mxu0 %v692
      %3203 = vmatprep.subr.mxu0 0.0
      %3204 = vmatpush1.msra.mxu0 %v691
      %3205 = vmatprep.subr.mxu0 0.0
      %3206 = vmatpush1.msra.mxu0 %v690
      %3207 = vmatprep.subr.mxu0 0.0
      %3208 = vmatpush1.msra.mxu0 %v689
      %3209 = vmatprep.subr.mxu0 0.0
      %3210 = vmatpush1.msra.mxu0 %v688
      %3211 = vmatprep.subr.mxu0 0.0
      %3212 = vmatpush1.msra.mxu0 %v687
      %3213 = vmatprep.subr.mxu0 0.0
      %3214 = vmatpush1.msra.mxu0 %v686
      %3215 = vmatprep.subr.mxu0 0.0
      %3216 = vmatpush1.msra.mxu0 %v685
      %3217 = vmatprep.subr.mxu0 0.0
      %3218 = vmatpush2.msra.mxu0 0.0
      %3219 = vmatprep.subr.mxu0 0.0
      %3220 = vmatpush2.msra.mxu0 0.0
      %3221 = vmatprep.subr.mxu0 0.0
      %3222 = vmatpush2.msra.mxu0 0.0
      %3223 = vmatprep.subr.mxu0 0.0
      %3224 = vmatpush2.msra.mxu0 0.0
      %3225 = vmatprep.subr.mxu0 0.0
      %3226 = vmatpush2.msra.mxu0 0.0
      %3227 = vmatprep.subr.mxu0 0.0
      %3228 = vmatpush2.msra.mxu0 0.0
      %3229 = vmatprep.subr.mxu0 0.0
      %3230 = vmatpush2.msra.mxu0 0.0
      %3231 = vmatprep.subr.mxu0 0.0
      %3232 = vmatpush2.msra.mxu0 0.0
      %3233 = vmatprep.subr.mxu0 0.0
      %3234 = vmatpush2.msra.mxu0 0.0
      %3235 = vmatprep.subr.mxu0 0.0
      %3236 = vmatpush2.msra.mxu0 0.0
      %3237 = vmatprep.subr.mxu0 0.0
      %3238 = vmatpush2.msra.mxu0 0.0
      %3239 = vmatprep.subr.mxu0 0.0
      %3240 = vmatpush2.msra.mxu0 0.0
      %3241 = vmatprep.subr.mxu0 0.0
      %3242 = vmatpush2.msra.mxu0 0.0
      %3243 = vmatprep.subr.mxu0 0.0
      %3244 = vmatpush2.msra.mxu0 0.0
      %3245 = vmatprep.subr.mxu0 0.0
      %3246 = vmatpush2.msra.mxu0 0.0
      %3247 = vmatprep.subr.mxu0 0.0
      %3248 = vmatpush2.msra.mxu0 0.0
      %3249 = vmatprep.mubr.f32.mxu0 0.0
      %3250 = vmatmul.mubr.f32.gmra.mxu0 %v3177
      %v3251 = vpop.f32.mrf.mxu0
      %v3252 = vadd.f32 %v1433, %v3251
      %v3253 = vpop.f32.mrf.mxu0
      %3254 = vmatprep.mubr.f32.mxu0 0.0
      %3255 = vmatmul.mubr.f32.gmra.mxu0 %v3180
      %v3256 = vpop.f32.mrf.mxu0
      %v3257 = vpop.f32.mrf.mxu0
      %3258 = vmatprep.mubr.f32.mxu0 0.0
      %3259 = vmatmul.mubr.f32.gmra.mxu0 %v3183
      %v3260 = vpop.f32.mrf.mxu0
      %v3261 = vpop.f32.mrf.mxu0
      %3262 = vdwg.mxu0
      %v3263 = vadd.f32 %v2958, %v3252
      %v3264 = vsel %vm657, %v3263, 0.0
      %3265 = vadd.xlane.f32.xlu0 %v3264
      %v3266 = vpop.xlane.xlu0 %3265
      %v3267 = vmul.f32 %v3266, %v720
      %v3268 = vsub.f32 %v3263, %v3267
      %v3269 = vmul.f32 %v3268, %v3268
      %v3270 = vsel %vm657, %v3269, 0.0
      %3271 = vadd.xlane.f32.xlu0 %v3270
      %v3272 = vpop.xlane.xlu0 %3271
      %v3273 = vmul.f32 %v3272, %v720
      %v3274 = vadd.f32 %v3273, 1e-05
      %v3275 = vrsqrt.pop %v3274
      %v3276 = vmul.f32 %v3268, %v3275
      %v3277 = vmul.f32 %v3276, %v1539
      %v3278 = vadd.f32 %v3277, %v1544
      %v3280 = vsel %vm657, %v3278, 0
      %3282 = vmatprep.subr.mxu0 0.0
      %3283 = vmatpush1.msra.mxu0 0.0
      %3284 = vmatprep.subr.mxu0 0.0
      %3285 = vmatpush1.msra.mxu0 0.0
      %3286 = vmatprep.subr.mxu0 0.0
      %3287 = vmatpush1.msra.mxu0 0.0
      %3288 = vmatprep.subr.mxu0 0.0
      %3289 = vmatpush1.msra.mxu0 0.0
      %3290 = vmatprep.subr.mxu0 0.0
      %3291 = vmatpush1.msra.mxu0 0.0
      %3292 = vmatprep.subr.mxu0 0.0
      %3293 = vmatpush1.msra.mxu0 0.0
      %3294 = vmatprep.subr.mxu0 0.0
      %3295 = vmatpush1.msra.mxu0 0.0
      %3296 = vmatprep.subr.mxu0 0.0
      %3297 = vmatpush1.msra.mxu0 0.0
      %3298 = vmatprep.subr.mxu0 0.0
      %3299 = vmatpush1.msra.mxu0 0.0
      %3300 = vmatprep.subr.mxu0 0.0
      %3301 = vmatpush1.msra.mxu0 0.0
      %3302 = vmatprep.subr.mxu0 0.0
      %3303 = vmatpush1.msra.mxu0 0.0
      %3304 = vmatprep.subr.mxu0 0.0
      %3305 = vmatpush1.msra.mxu0 0.0
      %3306 = vmatprep.subr.mxu0 0.0
      %3307 = vmatpush1.msra.mxu0 %v697
      %3308 = vmatprep.subr.mxu0 0.0
      %3309 = vmatpush1.msra.mxu0 %v696
      %3310 = vmatprep.subr.mxu0 0.0
      %3311 = vmatpush1.msra.mxu0 %v695
      %3312 = vmatprep.subr.mxu0 0.0
      %3313 = vmatpush1.msra.mxu0 %v694
      %3314 = vmatprep.subr.mxu0 0.0
      %3315 = vmatpush2.msra.mxu0 0.0
      %3316 = vmatprep.subr.mxu0 0.0
      %3317 = vmatpush2.msra.mxu0 0.0
      %3318 = vmatprep.subr.mxu0 0.0
      %3319 = vmatpush2.msra.mxu0 0.0
      %3320 = vmatprep.subr.mxu0 0.0
      %3321 = vmatpush2.msra.mxu0 0.0
      %3322 = vmatprep.subr.mxu0 0.0
      %3323 = vmatpush2.msra.mxu0 0.0
      %3324 = vmatprep.subr.mxu0 0.0
      %3325 = vmatpush2.msra.mxu0 0.0
      %3326 = vmatprep.subr.mxu0 0.0
      %3327 = vmatpush2.msra.mxu0 0.0
      %3328 = vmatprep.subr.mxu0 0.0
      %3329 = vmatpush2.msra.mxu0 0.0
      %3330 = vmatprep.subr.mxu0 0.0
      %3331 = vmatpush2.msra.mxu0 0.0
      %3332 = vmatprep.subr.mxu0 0.0
      %3333 = vmatpush2.msra.mxu0 0.0
      %3334 = vmatprep.subr.mxu0 0.0
      %3335 = vmatpush2.msra.mxu0 0.0
      %3336 = vmatprep.subr.mxu0 0.0
      %3337 = vmatpush2.msra.mxu0 0.0
      %3338 = vmatprep.subr.mxu0 0.0
      %3339 = vmatpush2.msra.mxu0 0.0
      %3340 = vmatprep.subr.mxu0 0.0
      %3341 = vmatpush2.msra.mxu0 0.0
      %3342 = vmatprep.subr.mxu0 0.0
      %3343 = vmatpush2.msra.mxu0 0.0
      %3344 = vmatprep.subr.mxu0 0.0
      %3345 = vmatpush2.msra.mxu0 0.0
      %3346 = vmatprep.mubr.f32.mxu0 0.0
      %3347 = vmatmul.mubr.f32.gmra.mxu0 %v3280
      %v3348 = vpop.f32.mrf.mxu0
      %v3349 = vadd.f32 %v698, %v3348
      %v3350 = vpop.f32.mrf.mxu0
      %3351 = vdwg.mxu0
      %3352 = vst.msk [vmem:[#allocation4 + $0x2] sm:$0x1] %vm1619, %v3349
      %v3353 = vld [vmem:[#allocation2 + $0xc] sm:$0xff]
      %v3354 = vld [vmem:[#allocation2 + $0x14] sm:$0xff]
      %v3355 = vadd.f32 %v3353, %v662
      %v3356 = vadd.f32 %v3354, %v663
      %3357 = vst.msk [vmem:[#allocation3 + $0x1] sm:$0xff] %vm657, %v3355
      %3358 = vst.msk [vmem:[#allocation3 + $0x9] sm:$0xff] %vm657, %v3356
      %v3359 = vld [vmem:[#allocation3] sm:$0xff]
      %v3360 = vld [vmem:[#allocation3 + $0x8] sm:$0xff]
      %v3361 = vld [vmem:[#allocation3 + $0x10] sm:$0x1]
      %v3362 = vsel %vm657, %v3359, 0.0
      %3363 = vadd.xlane.f32.xlu0 %v3362
      %v3364 = vpop.xlane.xlu0 %3363
      %v3365 = vsel %vm657, %v3360, 0.0
      %3366 = vadd.xlane.f32.xlu0 %v3365
      %v3367 = vpop.xlane.xlu0 %3366
      %v3368 = vsel %vm700, %v3361, 0.0
      %3369 = vadd.xlane.f32.xlu0 %v3368
      %v3370 = vpop.xlane.xlu0 %3369
      %v3371 = vmul.f32 %v3364, %v720
      %v3372 = vmul.f32 %v3367, %v720
      %v3373 = vmul.f32 %v3370, %v720
      %v3374 = vsub.f32 %v3359, %v3371
      %v3375 = vsub.f32 %v3360, %v3372
      %v3376 = vsub.f32 %v3361, %v3373
      %v3377 = vmul.f32 %v3374, %v3374
      %v3378 = vmul.f32 %v3375, %v3375
      %v3379 = vmul.f32 %v3376, %v3376
      %v3380 = vsel %vm657, %v3377, 0.0
      %3381 = vadd.xlane.f32.xlu0 %v3380
      %v3382 = vpop.xlane.xlu0 %3381
      %v3383 = vsel %vm657, %v3378, 0.0
      %3384 = vadd.xlane.f32.xlu0 %v3383
      %v3385 = vpop.xlane.xlu0 %3384
      %v3386 = vsel %vm700, %v3379, 0.0
      %3387 = vadd.xlane.f32.xlu0 %v3386
      %v3388 = vpop.xlane.xlu0 %3387
      %v3389 = vmul.f32 %v3382, %v720
      %v3390 = vmul.f32 %v3385, %v720
      %v3391 = vmul.f32 %v3388, %v720
      %v3392 = vadd.f32 %v3389, 1e-05
      %v3393 = vadd.f32 %v3390, 1e-05
      %v3394 = vadd.f32 %v3391, 1e-05
      %v3395 = vrsqrt.pop %v3392
      %v3396 = vrsqrt.pop %v3393
      %v3397 = vrsqrt.pop %v3394
      %v3398 = vmul.f32 %v3374, %v3395
      %v3399 = vmul.f32 %v3375, %v3396
      %v3400 = vmul.f32 %v3376, %v3397
      %v3401 = vmul.f32 %v3398, %v754
      %v3402 = vmul.f32 %v3399, %v754
      %v3403 = vmul.f32 %v3400, %v754
      %v3404 = vadd.f32 %v3401, %v761
      %v3405 = vadd.f32 %v3402, %v761
      %v3406 = vadd.f32 %v3403, %v761
      %v3408 = vsel %vm657, %v3404, 0
      %v3411 = vsel %vm657, %v3405, 0
      %v3414 = vsel %vm657, %v3406, 0
      %3416 = vmatprep.subr.mxu0 0.0
      %3417 = vmatpush1.msra.mxu0 0.0
      %3418 = vmatprep.subr.mxu0 0.0
      %3419 = vmatpush1.msra.mxu0 0.0
      %3420 = vmatprep.subr.mxu0 0.0
      %3421 = vmatpush1.msra.mxu0 0.0
      %3422 = vmatprep.subr.mxu0 0.0
      %3423 = vmatpush1.msra.mxu0 0.0
      %3424 = vmatprep.subr.mxu0 0.0
      %3425 = vmatpush1.msra.mxu0 0.0
      %3426 = vmatprep.subr.mxu0 0.0
      %3427 = vmatpush1.msra.mxu0 0.0
      %3428 = vmatprep.subr.mxu0 0.0
      %3429 = vmatpush1.msra.mxu0 0.0
      %3430 = vmatprep.subr.mxu0 0.0
      %3431 = vmatpush1.msra.mxu0 0.0
      %3432 = vmatprep.subr.mxu0 0.0
      %3433 = vmatpush1.msra.mxu0 0.0
      %3434 = vmatprep.subr.mxu0 0.0
      %3435 = vmatpush1.msra.mxu0 0.0
      %3436 = vmatprep.subr.mxu0 0.0
      %3437 = vmatpush1.msra.mxu0 0.0
      %3438 = vmatprep.subr.mxu0 0.0
      %3439 = vmatpush1.msra.mxu0 0.0
      %3440 = vmatprep.subr.mxu0 0.0
      %3441 = vmatpush1.msra.mxu0 %v673
      %3442 = vmatprep.subr.mxu0 0.0
      %3443 = vmatpush1.msra.mxu0 %v672
      %3444 = vmatprep.subr.mxu0 0.0
      %3445 = vmatpush1.msra.mxu0 %v671
      %3446 = vmatprep.subr.mxu0 0.0
      %3447 = vmatpush1.msra.mxu0 %v670
      %3448 = vmatprep.subr.mxu0 0.0
      %3449 = vmatpush2.msra.mxu0 0.0
      %3450 = vmatprep.subr.mxu0 0.0
      %3451 = vmatpush2.msra.mxu0 0.0
      %3452 = vmatprep.subr.mxu0 0.0
      %3453 = vmatpush2.msra.mxu0 0.0
      %3454 = vmatprep.subr.mxu0 0.0
      %3455 = vmatpush2.msra.mxu0 0.0
      %3456 = vmatprep.subr.mxu0 0.0
      %3457 = vmatpush2.msra.mxu0 0.0
      %3458 = vmatprep.subr.mxu0 0.0
      %3459 = vmatpush2.msra.mxu0 0.0
      %3460 = vmatprep.subr.mxu0 0.0
      %3461 = vmatpush2.msra.mxu0 0.0
      %3462 = vmatprep.subr.mxu0 0.0
      %3463 = vmatpush2.msra.mxu0 0.0
      %3464 = vmatprep.subr.mxu0 0.0
      %3465 = vmatpush2.msra.mxu0 0.0
      %3466 = vmatprep.subr.mxu0 0.0
      %3467 = vmatpush2.msra.mxu0 0.0
      %3468 = vmatprep.subr.mxu0 0.0
      %3469 = vmatpush2.msra.mxu0 0.0
      %3470 = vmatprep.subr.mxu0 0.0
      %3471 = vmatpush2.msra.mxu0 0.0
      %3472 = vmatprep.subr.mxu0 0.0
      %3473 = vmatpush2.msra.mxu0 0.0
      %3474 = vmatprep.subr.mxu0 0.0
      %3475 = vmatpush2.msra.mxu0 0.0
      %3476 = vmatprep.subr.mxu0 0.0
      %3477 = vmatpush2.msra.mxu0 0.0
      %3478 = vmatprep.subr.mxu0 0.0
      %3479 = vmatpush2.msra.mxu0 0.0
      %3480 = vmatprep.mubr.f32.mxu0 0.0
      %3481 = vmatmul.mubr.f32.gmra.mxu0 %v3408
      %v3482 = vpop.f32.mrf.mxu0
      %v3483 = vadd.f32 %v769, %v3482
      %v3484 = vpop.f32.mrf.mxu0
      %3485 = vmatprep.mubr.f32.mxu0 0.0
      %3486 = vmatmul.mubr.f32.gmra.mxu0 %v3411
      %v3487 = vpop.f32.mrf.mxu0
      %v3488 = vadd.f32 %v769, %v3487
      %v3489 = vpop.f32.mrf.mxu0
      %3490 = vmatprep.mubr.f32.mxu0 0.0
      %3491 = vmatmul.mubr.f32.gmra.mxu0 %v3414
      %v3492 = vpop.f32.mrf.mxu0
      %v3493 = vadd.f32 %v769, %v3492
      %v3494 = vpop.f32.mrf.mxu0
      %3495 = vdwg.mxu0
      %3499 = vrot.lane.b32.xlu0 %v3483, 96
      %v3500 = vpop.permute.xlu0 %3499
      %3501 = vrot.lane.b32.xlu0 %v3488, 96
      %v3502 = vpop.permute.xlu0 %3501
      %3503 = vrot.lane.b32.xlu0 %v3493, 96
      %v3504 = vpop.permute.xlu0 %3503
      %v3505 = vsel %vm657, %v3483, 0
      %v3507 = vsel %vm657, %v3488, 0
      %v3509 = vsel %vm657, %v3493, 0
      %v3511 = vsel %vm657, %v3500, 0
      %v3513 = vsel %vm657, %v3502, 0
      %v3515 = vsel %vm657, %v3504, 0
      %3517 = vmatprep.subr.mxu0 0.0
      %3518 = vmatpush1.xpose.msra.mxu0 0.0
      %3519 = vmatprep.subr.mxu0 0.0
      %3520 = vmatpush1.xpose.msra.mxu0 0.0
      %3521 = vmatprep.subr.mxu0 0.0
      %3522 = vmatpush1.xpose.msra.mxu0 0.0
      %3523 = vmatprep.subr.mxu0 0.0
      %3524 = vmatpush1.xpose.msra.mxu0 0.0
      %3525 = vmatprep.subr.mxu0 0.0
      %3526 = vmatpush1.xpose.msra.mxu0 0.0
      %3527 = vmatprep.subr.mxu0 0.0
      %3528 = vmatpush1.xpose.msra.mxu0 0.0
      %3529 = vmatprep.subr.mxu0 0.0
      %3530 = vmatpush1.xpose.msra.mxu0 0.0
      %3531 = vmatprep.subr.mxu0 0.0
      %3532 = vmatpush1.xpose.msra.mxu0 0.0
      %3533 = vmatprep.subr.mxu0 0.0
      %3534 = vmatpush1.xpose.msra.mxu0 0.0
      %3535 = vmatprep.subr.mxu0 0.0
      %3536 = vmatpush1.xpose.msra.mxu0 0.0
      %3537 = vmatprep.subr.mxu0 0.0
      %3538 = vmatpush1.xpose.msra.mxu0 0.0
      %3539 = vmatprep.subr.mxu0 0.0
      %3540 = vmatpush1.xpose.msra.mxu0 0.0
      %3541 = vmatprep.subr.mxu0 0.0
      %3542 = vmatpush1.xpose.msra.mxu0 0.0
      %3543 = vmatprep.subr.mxu0 0.0
      %3544 = vmatpush1.xpose.msra.mxu0 %v3515
      %3545 = vmatprep.subr.mxu0 0.0
      %3546 = vmatpush1.xpose.msra.mxu0 %v3513
      %3547 = vmatprep.subr.mxu0 0.0
      %3548 = vmatpush1.xpose.msra.mxu0 %v3511
      %3549 = vmatprep.subr.mxu0 0.0
      %3550 = vmatpush2.xpose.msra.mxu0 0.0
      %3551 = vmatprep.subr.mxu0 0.0
      %3552 = vmatpush2.xpose.msra.mxu0 0.0
      %3553 = vmatprep.subr.mxu0 0.0
      %3554 = vmatpush2.xpose.msra.mxu0 0.0
      %3555 = vmatprep.subr.mxu0 0.0
      %3556 = vmatpush2.xpose.msra.mxu0 0.0
      %3557 = vmatprep.subr.mxu0 0.0
      %3558 = vmatpush2.xpose.msra.mxu0 0.0
      %3559 = vmatprep.subr.mxu0 0.0
      %3560 = vmatpush2.xpose.msra.mxu0 0.0
      %3561 = vmatprep.subr.mxu0 0.0
      %3562 = vmatpush2.xpose.msra.mxu0 0.0
      %3563 = vmatprep.subr.mxu0 0.0
      %3564 = vmatpush2.xpose.msra.mxu0 0.0
      %3565 = vmatprep.subr.mxu0 0.0
      %3566 = vmatpush2.xpose.msra.mxu0 0.0
      %3567 = vmatprep.subr.mxu0 0.0
      %3568 = vmatpush2.xpose.msra.mxu0 0.0
      %3569 = vmatprep.subr.mxu0 0.0
      %3570 = vmatpush2.xpose.msra.mxu0 0.0
      %3571 = vmatprep.subr.mxu0 0.0
      %3572 = vmatpush2.xpose.msra.mxu0 0.0
      %3573 = vmatprep.subr.mxu0 0.0
      %3574 = vmatpush2.xpose.msra.mxu0 0.0
      %3575 = vmatprep.subr.mxu0 0.0
      %3576 = vmatpush2.xpose.msra.mxu0 0.0
      %3577 = vmatprep.subr.mxu0 0.0
      %3578 = vmatpush2.xpose.msra.mxu0 0.0
      %3579 = vmatprep.subr.mxu0 0.0
      %3580 = vmatpush2.xpose.msra.mxu0 0.0
      %3581 = vmatprep.mubr.f32.mxu0 0.0
      %3582 = vmatmul.mubr.f32.gmra.mxu0 %v3505
      %v3583 = vpop.f32.mrf.mxu0
      %v3584 = vadd.f32 0.0, %v3583
      %v3585 = vpop.f32.mrf.mxu0
      %3586 = vmatprep.mubr.f32.mxu0 0.0
      %3587 = vmatmul.mubr.f32.gmra.mxu0 %v3507
      %v3588 = vpop.f32.mrf.mxu0
      %v3589 = vadd.f32 0.0, %v3588
      %v3590 = vpop.f32.mrf.mxu0
      %3591 = vmatprep.mubr.f32.mxu0 0.0
      %3592 = vmatmul.mubr.f32.gmra.mxu0 %v3509
      %v3593 = vpop.f32.mrf.mxu0
      %v3594 = vadd.f32 0.0, %v3593
      %v3595 = vpop.f32.mrf.mxu0
      %3596 = vdwg.mxu0
      %v3597 = vmul.f32 %v3584, 0.17677669
      %v3598 = vmul.f32 %v3589, 0.17677669
      %v3599 = vmul.f32 %v3594, 0.17677669
      %v3600 = vsel %vm964, %v3597, -inf
      %3601 = vmax.xlane.f32.xlu0 %v3600
      %v3602 = vpop.xlane.xlu0 %3601
      %v3603 = vsel %vm964, %v3598, -inf
      %3604 = vmax.xlane.f32.xlu0 %v3603
      %v3605 = vpop.xlane.xlu0 %3604
      %v3606 = vsel %vm971, %v3599, -inf
      %3607 = vmax.xlane.f32.xlu0 %v3606
      %v3608 = vpop.xlane.xlu0 %3607
      %v3609 = vsub.f32 %v3597, %v3602
      %v3610 = vsub.f32 %v3598, %v3605
      %v3611 = vsub.f32 %v3599, %v3608
      %v3612 = vmul.f32 %v3609, 1.442695
      %v3613 = vpow.pop %v3612
      %v3614 = vmul.f32 %v3610, 1.442695
      %v3615 = vpow.pop %v3614
      %v3616 = vmul.f32 %v3611, 1.442695
      %v3617 = vpow.pop %v3616
      %v3618 = vsel %vm964, %v3613, 0.0
      %3619 = vadd.xlane.f32.xlu0 %v3618
      %v3620 = vpop.xlane.xlu0 %3619
      %v3621 = vsel %vm964, %v3615, 0.0
      %3622 = vadd.xlane.f32.xlu0 %v3621
      %v3623 = vpop.xlane.xlu0 %3622
      %v3624 = vsel %vm971, %v3617, 0.0
      %3625 = vadd.xlane.f32.xlu0 %v3624
      %v3626 = vpop.xlane.xlu0 %3625
      %v3627 = vrcp.pop %v3620
      %v3628 = vrcp.pop %v3623
      %v3629 = vrcp.pop %v3626
      %v3630 = vmul.f32 %v3613, %v3627
      %v3631 = vmul.f32 %v3615, %v3628
      %v3632 = vmul.f32 %v3617, %v3629
      %3633 = vrot.lane.b32.xlu0 %v3483, 64
      %v3634 = vpop.permute.xlu0 %3633
      %3635 = vrot.lane.b32.xlu0 %v3488, 64
      %v3636 = vpop.permute.xlu0 %3635
      %3637 = vrot.lane.b32.xlu0 %v3493, 64
      %v3638 = vpop.permute.xlu0 %3637
      %v3642 = vsel %vm964, %v3630, 0
      %v3645 = vsel %vm964, %v3631, 0
      %v3648 = vsel %vm964, %v3632, 0
      %v3650 = vsel %vm1016, %v3638, 0
      %3652 = vmatprep.subr.mxu0 0.0
      %3653 = vmatpush1.msra.mxu0 0.0
      %3654 = vmatprep.subr.mxu0 0.0
      %3655 = vmatpush1.msra.mxu0 0.0
      %3656 = vmatprep.subr.mxu0 0.0
      %3657 = vmatpush1.msra.mxu0 0.0
      %3658 = vmatprep.subr.mxu0 0.0
      %3659 = vmatpush1.msra.mxu0 0.0
      %3660 = vmatprep.subr.mxu0 0.0
      %3661 = vmatpush1.msra.mxu0 0.0
      %3662 = vmatprep.subr.mxu0 0.0
      %3663 = vmatpush1.msra.mxu0 0.0
      %3664 = vmatprep.subr.mxu0 0.0
      %3665 = vmatpush1.msra.mxu0 0.0
      %3666 = vmatprep.subr.mxu0 0.0
      %3667 = vmatpush1.msra.mxu0 0.0
      %3668 = vmatprep.subr.mxu0 0.0
      %3669 = vmatpush1.msra.mxu0 0.0
      %3670 = vmatprep.subr.mxu0 0.0
      %3671 = vmatpush1.msra.mxu0 0.0
      %3672 = vmatprep.subr.mxu0 0.0
      %3673 = vmatpush1.msra.mxu0 0.0
      %3674 = vmatprep.subr.mxu0 0.0
      %3675 = vmatpush1.msra.mxu0 0.0
      %3676 = vmatprep.subr.mxu0 0.0
      %3677 = vmatpush1.msra.mxu0 0.0
      %3678 = vmatprep.subr.mxu0 0.0
      %3679 = vmatpush1.msra.mxu0 %v3650
      %3680 = vmatprep.subr.mxu0 0.0
      %3681 = vmatpush1.msra.mxu0 %v3636
      %3682 = vmatprep.subr.mxu0 0.0
      %3683 = vmatpush1.msra.mxu0 %v3634
      %3684 = vmatprep.subr.mxu0 0.0
      %3685 = vmatpush2.msra.mxu0 0.0
      %3686 = vmatprep.subr.mxu0 0.0
      %3687 = vmatpush2.msra.mxu0 0.0
      %3688 = vmatprep.subr.mxu0 0.0
      %3689 = vmatpush2.msra.mxu0 0.0
      %3690 = vmatprep.subr.mxu0 0.0
      %3691 = vmatpush2.msra.mxu0 0.0
      %3692 = vmatprep.subr.mxu0 0.0
      %3693 = vmatpush2.msra.mxu0 0.0
      %3694 = vmatprep.subr.mxu0 0.0
      %3695 = vmatpush2.msra.mxu0 0.0
      %3696 = vmatprep.subr.mxu0 0.0
      %3697 = vmatpush2.msra.mxu0 0.0
      %3698 = vmatprep.subr.mxu0 0.0
      %3699 = vmatpush2.msra.mxu0 0.0
      %3700 = vmatprep.subr.mxu0 0.0
      %3701 = vmatpush2.msra.mxu0 0.0
      %3702 = vmatprep.subr.mxu0 0.0
      %3703 = vmatpush2.msra.mxu0 0.0
      %3704 = vmatprep.subr.mxu0 0.0
      %3705 = vmatpush2.msra.mxu0 0.0
      %3706 = vmatprep.subr.mxu0 0.0
      %3707 = vmatpush2.msra.mxu0 0.0
      %3708 = vmatprep.subr.mxu0 0.0
      %3709 = vmatpush2.msra.mxu0 0.0
      %3710 = vmatprep.subr.mxu0 0.0
      %3711 = vmatpush2.msra.mxu0 0.0
      %3712 = vmatprep.subr.mxu0 0.0
      %3713 = vmatpush2.msra.mxu0 0.0
      %3714 = vmatprep.subr.mxu0 0.0
      %3715 = vmatpush2.msra.mxu0 0.0
      %3716 = vmatprep.mubr.f32.mxu0 0.0
      %3717 = vmatmul.mubr.f32.gmra.mxu0 %v3642
      %v3718 = vpop.f32.mrf.mxu0
      %v3719 = vadd.f32 0.0, %v3718
      %v3720 = vpop.f32.mrf.mxu0
      %3721 = vmatprep.mubr.f32.mxu0 0.0
      %3722 = vmatmul.mubr.f32.gmra.mxu0 %v3645
      %v3723 = vpop.f32.mrf.mxu0
      %v3724 = vadd.f32 0.0, %v3723
      %v3725 = vpop.f32.mrf.mxu0
      %3726 = vmatprep.mubr.f32.mxu0 0.0
      %3727 = vmatmul.mubr.f32.gmra.mxu0 %v3648
      %v3728 = vpop.f32.mrf.mxu0
      %v3729 = vadd.f32 0.0, %v3728
      %v3730 = vpop.f32.mrf.mxu0
      %3731 = vdwg.mxu0
      %v3733 = vsel %vm657, %v3719, 0
      %v3736 = vsel %vm657, %v3724, 0
      %v3739 = vsel %vm657, %v3729, 0
      %3741 = vmatprep.subr.mxu0 0.0
      %3742 = vmatpush1.msra.mxu0 0.0
      %3743 = vmatprep.subr.mxu0 0.0
      %3744 = vmatpush1.msra.mxu0 0.0
      %3745 = vmatprep.subr.mxu0 0.0
      %3746 = vmatpush1.msra.mxu0 0.0
      %3747 = vmatprep.subr.mxu0 0.0
      %3748 = vmatpush1.msra.mxu0 0.0
      %3749 = vmatprep.subr.mxu0 0.0
      %3750 = vmatpush1.msra.mxu0 0.0
      %3751 = vmatprep.subr.mxu0 0.0
      %3752 = vmatpush1.msra.mxu0 0.0
      %3753 = vmatprep.subr.mxu0 0.0
      %3754 = vmatpush1.msra.mxu0 0.0
      %3755 = vmatprep.subr.mxu0 0.0
      %3756 = vmatpush1.msra.mxu0 0.0
      %3757 = vmatprep.subr.mxu0 0.0
      %3758 = vmatpush1.msra.mxu0 0.0
      %3759 = vmatprep.subr.mxu0 0.0
      %3760 = vmatpush1.msra.mxu0 0.0
      %3761 = vmatprep.subr.mxu0 0.0
      %3762 = vmatpush1.msra.mxu0 0.0
      %3763 = vmatprep.subr.mxu0 0.0
      %3764 = vmatpush1.msra.mxu0 0.0
      %3765 = vmatprep.subr.mxu0 0.0
      %3766 = vmatpush1.msra.mxu0 %v678
      %3767 = vmatprep.subr.mxu0 0.0
      %3768 = vmatpush1.msra.mxu0 %v677
      %3769 = vmatprep.subr.mxu0 0.0
      %3770 = vmatpush1.msra.mxu0 %v676
      %3771 = vmatprep.subr.mxu0 0.0
      %3772 = vmatpush1.msra.mxu0 %v675
      %3773 = vmatprep.subr.mxu0 0.0
      %3774 = vmatpush2.msra.mxu0 0.0
      %3775 = vmatprep.subr.mxu0 0.0
      %3776 = vmatpush2.msra.mxu0 0.0
      %3777 = vmatprep.subr.mxu0 0.0
      %3778 = vmatpush2.msra.mxu0 0.0
      %3779 = vmatprep.subr.mxu0 0.0
      %3780 = vmatpush2.msra.mxu0 0.0
      %3781 = vmatprep.subr.mxu0 0.0
      %3782 = vmatpush2.msra.mxu0 0.0
      %3783 = vmatprep.subr.mxu0 0.0
      %3784 = vmatpush2.msra.mxu0 0.0
      %3785 = vmatprep.subr.mxu0 0.0
      %3786 = vmatpush2.msra.mxu0 0.0
      %3787 = vmatprep.subr.mxu0 0.0
      %3788 = vmatpush2.msra.mxu0 0.0
      %3789 = vmatprep.subr.mxu0 0.0
      %3790 = vmatpush2.msra.mxu0 0.0
      %3791 = vmatprep.subr.mxu0 0.0
      %3792 = vmatpush2.msra.mxu0 0.0
      %3793 = vmatprep.subr.mxu0 0.0
      %3794 = vmatpush2.msra.mxu0 0.0
      %3795 = vmatprep.subr.mxu0 0.0
      %3796 = vmatpush2.msra.mxu0 0.0
      %3797 = vmatprep.subr.mxu0 0.0
      %3798 = vmatpush2.msra.mxu0 0.0
      %3799 = vmatprep.subr.mxu0 0.0
      %3800 = vmatpush2.msra.mxu0 0.0
      %3801 = vmatprep.subr.mxu0 0.0
      %3802 = vmatpush2.msra.mxu0 0.0
      %3803 = vmatprep.subr.mxu0 0.0
      %3804 = vmatpush2.msra.mxu0 0.0
      %3805 = vmatprep.mubr.f32.mxu0 0.0
      %3806 = vmatmul.mubr.f32.gmra.mxu0 %v3733
      %v3807 = vpop.f32.mrf.mxu0
      %v3808 = vadd.f32 0.0, %v3807
      %v3809 = vpop.f32.mrf.mxu0
      %3810 = vmatprep.mubr.f32.mxu0 0.0
      %3811 = vmatmul.mubr.f32.gmra.mxu0 %v3736
      %v3812 = vpop.f32.mrf.mxu0
      %v3813 = vadd.f32 0.0, %v3812
      %v3814 = vpop.f32.mrf.mxu0
      %3815 = vmatprep.mubr.f32.mxu0 0.0
      %3816 = vmatmul.mubr.f32.gmra.mxu0 %v3739
      %v3817 = vpop.f32.mrf.mxu0
      %v3818 = vadd.f32 0.0, %v3817
      %v3819 = vpop.f32.mrf.mxu0
      %3820 = vdwg.mxu0
      %v3821 = vadd.f32 %v3359, %v3808
      %v3822 = vadd.f32 %v3360, %v3813
      %v3823 = vadd.f32 %v3361, %v3818
      %v3824 = vadd.f32 %v3821, %v1195
      %v3825 = vadd.f32 %v3822, %v1195
      %v3826 = vadd.f32 %v3823, %v1195
      %v3827 = vsel %vm657, %v3824, 0.0
      %3828 = vadd.xlane.f32.xlu0 %v3827
      %v3829 = vpop.xlane.xlu0 %3828
      %v3830 = vsel %vm657, %v3825, 0.0
      %3831 = vadd.xlane.f32.xlu0 %v3830
      %v3832 = vpop.xlane.xlu0 %3831
      %v3833 = vsel %vm700, %v3826, 0.0
      %3834 = vadd.xlane.f32.xlu0 %v3833
      %v3835 = vpop.xlane.xlu0 %3834
      %v3836 = vmul.f32 %v3829, %v720
      %v3837 = vmul.f32 %v3832, %v720
      %v3838 = vmul.f32 %v3835, %v720
      %v3839 = vsub.f32 %v3824, %v3836
      %v3840 = vsub.f32 %v3825, %v3837
      %v3841 = vsub.f32 %v3826, %v3838
      %v3842 = vmul.f32 %v3839, %v3839
      %v3843 = vmul.f32 %v3840, %v3840
      %v3844 = vmul.f32 %v3841, %v3841
      %v3845 = vsel %vm657, %v3842, 0.0
      %3846 = vadd.xlane.f32.xlu0 %v3845
      %v3847 = vpop.xlane.xlu0 %3846
      %v3848 = vsel %vm657, %v3843, 0.0
      %3849 = vadd.xlane.f32.xlu0 %v3848
      %v3850 = vpop.xlane.xlu0 %3849
      %v3851 = vsel %vm700, %v3844, 0.0
      %3852 = vadd.xlane.f32.xlu0 %v3851
      %v3853 = vpop.xlane.xlu0 %3852
      %v3854 = vmul.f32 %v3847, %v720
      %v3855 = vmul.f32 %v3850, %v720
      %v3856 = vmul.f32 %v3853, %v720
      %v3857 = vadd.f32 %v3854, 1e-05
      %v3858 = vadd.f32 %v3855, 1e-05
      %v3859 = vadd.f32 %v3856, 1e-05
      %v3860 = vrsqrt.pop %v3857
      %v3861 = vrsqrt.pop %v3858
      %v3862 = vrsqrt.pop %v3859
      %v3863 = vmul.f32 %v3839, %v3860
      %v3864 = vmul.f32 %v3840, %v3861
      %v3865 = vmul.f32 %v3841, %v3862
      %v3866 = vmul.f32 %v3863, %v1242
      %v3867 = vmul.f32 %v3864, %v1242
      %v3868 = vmul.f32 %v3865, %v1242
      %v3869 = vadd.f32 %v3866, %v1249
      %v3870 = vadd.f32 %v3867, %v1249
      %v3871 = vadd.f32 %v3868, %v1249
      %v3873 = vsel %vm657, %v3869, 0
      %v3876 = vsel %vm657, %v3870, 0
      %v3879 = vsel %vm657, %v3871, 0
      %3881 = vmatprep.subr.mxu0 0.0
      %3882 = vmatpush1.msra.mxu0 0.0
      %3883 = vmatprep.subr.mxu0 0.0
      %3884 = vmatpush1.msra.mxu0 0.0
      %3885 = vmatprep.subr.mxu0 0.0
      %3886 = vmatpush1.msra.mxu0 0.0
      %3887 = vmatprep.subr.mxu0 0.0
      %3888 = vmatpush1.msra.mxu0 0.0
      %3889 = vmatprep.subr.mxu0 0.0
      %3890 = vmatpush1.msra.mxu0 0.0
      %3891 = vmatprep.subr.mxu0 0.0
      %3892 = vmatpush1.msra.mxu0 0.0
      %3893 = vmatprep.subr.mxu0 0.0
      %3894 = vmatpush1.msra.mxu0 0.0
      %3895 = vmatprep.subr.mxu0 0.0
      %3896 = vmatpush1.msra.mxu0 0.0
      %3897 = vmatprep.subr.mxu0 0.0
      %3898 = vmatpush1.msra.mxu0 0.0
      %3899 = vmatprep.subr.mxu0 0.0
      %3900 = vmatpush1.msra.mxu0 0.0
      %3901 = vmatprep.subr.mxu0 0.0
      %3902 = vmatpush1.msra.mxu0 0.0
      %3903 = vmatprep.subr.mxu0 0.0
      %3904 = vmatpush1.msra.mxu0 0.0
      %3905 = vmatprep.subr.mxu0 0.0
      %3906 = vmatpush1.msra.mxu0 %v683
      %3907 = vmatprep.subr.mxu0 0.0
      %3908 = vmatpush1.msra.mxu0 %v682
      %3909 = vmatprep.subr.mxu0 0.0
      %3910 = vmatpush1.msra.mxu0 %v681
      %3911 = vmatprep.subr.mxu0 0.0
      %3912 = vmatpush1.msra.mxu0 %v680
      %3913 = vmatprep.subr.mxu0 0.0
      %3914 = vmatpush2.msra.mxu0 0.0
      %3915 = vmatprep.subr.mxu0 0.0
      %3916 = vmatpush2.msra.mxu0 0.0
      %3917 = vmatprep.subr.mxu0 0.0
      %3918 = vmatpush2.msra.mxu0 0.0
      %3919 = vmatprep.subr.mxu0 0.0
      %3920 = vmatpush2.msra.mxu0 0.0
      %3921 = vmatprep.subr.mxu0 0.0
      %3922 = vmatpush2.msra.mxu0 0.0
      %3923 = vmatprep.subr.mxu0 0.0
      %3924 = vmatpush2.msra.mxu0 0.0
      %3925 = vmatprep.subr.mxu0 0.0
      %3926 = vmatpush2.msra.mxu0 0.0
      %3927 = vmatprep.subr.mxu0 0.0
      %3928 = vmatpush2.msra.mxu0 0.0
      %3929 = vmatprep.subr.mxu0 0.0
      %3930 = vmatpush2.msra.mxu0 0.0
      %3931 = vmatprep.subr.mxu0 0.0
      %3932 = vmatpush2.msra.mxu0 0.0
      %3933 = vmatprep.subr.mxu0 0.0
      %3934 = vmatpush2.msra.mxu0 0.0
      %3935 = vmatprep.subr.mxu0 0.0
      %3936 = vmatpush2.msra.mxu0 0.0
      %3937 = vmatprep.subr.mxu0 0.0
      %3938 = vmatpush2.msra.mxu0 0.0
      %3939 = vmatprep.subr.mxu0 0.0
      %3940 = vmatpush2.msra.mxu0 0.0
      %3941 = vmatprep.subr.mxu0 0.0
      %3942 = vmatpush2.msra.mxu0 0.0
      %3943 = vmatprep.subr.mxu0 0.0
      %3944 = vmatpush2.msra.mxu0 0.0
      %3945 = vmatprep.mubr.f32.mxu0 0.0
      %3946 = vmatmul.mubr.f32.gmra.mxu0 %v3873
      %v3947 = vpop.f32.mrf.mxu0
      %v3948 = vadd.f32 %v1257, %v3947
      %v3949 = vpop.f32.mrf.mxu0
      %3950 = vmatprep.mubr.f32.mxu0 0.0
      %3951 = vmatmul.mubr.f32.gmra.mxu0 %v3876
      %v3952 = vpop.f32.mrf.mxu0
      %v3953 = vadd.f32 %v1257, %v3952
      %v3954 = vpop.f32.mrf.mxu0
      %3955 = vmatprep.mubr.f32.mxu0 0.0
      %3956 = vmatmul.mubr.f32.gmra.mxu0 %v3879
      %v3957 = vpop.f32.mrf.mxu0
      %v3958 = vadd.f32 %v1257, %v3957
      %v3959 = vpop.f32.mrf.mxu0
      %3960 = vdwg.mxu0
      %v3961 = vmul.f32 %v3948, 0.5
      %v3962 = vmul.f32 %v3953, 0.5
      %v3963 = vmul.f32 %v3958, 0.5
      %v3964 = vmul.f32 %v3948, 0.70710677
      %v3965 = vmul.f32 %v3953, 0.70710677
      %v3966 = vmul.f32 %v3958, 0.70710677
      %vm3967 = vcmp.lt.f32.partialorder %v3964, 0.0
      %vm3968 = vcmp.lt.f32.partialorder %v3965, 0.0
      %vm3969 = vcmp.lt.f32.partialorder %v3966, 0.0
      %v3970 = vsel %vm3967, -1.0, 1.0
      %v3971 = vsel %vm3968, -1.0, 1.0
      %v3972 = vsel %vm3969, -1.0, 1.0
      %v3973 = vand.u32 2147483647, %v3964
      %v3974 = vand.u32 2147483647, %v3965
      %v3975 = vand.u32 2147483647, %v3966
      %v3976 = vmul.f32 %v3973, 0.3275911
      %v3977 = vmul.f32 %v3974, 0.3275911
      %v3978 = vmul.f32 %v3975, 0.3275911
      %v3979 = vadd.f32 %v3976, 1.0
      %v3980 = vadd.f32 %v3977, 1.0
      %v3981 = vadd.f32 %v3978, 1.0
      %v3982 = vrcp.pop %v3979
      %v3983 = vmul.f32 1.0, %v3982
      %v3984 = vrcp.pop %v3980
      %v3985 = vmul.f32 1.0, %v3984
      %v3986 = vrcp.pop %v3981
      %v3987 = vmul.f32 1.0, %v3986
      %v3988 = vmul.f32 %v3983, 1.0614054
      %v3989 = vmul.f32 %v3985, 1.0614054
      %v3990 = vmul.f32 %v3987, 1.0614054
      %v3991 = vadd.f32 %v3988, -1.4531521
      %v3992 = vadd.f32 %v3989, -1.4531521
      %v3993 = vadd.f32 %v3990, -1.4531521
      %v3994 = vmul.f32 %v3991, %v3983
      %v3995 = vmul.f32 %v3992, %v3985
      %v3996 = vmul.f32 %v3993, %v3987
      %v3997 = vadd.f32 %v3994, 1.4214138
      %v3998 = vadd.f32 %v3995, 1.4214138
      %v3999 = vadd.f32 %v3996, 1.4214138
      %v4000 = vmul.f32 %v3997, %v3983
      %v4001 = vmul.f32 %v3998, %v3985
      %v4002 = vmul.f32 %v3999, %v3987
      %v4003 = vadd.f32 %v4000, -0.28449672
      %v4004 = vadd.f32 %v4001, -0.28449672
      %v4005 = vadd.f32 %v4002, -0.28449672
      %v4006 = vmul.f32 %v4003, %v3983
      %v4007 = vmul.f32 %v4004, %v3985
      %v4008 = vmul.f32 %v4005, %v3987
      %v4009 = vadd.f32 %v4006, 0.2548296
      %v4010 = vadd.f32 %v4007, 0.2548296
      %v4011 = vadd.f32 %v4008, 0.2548296
      %v4012 = vmul.f32 %v4009, %v3983
      %v4013 = vmul.f32 %v4010, %v3985
      %v4014 = vmul.f32 %v4011, %v3987
      %v4015 = vsub.f32 0.0, %v3973
      %v4016 = vsub.f32 0.0, %v3974
      %v4017 = vsub.f32 0.0, %v3975
      %v4018 = vmul.f32 %v4015, %v3973
      %v4019 = vmul.f32 %v4016, %v3974
      %v4020 = vmul.f32 %v4017, %v3975
      %v4021 = vmul.f32 %v4018, 1.442695
      %v4022 = vpow.pop %v4021
      %v4023 = vmul.f32 %v4019, 1.442695
      %v4024 = vpow.pop %v4023
      %v4025 = vmul.f32 %v4020, 1.442695
      %v4026 = vpow.pop %v4025
      %v4027 = vmul.f32 %v4012, %v4022
      %v4028 = vmul.f32 %v4013, %v4024
      %v4029 = vmul.f32 %v4014, %v4026
      %v4030 = vsub.f32 1.0, %v4027
      %v4031 = vsub.f32 1.0, %v4028
      %v4032 = vsub.f32 1.0, %v4029
      %v4033 = vmul.f32 %v3970, %v4030
      %v4034 = vmul.f32 %v3971, %v4031
      %v4035 = vmul.f32 %v3972, %v4032
      %v4036 = vadd.f32 %v4033, 1.0
      %v4037 = vadd.f32 %v4034, 1.0
      %v4038 = vadd.f32 %v4035, 1.0
      %v4039 = vmul.f32 %v3961, %v4036
      %v4040 = vmul.f32 %v3962, %v4037
      %v4041 = vmul.f32 %v3963, %v4038
      %v4043 = vsel %vm559, %v4039, 0
      %v4046 = vsel %vm559, %v4040, 0
      %v4049 = vsel %vm559, %v4041, 0
      %4051 = vmatprep.subr.mxu0 0.0
      %4052 = vmatpush1.msra.mxu0 0.0
      %4053 = vmatprep.subr.mxu0 0.0
      %4054 = vmatpush1.msra.mxu0 0.0
      %4055 = vmatprep.subr.mxu0 0.0
      %4056 = vmatpush1.msra.mxu0 0.0
      %4057 = vmatprep.subr.mxu0 0.0
      %4058 = vmatpush1.msra.mxu0 0.0
      %4059 = vmatprep.subr.mxu0 0.0
      %4060 = vmatpush1.msra.mxu0 0.0
      %4061 = vmatprep.subr.mxu0 0.0
      %4062 = vmatpush1.msra.mxu0 0.0
      %4063 = vmatprep.subr.mxu0 0.0
      %4064 = vmatpush1.msra.mxu0 0.0
      %4065 = vmatprep.subr.mxu0 0.0
      %4066 = vmatpush1.msra.mxu0 0.0
      %4067 = vmatprep.subr.mxu0 0.0
      %4068 = vmatpush1.msra.mxu0 %v692
      %4069 = vmatprep.subr.mxu0 0.0
      %4070 = vmatpush1.msra.mxu0 %v691
      %4071 = vmatprep.subr.mxu0 0.0
      %4072 = vmatpush1.msra.mxu0 %v690
      %4073 = vmatprep.subr.mxu0 0.0
      %4074 = vmatpush1.msra.mxu0 %v689
      %4075 = vmatprep.subr.mxu0 0.0
      %4076 = vmatpush1.msra.mxu0 %v688
      %4077 = vmatprep.subr.mxu0 0.0
      %4078 = vmatpush1.msra.mxu0 %v687
      %4079 = vmatprep.subr.mxu0 0.0
      %4080 = vmatpush1.msra.mxu0 %v686
      %4081 = vmatprep.subr.mxu0 0.0
      %4082 = vmatpush1.msra.mxu0 %v685
      %4083 = vmatprep.subr.mxu0 0.0
      %4084 = vmatpush2.msra.mxu0 0.0
      %4085 = vmatprep.subr.mxu0 0.0
      %4086 = vmatpush2.msra.mxu0 0.0
      %4087 = vmatprep.subr.mxu0 0.0
      %4088 = vmatpush2.msra.mxu0 0.0
      %4089 = vmatprep.subr.mxu0 0.0
      %4090 = vmatpush2.msra.mxu0 0.0
      %4091 = vmatprep.subr.mxu0 0.0
      %4092 = vmatpush2.msra.mxu0 0.0
      %4093 = vmatprep.subr.mxu0 0.0
      %4094 = vmatpush2.msra.mxu0 0.0
      %4095 = vmatprep.subr.mxu0 0.0
      %4096 = vmatpush2.msra.mxu0 0.0
      %4097 = vmatprep.subr.mxu0 0.0
      %4098 = vmatpush2.msra.mxu0 0.0
      %4099 = vmatprep.subr.mxu0 0.0
      %4100 = vmatpush2.msra.mxu0 0.0
      %4101 = vmatprep.subr.mxu0 0.0
      %4102 = vmatpush2.msra.mxu0 0.0
      %4103 = vmatprep.subr.mxu0 0.0
      %4104 = vmatpush2.msra.mxu0 0.0
      %4105 = vmatprep.subr.mxu0 0.0
      %4106 = vmatpush2.msra.mxu0 0.0
      %4107 = vmatprep.subr.mxu0 0.0
      %4108 = vmatpush2.msra.mxu0 0.0
      %4109 = vmatprep.subr.mxu0 0.0
      %4110 = vmatpush2.msra.mxu0 0.0
      %4111 = vmatprep.subr.mxu0 0.0
      %4112 = vmatpush2.msra.mxu0 0.0
      %4113 = vmatprep.subr.mxu0 0.0
      %4114 = vmatpush2.msra.mxu0 0.0
      %4115 = vmatprep.mubr.f32.mxu0 0.0
      %4116 = vmatmul.mubr.f32.gmra.mxu0 %v4043
      %v4117 = vpop.f32.mrf.mxu0
      %v4118 = vadd.f32 %v1433, %v4117
      %v4119 = vpop.f32.mrf.mxu0
      %4120 = vmatprep.mubr.f32.mxu0 0.0
      %4121 = vmatmul.mubr.f32.gmra.mxu0 %v4046
      %v4122 = vpop.f32.mrf.mxu0
      %v4123 = vpop.f32.mrf.mxu0
      %4124 = vmatprep.mubr.f32.mxu0 0.0
      %4125 = vmatmul.mubr.f32.gmra.mxu0 %v4049
      %v4126 = vpop.f32.mrf.mxu0
      %v4127 = vpop.f32.mrf.mxu0
      %4128 = vdwg.mxu0
      %v4129 = vadd.f32 %v3824, %v4118
      %v4130 = vsel %vm657, %v4129, 0.0
      %4131 = vadd.xlane.f32.xlu0 %v4130
      %v4132 = vpop.xlane.xlu0 %4131
      %v4133 = vmul.f32 %v4132, %v720
      %v4134 = vsub.f32 %v4129, %v4133
      %v4135 = vmul.f32 %v4134, %v4134
      %v4136 = vsel %vm657, %v4135, 0.0
      %4137 = vadd.xlane.f32.xlu0 %v4136
      %v4138 = vpop.xlane.xlu0 %4137
      %v4139 = vmul.f32 %v4138, %v720
      %v4140 = vadd.f32 %v4139, 1e-05
      %v4141 = vrsqrt.pop %v4140
      %v4142 = vmul.f32 %v4134, %v4141
      %v4143 = vmul.f32 %v4142, %v1539
      %v4144 = vadd.f32 %v4143, %v1544
      %v4146 = vsel %vm657, %v4144, 0
      %4148 = vmatprep.subr.mxu0 0.0
      %4149 = vmatpush1.msra.mxu0 0.0
      %4150 = vmatprep.subr.mxu0 0.0
      %4151 = vmatpush1.msra.mxu0 0.0
      %4152 = vmatprep.subr.mxu0 0.0
      %4153 = vmatpush1.msra.mxu0 0.0
      %4154 = vmatprep.subr.mxu0 0.0
      %4155 = vmatpush1.msra.mxu0 0.0
      %4156 = vmatprep.subr.mxu0 0.0
      %4157 = vmatpush1.msra.mxu0 0.0
      %4158 = vmatprep.subr.mxu0 0.0
      %4159 = vmatpush1.msra.mxu0 0.0
      %4160 = vmatprep.subr.mxu0 0.0
      %4161 = vmatpush1.msra.mxu0 0.0
      %4162 = vmatprep.subr.mxu0 0.0
      %4163 = vmatpush1.msra.mxu0 0.0
      %4164 = vmatprep.subr.mxu0 0.0
      %4165 = vmatpush1.msra.mxu0 0.0
      %4166 = vmatprep.subr.mxu0 0.0
      %4167 = vmatpush1.msra.mxu0 0.0
      %4168 = vmatprep.subr.mxu0 0.0
      %4169 = vmatpush1.msra.mxu0 0.0
      %4170 = vmatprep.subr.mxu0 0.0
      %4171 = vmatpush1.msra.mxu0 0.0
      %4172 = vmatprep.subr.mxu0 0.0
      %4173 = vmatpush1.msra.mxu0 %v697
      %4174 = vmatprep.subr.mxu0 0.0
      %4175 = vmatpush1.msra.mxu0 %v696
      %4176 = vmatprep.subr.mxu0 0.0
      %4177 = vmatpush1.msra.mxu0 %v695
      %4178 = vmatprep.subr.mxu0 0.0
      %4179 = vmatpush1.msra.mxu0 %v694
      %4180 = vmatprep.subr.mxu0 0.0
      %4181 = vmatpush2.msra.mxu0 0.0
      %4182 = vmatprep.subr.mxu0 0.0
      %4183 = vmatpush2.msra.mxu0 0.0
      %4184 = vmatprep.subr.mxu0 0.0
      %4185 = vmatpush2.msra.mxu0 0.0
      %4186 = vmatprep.subr.mxu0 0.0
      %4187 = vmatpush2.msra.mxu0 0.0
      %4188 = vmatprep.subr.mxu0 0.0
      %4189 = vmatpush2.msra.mxu0 0.0
      %4190 = vmatprep.subr.mxu0 0.0
      %4191 = vmatpush2.msra.mxu0 0.0
      %4192 = vmatprep.subr.mxu0 0.0
      %4193 = vmatpush2.msra.mxu0 0.0
      %4194 = vmatprep.subr.mxu0 0.0
      %4195 = vmatpush2.msra.mxu0 0.0
      %4196 = vmatprep.subr.mxu0 0.0
      %4197 = vmatpush2.msra.mxu0 0.0
      %4198 = vmatprep.subr.mxu0 0.0
      %4199 = vmatpush2.msra.mxu0 0.0
      %4200 = vmatprep.subr.mxu0 0.0
      %4201 = vmatpush2.msra.mxu0 0.0
      %4202 = vmatprep.subr.mxu0 0.0
      %4203 = vmatpush2.msra.mxu0 0.0
      %4204 = vmatprep.subr.mxu0 0.0
      %4205 = vmatpush2.msra.mxu0 0.0
      %4206 = vmatprep.subr.mxu0 0.0
      %4207 = vmatpush2.msra.mxu0 0.0
      %4208 = vmatprep.subr.mxu0 0.0
      %4209 = vmatpush2.msra.mxu0 0.0
      %4210 = vmatprep.subr.mxu0 0.0
      %4211 = vmatpush2.msra.mxu0 0.0
      %4212 = vmatprep.mubr.f32.mxu0 0.0
      %4213 = vmatmul.mubr.f32.gmra.mxu0 %v4146
      %v4214 = vpop.f32.mrf.mxu0
      %v4215 = vadd.f32 %v698, %v4214
      %v4216 = vpop.f32.mrf.mxu0
      %4217 = vdwg.mxu0
      %4218 = vst.msk [vmem:[#allocation4 + $0x3] sm:$0x1] %vm1619, %v4215
      %v4219 = vld [vmem:[#allocation2 + $0x10] sm:$0xff]
      %v4220 = vld [vmem:[#allocation2 + $0x18] sm:$0xff]
      %v4221 = vadd.f32 %v4219, %v662
      %v4222 = vadd.f32 %v4220, %v663
      %4223 = vst.msk [vmem:[#allocation3 + $0x1] sm:$0xff] %vm657, %v4221
      %4224 = vst.msk [vmem:[#allocation3 + $0x9] sm:$0xff] %vm657, %v4222
      %v4225 = vld [vmem:[#allocation3] sm:$0xff]
      %v4226 = vld [vmem:[#allocation3 + $0x8] sm:$0xff]
      %v4227 = vld [vmem:[#allocation3 + $0x10] sm:$0x1]
      %v4228 = vsel %vm657, %v4225, 0.0
      %4229 = vadd.xlane.f32.xlu0 %v4228
      %v4230 = vpop.xlane.xlu0 %4229
      %v4231 = vsel %vm657, %v4226, 0.0
      %4232 = vadd.xlane.f32.xlu0 %v4231
      %v4233 = vpop.xlane.xlu0 %4232
      %v4234 = vsel %vm700, %v4227, 0.0
      %4235 = vadd.xlane.f32.xlu0 %v4234
      %v4236 = vpop.xlane.xlu0 %4235
      %v4237 = vmul.f32 %v4230, %v720
      %v4238 = vmul.f32 %v4233, %v720
      %v4239 = vmul.f32 %v4236, %v720
      %v4240 = vsub.f32 %v4225, %v4237
      %v4241 = vsub.f32 %v4226, %v4238
      %v4242 = vsub.f32 %v4227, %v4239
      %v4243 = vmul.f32 %v4240, %v4240
      %v4244 = vmul.f32 %v4241, %v4241
      %v4245 = vmul.f32 %v4242, %v4242
      %v4246 = vsel %vm657, %v4243, 0.0
      %4247 = vadd.xlane.f32.xlu0 %v4246
      %v4248 = vpop.xlane.xlu0 %4247
      %v4249 = vsel %vm657, %v4244, 0.0
      %4250 = vadd.xlane.f32.xlu0 %v4249
      %v4251 = vpop.xlane.xlu0 %4250
      %v4252 = vsel %vm700, %v4245, 0.0
      %4253 = vadd.xlane.f32.xlu0 %v4252
      %v4254 = vpop.xlane.xlu0 %4253
      %v4255 = vmul.f32 %v4248, %v720
      %v4256 = vmul.f32 %v4251, %v720
      %v4257 = vmul.f32 %v4254, %v720
      %v4258 = vadd.f32 %v4255, 1e-05
      %v4259 = vadd.f32 %v4256, 1e-05
      %v4260 = vadd.f32 %v4257, 1e-05
      %v4261 = vrsqrt.pop %v4258
      %v4262 = vrsqrt.pop %v4259
      %v4263 = vrsqrt.pop %v4260
      %v4264 = vmul.f32 %v4240, %v4261
      %v4265 = vmul.f32 %v4241, %v4262
      %v4266 = vmul.f32 %v4242, %v4263
      %v4267 = vmul.f32 %v4264, %v754
      %v4268 = vmul.f32 %v4265, %v754
      %v4269 = vmul.f32 %v4266, %v754
      %v4270 = vadd.f32 %v4267, %v761
      %v4271 = vadd.f32 %v4268, %v761
      %v4272 = vadd.f32 %v4269, %v761
      %v4274 = vsel %vm657, %v4270, 0
      %v4277 = vsel %vm657, %v4271, 0
      %v4280 = vsel %vm657, %v4272, 0
      %4282 = vmatprep.subr.mxu0 0.0
      %4283 = vmatpush1.msra.mxu0 0.0
      %4284 = vmatprep.subr.mxu0 0.0
      %4285 = vmatpush1.msra.mxu0 0.0
      %4286 = vmatprep.subr.mxu0 0.0
      %4287 = vmatpush1.msra.mxu0 0.0
      %4288 = vmatprep.subr.mxu0 0.0
      %4289 = vmatpush1.msra.mxu0 0.0
      %4290 = vmatprep.subr.mxu0 0.0
      %4291 = vmatpush1.msra.mxu0 0.0
      %4292 = vmatprep.subr.mxu0 0.0
      %4293 = vmatpush1.msra.mxu0 0.0
      %4294 = vmatprep.subr.mxu0 0.0
      %4295 = vmatpush1.msra.mxu0 0.0
      %4296 = vmatprep.subr.mxu0 0.0
      %4297 = vmatpush1.msra.mxu0 0.0
      %4298 = vmatprep.subr.mxu0 0.0
      %4299 = vmatpush1.msra.mxu0 0.0
      %4300 = vmatprep.subr.mxu0 0.0
      %4301 = vmatpush1.msra.mxu0 0.0
      %4302 = vmatprep.subr.mxu0 0.0
      %4303 = vmatpush1.msra.mxu0 0.0
      %4304 = vmatprep.subr.mxu0 0.0
      %4305 = vmatpush1.msra.mxu0 0.0
      %4306 = vmatprep.subr.mxu0 0.0
      %4307 = vmatpush1.msra.mxu0 %v673
      %4308 = vmatprep.subr.mxu0 0.0
      %4309 = vmatpush1.msra.mxu0 %v672
      %4310 = vmatprep.subr.mxu0 0.0
      %4311 = vmatpush1.msra.mxu0 %v671
      %4312 = vmatprep.subr.mxu0 0.0
      %4313 = vmatpush1.msra.mxu0 %v670
      %4314 = vmatprep.subr.mxu0 0.0
      %4315 = vmatpush2.msra.mxu0 0.0
      %4316 = vmatprep.subr.mxu0 0.0
      %4317 = vmatpush2.msra.mxu0 0.0
      %4318 = vmatprep.subr.mxu0 0.0
      %4319 = vmatpush2.msra.mxu0 0.0
      %4320 = vmatprep.subr.mxu0 0.0
      %4321 = vmatpush2.msra.mxu0 0.0
      %4322 = vmatprep.subr.mxu0 0.0
      %4323 = vmatpush2.msra.mxu0 0.0
      %4324 = vmatprep.subr.mxu0 0.0
      %4325 = vmatpush2.msra.mxu0 0.0
      %4326 = vmatprep.subr.mxu0 0.0
      %4327 = vmatpush2.msra.mxu0 0.0
      %4328 = vmatprep.subr.mxu0 0.0
      %4329 = vmatpush2.msra.mxu0 0.0
      %4330 = vmatprep.subr.mxu0 0.0
      %4331 = vmatpush2.msra.mxu0 0.0
      %4332 = vmatprep.subr.mxu0 0.0
      %4333 = vmatpush2.msra.mxu0 0.0
      %4334 = vmatprep.subr.mxu0 0.0
      %4335 = vmatpush2.msra.mxu0 0.0
      %4336 = vmatprep.subr.mxu0 0.0
      %4337 = vmatpush2.msra.mxu0 0.0
      %4338 = vmatprep.subr.mxu0 0.0
      %4339 = vmatpush2.msra.mxu0 0.0
      %4340 = vmatprep.subr.mxu0 0.0
      %4341 = vmatpush2.msra.mxu0 0.0
      %4342 = vmatprep.subr.mxu0 0.0
      %4343 = vmatpush2.msra.mxu0 0.0
      %4344 = vmatprep.subr.mxu0 0.0
      %4345 = vmatpush2.msra.mxu0 0.0
      %4346 = vmatprep.mubr.f32.mxu0 0.0
      %4347 = vmatmul.mubr.f32.gmra.mxu0 %v4274
      %v4348 = vpop.f32.mrf.mxu0
      %v4349 = vadd.f32 %v769, %v4348
      %v4350 = vpop.f32.mrf.mxu0
      %4351 = vmatprep.mubr.f32.mxu0 0.0
      %4352 = vmatmul.mubr.f32.gmra.mxu0 %v4277
      %v4353 = vpop.f32.mrf.mxu0
      %v4354 = vadd.f32 %v769, %v4353
      %v4355 = vpop.f32.mrf.mxu0
      %4356 = vmatprep.mubr.f32.mxu0 0.0
      %4357 = vmatmul.mubr.f32.gmra.mxu0 %v4280
      %v4358 = vpop.f32.mrf.mxu0
      %v4359 = vadd.f32 %v769, %v4358
      %v4360 = vpop.f32.mrf.mxu0
      %4361 = vdwg.mxu0
      %4365 = vrot.lane.b32.xlu0 %v4349, 96
      %v4366 = vpop.permute.xlu0 %4365
      %4367 = vrot.lane.b32.xlu0 %v4354, 96
      %v4368 = vpop.permute.xlu0 %4367
      %4369 = vrot.lane.b32.xlu0 %v4359, 96
      %v4370 = vpop.permute.xlu0 %4369
      %v4371 = vsel %vm657, %v4349, 0
      %v4373 = vsel %vm657, %v4354, 0
      %v4375 = vsel %vm657, %v4359, 0
      %v4377 = vsel %vm657, %v4366, 0
      %v4379 = vsel %vm657, %v4368, 0
      %v4381 = vsel %vm657, %v4370, 0
      %4383 = vmatprep.subr.mxu0 0.0
      %4384 = vmatpush1.xpose.msra.mxu0 0.0
      %4385 = vmatprep.subr.mxu0 0.0
      %4386 = vmatpush1.xpose.msra.mxu0 0.0
      %4387 = vmatprep.subr.mxu0 0.0
      %4388 = vmatpush1.xpose.msra.mxu0 0.0
      %4389 = vmatprep.subr.mxu0 0.0
      %4390 = vmatpush1.xpose.msra.mxu0 0.0
      %4391 = vmatprep.subr.mxu0 0.0
      %4392 = vmatpush1.xpose.msra.mxu0 0.0
      %4393 = vmatprep.subr.mxu0 0.0
      %4394 = vmatpush1.xpose.msra.mxu0 0.0
      %4395 = vmatprep.subr.mxu0 0.0
      %4396 = vmatpush1.xpose.msra.mxu0 0.0
      %4397 = vmatprep.subr.mxu0 0.0
      %4398 = vmatpush1.xpose.msra.mxu0 0.0
      %4399 = vmatprep.subr.mxu0 0.0
      %4400 = vmatpush1.xpose.msra.mxu0 0.0
      %4401 = vmatprep.subr.mxu0 0.0
      %4402 = vmatpush1.xpose.msra.mxu0 0.0
      %4403 = vmatprep.subr.mxu0 0.0
      %4404 = vmatpush1.xpose.msra.mxu0 0.0
      %4405 = vmatprep.subr.mxu0 0.0
      %4406 = vmatpush1.xpose.msra.mxu0 0.0
      %4407 = vmatprep.subr.mxu0 0.0
      %4408 = vmatpush1.xpose.msra.mxu0 0.0
      %4409 = vmatprep.subr.mxu0 0.0
      %4410 = vmatpush1.xpose.msra.mxu0 %v4381
      %4411 = vmatprep.subr.mxu0 0.0
      %4412 = vmatpush1.xpose.msra.mxu0 %v4379
      %4413 = vmatprep.subr.mxu0 0.0
      %4414 = vmatpush1.xpose.msra.mxu0 %v4377
      %4415 = vmatprep.subr.mxu0 0.0
      %4416 = vmatpush2.xpose.msra.mxu0 0.0
      %4417 = vmatprep.subr.mxu0 0.0
      %4418 = vmatpush2.xpose.msra.mxu0 0.0
      %4419 = vmatprep.subr.mxu0 0.0
      %4420 = vmatpush2.xpose.msra.mxu0 0.0
      %4421 = vmatprep.subr.mxu0 0.0
      %4422 = vmatpush2.xpose.msra.mxu0 0.0
      %4423 = vmatprep.subr.mxu0 0.0
      %4424 = vmatpush2.xpose.msra.mxu0 0.0
      %4425 = vmatprep.subr.mxu0 0.0
      %4426 = vmatpush2.xpose.msra.mxu0 0.0
      %4427 = vmatprep.subr.mxu0 0.0
      %4428 = vmatpush2.xpose.msra.mxu0 0.0
      %4429 = vmatprep.subr.mxu0 0.0
      %4430 = vmatpush2.xpose.msra.mxu0 0.0
      %4431 = vmatprep.subr.mxu0 0.0
      %4432 = vmatpush2.xpose.msra.mxu0 0.0
      %4433 = vmatprep.subr.mxu0 0.0
      %4434 = vmatpush2.xpose.msra.mxu0 0.0
      %4435 = vmatprep.subr.mxu0 0.0
      %4436 = vmatpush2.xpose.msra.mxu0 0.0
      %4437 = vmatprep.subr.mxu0 0.0
      %4438 = vmatpush2.xpose.msra.mxu0 0.0
      %4439 = vmatprep.subr.mxu0 0.0
      %4440 = vmatpush2.xpose.msra.mxu0 0.0
      %4441 = vmatprep.subr.mxu0 0.0
      %4442 = vmatpush2.xpose.msra.mxu0 0.0
      %4443 = vmatprep.subr.mxu0 0.0
      %4444 = vmatpush2.xpose.msra.mxu0 0.0
      %4445 = vmatprep.subr.mxu0 0.0
      %4446 = vmatpush2.xpose.msra.mxu0 0.0
      %4447 = vmatprep.mubr.f32.mxu0 0.0
      %4448 = vmatmul.mubr.f32.gmra.mxu0 %v4371
      %v4449 = vpop.f32.mrf.mxu0
      %v4450 = vadd.f32 0.0, %v4449
      %v4451 = vpop.f32.mrf.mxu0
      %4452 = vmatprep.mubr.f32.mxu0 0.0
      %4453 = vmatmul.mubr.f32.gmra.mxu0 %v4373
      %v4454 = vpop.f32.mrf.mxu0
      %v4455 = vadd.f32 0.0, %v4454
      %v4456 = vpop.f32.mrf.mxu0
      %4457 = vmatprep.mubr.f32.mxu0 0.0
      %4458 = vmatmul.mubr.f32.gmra.mxu0 %v4375
      %v4459 = vpop.f32.mrf.mxu0
      %v4460 = vadd.f32 0.0, %v4459
      %v4461 = vpop.f32.mrf.mxu0
      %4462 = vdwg.mxu0
      %v4463 = vmul.f32 %v4450, 0.17677669
      %v4464 = vmul.f32 %v4455, 0.17677669
      %v4465 = vmul.f32 %v4460, 0.17677669
      %v4466 = vsel %vm964, %v4463, -inf
      %4467 = vmax.xlane.f32.xlu0 %v4466
      %v4468 = vpop.xlane.xlu0 %4467
      %v4469 = vsel %vm964, %v4464, -inf
      %4470 = vmax.xlane.f32.xlu0 %v4469
      %v4471 = vpop.xlane.xlu0 %4470
      %v4472 = vsel %vm971, %v4465, -inf
      %4473 = vmax.xlane.f32.xlu0 %v4472
      %v4474 = vpop.xlane.xlu0 %4473
      %v4475 = vsub.f32 %v4463, %v4468
      %v4476 = vsub.f32 %v4464, %v4471
      %v4477 = vsub.f32 %v4465, %v4474
      %v4478 = vmul.f32 %v4475, 1.442695
      %v4479 = vpow.pop %v4478
      %v4480 = vmul.f32 %v4476, 1.442695
      %v4481 = vpow.pop %v4480
      %v4482 = vmul.f32 %v4477, 1.442695
      %v4483 = vpow.pop %v4482
      %v4484 = vsel %vm964, %v4479, 0.0
      %4485 = vadd.xlane.f32.xlu0 %v4484
      %v4486 = vpop.xlane.xlu0 %4485
      %v4487 = vsel %vm964, %v4481, 0.0
      %4488 = vadd.xlane.f32.xlu0 %v4487
      %v4489 = vpop.xlane.xlu0 %4488
      %v4490 = vsel %vm971, %v4483, 0.0
      %4491 = vadd.xlane.f32.xlu0 %v4490
      %v4492 = vpop.xlane.xlu0 %4491
      %v4493 = vrcp.pop %v4486
      %v4494 = vrcp.pop %v4489
      %v4495 = vrcp.pop %v4492
      %v4496 = vmul.f32 %v4479, %v4493
      %v4497 = vmul.f32 %v4481, %v4494
      %v4498 = vmul.f32 %v4483, %v4495
      %4499 = vrot.lane.b32.xlu0 %v4349, 64
      %v4500 = vpop.permute.xlu0 %4499
      %4501 = vrot.lane.b32.xlu0 %v4354, 64
      %v4502 = vpop.permute.xlu0 %4501
      %4503 = vrot.lane.b32.xlu0 %v4359, 64
      %v4504 = vpop.permute.xlu0 %4503
      %v4508 = vsel %vm964, %v4496, 0
      %v4511 = vsel %vm964, %v4497, 0
      %v4514 = vsel %vm964, %v4498, 0
      %v4516 = vsel %vm1016, %v4504, 0
      %4518 = vmatprep.subr.mxu0 0.0
      %4519 = vmatpush1.msra.mxu0 0.0
      %4520 = vmatprep.subr.mxu0 0.0
      %4521 = vmatpush1.msra.mxu0 0.0
      %4522 = vmatprep.subr.mxu0 0.0
      %4523 = vmatpush1.msra.mxu0 0.0
      %4524 = vmatprep.subr.mxu0 0.0
      %4525 = vmatpush1.msra.mxu0 0.0
      %4526 = vmatprep.subr.mxu0 0.0
      %4527 = vmatpush1.msra.mxu0 0.0
      %4528 = vmatprep.subr.mxu0 0.0
      %4529 = vmatpush1.msra.mxu0 0.0
      %4530 = vmatprep.subr.mxu0 0.0
      %4531 = vmatpush1.msra.mxu0 0.0
      %4532 = vmatprep.subr.mxu0 0.0
      %4533 = vmatpush1.msra.mxu0 0.0
      %4534 = vmatprep.subr.mxu0 0.0
      %4535 = vmatpush1.msra.mxu0 0.0
      %4536 = vmatprep.subr.mxu0 0.0
      %4537 = vmatpush1.msra.mxu0 0.0
      %4538 = vmatprep.subr.mxu0 0.0
      %4539 = vmatpush1.msra.mxu0 0.0
      %4540 = vmatprep.subr.mxu0 0.0
      %4541 = vmatpush1.msra.mxu0 0.0
      %4542 = vmatprep.subr.mxu0 0.0
      %4543 = vmatpush1.msra.mxu0 0.0
      %4544 = vmatprep.subr.mxu0 0.0
      %4545 = vmatpush1.msra.mxu0 %v4516
      %4546 = vmatprep.subr.mxu0 0.0
      %4547 = vmatpush1.msra.mxu0 %v4502
      %4548 = vmatprep.subr.mxu0 0.0
      %4549 = vmatpush1.msra.mxu0 %v4500
      %4550 = vmatprep.subr.mxu0 0.0
      %4551 = vmatpush2.msra.mxu0 0.0
      %4552 = vmatprep.subr.mxu0 0.0
      %4553 = vmatpush2.msra.mxu0 0.0
      %4554 = vmatprep.subr.mxu0 0.0
      %4555 = vmatpush2.msra.mxu0 0.0
      %4556 = vmatprep.subr.mxu0 0.0
      %4557 = vmatpush2.msra.mxu0 0.0
      %4558 = vmatprep.subr.mxu0 0.0
      %4559 = vmatpush2.msra.mxu0 0.0
      %4560 = vmatprep.subr.mxu0 0.0
      %4561 = vmatpush2.msra.mxu0 0.0
      %4562 = vmatprep.subr.mxu0 0.0
      %4563 = vmatpush2.msra.mxu0 0.0
      %4564 = vmatprep.subr.mxu0 0.0
      %4565 = vmatpush2.msra.mxu0 0.0
      %4566 = vmatprep.subr.mxu0 0.0
      %4567 = vmatpush2.msra.mxu0 0.0
      %4568 = vmatprep.subr.mxu0 0.0
      %4569 = vmatpush2.msra.mxu0 0.0
      %4570 = vmatprep.subr.mxu0 0.0
      %4571 = vmatpush2.msra.mxu0 0.0
      %4572 = vmatprep.subr.mxu0 0.0
      %4573 = vmatpush2.msra.mxu0 0.0
      %4574 = vmatprep.subr.mxu0 0.0
      %4575 = vmatpush2.msra.mxu0 0.0
      %4576 = vmatprep.subr.mxu0 0.0
      %4577 = vmatpush2.msra.mxu0 0.0
      %4578 = vmatprep.subr.mxu0 0.0
      %4579 = vmatpush2.msra.mxu0 0.0
      %4580 = vmatprep.subr.mxu0 0.0
      %4581 = vmatpush2.msra.mxu0 0.0
      %4582 = vmatprep.mubr.f32.mxu0 0.0
      %4583 = vmatmul.mubr.f32.gmra.mxu0 %v4508
      %v4584 = vpop.f32.mrf.mxu0
      %v4585 = vadd.f32 0.0, %v4584
      %v4586 = vpop.f32.mrf.mxu0
      %4587 = vmatprep.mubr.f32.mxu0 0.0
      %4588 = vmatmul.mubr.f32.gmra.mxu0 %v4511
      %v4589 = vpop.f32.mrf.mxu0
      %v4590 = vadd.f32 0.0, %v4589
      %v4591 = vpop.f32.mrf.mxu0
      %4592 = vmatprep.mubr.f32.mxu0 0.0
      %4593 = vmatmul.mubr.f32.gmra.mxu0 %v4514
      %v4594 = vpop.f32.mrf.mxu0
      %v4595 = vadd.f32 0.0, %v4594
      %v4596 = vpop.f32.mrf.mxu0
      %4597 = vdwg.mxu0
      %v4599 = vsel %vm657, %v4585, 0
      %v4602 = vsel %vm657, %v4590, 0
      %v4605 = vsel %vm657, %v4595, 0
      %4607 = vmatprep.subr.mxu0 0.0
      %4608 = vmatpush1.msra.mxu0 0.0
      %4609 = vmatprep.subr.mxu0 0.0
      %4610 = vmatpush1.msra.mxu0 0.0
      %4611 = vmatprep.subr.mxu0 0.0
      %4612 = vmatpush1.msra.mxu0 0.0
      %4613 = vmatprep.subr.mxu0 0.0
      %4614 = vmatpush1.msra.mxu0 0.0
      %4615 = vmatprep.subr.mxu0 0.0
      %4616 = vmatpush1.msra.mxu0 0.0
      %4617 = vmatprep.subr.mxu0 0.0
      %4618 = vmatpush1.msra.mxu0 0.0
      %4619 = vmatprep.subr.mxu0 0.0
      %4620 = vmatpush1.msra.mxu0 0.0
      %4621 = vmatprep.subr.mxu0 0.0
      %4622 = vmatpush1.msra.mxu0 0.0
      %4623 = vmatprep.subr.mxu0 0.0
      %4624 = vmatpush1.msra.mxu0 0.0
      %4625 = vmatprep.subr.mxu0 0.0
      %4626 = vmatpush1.msra.mxu0 0.0
      %4627 = vmatprep.subr.mxu0 0.0
      %4628 = vmatpush1.msra.mxu0 0.0
      %4629 = vmatprep.subr.mxu0 0.0
      %4630 = vmatpush1.msra.mxu0 0.0
      %4631 = vmatprep.subr.mxu0 0.0
      %4632 = vmatpush1.msra.mxu0 %v678
      %4633 = vmatprep.subr.mxu0 0.0
      %4634 = vmatpush1.msra.mxu0 %v677
      %4635 = vmatprep.subr.mxu0 0.0
      %4636 = vmatpush1.msra.mxu0 %v676
      %4637 = vmatprep.subr.mxu0 0.0
      %4638 = vmatpush1.msra.mxu0 %v675
      %4639 = vmatprep.subr.mxu0 0.0
      %4640 = vmatpush2.msra.mxu0 0.0
      %4641 = vmatprep.subr.mxu0 0.0
      %4642 = vmatpush2.msra.mxu0 0.0
      %4643 = vmatprep.subr.mxu0 0.0
      %4644 = vmatpush2.msra.mxu0 0.0
      %4645 = vmatprep.subr.mxu0 0.0
      %4646 = vmatpush2.msra.mxu0 0.0
      %4647 = vmatprep.subr.mxu0 0.0
      %4648 = vmatpush2.msra.mxu0 0.0
      %4649 = vmatprep.subr.mxu0 0.0
      %4650 = vmatpush2.msra.mxu0 0.0
      %4651 = vmatprep.subr.mxu0 0.0
      %4652 = vmatpush2.msra.mxu0 0.0
      %4653 = vmatprep.subr.mxu0 0.0
      %4654 = vmatpush2.msra.mxu0 0.0
      %4655 = vmatprep.subr.mxu0 0.0
      %4656 = vmatpush2.msra.mxu0 0.0
      %4657 = vmatprep.subr.mxu0 0.0
      %4658 = vmatpush2.msra.mxu0 0.0
      %4659 = vmatprep.subr.mxu0 0.0
      %4660 = vmatpush2.msra.mxu0 0.0
      %4661 = vmatprep.subr.mxu0 0.0
      %4662 = vmatpush2.msra.mxu0 0.0
      %4663 = vmatprep.subr.mxu0 0.0
      %4664 = vmatpush2.msra.mxu0 0.0
      %4665 = vmatprep.subr.mxu0 0.0
      %4666 = vmatpush2.msra.mxu0 0.0
      %4667 = vmatprep.subr.mxu0 0.0
      %4668 = vmatpush2.msra.mxu0 0.0
      %4669 = vmatprep.subr.mxu0 0.0
      %4670 = vmatpush2.msra.mxu0 0.0
      %4671 = vmatprep.mubr.f32.mxu0 0.0
      %4672 = vmatmul.mubr.f32.gmra.mxu0 %v4599
      %v4673 = vpop.f32.mrf.mxu0
      %v4674 = vadd.f32 0.0, %v4673
      %v4675 = vpop.f32.mrf.mxu0
      %4676 = vmatprep.mubr.f32.mxu0 0.0
      %4677 = vmatmul.mubr.f32.gmra.mxu0 %v4602
      %v4678 = vpop.f32.mrf.mxu0
      %v4679 = vadd.f32 0.0, %v4678
      %v4680 = vpop.f32.mrf.mxu0
      %4681 = vmatprep.mubr.f32.mxu0 0.0
      %4682 = vmatmul.mubr.f32.gmra.mxu0 %v4605
      %v4683 = vpop.f32.mrf.mxu0
      %v4684 = vadd.f32 0.0, %v4683
      %v4685 = vpop.f32.mrf.mxu0
      %4686 = vdwg.mxu0
      %v4687 = vadd.f32 %v4225, %v4674
      %v4688 = vadd.f32 %v4226, %v4679
      %v4689 = vadd.f32 %v4227, %v4684
      %v4690 = vadd.f32 %v4687, %v1195
      %v4691 = vadd.f32 %v4688, %v1195
      %v4692 = vadd.f32 %v4689, %v1195
      %v4693 = vsel %vm657, %v4690, 0.0
      %4694 = vadd.xlane.f32.xlu0 %v4693
      %v4695 = vpop.xlane.xlu0 %4694
      %v4696 = vsel %vm657, %v4691, 0.0
      %4697 = vadd.xlane.f32.xlu0 %v4696
      %v4698 = vpop.xlane.xlu0 %4697
      %v4699 = vsel %vm700, %v4692, 0.0
      %4700 = vadd.xlane.f32.xlu0 %v4699
      %v4701 = vpop.xlane.xlu0 %4700
      %v4702 = vmul.f32 %v4695, %v720
      %v4703 = vmul.f32 %v4698, %v720
      %v4704 = vmul.f32 %v4701, %v720
      %v4705 = vsub.f32 %v4690, %v4702
      %v4706 = vsub.f32 %v4691, %v4703
      %v4707 = vsub.f32 %v4692, %v4704
      %v4708 = vmul.f32 %v4705, %v4705
      %v4709 = vmul.f32 %v4706, %v4706
      %v4710 = vmul.f32 %v4707, %v4707
      %v4711 = vsel %vm657, %v4708, 0.0
      %4712 = vadd.xlane.f32.xlu0 %v4711
      %v4713 = vpop.xlane.xlu0 %4712
      %v4714 = vsel %vm657, %v4709, 0.0
      %4715 = vadd.xlane.f32.xlu0 %v4714
      %v4716 = vpop.xlane.xlu0 %4715
      %v4717 = vsel %vm700, %v4710, 0.0
      %4718 = vadd.xlane.f32.xlu0 %v4717
      %v4719 = vpop.xlane.xlu0 %4718
      %v4720 = vmul.f32 %v4713, %v720
      %v4721 = vmul.f32 %v4716, %v720
      %v4722 = vmul.f32 %v4719, %v720
      %v4723 = vadd.f32 %v4720, 1e-05
      %v4724 = vadd.f32 %v4721, 1e-05
      %v4725 = vadd.f32 %v4722, 1e-05
      %v4726 = vrsqrt.pop %v4723
      %v4727 = vrsqrt.pop %v4724
      %v4728 = vrsqrt.pop %v4725
      %v4729 = vmul.f32 %v4705, %v4726
      %v4730 = vmul.f32 %v4706, %v4727
      %v4731 = vmul.f32 %v4707, %v4728
      %v4732 = vmul.f32 %v4729, %v1242
      %v4733 = vmul.f32 %v4730, %v1242
      %v4734 = vmul.f32 %v4731, %v1242
      %v4735 = vadd.f32 %v4732, %v1249
      %v4736 = vadd.f32 %v4733, %v1249
      %v4737 = vadd.f32 %v4734, %v1249
      %v4739 = vsel %vm657, %v4735, 0
      %v4742 = vsel %vm657, %v4736, 0
      %v4745 = vsel %vm657, %v4737, 0
      %4747 = vmatprep.subr.mxu0 0.0
      %4748 = vmatpush1.msra.mxu0 0.0
      %4749 = vmatprep.subr.mxu0 0.0
      %4750 = vmatpush1.msra.mxu0 0.0
      %4751 = vmatprep.subr.mxu0 0.0
      %4752 = vmatpush1.msra.mxu0 0.0
      %4753 = vmatprep.subr.mxu0 0.0
      %4754 = vmatpush1.msra.mxu0 0.0
      %4755 = vmatprep.subr.mxu0 0.0
      %4756 = vmatpush1.msra.mxu0 0.0
      %4757 = vmatprep.subr.mxu0 0.0
      %4758 = vmatpush1.msra.mxu0 0.0
      %4759 = vmatprep.subr.mxu0 0.0
      %4760 = vmatpush1.msra.mxu0 0.0
      %4761 = vmatprep.subr.mxu0 0.0
      %4762 = vmatpush1.msra.mxu0 0.0
      %4763 = vmatprep.subr.mxu0 0.0
      %4764 = vmatpush1.msra.mxu0 0.0
      %4765 = vmatprep.subr.mxu0 0.0
      %4766 = vmatpush1.msra.mxu0 0.0
      %4767 = vmatprep.subr.mxu0 0.0
      %4768 = vmatpush1.msra.mxu0 0.0
      %4769 = vmatprep.subr.mxu0 0.0
      %4770 = vmatpush1.msra.mxu0 0.0
      %4771 = vmatprep.subr.mxu0 0.0
      %4772 = vmatpush1.msra.mxu0 %v683
      %4773 = vmatprep.subr.mxu0 0.0
      %4774 = vmatpush1.msra.mxu0 %v682
      %4775 = vmatprep.subr.mxu0 0.0
      %4776 = vmatpush1.msra.mxu0 %v681
      %4777 = vmatprep.subr.mxu0 0.0
      %4778 = vmatpush1.msra.mxu0 %v680
      %4779 = vmatprep.subr.mxu0 0.0
      %4780 = vmatpush2.msra.mxu0 0.0
      %4781 = vmatprep.subr.mxu0 0.0
      %4782 = vmatpush2.msra.mxu0 0.0
      %4783 = vmatprep.subr.mxu0 0.0
      %4784 = vmatpush2.msra.mxu0 0.0
      %4785 = vmatprep.subr.mxu0 0.0
      %4786 = vmatpush2.msra.mxu0 0.0
      %4787 = vmatprep.subr.mxu0 0.0
      %4788 = vmatpush2.msra.mxu0 0.0
      %4789 = vmatprep.subr.mxu0 0.0
      %4790 = vmatpush2.msra.mxu0 0.0
      %4791 = vmatprep.subr.mxu0 0.0
      %4792 = vmatpush2.msra.mxu0 0.0
      %4793 = vmatprep.subr.mxu0 0.0
      %4794 = vmatpush2.msra.mxu0 0.0
      %4795 = vmatprep.subr.mxu0 0.0
      %4796 = vmatpush2.msra.mxu0 0.0
      %4797 = vmatprep.subr.mxu0 0.0
      %4798 = vmatpush2.msra.mxu0 0.0
      %4799 = vmatprep.subr.mxu0 0.0
      %4800 = vmatpush2.msra.mxu0 0.0
      %4801 = vmatprep.subr.mxu0 0.0
      %4802 = vmatpush2.msra.mxu0 0.0
      %4803 = vmatprep.subr.mxu0 0.0
      %4804 = vmatpush2.msra.mxu0 0.0
      %4805 = vmatprep.subr.mxu0 0.0
      %4806 = vmatpush2.msra.mxu0 0.0
      %4807 = vmatprep.subr.mxu0 0.0
      %4808 = vmatpush2.msra.mxu0 0.0
      %4809 = vmatprep.subr.mxu0 0.0
      %4810 = vmatpush2.msra.mxu0 0.0
      %4811 = vmatprep.mubr.f32.mxu0 0.0
      %4812 = vmatmul.mubr.f32.gmra.mxu0 %v4739
      %v4813 = vpop.f32.mrf.mxu0
      %v4814 = vadd.f32 %v1257, %v4813
      %v4815 = vpop.f32.mrf.mxu0
      %4816 = vmatprep.mubr.f32.mxu0 0.0
      %4817 = vmatmul.mubr.f32.gmra.mxu0 %v4742
      %v4818 = vpop.f32.mrf.mxu0
      %v4819 = vadd.f32 %v1257, %v4818
      %v4820 = vpop.f32.mrf.mxu0
      %4821 = vmatprep.mubr.f32.mxu0 0.0
      %4822 = vmatmul.mubr.f32.gmra.mxu0 %v4745
      %v4823 = vpop.f32.mrf.mxu0
      %v4824 = vadd.f32 %v1257, %v4823
      %v4825 = vpop.f32.mrf.mxu0
      %4826 = vdwg.mxu0
      %v4827 = vmul.f32 %v4814, 0.5
      %v4828 = vmul.f32 %v4819, 0.5
      %v4829 = vmul.f32 %v4824, 0.5
      %v4830 = vmul.f32 %v4814, 0.70710677
      %v4831 = vmul.f32 %v4819, 0.70710677
      %v4832 = vmul.f32 %v4824, 0.70710677
      %vm4833 = vcmp.lt.f32.partialorder %v4830, 0.0
      %vm4834 = vcmp.lt.f32.partialorder %v4831, 0.0
      %vm4835 = vcmp.lt.f32.partialorder %v4832, 0.0
      %v4836 = vsel %vm4833, -1.0, 1.0
      %v4837 = vsel %vm4834, -1.0, 1.0
      %v4838 = vsel %vm4835, -1.0, 1.0
      %v4839 = vand.u32 2147483647, %v4830
      %v4840 = vand.u32 2147483647, %v4831
      %v4841 = vand.u32 2147483647, %v4832
      %v4842 = vmul.f32 %v4839, 0.3275911
      %v4843 = vmul.f32 %v4840, 0.3275911
      %v4844 = vmul.f32 %v4841, 0.3275911
      %v4845 = vadd.f32 %v4842, 1.0
      %v4846 = vadd.f32 %v4843, 1.0
      %v4847 = vadd.f32 %v4844, 1.0
      %v4848 = vrcp.pop %v4845
      %v4849 = vmul.f32 1.0, %v4848
      %v4850 = vrcp.pop %v4846
      %v4851 = vmul.f32 1.0, %v4850
      %v4852 = vrcp.pop %v4847
      %v4853 = vmul.f32 1.0, %v4852
      %v4854 = vmul.f32 %v4849, 1.0614054
      %v4855 = vmul.f32 %v4851, 1.0614054
      %v4856 = vmul.f32 %v4853, 1.0614054
      %v4857 = vadd.f32 %v4854, -1.4531521
      %v4858 = vadd.f32 %v4855, -1.4531521
      %v4859 = vadd.f32 %v4856, -1.4531521
      %v4860 = vmul.f32 %v4857, %v4849
      %v4861 = vmul.f32 %v4858, %v4851
      %v4862 = vmul.f32 %v4859, %v4853
      %v4863 = vadd.f32 %v4860, 1.4214138
      %v4864 = vadd.f32 %v4861, 1.4214138
      %v4865 = vadd.f32 %v4862, 1.4214138
      %v4866 = vmul.f32 %v4863, %v4849
      %v4867 = vmul.f32 %v4864, %v4851
      %v4868 = vmul.f32 %v4865, %v4853
      %v4869 = vadd.f32 %v4866, -0.28449672
      %v4870 = vadd.f32 %v4867, -0.28449672
      %v4871 = vadd.f32 %v4868, -0.28449672
      %v4872 = vmul.f32 %v4869, %v4849
      %v4873 = vmul.f32 %v4870, %v4851
      %v4874 = vmul.f32 %v4871, %v4853
      %v4875 = vadd.f32 %v4872, 0.2548296
      %v4876 = vadd.f32 %v4873, 0.2548296
      %v4877 = vadd.f32 %v4874, 0.2548296
      %v4878 = vmul.f32 %v4875, %v4849
      %v4879 = vmul.f32 %v4876, %v4851
      %v4880 = vmul.f32 %v4877, %v4853
      %v4881 = vsub.f32 0.0, %v4839
      %v4882 = vsub.f32 0.0, %v4840
      %v4883 = vsub.f32 0.0, %v4841
      %v4884 = vmul.f32 %v4881, %v4839
      %v4885 = vmul.f32 %v4882, %v4840
      %v4886 = vmul.f32 %v4883, %v4841
      %v4887 = vmul.f32 %v4884, 1.442695
      %v4888 = vpow.pop %v4887
      %v4889 = vmul.f32 %v4885, 1.442695
      %v4890 = vpow.pop %v4889
      %v4891 = vmul.f32 %v4886, 1.442695
      %v4892 = vpow.pop %v4891
      %v4893 = vmul.f32 %v4878, %v4888
      %v4894 = vmul.f32 %v4879, %v4890
      %v4895 = vmul.f32 %v4880, %v4892
      %v4896 = vsub.f32 1.0, %v4893
      %v4897 = vsub.f32 1.0, %v4894
      %v4898 = vsub.f32 1.0, %v4895
      %v4899 = vmul.f32 %v4836, %v4896
      %v4900 = vmul.f32 %v4837, %v4897
      %v4901 = vmul.f32 %v4838, %v4898
      %v4902 = vadd.f32 %v4899, 1.0
      %v4903 = vadd.f32 %v4900, 1.0
      %v4904 = vadd.f32 %v4901, 1.0
      %v4905 = vmul.f32 %v4827, %v4902
      %v4906 = vmul.f32 %v4828, %v4903
      %v4907 = vmul.f32 %v4829, %v4904
      %v4909 = vsel %vm559, %v4905, 0
      %v4912 = vsel %vm559, %v4906, 0
      %v4915 = vsel %vm559, %v4907, 0
      %4917 = vmatprep.subr.mxu0 0.0
      %4918 = vmatpush1.msra.mxu0 0.0
      %4919 = vmatprep.subr.mxu0 0.0
      %4920 = vmatpush1.msra.mxu0 0.0
      %4921 = vmatprep.subr.mxu0 0.0
      %4922 = vmatpush1.msra.mxu0 0.0
      %4923 = vmatprep.subr.mxu0 0.0
      %4924 = vmatpush1.msra.mxu0 0.0
      %4925 = vmatprep.subr.mxu0 0.0
      %4926 = vmatpush1.msra.mxu0 0.0
      %4927 = vmatprep.subr.mxu0 0.0
      %4928 = vmatpush1.msra.mxu0 0.0
      %4929 = vmatprep.subr.mxu0 0.0
      %4930 = vmatpush1.msra.mxu0 0.0
      %4931 = vmatprep.subr.mxu0 0.0
      %4932 = vmatpush1.msra.mxu0 0.0
      %4933 = vmatprep.subr.mxu0 0.0
      %4934 = vmatpush1.msra.mxu0 %v692
      %4935 = vmatprep.subr.mxu0 0.0
      %4936 = vmatpush1.msra.mxu0 %v691
      %4937 = vmatprep.subr.mxu0 0.0
      %4938 = vmatpush1.msra.mxu0 %v690
      %4939 = vmatprep.subr.mxu0 0.0
      %4940 = vmatpush1.msra.mxu0 %v689
      %4941 = vmatprep.subr.mxu0 0.0
      %4942 = vmatpush1.msra.mxu0 %v688
      %4943 = vmatprep.subr.mxu0 0.0
      %4944 = vmatpush1.msra.mxu0 %v687
      %4945 = vmatprep.subr.mxu0 0.0
      %4946 = vmatpush1.msra.mxu0 %v686
      %4947 = vmatprep.subr.mxu0 0.0
      %4948 = vmatpush1.msra.mxu0 %v685
      %4949 = vmatprep.subr.mxu0 0.0
      %4950 = vmatpush2.msra.mxu0 0.0
      %4951 = vmatprep.subr.mxu0 0.0
      %4952 = vmatpush2.msra.mxu0 0.0
      %4953 = vmatprep.subr.mxu0 0.0
      %4954 = vmatpush2.msra.mxu0 0.0
      %4955 = vmatprep.subr.mxu0 0.0
      %4956 = vmatpush2.msra.mxu0 0.0
      %4957 = vmatprep.subr.mxu0 0.0
      %4958 = vmatpush2.msra.mxu0 0.0
      %4959 = vmatprep.subr.mxu0 0.0
      %4960 = vmatpush2.msra.mxu0 0.0
      %4961 = vmatprep.subr.mxu0 0.0
      %4962 = vmatpush2.msra.mxu0 0.0
      %4963 = vmatprep.subr.mxu0 0.0
      %4964 = vmatpush2.msra.mxu0 0.0
      %4965 = vmatprep.subr.mxu0 0.0
      %4966 = vmatpush2.msra.mxu0 0.0
      %4967 = vmatprep.subr.mxu0 0.0
      %4968 = vmatpush2.msra.mxu0 0.0
      %4969 = vmatprep.subr.mxu0 0.0
      %4970 = vmatpush2.msra.mxu0 0.0
      %4971 = vmatprep.subr.mxu0 0.0
      %4972 = vmatpush2.msra.mxu0 0.0
      %4973 = vmatprep.subr.mxu0 0.0
      %4974 = vmatpush2.msra.mxu0 0.0
      %4975 = vmatprep.subr.mxu0 0.0
      %4976 = vmatpush2.msra.mxu0 0.0
      %4977 = vmatprep.subr.mxu0 0.0
      %4978 = vmatpush2.msra.mxu0 0.0
      %4979 = vmatprep.subr.mxu0 0.0
      %4980 = vmatpush2.msra.mxu0 0.0
      %4981 = vmatprep.mubr.f32.mxu0 0.0
      %4982 = vmatmul.mubr.f32.gmra.mxu0 %v4909
      %v4983 = vpop.f32.mrf.mxu0
      %v4984 = vadd.f32 %v1433, %v4983
      %v4985 = vpop.f32.mrf.mxu0
      %4986 = vmatprep.mubr.f32.mxu0 0.0
      %4987 = vmatmul.mubr.f32.gmra.mxu0 %v4912
      %v4988 = vpop.f32.mrf.mxu0
      %v4989 = vpop.f32.mrf.mxu0
      %4990 = vmatprep.mubr.f32.mxu0 0.0
      %4991 = vmatmul.mubr.f32.gmra.mxu0 %v4915
      %v4992 = vpop.f32.mrf.mxu0
      %v4993 = vpop.f32.mrf.mxu0
      %4994 = vdwg.mxu0
      %v4995 = vadd.f32 %v4690, %v4984
      %v4996 = vsel %vm657, %v4995, 0.0
      %4997 = vadd.xlane.f32.xlu0 %v4996
      %v4998 = vpop.xlane.xlu0 %4997
      %v4999 = vmul.f32 %v4998, %v720
      %v5000 = vsub.f32 %v4995, %v4999
      %v5001 = vmul.f32 %v5000, %v5000
      %v5002 = vsel %vm657, %v5001, 0.0
      %5003 = vadd.xlane.f32.xlu0 %v5002
      %v5004 = vpop.xlane.xlu0 %5003
      %v5005 = vmul.f32 %v5004, %v720
      %v5006 = vadd.f32 %v5005, 1e-05
      %v5007 = vrsqrt.pop %v5006
      %v5008 = vmul.f32 %v5000, %v5007
      %v5009 = vmul.f32 %v5008, %v1539
      %v5010 = vadd.f32 %v5009, %v1544
      %v5012 = vsel %vm657, %v5010, 0
      %5014 = vmatprep.subr.mxu0 0.0
      %5015 = vmatpush1.msra.mxu0 0.0
      %5016 = vmatprep.subr.mxu0 0.0
      %5017 = vmatpush1.msra.mxu0 0.0
      %5018 = vmatprep.subr.mxu0 0.0
      %5019 = vmatpush1.msra.mxu0 0.0
      %5020 = vmatprep.subr.mxu0 0.0
      %5021 = vmatpush1.msra.mxu0 0.0
      %5022 = vmatprep.subr.mxu0 0.0
      %5023 = vmatpush1.msra.mxu0 0.0
      %5024 = vmatprep.subr.mxu0 0.0
      %5025 = vmatpush1.msra.mxu0 0.0
      %5026 = vmatprep.subr.mxu0 0.0
      %5027 = vmatpush1.msra.mxu0 0.0
      %5028 = vmatprep.subr.mxu0 0.0
      %5029 = vmatpush1.msra.mxu0 0.0
      %5030 = vmatprep.subr.mxu0 0.0
      %5031 = vmatpush1.msra.mxu0 0.0
      %5032 = vmatprep.subr.mxu0 0.0
      %5033 = vmatpush1.msra.mxu0 0.0
      %5034 = vmatprep.subr.mxu0 0.0
      %5035 = vmatpush1.msra.mxu0 0.0
      %5036 = vmatprep.subr.mxu0 0.0
      %5037 = vmatpush1.msra.mxu0 0.0
      %5038 = vmatprep.subr.mxu0 0.0
      %5039 = vmatpush1.msra.mxu0 %v697
      %5040 = vmatprep.subr.mxu0 0.0
      %5041 = vmatpush1.msra.mxu0 %v696
      %5042 = vmatprep.subr.mxu0 0.0
      %5043 = vmatpush1.msra.mxu0 %v695
      %5044 = vmatprep.subr.mxu0 0.0
      %5045 = vmatpush1.msra.mxu0 %v694
      %5046 = vmatprep.subr.mxu0 0.0
      %5047 = vmatpush2.msra.mxu0 0.0
      %5048 = vmatprep.subr.mxu0 0.0
      %5049 = vmatpush2.msra.mxu0 0.0
      %5050 = vmatprep.subr.mxu0 0.0
      %5051 = vmatpush2.msra.mxu0 0.0
      %5052 = vmatprep.subr.mxu0 0.0
      %5053 = vmatpush2.msra.mxu0 0.0
      %5054 = vmatprep.subr.mxu0 0.0
      %5055 = vmatpush2.msra.mxu0 0.0
      %5056 = vmatprep.subr.mxu0 0.0
      %5057 = vmatpush2.msra.mxu0 0.0
      %5058 = vmatprep.subr.mxu0 0.0
      %5059 = vmatpush2.msra.mxu0 0.0
      %5060 = vmatprep.subr.mxu0 0.0
      %5061 = vmatpush2.msra.mxu0 0.0
      %5062 = vmatprep.subr.mxu0 0.0
      %5063 = vmatpush2.msra.mxu0 0.0
      %5064 = vmatprep.subr.mxu0 0.0
      %5065 = vmatpush2.msra.mxu0 0.0
      %5066 = vmatprep.subr.mxu0 0.0
      %5067 = vmatpush2.msra.mxu0 0.0
      %5068 = vmatprep.subr.mxu0 0.0
      %5069 = vmatpush2.msra.mxu0 0.0
      %5070 = vmatprep.subr.mxu0 0.0
      %5071 = vmatpush2.msra.mxu0 0.0
      %5072 = vmatprep.subr.mxu0 0.0
      %5073 = vmatpush2.msra.mxu0 0.0
      %5074 = vmatprep.subr.mxu0 0.0
      %5075 = vmatpush2.msra.mxu0 0.0
      %5076 = vmatprep.subr.mxu0 0.0
      %5077 = vmatpush2.msra.mxu0 0.0
      %5078 = vmatprep.mubr.f32.mxu0 0.0
      %5079 = vmatmul.mubr.f32.gmra.mxu0 %v5012
      %v5080 = vpop.f32.mrf.mxu0
      %v5081 = vadd.f32 %v698, %v5080
      %v5082 = vpop.f32.mrf.mxu0
      %5083 = vdwg.mxu0
      %5084 = vst.msk [vmem:[#allocation4 + $0x4] sm:$0x1] %vm1619, %v5081
      %v5085 = vld [vmem:[#allocation4] sm:$0x1f]
      %vm5086 = vcmask 126976
      %5087 = vst.msk [vmem:[%s519] sm:$0x1f] %vm5086, %v5085
      %p5088 = scmp.lt.s32.totalorder %s27, 1
      %s5089 = scalar_select %p5088, %s27, 1
      %s5090 = smul.addr %s5089, 8
      %s5091 = scalar_lea.vmem %s16, %s5090
      // Predicated region
      $region85: #{egovlp_forward.2} parent=83 // pred_check
        %p5092 = pneg %p386
      $region86: #{egovlp_forward.2} parent=83 // pred_check_branch
        %5094 = sbr.rel (%p5092) target = $region88
      $region87: #{egovlp_forward.2} parent=83 // pred_region
        _
      $region88: #{egovlp_forward.2} parent=83 // pred_fallthru
        _
    $region84: #{egovlp_forward.2} parent=5 // pred_fallthru
      _
    %p5095 = scmp.le.s32.totalorder 2, %s22
    // Predicated region
    $region89: #{egovlp_forward.2} parent=5 // pred_check
      %p5096 = pneg %p5095
    $region90: #{egovlp_forward.2} parent=5 // pred_check_branch
      %5098 = sbr.rel (%p5096) target = $region92
    $region91: #{egovlp_forward.2} parent=5 // pred_region
      %s5099 = ssub.s32 %s22, 2
      // Predicated region
      $region93: #{egovlp_forward.2} parent=91 // pred_check
        %p5100 = pneg %p392
      $region94: #{egovlp_forward.2} parent=91 // pred_check_branch
        %5102 = sbr.rel (%p5100) target = $region96
      $region95: #{egovlp_forward.2} parent=91 // pred_region
        %p5103 = scmp.lt.s32.totalorder %s28, 1
        %s5104 = scalar_select %p5103, %s28, 1
        %s5105 = smul.addr %s5104, 8
        %s5106 = scalar_lea.vmem %s16, %s5105
      $region96: #{egovlp_forward.2} parent=91 // pred_fallthru
        _
    $region92: #{egovlp_forward.2} parent=5 // pred_fallthru
      _
  $region6: #{egovlp_forward.2} parent=0 // loop_footer
    %s26 = sadd.s32 1, %s22
  $region7: #{egovlp_forward.2} parent=0 // loop_footer_branch
    %21 = sbr.rel target = $region3
  $region8: #{egovlp_forward.2} parent=0 // loop_exit
    _

</llo_original>
